<compile_context>
chip_gen: v5e
topology: v5e:2x2
jax: 0.10.0
libtpu: 0.0.40
codegen_flags: <defaults>
</compile_context>

<pallas_src>
import math

import jax
import jax.numpy as jnp
from jax.experimental import pallas as pl
from jax.experimental.pallas import tpu as pltpu

B = 2        # batch
S = 8        # sequence length
D = 768      # hidden size (module hard-codes 768)
TWO_D = 2 * D
VOCAB = 32
NUM_MONTHS = 12
SCALING = math.sqrt(D)
OUT_LANES = 128   # lane-dense padded output width


def _gelu_exact(x):
    # torch.nn.functional.gelu default = exact erf-based GELU (f32 path)
    return 0.5 * x * (1.0 + jax.lax.erf(x * 0.7071067811865476))


def model_kernel(hcat_ref, mask_ref, temb_ref,
                 wp_ref, bp_ref,          # pooler.proj      (2D -> D), bf16 weight
                 wa_ref, ba_ref,          # pooler.attention (D -> 1) as (1, D) row
                 wo_ref, bo_ref,          # pooler.out_proj  (D -> D), bf16 weight
                 wh_ref, bh_ref,          # regression.hidden_proj (D -> 2D), bf16
                 wr_ref, br_ref,          # regression.output_proj (2D -> 1) as (1, 2D) row
                 out_ref):
    bs, two_d = hcat_ref.shape
    d = two_d // 2
    b, s = mask_ref.shape

    # ---- AttentionPooling.proj : bf16 x bf16 -> f32 accumulate on MXU ----
    x = jnp.dot(hcat_ref[...], wp_ref[...],
                preferred_element_type=jnp.float32) + bp_ref[...]        # [B*S, D] f32
    x3 = x.reshape(b, s, d)                                              # sublane split (8-row tile)

    # ---- attention scores: VPU broadcast-multiply + lane reduce (no N=1 MXU matmul) ----
    scores = (jnp.sum(x3 * wa_ref[...], axis=-1) + ba_ref[...]) * (1.0 / SCALING)  # [B, S]
    scores = jnp.where(mask_ref[...] > 0.0, scores, jnp.float32(-1e30))

    # softmax over the sequence axis (dim=1), f32
    m = jnp.max(scores, axis=1, keepdims=True)
    e = jnp.exp(scores - m)
    attn = e / jnp.sum(e, axis=1, keepdims=True)                         # [B, S]

    # weighted pooling over sequence
    pool = jnp.sum(attn[:, :, None] * x3, axis=1)                        # [B, D] f32

    # pooler.out_proj on MXU (bf16 operands, f32 accumulate)
    pooled = jnp.dot(pool.astype(jnp.bfloat16), wo_ref[...],
                     preferred_element_type=jnp.float32) + bo_ref[...]   # [B, D] f32

    # ---- add time embedding + exact GELU (f32) ----
    added = _gelu_exact(pooled + temb_ref[...])                          # [B, D]

    # ---- RegressionLayer ----
    hid = _gelu_exact(
        jnp.dot(added.astype(jnp.bfloat16), wh_ref[...],
                preferred_element_type=jnp.float32) + bh_ref[...])       # [B, 2D] f32

    # output head: VPU multiply + lane reduce, lane-dense padded store
    out_val = jnp.sum(hid * wr_ref[...], axis=-1, keepdims=True) + br_ref[...]   # [B, 1]
    out_ref[...] = jnp.broadcast_to(out_val, out_ref.shape)              # [B, 128]


def run_model(input_ids, time_input, attention_mask, params):
    # -------- plain-JAX glue: synthetic encoder + embedding lookups --------
    # TODO(synk): stand-in for T5EncoderModel hidden_states[-2:]
    hs_prev = params["enc_emb_a"][input_ids]                      # [B, S, D]
    hs_last = params["enc_emb_b"][input_ids]                      # [B, S, D]
    hcat = jnp.concatenate([hs_prev, hs_last], axis=-1)           # [B, S, 2D]
    # flatten in the wrapper (free layout plumbing) + bf16 for MXU-native input
    hcat2d = hcat.reshape(B * S, TWO_D).astype(jnp.bfloat16)      # [B*S, 2D]

    month = time_input[:, 0]                                      # split(time_input, 1, dim=1)[0]
    temb = params["month_emb"][month]                             # [B, D] f32 (squeeze(1) equiv.)

    mask_f = attention_mask.astype(jnp.float32)                   # [B, S]

    kernel_inputs = (
        hcat2d, mask_f, temb,
        params["wp"], params["bp"],
        params["wa"], params["ba"],
        params["wo"], params["bo"],
        params["wh"], params["bh"],
        params["wr"], params["br"],
    )

    vmem_spec = pl.BlockSpec(memory_space=pltpu.MemorySpace.VMEM)
    out_padded = pl.pallas_call(
        model_kernel,
        out_shape=jax.ShapeDtypeStruct((B, OUT_LANES), jnp.float32),
        in_specs=[vmem_spec] * len(kernel_inputs),
        out_specs=vmem_spec,
        compiler_params=pltpu.CompilerParams(vmem_limit_bytes=32 * 1024 * 1024),
    )(*kernel_inputs)
    return out_padded[:, :1]                                      # [B, 1]


def make_params(key):
    ks = jax.random.split(key, 12)
    std = 0.02
    return {
        # synthetic encoder embeddings (T5 stand-in), f32 lookup tables
        "enc_emb_a": jax.random.normal(ks[0], (VOCAB, D), jnp.float32) * std,
        "enc_emb_b": jax.random.normal(ks[1], (VOCAB, D), jnp.float32) * std,
        # TimeEmbedding.month_embedding
        "month_emb": jax.random.normal(ks[2], (NUM_MONTHS, D), jnp.float32) * std,
        # AttentionPooling — big matrices streamed as bf16, biases f32
        "wp": (jax.random.normal(ks[3], (TWO_D, D), jnp.float32) * std).astype(jnp.bfloat16),
        "bp": jnp.zeros((1, D), jnp.float32),
        "wa": jax.random.normal(ks[4], (1, D), jnp.float32) * std,    # attention weight as lane row
        "ba": jnp.zeros((1, 1), jnp.float32),
        "wo": (jax.random.normal(ks[5], (D, D), jnp.float32) * std).astype(jnp.bfloat16),
        "bo": jnp.zeros((1, D), jnp.float32),
        # RegressionLayer
        "wh": (jax.random.normal(ks[6], (D, TWO_D), jnp.float32) * std).astype(jnp.bfloat16),
        "bh": jnp.zeros((1, TWO_D), jnp.float32),
        "wr": jax.random.normal(ks[7], (1, TWO_D), jnp.float32) * std,  # output weight as lane row
        "br": jnp.zeros((1, 1), jnp.float32),
    }


if __name__ == "__main__":
    key = jax.random.PRNGKey(0)
    k_ids, k_time, k_params = jax.random.split(key, 3)

    input_ids = jax.random.randint(k_ids, (B, S), 0, VOCAB, dtype=jnp.int32)
    month = jax.random.randint(k_time, (B, 1), 0, NUM_MONTHS, dtype=jnp.int32)
    year = jnp.zeros((B, 1), jnp.int32)
    time_input = jnp.concatenate([month, year], axis=1)           # [B, 2]
    attention_mask = jnp.ones((B, S), jnp.int32).at[1, S - 2:].set(0)

    params = make_params(k_params)

    logits = run_model(input_ids, time_input, attention_mask, params)
    jax.block_until_ready(logits)
    assert logits.shape == (B, 1) and logits.dtype == jnp.float32
    assert bool(jnp.all(jnp.isfinite(logits)))
    print("KERNEL_OK")
</pallas_src>

<mosaic_0001>
module attributes {stable_mosaic.version = 11 : i64} {
  func.func @model_kernel(%arg0: memref<16x1536xbf16, #tpu.memory_space<vmem>>, %arg1: memref<2x8xf32, #tpu.memory_space<vmem>>, %arg2: memref<2x768xf32, #tpu.memory_space<vmem>>, %arg3: memref<1536x768xbf16, #tpu.memory_space<vmem>>, %arg4: memref<1x768xf32, #tpu.memory_space<vmem>>, %arg5: memref<1x768xf32, #tpu.memory_space<vmem>>, %arg6: memref<1x1xf32, #tpu.memory_space<vmem>>, %arg7: memref<768x768xbf16, #tpu.memory_space<vmem>>, %arg8: memref<1x768xf32, #tpu.memory_space<vmem>>, %arg9: memref<768x1536xbf16, #tpu.memory_space<vmem>>, %arg10: memref<1x1536xf32, #tpu.memory_space<vmem>>, %arg11: memref<1x1536xf32, #tpu.memory_space<vmem>>, %arg12: memref<1x1xf32, #tpu.memory_space<vmem>>, %arg13: memref<2x128xf32, #tpu.memory_space<vmem>>) attributes {dimension_semantics = [], scalar_prefetch = 0 : i64, scratch_operands = 0 : i64, tpu.core_type = #tpu.core_type<tc>} {
    %c0 = arith.constant 0 : index
    %c0_0 = arith.constant 0 : index
    %0 = vector.load %arg0[%c0, %c0_0] : memref<16x1536xbf16, #tpu.memory_space<vmem>>, vector<16x1536xbf16>
    %c0_1 = arith.constant 0 : index
    %c0_2 = arith.constant 0 : index
    %1 = vector.load %arg3[%c0_1, %c0_2] : memref<1536x768xbf16, #tpu.memory_space<vmem>>, vector<1536x768xbf16>
    %cst = arith.constant dense<0.000000e+00> : vector<16x768xf32>
    %2 = tpu.matmul %0, %1, %cst {dimension_numbers = #tpu.dot_dimension_numbers<[1], [0], [0], [1], [0, 0, 1, 1], [], []>} : vector<16x1536xbf16>, vector<1536x768xbf16>, vector<16x768xf32> -> vector<16x768xf32>
    %c0_3 = arith.constant 0 : index
    %c0_4 = arith.constant 0 : index
    %3 = vector.load %arg4[%c0_3, %c0_4] : memref<1x768xf32, #tpu.memory_space<vmem>>, vector<1x768xf32>
    %4 = vector.broadcast %3 : vector<1x768xf32> to vector<16x768xf32>
    %5 = arith.addf %2, %4 : vector<16x768xf32>
    %6 = vector.shape_cast %5 : vector<16x768xf32> to vector<2x8x768xf32>
    %c0_5 = arith.constant 0 : index
    %c0_6 = arith.constant 0 : index
    %7 = vector.load %arg5[%c0_5, %c0_6] : memref<1x768xf32, #tpu.memory_space<vmem>>, vector<1x768xf32>
    %8 = vector.shape_cast %7 : vector<1x768xf32> to vector<1x1x768xf32>
    %9 = vector.broadcast %8 : vector<1x1x768xf32> to vector<2x8x768xf32>
    %10 = arith.mulf %6, %9 : vector<2x8x768xf32>
    %cst_7 = arith.constant dense<0.000000e+00> : vector<2x8xf32>
    %11 = vector.multi_reduction <add>, %10, %cst_7 [2] : vector<2x8x768xf32> to vector<2x8xf32>
    %c0_8 = arith.constant 0 : index
    %c0_9 = arith.constant 0 : index
    %12 = vector.load %arg6[%c0_8, %c0_9] : memref<1x1xf32, #tpu.memory_space<vmem>>, vector<1x1xf32>
    %13 = vector.broadcast %12 : vector<1x1xf32> to vector<2x8xf32>
    %14 = arith.addf %11, %13 : vector<2x8xf32>
    %cst_10 = arith.constant 0.0360843912 : f32
    %15 = vector.broadcast %cst_10 : f32 to vector<2x8xf32>
    %16 = arith.mulf %14, %15 : vector<2x8xf32>
    %c0_11 = arith.constant 0 : index
    %c0_12 = arith.constant 0 : index
    %17 = vector.load %arg1[%c0_11, %c0_12] : memref<2x8xf32, #tpu.memory_space<vmem>>, vector<2x8xf32>
    %cst_13 = arith.constant 0.000000e+00 : f32
    %18 = vector.broadcast %cst_13 : f32 to vector<2x8xf32>
    %19 = arith.cmpf ogt, %17, %18 : vector<2x8xf32>
    %cst_14 = arith.constant -1.000000e+30 : f32
    %20 = vector.broadcast %cst_14 : f32 to vector<2x8xf32>
    %21 = arith.select %19, %16, %20 : vector<2x8xi1>, vector<2x8xf32>
    %cst_15 = arith.constant dense<0xFF800000> : vector<2xf32>
    %22 = vector.multi_reduction <maximumf>, %21, %cst_15 [1] : vector<2x8xf32> to vector<2xf32>
    %23 = vector.shape_cast %22 : vector<2xf32> to vector<2x1xf32>
    %24 = vector.broadcast %23 : vector<2x1xf32> to vector<2x8xf32>
    %25 = arith.subf %21, %24 : vector<2x8xf32>
    %26 = math.exp %25 : vector<2x8xf32>
    %cst_16 = arith.constant dense<0.000000e+00> : vector<2xf32>
    %27 = vector.multi_reduction <add>, %26, %cst_16 [1] : vector<2x8xf32> to vector<2xf32>
    %28 = vector.shape_cast %27 : vector<2xf32> to vector<2x1xf32>
    %29 = vector.broadcast %28 : vector<2x1xf32> to vector<2x8xf32>
    %30 = arith.divf %26, %29 : vector<2x8xf32>
    %31 = vector.shape_cast %30 : vector<2x8xf32> to vector<2x8x1xf32>
    %32 = vector.broadcast %31 : vector<2x8x1xf32> to vector<2x8x768xf32>
    %33 = arith.mulf %32, %6 : vector<2x8x768xf32>
    %cst_17 = arith.constant dense<0.000000e+00> : vector<2x768xf32>
    %34 = vector.multi_reduction <add>, %33, %cst_17 [1] : vector<2x8x768xf32> to vector<2x768xf32>
    %35 = arith.truncf %34 : vector<2x768xf32> to vector<2x768xbf16>
    %c0_18 = arith.constant 0 : index
    %c0_19 = arith.constant 0 : index
    %36 = vector.load %arg7[%c0_18, %c0_19] : memref<768x768xbf16, #tpu.memory_space<vmem>>, vector<768x768xbf16>
    %cst_20 = arith.constant dense<0.000000e+00> : vector<2x768xf32>
    %37 = tpu.matmul %35, %36, %cst_20 {dimension_numbers = #tpu.dot_dimension_numbers<[1], [0], [0], [1], [0, 0, 1, 1], [], []>} : vector<2x768xbf16>, vector<768x768xbf16>, vector<2x768xf32> -> vector<2x768xf32>
    %c0_21 = arith.constant 0 : index
    %c0_22 = arith.constant 0 : index
    %38 = vector.load %arg8[%c0_21, %c0_22] : memref<1x768xf32, #tpu.memory_space<vmem>>, vector<1x768xf32>
    %39 = vector.broadcast %38 : vector<1x768xf32> to vector<2x768xf32>
    %40 = arith.addf %37, %39 : vector<2x768xf32>
    %c0_23 = arith.constant 0 : index
    %c0_24 = arith.constant 0 : index
    %41 = vector.load %arg2[%c0_23, %c0_24] : memref<2x768xf32, #tpu.memory_space<vmem>>, vector<2x768xf32>
    %42 = arith.addf %40, %41 : vector<2x768xf32>
    %cst_25 = arith.constant 5.000000e-01 : f32
    %43 = vector.broadcast %cst_25 : f32 to vector<2x768xf32>
    %44 = arith.mulf %43, %42 : vector<2x768xf32>
    %cst_26 = arith.constant 0.707106769 : f32
    %45 = vector.broadcast %cst_26 : f32 to vector<2x768xf32>
    %46 = arith.mulf %42, %45 : vector<2x768xf32>
    %47 = math.erf %46 : vector<2x768xf32>
    %cst_27 = arith.constant 1.000000e+00 : f32
    %48 = vector.broadcast %cst_27 : f32 to vector<2x768xf32>
    %49 = arith.addf %48, %47 : vector<2x768xf32>
    %50 = arith.mulf %44, %49 : vector<2x768xf32>
    %51 = arith.truncf %50 : vector<2x768xf32> to vector<2x768xbf16>
    %c0_28 = arith.constant 0 : index
    %c0_29 = arith.constant 0 : index
    %52 = vector.load %arg9[%c0_28, %c0_29] : memref<768x1536xbf16, #tpu.memory_space<vmem>>, vector<768x1536xbf16>
    %cst_30 = arith.constant dense<0.000000e+00> : vector<2x1536xf32>
    %53 = tpu.matmul %51, %52, %cst_30 {dimension_numbers = #tpu.dot_dimension_numbers<[1], [0], [0], [1], [0, 0, 1, 1], [], []>} : vector<2x768xbf16>, vector<768x1536xbf16>, vector<2x1536xf32> -> vector<2x1536xf32>
    %c0_31 = arith.constant 0 : index
    %c0_32 = arith.constant 0 : index
    %54 = vector.load %arg10[%c0_31, %c0_32] : memref<1x1536xf32, #tpu.memory_space<vmem>>, vector<1x1536xf32>
    %55 = vector.broadcast %54 : vector<1x1536xf32> to vector<2x1536xf32>
    %56 = arith.addf %53, %55 : vector<2x1536xf32>
    %cst_33 = arith.constant 5.000000e-01 : f32
    %57 = vector.broadcast %cst_33 : f32 to vector<2x1536xf32>
    %58 = arith.mulf %57, %56 : vector<2x1536xf32>
    %cst_34 = arith.constant 0.707106769 : f32
    %59 = vector.broadcast %cst_34 : f32 to vector<2x1536xf32>
    %60 = arith.mulf %56, %59 : vector<2x1536xf32>
    %61 = math.erf %60 : vector<2x1536xf32>
    %cst_35 = arith.constant 1.000000e+00 : f32
    %62 = vector.broadcast %cst_35 : f32 to vector<2x1536xf32>
    %63 = arith.addf %62, %61 : vector<2x1536xf32>
    %64 = arith.mulf %58, %63 : vector<2x1536xf32>
    %c0_36 = arith.constant 0 : index
    %c0_37 = arith.constant 0 : index
    %65 = vector.load %arg11[%c0_36, %c0_37] : memref<1x1536xf32, #tpu.memory_space<vmem>>, vector<1x1536xf32>
    %66 = vector.broadcast %65 : vector<1x1536xf32> to vector<2x1536xf32>
    %67 = arith.mulf %64, %66 : vector<2x1536xf32>
    %cst_38 = arith.constant dense<0.000000e+00> : vector<2xf32>
    %68 = vector.multi_reduction <add>, %67, %cst_38 [1] : vector<2x1536xf32> to vector<2xf32>
    %69 = vector.shape_cast %68 : vector<2xf32> to vector<2x1xf32>
    %c0_39 = arith.constant 0 : index
    %c0_40 = arith.constant 0 : index
    %70 = vector.load %arg12[%c0_39, %c0_40] : memref<1x1xf32, #tpu.memory_space<vmem>>, vector<1x1xf32>
    %71 = vector.broadcast %70 : vector<1x1xf32> to vector<2x1xf32>
    %72 = arith.addf %69, %71 : vector<2x1xf32>
    %73 = vector.shape_cast %72 : vector<2x1xf32> to vector<2x1xf32>
    %74 = vector.broadcast %73 : vector<2x1xf32> to vector<2x128xf32>
    %c0_41 = arith.constant 0 : index
    %c0_42 = arith.constant 0 : index
    %75 = vector.load %arg13[%c0_41, %c0_42] : memref<2x128xf32, #tpu.memory_space<vmem>>, vector<2x128xf32>
    tpu.vector_store %arg13[%c0_41, %c0_42], %74 {strides = array<i32>} : memref<2x128xf32, #tpu.memory_space<vmem>>, vector<2x128xf32>,
    return
  }
}

</mosaic_0001>

<llo_original>
// kernel: tpu_custom_call.1
$region0: #{tpu_custom_call.1}
  #allocation0 [shape = 'u32[]', space=smem, size = 0x4, offset = 0x4, fixed_abs, tag = 'smem constant byte address 0x4 - core index']
  #allocation1 [shape = 'u32[72,128]{1,0:T(1,128)}', space=vmem, size = 0x9000, scoped, tag = 'internal scratch']
  #allocation2 [shape = 'f32[1,1]{1,0:T(1,128)S(1)}', space=vmem, size = 0x200, scoped, tag = 'scoped memory for tpu_custom_call.1']
  #allocation3 [shape = 'f32[1,1]{1,0:T(1,128)S(1)}', space=vmem, size = 0x200, scoped, tag = 'scoped memory for tpu_custom_call.1']
  %s0 = inlined_call_operand.hbm [shape: bf16[16,1536], index: 0, kind: input, shape index: {}]
  %s1 = inlined_call_operand.hbm [shape: f32[2,8], index: 1, kind: input, shape index: {}]
  %s2 = inlined_call_operand.hbm [shape: f32[2,768], index: 2, kind: input, shape index: {}]
  %s3 = inlined_call_operand.hbm [shape: bf16[1536,768], index: 3, kind: input, shape index: {}]
  %s4 = inlined_call_operand.hbm [shape: f32[1,768], index: 4, kind: input, shape index: {}]
  %s5 = inlined_call_operand.hbm [shape: f32[1,768], index: 5, kind: input, shape index: {}]
  %s6 = inlined_call_operand.<no memory space> [shape: f32[1,1], index: 6, kind: input, shape index: {}]
  %s7 = inlined_call_operand.hbm [shape: bf16[768,768], index: 7, kind: input, shape index: {}]
  %s8 = inlined_call_operand.hbm [shape: f32[1,768], index: 8, kind: input, shape index: {}]
  %s9 = inlined_call_operand.hbm [shape: bf16[768,1536], index: 9, kind: input, shape index: {}]
  %s10 = inlined_call_operand.hbm [shape: f32[1,1536], index: 10, kind: input, shape index: {}]
  %s11 = inlined_call_operand.hbm [shape: f32[1,1536], index: 11, kind: input, shape index: {}]
  %s12 = inlined_call_operand.<no memory space> [shape: f32[1,1], index: 12, kind: input, shape index: {}]
  %s13 = inlined_call_operand.hbm [shape: f32[2,128], index: 13, kind: output, shape index: {}]
  %s14 = sld [smem:[#allocation0]]
  $region106: #{tpu_custom_call.1} parent=0
    _
  %s16 = ssub.s32 1, %s14
  %s17 = scalar_select 0, %s16, %s14
  %v18 = vstv %s6
  %19 = vst [vmem:[#allocation2] sm:$0x1] %v18
  %v20 = vstv %s12
  %21 = vst [vmem:[#allocation3] sm:$0x1] %v20
  $region1: #{tpu_custom_call.1} parent=0
    #allocation4 [shape = 'u8[49152]{0}', space=vmem, size = 0xc000, scoped, tag = 'input window, operand 0, single buffered']
    #allocation5 [shape = 's32[1]{0}', space=sflag, size = 0x4, scoped, tag = 'scoped memory for tpu_custom_call.1']
    #allocation6 [shape = 's32[1]{0}', space=sflag, size = 0x4, scoped, tag = 'scoped memory for tpu_custom_call.1']
    #allocation7 [shape = 'u8[1024]{0}', space=vmem, size = 0x400, scoped, tag = 'input window, operand 1, single buffered']
    #allocation8 [shape = 's32[1]{0}', space=sflag, size = 0x4, scoped, tag = 'scoped memory for tpu_custom_call.1']
    #allocation9 [shape = 'u8[6144]{0}', space=vmem, size = 0x1800, scoped, tag = 'input window, operand 2, single buffered']
    #allocation10 [shape = 'u8[2359296]{0}', space=vmem, size = 0x240000, scoped, tag = 'input window, operand 3, single buffered']
    #allocation11 [shape = 's32[1]{0}', space=sflag, size = 0x4, scoped, tag = 'scoped memory for tpu_custom_call.1']
    #allocation12 [shape = 'u8[3072]{0}', space=vmem, size = 0xc00, scoped, tag = 'input window, operand 4, single buffered']
    #allocation13 [shape = 'u8[3072]{0}', space=vmem, size = 0xc00, scoped, tag = 'input window, operand 5, single buffered']
    #allocation14 [shape = 's32[1]{0}', space=sflag, size = 0x4, scoped, tag = 'scoped memory for tpu_custom_call.1']
    #allocation15 [shape = 'u8[1179648]{0}', space=vmem, size = 0x120000, scoped, tag = 'input window, operand 7, single buffered']
    #allocation16 [shape = 'u8[3072]{0}', space=vmem, size = 0xc00, scoped, tag = 'input window, operand 8, single buffered']
    #allocation17 [shape = 's32[1]{0}', space=sflag, size = 0x4, scoped, tag = 'scoped memory for tpu_custom_call.1']
    #allocation18 [shape = 'u8[2359296]{0}', space=vmem, size = 0x240000, scoped, tag = 'input window, operand 9, single buffered']
    #allocation19 [shape = 'u8[6144]{0}', space=vmem, size = 0x1800, scoped, tag = 'input window, operand 10, single buffered']
    #allocation20 [shape = 's32[1]{0}', space=sflag, size = 0x4, scoped, tag = 'scoped memory for tpu_custom_call.1']
    #allocation21 [shape = 'u8[6144]{0}', space=vmem, size = 0x1800, scoped, tag = 'input window, operand 11, single buffered']
    #allocation22 [shape = 'u8[1024]{0}', space=vmem, size = 0x400, scoped, tag = 'output window, operand 0, single buffered']
    %22 = vsyncpa [#allocation5], 0
    %23 = vsyncpa [#allocation8], 0
    %24 = vsyncpa [#allocation11], 0
    %25 = vsyncpa [#allocation14], 0
    %26 = vsyncpa [#allocation17], 0
    %27 = vsyncpa [#allocation20], 0
    %28 = vsyncpa [#allocation6], 0
    // Predicated region
    $region2: #{tpu_custom_call.1} parent=1 // pred_check
      _
    $region3: #{tpu_custom_call.1} parent=1 // pred_check_branch
      %30 = sbr.rel (0) target = $region5
    $region4: #{tpu_custom_call.1} parent=1 // pred_region
      %32 = vsyncadd [#allocation5], 0
      %s33 = sshll.u32 %s0, 4
      %s34 = int_to_ptr.hbm [resolvable:$true] %s33
      %s35 = sshll.u32 [#allocation4], 4
      %s36 = int_to_ptr.vmem [resolvable:$true] %s35
      %41 = dma.hbm_to_vmem [thread:$0]  %s34, 1536, %s36, [#allocation5], 768, 768, 48
    $region5: #{tpu_custom_call.1} parent=1 // pred_fallthru
      _
    // Predicated region
    $region6: #{tpu_custom_call.1} parent=1 // pred_check
      _
    $region7: #{tpu_custom_call.1} parent=1 // pred_check_branch
      %43 = sbr.rel (0) target = $region9
    $region8: #{tpu_custom_call.1} parent=1 // pred_region
      %45 = vsyncadd [#allocation8], 0
      %s47 = sshll.u32 %s1, 4
      %s48 = int_to_ptr.hbm [resolvable:$true] %s47
      %s49 = sshll.u32 [#allocation7], 4
      %s50 = int_to_ptr.vmem [resolvable:$true] %s49
      %52 = dma.hbm_to_vmem [thread:$0]  %s48, 32, %s50, [#allocation8]
    $region9: #{tpu_custom_call.1} parent=1 // pred_fallthru
      _
    // Predicated region
    $region10: #{tpu_custom_call.1} parent=1 // pred_check
      _
    $region11: #{tpu_custom_call.1} parent=1 // pred_check_branch
      %54 = sbr.rel (0) target = $region13
    $region12: #{tpu_custom_call.1} parent=1 // pred_region
      %56 = vsyncadd [#allocation8], 0
      %s58 = sshll.u32 %s2, 4
      %s59 = int_to_ptr.hbm [resolvable:$true] %s58
      %s60 = sshll.u32 [#allocation9], 4
      %s61 = int_to_ptr.vmem [resolvable:$true] %s60
      %63 = dma.hbm_to_vmem [thread:$0]  %s59, 192, %s61, [#allocation8]
    $region13: #{tpu_custom_call.1} parent=1 // pred_fallthru
      _
    // Predicated region
    $region14: #{tpu_custom_call.1} parent=1 // pred_check
      _
    $region15: #{tpu_custom_call.1} parent=1 // pred_check_branch
      %65 = sbr.rel (0) target = $region17
    $region16: #{tpu_custom_call.1} parent=1 // pred_region
      %67 = vsyncadd [#allocation11], 0
      %s68 = sshll.u32 %s3, 4
      %s69 = int_to_ptr.hbm [resolvable:$true] %s68
      %s70 = sshll.u32 [#allocation10], 4
      %s71 = int_to_ptr.vmem [resolvable:$true] %s70
      %76 = dma.hbm_to_vmem [thread:$0]  %s69, 73728, %s71, [#allocation11], 384, 384, 24
    $region17: #{tpu_custom_call.1} parent=1 // pred_fallthru
      _
    // Predicated region
    $region18: #{tpu_custom_call.1} parent=1 // pred_check
      _
    $region19: #{tpu_custom_call.1} parent=1 // pred_check_branch
      %78 = sbr.rel (0) target = $region21
    $region20: #{tpu_custom_call.1} parent=1 // pred_region
      %80 = vsyncadd [#allocation11], 0
      %s82 = sshll.u32 %s4, 4
      %s83 = int_to_ptr.hbm [resolvable:$true] %s82
      %s84 = sshll.u32 [#allocation12], 4
      %s85 = int_to_ptr.vmem [resolvable:$true] %s84
      %87 = dma.hbm_to_vmem [thread:$0]  %s83, 96, %s85, [#allocation11]
    $region21: #{tpu_custom_call.1} parent=1 // pred_fallthru
      _
    // Predicated region
    $region22: #{tpu_custom_call.1} parent=1 // pred_check
      _
    $region23: #{tpu_custom_call.1} parent=1 // pred_check_branch
      %89 = sbr.rel (0) target = $region25
    $region24: #{tpu_custom_call.1} parent=1 // pred_region
      %91 = vsyncadd [#allocation14], 0
      %s93 = sshll.u32 %s5, 4
      %s94 = int_to_ptr.hbm [resolvable:$true] %s93
      %s95 = sshll.u32 [#allocation13], 4
      %s96 = int_to_ptr.vmem [resolvable:$true] %s95
      %98 = dma.hbm_to_vmem [thread:$0]  %s94, 96, %s96, [#allocation14]
    $region25: #{tpu_custom_call.1} parent=1 // pred_fallthru
      _
    // Predicated region
    $region26: #{tpu_custom_call.1} parent=1 // pred_check
      _
    $region27: #{tpu_custom_call.1} parent=1 // pred_check_branch
      %100 = sbr.rel (0) target = $region29
    $region28: #{tpu_custom_call.1} parent=1 // pred_region
      _
    $region29: #{tpu_custom_call.1} parent=1 // pred_fallthru
      _
    // Predicated region
    $region30: #{tpu_custom_call.1} parent=1 // pred_check
      _
    $region31: #{tpu_custom_call.1} parent=1 // pred_check_branch
      %102 = sbr.rel (0) target = $region33
    $region32: #{tpu_custom_call.1} parent=1 // pred_region
      %104 = vsyncadd [#allocation14], 0
      %s105 = sshll.u32 %s7, 4
      %s106 = int_to_ptr.hbm [resolvable:$true] %s105
      %s107 = sshll.u32 [#allocation15], 4
      %s108 = int_to_ptr.vmem [resolvable:$true] %s107
      %113 = dma.hbm_to_vmem [thread:$0]  %s106, 36864, %s108, [#allocation14], 384, 384, 24
    $region33: #{tpu_custom_call.1} parent=1 // pred_fallthru
      _
    // Predicated region
    $region34: #{tpu_custom_call.1} parent=1 // pred_check
      _
    $region35: #{tpu_custom_call.1} parent=1 // pred_check_branch
      %115 = sbr.rel (0) target = $region37
    $region36: #{tpu_custom_call.1} parent=1 // pred_region
      %117 = vsyncadd [#allocation17], 0
      %s119 = sshll.u32 %s8, 4
      %s120 = int_to_ptr.hbm [resolvable:$true] %s119
      %s121 = sshll.u32 [#allocation16], 4
      %s122 = int_to_ptr.vmem [resolvable:$true] %s121
      %124 = dma.hbm_to_vmem [thread:$0]  %s120, 96, %s122, [#allocation17]
    $region37: #{tpu_custom_call.1} parent=1 // pred_fallthru
      _
    // Predicated region
    $region38: #{tpu_custom_call.1} parent=1 // pred_check
      _
    $region39: #{tpu_custom_call.1} parent=1 // pred_check_branch
      %126 = sbr.rel (0) target = $region41
    $region40: #{tpu_custom_call.1} parent=1 // pred_region
      %128 = vsyncadd [#allocation17], 0
      %s129 = sshll.u32 %s9, 4
      %s130 = int_to_ptr.hbm [resolvable:$true] %s129
      %s131 = sshll.u32 [#allocation18], 4
      %s132 = int_to_ptr.vmem [resolvable:$true] %s131
      %137 = dma.hbm_to_vmem [thread:$0]  %s130, 73728, %s132, [#allocation17], 768, 768, 48
    $region41: #{tpu_custom_call.1} parent=1 // pred_fallthru
      _
    // Predicated region
    $region42: #{tpu_custom_call.1} parent=1 // pred_check
      _
    $region43: #{tpu_custom_call.1} parent=1 // pred_check_branch
      %139 = sbr.rel (0) target = $region45
    $region44: #{tpu_custom_call.1} parent=1 // pred_region
      %141 = vsyncadd [#allocation20], 0
      %s143 = sshll.u32 %s10, 4
      %s144 = int_to_ptr.hbm [resolvable:$true] %s143
      %s145 = sshll.u32 [#allocation19], 4
      %s146 = int_to_ptr.vmem [resolvable:$true] %s145
      %148 = dma.hbm_to_vmem [thread:$0]  %s144, 192, %s146, [#allocation20]
    $region45: #{tpu_custom_call.1} parent=1 // pred_fallthru
      _
    // Predicated region
    $region46: #{tpu_custom_call.1} parent=1 // pred_check
      _
    $region47: #{tpu_custom_call.1} parent=1 // pred_check_branch
      %150 = sbr.rel (0) target = $region49
    $region48: #{tpu_custom_call.1} parent=1 // pred_region
      %152 = vsyncadd [#allocation20], 0
      %s154 = sshll.u32 %s11, 4
      %s155 = int_to_ptr.hbm [resolvable:$true] %s154
      %s156 = sshll.u32 [#allocation21], 4
      %s157 = int_to_ptr.vmem [resolvable:$true] %s156
      %159 = dma.hbm_to_vmem [thread:$0]  %s155, 192, %s157, [#allocation20]
    $region49: #{tpu_custom_call.1} parent=1 // pred_fallthru
      _
    // Predicated region
    $region50: #{tpu_custom_call.1} parent=1 // pred_check
      _
    $region51: #{tpu_custom_call.1} parent=1 // pred_check_branch
      %161 = sbr.rel (0) target = $region53
    $region52: #{tpu_custom_call.1} parent=1 // pred_region
      _
    $region53: #{tpu_custom_call.1} parent=1 // pred_fallthru
      _
    // Predicated region
    $region54: #{tpu_custom_call.1} parent=1 // pred_check
      _
    $region55: #{tpu_custom_call.1} parent=1 // pred_check_branch
      %163 = sbr.rel (0) target = $region57
    $region56: #{tpu_custom_call.1} parent=1 // pred_region
      %165 = dma.done [#allocation5], 1536
    $region57: #{tpu_custom_call.1} parent=1 // pred_fallthru
      _
    // Predicated region
    $region58: #{tpu_custom_call.1} parent=1 // pred_check
      _
    $region59: #{tpu_custom_call.1} parent=1 // pred_check_branch
      %167 = sbr.rel (0) target = $region61
    $region60: #{tpu_custom_call.1} parent=1 // pred_region
      %169 = dma.done [#allocation8], 32
    $region61: #{tpu_custom_call.1} parent=1 // pred_fallthru
      _
    // Predicated region
    $region62: #{tpu_custom_call.1} parent=1 // pred_check
      _
    $region63: #{tpu_custom_call.1} parent=1 // pred_check_branch
      %171 = sbr.rel (0) target = $region65
    $region64: #{tpu_custom_call.1} parent=1 // pred_region
      %173 = dma.done [#allocation8], 192
    $region65: #{tpu_custom_call.1} parent=1 // pred_fallthru
      _
    // Predicated region
    $region66: #{tpu_custom_call.1} parent=1 // pred_check
      _
    $region67: #{tpu_custom_call.1} parent=1 // pred_check_branch
      %175 = sbr.rel (0) target = $region69
    $region68: #{tpu_custom_call.1} parent=1 // pred_region
      %177 = dma.done [#allocation11], 73728
    $region69: #{tpu_custom_call.1} parent=1 // pred_fallthru
      _
    // Predicated region
    $region70: #{tpu_custom_call.1} parent=1 // pred_check
      _
    $region71: #{tpu_custom_call.1} parent=1 // pred_check_branch
      %179 = sbr.rel (0) target = $region73
    $region72: #{tpu_custom_call.1} parent=1 // pred_region
      %181 = dma.done [#allocation11], 96
    $region73: #{tpu_custom_call.1} parent=1 // pred_fallthru
      _
    // Predicated region
    $region74: #{tpu_custom_call.1} parent=1 // pred_check
      _
    $region75: #{tpu_custom_call.1} parent=1 // pred_check_branch
      %183 = sbr.rel (0) target = $region77
    $region76: #{tpu_custom_call.1} parent=1 // pred_region
      %185 = dma.done [#allocation14], 96
    $region77: #{tpu_custom_call.1} parent=1 // pred_fallthru
      _
    // Predicated region
    $region78: #{tpu_custom_call.1} parent=1 // pred_check
      _
    $region79: #{tpu_custom_call.1} parent=1 // pred_check_branch
      %187 = sbr.rel (0) target = $region81
    $region80: #{tpu_custom_call.1} parent=1 // pred_region
      %189 = dma.done [#allocation14], 36864
    $region81: #{tpu_custom_call.1} parent=1 // pred_fallthru
      _
    // Predicated region
    $region82: #{tpu_custom_call.1} parent=1 // pred_check
      _
    $region83: #{tpu_custom_call.1} parent=1 // pred_check_branch
      %191 = sbr.rel (0) target = $region85
    $region84: #{tpu_custom_call.1} parent=1 // pred_region
      %193 = dma.done [#allocation17], 96
    $region85: #{tpu_custom_call.1} parent=1 // pred_fallthru
      _
    // Predicated region
    $region86: #{tpu_custom_call.1} parent=1 // pred_check
      _
    $region87: #{tpu_custom_call.1} parent=1 // pred_check_branch
      %195 = sbr.rel (0) target = $region89
    $region88: #{tpu_custom_call.1} parent=1 // pred_region
      %197 = dma.done [#allocation17], 73728
    $region89: #{tpu_custom_call.1} parent=1 // pred_fallthru
      _
    // Predicated region
    $region90: #{tpu_custom_call.1} parent=1 // pred_check
      _
    $region91: #{tpu_custom_call.1} parent=1 // pred_check_branch
      %199 = sbr.rel (0) target = $region93
    $region92: #{tpu_custom_call.1} parent=1 // pred_region
      %201 = dma.done [#allocation20], 192
    $region93: #{tpu_custom_call.1} parent=1 // pred_fallthru
      _
    // Predicated region
    $region94: #{tpu_custom_call.1} parent=1 // pred_check
      _
    $region95: #{tpu_custom_call.1} parent=1 // pred_check_branch
      %203 = sbr.rel (0) target = $region97
    $region96: #{tpu_custom_call.1} parent=1 // pred_region
      %205 = dma.done [#allocation20], 192
    $region97: #{tpu_custom_call.1} parent=1 // pred_fallthru
      _
    %v206 = vld [vmem:[#allocation4] sm:$0xff]
    %v207 = vld [vmem:[#allocation4 + $0x8] sm:$0xff]
    %v208 = vld [vmem:[#allocation4 + $0x10] sm:$0xff]
    %v209 = vld [vmem:[#allocation4 + $0x18] sm:$0xff]
    %v210 = vld [vmem:[#allocation4 + $0x20] sm:$0xff]
    %v211 = vld [vmem:[#allocation4 + $0x28] sm:$0xff]
    %v212 = vld [vmem:[#allocation4 + $0x30] sm:$0xff]
    %v213 = vld [vmem:[#allocation4 + $0x38] sm:$0xff]
    %v214 = vld [vmem:[#allocation4 + $0x40] sm:$0xff]
    %v215 = vld [vmem:[#allocation4 + $0x48] sm:$0xff]
    %v216 = vld [vmem:[#allocation4 + $0x50] sm:$0xff]
    %v217 = vld [vmem:[#allocation4 + $0x58] sm:$0xff]
    %v218 = vld [vmem:[#allocation10] sm:$0xff]
    %v219 = vld [vmem:[#allocation10 + $0x8] sm:$0xff]
    %v220 = vld [vmem:[#allocation10 + $0x10] sm:$0xff]
    %v221 = vld [vmem:[#allocation10 + $0x18] sm:$0xff]
    %v222 = vld [vmem:[#allocation10 + $0x20] sm:$0xff]
    %v223 = vld [vmem:[#allocation10 + $0x28] sm:$0xff]
    %v224 = vld [vmem:[#allocation10 + $0x30] sm:$0xff]
    %v225 = vld [vmem:[#allocation10 + $0x38] sm:$0xff]
    %v226 = vld [vmem:[#allocation10 + $0x40] sm:$0xff]
    %v227 = vld [vmem:[#allocation10 + $0x48] sm:$0xff]
    %v228 = vld [vmem:[#allocation10 + $0x50] sm:$0xff]
    %v229 = vld [vmem:[#allocation10 + $0x58] sm:$0xff]
    %v230 = vld [vmem:[#allocation10 + $0x60] sm:$0xff]
    %v231 = vld [vmem:[#allocation10 + $0x68] sm:$0xff]
    %v232 = vld [vmem:[#allocation10 + $0x70] sm:$0xff]
    %v233 = vld [vmem:[#allocation10 + $0x78] sm:$0xff]
    %v234 = vld [vmem:[#allocation10 + $0x80] sm:$0xff]
    %v235 = vld [vmem:[#allocation10 + $0x88] sm:$0xff]
    %v236 = vld [vmem:[#allocation10 + $0x90] sm:$0xff]
    %v237 = vld [vmem:[#allocation10 + $0x98] sm:$0xff]
    %v238 = vld [vmem:[#allocation10 + $0xa0] sm:$0xff]
    %v239 = vld [vmem:[#allocation10 + $0xa8] sm:$0xff]
    %v240 = vld [vmem:[#allocation10 + $0xb0] sm:$0xff]
    %v241 = vld [vmem:[#allocation10 + $0xb8] sm:$0xff]
    %v242 = vld [vmem:[#allocation10 + $0xc0] sm:$0xff]
    %v243 = vld [vmem:[#allocation10 + $0xc8] sm:$0xff]
    %v244 = vld [vmem:[#allocation10 + $0xd0] sm:$0xff]
    %v245 = vld [vmem:[#allocation10 + $0xd8] sm:$0xff]
    %v246 = vld [vmem:[#allocation10 + $0xe0] sm:$0xff]
    %v247 = vld [vmem:[#allocation10 + $0xe8] sm:$0xff]
    %v248 = vld [vmem:[#allocation10 + $0xf0] sm:$0xff]
    %v249 = vld [vmem:[#allocation10 + $0xf8] sm:$0xff]
    %v250 = vld [vmem:[#allocation10 + $0x100] sm:$0xff]
    %v251 = vld [vmem:[#allocation10 + $0x108] sm:$0xff]
    %v252 = vld [vmem:[#allocation10 + $0x110] sm:$0xff]
    %v253 = vld [vmem:[#allocation10 + $0x118] sm:$0xff]
    %v254 = vld [vmem:[#allocation10 + $0x120] sm:$0xff]
    %v255 = vld [vmem:[#allocation10 + $0x128] sm:$0xff]
    %v256 = vld [vmem:[#allocation10 + $0x130] sm:$0xff]
    %v257 = vld [vmem:[#allocation10 + $0x138] sm:$0xff]
    %v258 = vld [vmem:[#allocation10 + $0x140] sm:$0xff]
    %v259 = vld [vmem:[#allocation10 + $0x148] sm:$0xff]
    %v260 = vld [vmem:[#allocation10 + $0x150] sm:$0xff]
    %v261 = vld [vmem:[#allocation10 + $0x158] sm:$0xff]
    %v262 = vld [vmem:[#allocation10 + $0x160] sm:$0xff]
    %v263 = vld [vmem:[#allocation10 + $0x168] sm:$0xff]
    %v264 = vld [vmem:[#allocation10 + $0x170] sm:$0xff]
    %v265 = vld [vmem:[#allocation10 + $0x178] sm:$0xff]
    %v266 = vld [vmem:[#allocation10 + $0x180] sm:$0xff]
    %v267 = vld [vmem:[#allocation10 + $0x188] sm:$0xff]
    %v268 = vld [vmem:[#allocation10 + $0x190] sm:$0xff]
    %v269 = vld [vmem:[#allocation10 + $0x198] sm:$0xff]
    %v270 = vld [vmem:[#allocation10 + $0x1a0] sm:$0xff]
    %v271 = vld [vmem:[#allocation10 + $0x1a8] sm:$0xff]
    %v272 = vld [vmem:[#allocation10 + $0x1b0] sm:$0xff]
    %v273 = vld [vmem:[#allocation10 + $0x1b8] sm:$0xff]
    %v274 = vld [vmem:[#allocation10 + $0x1c0] sm:$0xff]
    %v275 = vld [vmem:[#allocation10 + $0x1c8] sm:$0xff]
    %v276 = vld [vmem:[#allocation10 + $0x1d0] sm:$0xff]
    %v277 = vld [vmem:[#allocation10 + $0x1d8] sm:$0xff]
    %v278 = vld [vmem:[#allocation10 + $0x1e0] sm:$0xff]
    %v279 = vld [vmem:[#allocation10 + $0x1e8] sm:$0xff]
    %v280 = vld [vmem:[#allocation10 + $0x1f0] sm:$0xff]
    %v281 = vld [vmem:[#allocation10 + $0x1f8] sm:$0xff]
    %v282 = vld [vmem:[#allocation10 + $0x200] sm:$0xff]
    %v283 = vld [vmem:[#allocation10 + $0x208] sm:$0xff]
    %v284 = vld [vmem:[#allocation10 + $0x210] sm:$0xff]
    %v285 = vld [vmem:[#allocation10 + $0x218] sm:$0xff]
    %v286 = vld [vmem:[#allocation10 + $0x220] sm:$0xff]
    %v287 = vld [vmem:[#allocation10 + $0x228] sm:$0xff]
    %v288 = vld [vmem:[#allocation10 + $0x230] sm:$0xff]
    %v289 = vld [vmem:[#allocation10 + $0x238] sm:$0xff]
    %v290 = vld [vmem:[#allocation10 + $0x240] sm:$0xff]
    %v291 = vld [vmem:[#allocation10 + $0x248] sm:$0xff]
    %v292 = vld [vmem:[#allocation10 + $0x250] sm:$0xff]
    %v293 = vld [vmem:[#allocation10 + $0x258] sm:$0xff]
    %v294 = vld [vmem:[#allocation10 + $0x260] sm:$0xff]
    %v295 = vld [vmem:[#allocation10 + $0x268] sm:$0xff]
    %v296 = vld [vmem:[#allocation10 + $0x270] sm:$0xff]
    %v297 = vld [vmem:[#allocation10 + $0x278] sm:$0xff]
    %v298 = vld [vmem:[#allocation10 + $0x280] sm:$0xff]
    %v299 = vld [vmem:[#allocation10 + $0x288] sm:$0xff]
    %v300 = vld [vmem:[#allocation10 + $0x290] sm:$0xff]
    %v301 = vld [vmem:[#allocation10 + $0x298] sm:$0xff]
    %v302 = vld [vmem:[#allocation10 + $0x2a0] sm:$0xff]
    %v303 = vld [vmem:[#allocation10 + $0x2a8] sm:$0xff]
    %v304 = vld [vmem:[#allocation10 + $0x2b0] sm:$0xff]
    %v305 = vld [vmem:[#allocation10 + $0x2b8] sm:$0xff]
    %v306 = vld [vmem:[#allocation10 + $0x2c0] sm:$0xff]
    %v307 = vld [vmem:[#allocation10 + $0x2c8] sm:$0xff]
    %v308 = vld [vmem:[#allocation10 + $0x2d0] sm:$0xff]
    %v309 = vld [vmem:[#allocation10 + $0x2d8] sm:$0xff]
    %v310 = vld [vmem:[#allocation10 + $0x2e0] sm:$0xff]
    %v311 = vld [vmem:[#allocation10 + $0x2e8] sm:$0xff]
    %v312 = vld [vmem:[#allocation10 + $0x2f0] sm:$0xff]
    %v313 = vld [vmem:[#allocation10 + $0x2f8] sm:$0xff]
    %v314 = vld [vmem:[#allocation10 + $0x300] sm:$0xff]
    %v315 = vld [vmem:[#allocation10 + $0x308] sm:$0xff]
    %v316 = vld [vmem:[#allocation10 + $0x310] sm:$0xff]
    %v317 = vld [vmem:[#allocation10 + $0x318] sm:$0xff]
    %v318 = vld [vmem:[#allocation10 + $0x320] sm:$0xff]
    %v319 = vld [vmem:[#allocation10 + $0x328] sm:$0xff]
    %v320 = vld [vmem:[#allocation10 + $0x330] sm:$0xff]
    %v321 = vld [vmem:[#allocation10 + $0x338] sm:$0xff]
    %v322 = vld [vmem:[#allocation10 + $0x340] sm:$0xff]
    %v323 = vld [vmem:[#allocation10 + $0x348] sm:$0xff]
    %v324 = vld [vmem:[#allocation10 + $0x350] sm:$0xff]
    %v325 = vld [vmem:[#allocation10 + $0x358] sm:$0xff]
    %v326 = vld [vmem:[#allocation10 + $0x360] sm:$0xff]
    %v327 = vld [vmem:[#allocation10 + $0x368] sm:$0xff]
    %v328 = vld [vmem:[#allocation10 + $0x370] sm:$0xff]
    %v329 = vld [vmem:[#allocation10 + $0x378] sm:$0xff]
    %v330 = vld [vmem:[#allocation10 + $0x380] sm:$0xff]
    %v331 = vld [vmem:[#allocation10 + $0x388] sm:$0xff]
    %v332 = vld [vmem:[#allocation10 + $0x390] sm:$0xff]
    %v333 = vld [vmem:[#allocation10 + $0x398] sm:$0xff]
    %v334 = vld [vmem:[#allocation10 + $0x3a0] sm:$0xff]
    %v335 = vld [vmem:[#allocation10 + $0x3a8] sm:$0xff]
    %v336 = vld [vmem:[#allocation10 + $0x3b0] sm:$0xff]
    %v337 = vld [vmem:[#allocation10 + $0x3b8] sm:$0xff]
    %v338 = vld [vmem:[#allocation10 + $0x3c0] sm:$0xff]
    %v339 = vld [vmem:[#allocation10 + $0x3c8] sm:$0xff]
    %v340 = vld [vmem:[#allocation10 + $0x3d0] sm:$0xff]
    %v341 = vld [vmem:[#allocation10 + $0x3d8] sm:$0xff]
    %v342 = vld [vmem:[#allocation10 + $0x3e0] sm:$0xff]
    %v343 = vld [vmem:[#allocation10 + $0x3e8] sm:$0xff]
    %v344 = vld [vmem:[#allocation10 + $0x3f0] sm:$0xff]
    %v345 = vld [vmem:[#allocation10 + $0x3f8] sm:$0xff]
    %v346 = vld [vmem:[#allocation10 + $0x400] sm:$0xff]
    %v347 = vld [vmem:[#allocation10 + $0x408] sm:$0xff]
    %v348 = vld [vmem:[#allocation10 + $0x410] sm:$0xff]
    %v349 = vld [vmem:[#allocation10 + $0x418] sm:$0xff]
    %v350 = vld [vmem:[#allocation10 + $0x420] sm:$0xff]
    %v351 = vld [vmem:[#allocation10 + $0x428] sm:$0xff]
    %v352 = vld [vmem:[#allocation10 + $0x430] sm:$0xff]
    %v353 = vld [vmem:[#allocation10 + $0x438] sm:$0xff]
    %v354 = vld [vmem:[#allocation10 + $0x440] sm:$0xff]
    %v355 = vld [vmem:[#allocation10 + $0x448] sm:$0xff]
    %v356 = vld [vmem:[#allocation10 + $0x450] sm:$0xff]
    %v357 = vld [vmem:[#allocation10 + $0x458] sm:$0xff]
    %v358 = vld [vmem:[#allocation10 + $0x460] sm:$0xff]
    %v359 = vld [vmem:[#allocation10 + $0x468] sm:$0xff]
    %v360 = vld [vmem:[#allocation10 + $0x470] sm:$0xff]
    %v361 = vld [vmem:[#allocation10 + $0x478] sm:$0xff]
    %v362 = vld [vmem:[#allocation10 + $0x480] sm:$0xff]
    %v363 = vld [vmem:[#allocation10 + $0x488] sm:$0xff]
    %v364 = vld [vmem:[#allocation10 + $0x490] sm:$0xff]
    %v365 = vld [vmem:[#allocation10 + $0x498] sm:$0xff]
    %v366 = vld [vmem:[#allocation10 + $0x4a0] sm:$0xff]
    %v367 = vld [vmem:[#allocation10 + $0x4a8] sm:$0xff]
    %v368 = vld [vmem:[#allocation10 + $0x4b0] sm:$0xff]
    %v369 = vld [vmem:[#allocation10 + $0x4b8] sm:$0xff]
    %v370 = vld [vmem:[#allocation10 + $0x4c0] sm:$0xff]
    %v371 = vld [vmem:[#allocation10 + $0x4c8] sm:$0xff]
    %v372 = vld [vmem:[#allocation10 + $0x4d0] sm:$0xff]
    %v373 = vld [vmem:[#allocation10 + $0x4d8] sm:$0xff]
    %v374 = vld [vmem:[#allocation10 + $0x4e0] sm:$0xff]
    %v375 = vld [vmem:[#allocation10 + $0x4e8] sm:$0xff]
    %v376 = vld [vmem:[#allocation10 + $0x4f0] sm:$0xff]
    %v377 = vld [vmem:[#allocation10 + $0x4f8] sm:$0xff]
    %v378 = vld [vmem:[#allocation10 + $0x500] sm:$0xff]
    %v379 = vld [vmem:[#allocation10 + $0x508] sm:$0xff]
    %v380 = vld [vmem:[#allocation10 + $0x510] sm:$0xff]
    %v381 = vld [vmem:[#allocation10 + $0x518] sm:$0xff]
    %v382 = vld [vmem:[#allocation10 + $0x520] sm:$0xff]
    %v383 = vld [vmem:[#allocation10 + $0x528] sm:$0xff]
    %v384 = vld [vmem:[#allocation10 + $0x530] sm:$0xff]
    %v385 = vld [vmem:[#allocation10 + $0x538] sm:$0xff]
    %v386 = vld [vmem:[#allocation10 + $0x540] sm:$0xff]
    %v387 = vld [vmem:[#allocation10 + $0x548] sm:$0xff]
    %v388 = vld [vmem:[#allocation10 + $0x550] sm:$0xff]
    %v389 = vld [vmem:[#allocation10 + $0x558] sm:$0xff]
    %v390 = vld [vmem:[#allocation10 + $0x560] sm:$0xff]
    %v391 = vld [vmem:[#allocation10 + $0x568] sm:$0xff]
    %v392 = vld [vmem:[#allocation10 + $0x570] sm:$0xff]
    %v393 = vld [vmem:[#allocation10 + $0x578] sm:$0xff]
    %v394 = vld [vmem:[#allocation10 + $0x580] sm:$0xff]
    %v395 = vld [vmem:[#allocation10 + $0x588] sm:$0xff]
    %v396 = vld [vmem:[#allocation10 + $0x590] sm:$0xff]
    %v397 = vld [vmem:[#allocation10 + $0x598] sm:$0xff]
    %v398 = vld [vmem:[#allocation10 + $0x5a0] sm:$0xff]
    %v399 = vld [vmem:[#allocation10 + $0x5a8] sm:$0xff]
    %v400 = vld [vmem:[#allocation10 + $0x5b0] sm:$0xff]
    %v401 = vld [vmem:[#allocation10 + $0x5b8] sm:$0xff]
    %v402 = vld [vmem:[#allocation10 + $0x5c0] sm:$0xff]
    %v403 = vld [vmem:[#allocation10 + $0x5c8] sm:$0xff]
    %v404 = vld [vmem:[#allocation10 + $0x5d0] sm:$0xff]
    %v405 = vld [vmem:[#allocation10 + $0x5d8] sm:$0xff]
    %v406 = vld [vmem:[#allocation10 + $0x5e0] sm:$0xff]
    %v407 = vld [vmem:[#allocation10 + $0x5e8] sm:$0xff]
    %v408 = vld [vmem:[#allocation10 + $0x5f0] sm:$0xff]
    %v409 = vld [vmem:[#allocation10 + $0x5f8] sm:$0xff]
    %v410 = vld [vmem:[#allocation10 + $0x600] sm:$0xff]
    %v411 = vld [vmem:[#allocation10 + $0x608] sm:$0xff]
    %v412 = vld [vmem:[#allocation10 + $0x610] sm:$0xff]
    %v413 = vld [vmem:[#allocation10 + $0x618] sm:$0xff]
    %v414 = vld [vmem:[#allocation10 + $0x620] sm:$0xff]
    %v415 = vld [vmem:[#allocation10 + $0x628] sm:$0xff]
    %v416 = vld [vmem:[#allocation10 + $0x630] sm:$0xff]
    %v417 = vld [vmem:[#allocation10 + $0x638] sm:$0xff]
    %v418 = vld [vmem:[#allocation10 + $0x640] sm:$0xff]
    %v419 = vld [vmem:[#allocation10 + $0x648] sm:$0xff]
    %v420 = vld [vmem:[#allocation10 + $0x650] sm:$0xff]
    %v421 = vld [vmem:[#allocation10 + $0x658] sm:$0xff]
    %v422 = vld [vmem:[#allocation10 + $0x660] sm:$0xff]
    %v423 = vld [vmem:[#allocation10 + $0x668] sm:$0xff]
    %v424 = vld [vmem:[#allocation10 + $0x670] sm:$0xff]
    %v425 = vld [vmem:[#allocation10 + $0x678] sm:$0xff]
    %v426 = vld [vmem:[#allocation10 + $0x680] sm:$0xff]
    %v427 = vld [vmem:[#allocation10 + $0x688] sm:$0xff]
    %v428 = vld [vmem:[#allocation10 + $0x690] sm:$0xff]
    %v429 = vld [vmem:[#allocation10 + $0x698] sm:$0xff]
    %v430 = vld [vmem:[#allocation10 + $0x6a0] sm:$0xff]
    %v431 = vld [vmem:[#allocation10 + $0x6a8] sm:$0xff]
    %v432 = vld [vmem:[#allocation10 + $0x6b0] sm:$0xff]
    %v433 = vld [vmem:[#allocation10 + $0x6b8] sm:$0xff]
    %v434 = vld [vmem:[#allocation10 + $0x6c0] sm:$0xff]
    %v435 = vld [vmem:[#allocation10 + $0x6c8] sm:$0xff]
    %v436 = vld [vmem:[#allocation10 + $0x6d0] sm:$0xff]
    %v437 = vld [vmem:[#allocation10 + $0x6d8] sm:$0xff]
    %v438 = vld [vmem:[#allocation10 + $0x6e0] sm:$0xff]
    %v439 = vld [vmem:[#allocation10 + $0x6e8] sm:$0xff]
    %v440 = vld [vmem:[#allocation10 + $0x6f0] sm:$0xff]
    %v441 = vld [vmem:[#allocation10 + $0x6f8] sm:$0xff]
    %v442 = vld [vmem:[#allocation10 + $0x700] sm:$0xff]
    %v443 = vld [vmem:[#allocation10 + $0x708] sm:$0xff]
    %v444 = vld [vmem:[#allocation10 + $0x710] sm:$0xff]
    %v445 = vld [vmem:[#allocation10 + $0x718] sm:$0xff]
    %v446 = vld [vmem:[#allocation10 + $0x720] sm:$0xff]
    %v447 = vld [vmem:[#allocation10 + $0x728] sm:$0xff]
    %v448 = vld [vmem:[#allocation10 + $0x730] sm:$0xff]
    %v449 = vld [vmem:[#allocation10 + $0x738] sm:$0xff]
    %v450 = vld [vmem:[#allocation10 + $0x740] sm:$0xff]
    %v451 = vld [vmem:[#allocation10 + $0x748] sm:$0xff]
    %v452 = vld [vmem:[#allocation10 + $0x750] sm:$0xff]
    %v453 = vld [vmem:[#allocation10 + $0x758] sm:$0xff]
    %v454 = vld [vmem:[#allocation10 + $0x760] sm:$0xff]
    %v455 = vld [vmem:[#allocation10 + $0x768] sm:$0xff]
    %v456 = vld [vmem:[#allocation10 + $0x770] sm:$0xff]
    %v457 = vld [vmem:[#allocation10 + $0x778] sm:$0xff]
    %v458 = vld [vmem:[#allocation10 + $0x780] sm:$0xff]
    %v459 = vld [vmem:[#allocation10 + $0x788] sm:$0xff]
    %v460 = vld [vmem:[#allocation10 + $0x790] sm:$0xff]
    %v461 = vld [vmem:[#allocation10 + $0x798] sm:$0xff]
    %v462 = vld [vmem:[#allocation10 + $0x7a0] sm:$0xff]
    %v463 = vld [vmem:[#allocation10 + $0x7a8] sm:$0xff]
    %v464 = vld [vmem:[#allocation10 + $0x7b0] sm:$0xff]
    %v465 = vld [vmem:[#allocation10 + $0x7b8] sm:$0xff]
    %v466 = vld [vmem:[#allocation10 + $0x7c0] sm:$0xff]
    %v467 = vld [vmem:[#allocation10 + $0x7c8] sm:$0xff]
    %v468 = vld [vmem:[#allocation10 + $0x7d0] sm:$0xff]
    %v469 = vld [vmem:[#allocation10 + $0x7d8] sm:$0xff]
    %v470 = vld [vmem:[#allocation10 + $0x7e0] sm:$0xff]
    %v471 = vld [vmem:[#allocation10 + $0x7e8] sm:$0xff]
    %v472 = vld [vmem:[#allocation10 + $0x7f0] sm:$0xff]
    %v473 = vld [vmem:[#allocation10 + $0x7f8] sm:$0xff]
    %v474 = vld [vmem:[#allocation10 + $0x800] sm:$0xff]
    %v475 = vld [vmem:[#allocation10 + $0x808] sm:$0xff]
    %v476 = vld [vmem:[#allocation10 + $0x810] sm:$0xff]
    %v477 = vld [vmem:[#allocation10 + $0x818] sm:$0xff]
    %v478 = vld [vmem:[#allocation10 + $0x820] sm:$0xff]
    %v479 = vld [vmem:[#allocation10 + $0x828] sm:$0xff]
    %v480 = vld [vmem:[#allocation10 + $0x830] sm:$0xff]
    %v481 = vld [vmem:[#allocation10 + $0x838] sm:$0xff]
    %v482 = vld [vmem:[#allocation10 + $0x840] sm:$0xff]
    %v483 = vld [vmem:[#allocation10 + $0x848] sm:$0xff]
    %v484 = vld [vmem:[#allocation10 + $0x850] sm:$0xff]
    %v485 = vld [vmem:[#allocation10 + $0x858] sm:$0xff]
    %v486 = vld [vmem:[#allocation10 + $0x860] sm:$0xff]
    %v487 = vld [vmem:[#allocation10 + $0x868] sm:$0xff]
    %v488 = vld [vmem:[#allocation10 + $0x870] sm:$0xff]
    %v489 = vld [vmem:[#allocation10 + $0x878] sm:$0xff]
    %v490 = vld [vmem:[#allocation10 + $0x880] sm:$0xff]
    %v491 = vld [vmem:[#allocation10 + $0x888] sm:$0xff]
    %v492 = vld [vmem:[#allocation10 + $0x890] sm:$0xff]
    %v493 = vld [vmem:[#allocation10 + $0x898] sm:$0xff]
    %v494 = vld [vmem:[#allocation10 + $0x8a0] sm:$0xff]
    %v495 = vld [vmem:[#allocation10 + $0x8a8] sm:$0xff]
    %v496 = vld [vmem:[#allocation10 + $0x8b0] sm:$0xff]
    %v497 = vld [vmem:[#allocation10 + $0x8b8] sm:$0xff]
    %v498 = vld [vmem:[#allocation10 + $0x8c0] sm:$0xff]
    %v499 = vld [vmem:[#allocation10 + $0x8c8] sm:$0xff]
    %v500 = vld [vmem:[#allocation10 + $0x8d0] sm:$0xff]
    %v501 = vld [vmem:[#allocation10 + $0x8d8] sm:$0xff]
    %v502 = vld [vmem:[#allocation10 + $0x8e0] sm:$0xff]
    %v503 = vld [vmem:[#allocation10 + $0x8e8] sm:$0xff]
    %v504 = vld [vmem:[#allocation10 + $0x8f0] sm:$0xff]
    %v505 = vld [vmem:[#allocation10 + $0x8f8] sm:$0xff]
    %v506 = vld [vmem:[#allocation10 + $0x900] sm:$0xff]
    %v507 = vld [vmem:[#allocation10 + $0x908] sm:$0xff]
    %v508 = vld [vmem:[#allocation10 + $0x910] sm:$0xff]
    %v509 = vld [vmem:[#allocation10 + $0x918] sm:$0xff]
    %v510 = vld [vmem:[#allocation10 + $0x920] sm:$0xff]
    %v511 = vld [vmem:[#allocation10 + $0x928] sm:$0xff]
    %v512 = vld [vmem:[#allocation10 + $0x930] sm:$0xff]
    %v513 = vld [vmem:[#allocation10 + $0x938] sm:$0xff]
    %v514 = vld [vmem:[#allocation10 + $0x940] sm:$0xff]
    %v515 = vld [vmem:[#allocation10 + $0x948] sm:$0xff]
    %v516 = vld [vmem:[#allocation10 + $0x950] sm:$0xff]
    %v517 = vld [vmem:[#allocation10 + $0x958] sm:$0xff]
    %v518 = vld [vmem:[#allocation10 + $0x960] sm:$0xff]
    %v519 = vld [vmem:[#allocation10 + $0x968] sm:$0xff]
    %v520 = vld [vmem:[#allocation10 + $0x970] sm:$0xff]
    %v521 = vld [vmem:[#allocation10 + $0x978] sm:$0xff]
    %v522 = vld [vmem:[#allocation10 + $0x980] sm:$0xff]
    %v523 = vld [vmem:[#allocation10 + $0x988] sm:$0xff]
    %v524 = vld [vmem:[#allocation10 + $0x990] sm:$0xff]
    %v525 = vld [vmem:[#allocation10 + $0x998] sm:$0xff]
    %v526 = vld [vmem:[#allocation10 + $0x9a0] sm:$0xff]
    %v527 = vld [vmem:[#allocation10 + $0x9a8] sm:$0xff]
    %v528 = vld [vmem:[#allocation10 + $0x9b0] sm:$0xff]
    %v529 = vld [vmem:[#allocation10 + $0x9b8] sm:$0xff]
    %v530 = vld [vmem:[#allocation10 + $0x9c0] sm:$0xff]
    %v531 = vld [vmem:[#allocation10 + $0x9c8] sm:$0xff]
    %v532 = vld [vmem:[#allocation10 + $0x9d0] sm:$0xff]
    %v533 = vld [vmem:[#allocation10 + $0x9d8] sm:$0xff]
    %v534 = vld [vmem:[#allocation10 + $0x9e0] sm:$0xff]
    %v535 = vld [vmem:[#allocation10 + $0x9e8] sm:$0xff]
    %v536 = vld [vmem:[#allocation10 + $0x9f0] sm:$0xff]
    %v537 = vld [vmem:[#allocation10 + $0x9f8] sm:$0xff]
    %v538 = vld [vmem:[#allocation10 + $0xa00] sm:$0xff]
    %v539 = vld [vmem:[#allocation10 + $0xa08] sm:$0xff]
    %v540 = vld [vmem:[#allocation10 + $0xa10] sm:$0xff]
    %v541 = vld [vmem:[#allocation10 + $0xa18] sm:$0xff]
    %v542 = vld [vmem:[#allocation10 + $0xa20] sm:$0xff]
    %v543 = vld [vmem:[#allocation10 + $0xa28] sm:$0xff]
    %v544 = vld [vmem:[#allocation10 + $0xa30] sm:$0xff]
    %v545 = vld [vmem:[#allocation10 + $0xa38] sm:$0xff]
    %v546 = vld [vmem:[#allocation10 + $0xa40] sm:$0xff]
    %v547 = vld [vmem:[#allocation10 + $0xa48] sm:$0xff]
    %v548 = vld [vmem:[#allocation10 + $0xa50] sm:$0xff]
    %v549 = vld [vmem:[#allocation10 + $0xa58] sm:$0xff]
    %v550 = vld [vmem:[#allocation10 + $0xa60] sm:$0xff]
    %v551 = vld [vmem:[#allocation10 + $0xa68] sm:$0xff]
    %v552 = vld [vmem:[#allocation10 + $0xa70] sm:$0xff]
    %v553 = vld [vmem:[#allocation10 + $0xa78] sm:$0xff]
    %v554 = vld [vmem:[#allocation10 + $0xa80] sm:$0xff]
    %v555 = vld [vmem:[#allocation10 + $0xa88] sm:$0xff]
    %v556 = vld [vmem:[#allocation10 + $0xa90] sm:$0xff]
    %v557 = vld [vmem:[#allocation10 + $0xa98] sm:$0xff]
    %v558 = vld [vmem:[#allocation10 + $0xaa0] sm:$0xff]
    %v559 = vld [vmem:[#allocation10 + $0xaa8] sm:$0xff]
    %v560 = vld [vmem:[#allocation10 + $0xab0] sm:$0xff]
    %v561 = vld [vmem:[#allocation10 + $0xab8] sm:$0xff]
    %v562 = vld [vmem:[#allocation10 + $0xac0] sm:$0xff]
    %v563 = vld [vmem:[#allocation10 + $0xac8] sm:$0xff]
    %v564 = vld [vmem:[#allocation10 + $0xad0] sm:$0xff]
    %v565 = vld [vmem:[#allocation10 + $0xad8] sm:$0xff]
    %v566 = vld [vmem:[#allocation10 + $0xae0] sm:$0xff]
    %v567 = vld [vmem:[#allocation10 + $0xae8] sm:$0xff]
    %v568 = vld [vmem:[#allocation10 + $0xaf0] sm:$0xff]
    %v569 = vld [vmem:[#allocation10 + $0xaf8] sm:$0xff]
    %v570 = vld [vmem:[#allocation10 + $0xb00] sm:$0xff]
    %v571 = vld [vmem:[#allocation10 + $0xb08] sm:$0xff]
    %v572 = vld [vmem:[#allocation10 + $0xb10] sm:$0xff]
    %v573 = vld [vmem:[#allocation10 + $0xb18] sm:$0xff]
    %v574 = vld [vmem:[#allocation10 + $0xb20] sm:$0xff]
    %v575 = vld [vmem:[#allocation10 + $0xb28] sm:$0xff]
    %v576 = vld [vmem:[#allocation10 + $0xb30] sm:$0xff]
    %v577 = vld [vmem:[#allocation10 + $0xb38] sm:$0xff]
    %v578 = vld [vmem:[#allocation10 + $0xb40] sm:$0xff]
    %v579 = vld [vmem:[#allocation10 + $0xb48] sm:$0xff]
    %v580 = vld [vmem:[#allocation10 + $0xb50] sm:$0xff]
    %v581 = vld [vmem:[#allocation10 + $0xb58] sm:$0xff]
    %v582 = vld [vmem:[#allocation10 + $0xb60] sm:$0xff]
    %v583 = vld [vmem:[#allocation10 + $0xb68] sm:$0xff]
    %v584 = vld [vmem:[#allocation10 + $0xb70] sm:$0xff]
    %v585 = vld [vmem:[#allocation10 + $0xb78] sm:$0xff]
    %v586 = vld [vmem:[#allocation10 + $0xb80] sm:$0xff]
    %v587 = vld [vmem:[#allocation10 + $0xb88] sm:$0xff]
    %v588 = vld [vmem:[#allocation10 + $0xb90] sm:$0xff]
    %v589 = vld [vmem:[#allocation10 + $0xb98] sm:$0xff]
    %v590 = vld [vmem:[#allocation10 + $0xba0] sm:$0xff]
    %v591 = vld [vmem:[#allocation10 + $0xba8] sm:$0xff]
    %v592 = vld [vmem:[#allocation10 + $0xbb0] sm:$0xff]
    %v593 = vld [vmem:[#allocation10 + $0xbb8] sm:$0xff]
    %v594 = vld [vmem:[#allocation10 + $0xbc0] sm:$0xff]
    %v595 = vld [vmem:[#allocation10 + $0xbc8] sm:$0xff]
    %v596 = vld [vmem:[#allocation10 + $0xbd0] sm:$0xff]
    %v597 = vld [vmem:[#allocation10 + $0xbd8] sm:$0xff]
    %v598 = vld [vmem:[#allocation10 + $0xbe0] sm:$0xff]
    %v599 = vld [vmem:[#allocation10 + $0xbe8] sm:$0xff]
    %v600 = vld [vmem:[#allocation10 + $0xbf0] sm:$0xff]
    %v601 = vld [vmem:[#allocation10 + $0xbf8] sm:$0xff]
    %v602 = vld [vmem:[#allocation10 + $0xc00] sm:$0xff]
    %v603 = vld [vmem:[#allocation10 + $0xc08] sm:$0xff]
    %v604 = vld [vmem:[#allocation10 + $0xc10] sm:$0xff]
    %v605 = vld [vmem:[#allocation10 + $0xc18] sm:$0xff]
    %v606 = vld [vmem:[#allocation10 + $0xc20] sm:$0xff]
    %v607 = vld [vmem:[#allocation10 + $0xc28] sm:$0xff]
    %v608 = vld [vmem:[#allocation10 + $0xc30] sm:$0xff]
    %v609 = vld [vmem:[#allocation10 + $0xc38] sm:$0xff]
    %v610 = vld [vmem:[#allocation10 + $0xc40] sm:$0xff]
    %v611 = vld [vmem:[#allocation10 + $0xc48] sm:$0xff]
    %v612 = vld [vmem:[#allocation10 + $0xc50] sm:$0xff]
    %v613 = vld [vmem:[#allocation10 + $0xc58] sm:$0xff]
    %v614 = vld [vmem:[#allocation10 + $0xc60] sm:$0xff]
    %v615 = vld [vmem:[#allocation10 + $0xc68] sm:$0xff]
    %v616 = vld [vmem:[#allocation10 + $0xc70] sm:$0xff]
    %v617 = vld [vmem:[#allocation10 + $0xc78] sm:$0xff]
    %v618 = vld [vmem:[#allocation10 + $0xc80] sm:$0xff]
    %v619 = vld [vmem:[#allocation10 + $0xc88] sm:$0xff]
    %v620 = vld [vmem:[#allocation10 + $0xc90] sm:$0xff]
    %v621 = vld [vmem:[#allocation10 + $0xc98] sm:$0xff]
    %v622 = vld [vmem:[#allocation10 + $0xca0] sm:$0xff]
    %v623 = vld [vmem:[#allocation10 + $0xca8] sm:$0xff]
    %v624 = vld [vmem:[#allocation10 + $0xcb0] sm:$0xff]
    %v625 = vld [vmem:[#allocation10 + $0xcb8] sm:$0xff]
    %v626 = vld [vmem:[#allocation10 + $0xcc0] sm:$0xff]
    %v627 = vld [vmem:[#allocation10 + $0xcc8] sm:$0xff]
    %v628 = vld [vmem:[#allocation10 + $0xcd0] sm:$0xff]
    %v629 = vld [vmem:[#allocation10 + $0xcd8] sm:$0xff]
    %v630 = vld [vmem:[#allocation10 + $0xce0] sm:$0xff]
    %v631 = vld [vmem:[#allocation10 + $0xce8] sm:$0xff]
    %v632 = vld [vmem:[#allocation10 + $0xcf0] sm:$0xff]
    %v633 = vld [vmem:[#allocation10 + $0xcf8] sm:$0xff]
    %v634 = vld [vmem:[#allocation10 + $0xd00] sm:$0xff]
    %v635 = vld [vmem:[#allocation10 + $0xd08] sm:$0xff]
    %v636 = vld [vmem:[#allocation10 + $0xd10] sm:$0xff]
    %v637 = vld [vmem:[#allocation10 + $0xd18] sm:$0xff]
    %v638 = vld [vmem:[#allocation10 + $0xd20] sm:$0xff]
    %v639 = vld [vmem:[#allocation10 + $0xd28] sm:$0xff]
    %v640 = vld [vmem:[#allocation10 + $0xd30] sm:$0xff]
    %v641 = vld [vmem:[#allocation10 + $0xd38] sm:$0xff]
    %v642 = vld [vmem:[#allocation10 + $0xd40] sm:$0xff]
    %v643 = vld [vmem:[#allocation10 + $0xd48] sm:$0xff]
    %v644 = vld [vmem:[#allocation10 + $0xd50] sm:$0xff]
    %v645 = vld [vmem:[#allocation10 + $0xd58] sm:$0xff]
    %v646 = vld [vmem:[#allocation10 + $0xd60] sm:$0xff]
    %v647 = vld [vmem:[#allocation10 + $0xd68] sm:$0xff]
    %v648 = vld [vmem:[#allocation10 + $0xd70] sm:$0xff]
    %v649 = vld [vmem:[#allocation10 + $0xd78] sm:$0xff]
    %v650 = vld [vmem:[#allocation10 + $0xd80] sm:$0xff]
    %v651 = vld [vmem:[#allocation10 + $0xd88] sm:$0xff]
    %v652 = vld [vmem:[#allocation10 + $0xd90] sm:$0xff]
    %v653 = vld [vmem:[#allocation10 + $0xd98] sm:$0xff]
    %v654 = vld [vmem:[#allocation10 + $0xda0] sm:$0xff]
    %v655 = vld [vmem:[#allocation10 + $0xda8] sm:$0xff]
    %v656 = vld [vmem:[#allocation10 + $0xdb0] sm:$0xff]
    %v657 = vld [vmem:[#allocation10 + $0xdb8] sm:$0xff]
    %v658 = vld [vmem:[#allocation10 + $0xdc0] sm:$0xff]
    %v659 = vld [vmem:[#allocation10 + $0xdc8] sm:$0xff]
    %v660 = vld [vmem:[#allocation10 + $0xdd0] sm:$0xff]
    %v661 = vld [vmem:[#allocation10 + $0xdd8] sm:$0xff]
    %v662 = vld [vmem:[#allocation10 + $0xde0] sm:$0xff]
    %v663 = vld [vmem:[#allocation10 + $0xde8] sm:$0xff]
    %v664 = vld [vmem:[#allocation10 + $0xdf0] sm:$0xff]
    %v665 = vld [vmem:[#allocation10 + $0xdf8] sm:$0xff]
    %v666 = vld [vmem:[#allocation10 + $0xe00] sm:$0xff]
    %v667 = vld [vmem:[#allocation10 + $0xe08] sm:$0xff]
    %v668 = vld [vmem:[#allocation10 + $0xe10] sm:$0xff]
    %v669 = vld [vmem:[#allocation10 + $0xe18] sm:$0xff]
    %v670 = vld [vmem:[#allocation10 + $0xe20] sm:$0xff]
    %v671 = vld [vmem:[#allocation10 + $0xe28] sm:$0xff]
    %v672 = vld [vmem:[#allocation10 + $0xe30] sm:$0xff]
    %v673 = vld [vmem:[#allocation10 + $0xe38] sm:$0xff]
    %v674 = vld [vmem:[#allocation10 + $0xe40] sm:$0xff]
    %v675 = vld [vmem:[#allocation10 + $0xe48] sm:$0xff]
    %v676 = vld [vmem:[#allocation10 + $0xe50] sm:$0xff]
    %v677 = vld [vmem:[#allocation10 + $0xe58] sm:$0xff]
    %v678 = vld [vmem:[#allocation10 + $0xe60] sm:$0xff]
    %v679 = vld [vmem:[#allocation10 + $0xe68] sm:$0xff]
    %v680 = vld [vmem:[#allocation10 + $0xe70] sm:$0xff]
    %v681 = vld [vmem:[#allocation10 + $0xe78] sm:$0xff]
    %v682 = vld [vmem:[#allocation10 + $0xe80] sm:$0xff]
    %v683 = vld [vmem:[#allocation10 + $0xe88] sm:$0xff]
    %v684 = vld [vmem:[#allocation10 + $0xe90] sm:$0xff]
    %v685 = vld [vmem:[#allocation10 + $0xe98] sm:$0xff]
    %v686 = vld [vmem:[#allocation10 + $0xea0] sm:$0xff]
    %v687 = vld [vmem:[#allocation10 + $0xea8] sm:$0xff]
    %v688 = vld [vmem:[#allocation10 + $0xeb0] sm:$0xff]
    %v689 = vld [vmem:[#allocation10 + $0xeb8] sm:$0xff]
    %v690 = vld [vmem:[#allocation10 + $0xec0] sm:$0xff]
    %v691 = vld [vmem:[#allocation10 + $0xec8] sm:$0xff]
    %v692 = vld [vmem:[#allocation10 + $0xed0] sm:$0xff]
    %v693 = vld [vmem:[#allocation10 + $0xed8] sm:$0xff]
    %v694 = vld [vmem:[#allocation10 + $0xee0] sm:$0xff]
    %v695 = vld [vmem:[#allocation10 + $0xee8] sm:$0xff]
    %v696 = vld [vmem:[#allocation10 + $0xef0] sm:$0xff]
    %v697 = vld [vmem:[#allocation10 + $0xef8] sm:$0xff]
    %v698 = vld [vmem:[#allocation10 + $0xf00] sm:$0xff]
    %v699 = vld [vmem:[#allocation10 + $0xf08] sm:$0xff]
    %v700 = vld [vmem:[#allocation10 + $0xf10] sm:$0xff]
    %v701 = vld [vmem:[#allocation10 + $0xf18] sm:$0xff]
    %v702 = vld [vmem:[#allocation10 + $0xf20] sm:$0xff]
    %v703 = vld [vmem:[#allocation10 + $0xf28] sm:$0xff]
    %v704 = vld [vmem:[#allocation10 + $0xf30] sm:$0xff]
    %v705 = vld [vmem:[#allocation10 + $0xf38] sm:$0xff]
    %v706 = vld [vmem:[#allocation10 + $0xf40] sm:$0xff]
    %v707 = vld [vmem:[#allocation10 + $0xf48] sm:$0xff]
    %v708 = vld [vmem:[#allocation10 + $0xf50] sm:$0xff]
    %v709 = vld [vmem:[#allocation10 + $0xf58] sm:$0xff]
    %v710 = vld [vmem:[#allocation10 + $0xf60] sm:$0xff]
    %v711 = vld [vmem:[#allocation10 + $0xf68] sm:$0xff]
    %v712 = vld [vmem:[#allocation10 + $0xf70] sm:$0xff]
    %v713 = vld [vmem:[#allocation10 + $0xf78] sm:$0xff]
    %v714 = vld [vmem:[#allocation10 + $0xf80] sm:$0xff]
    %v715 = vld [vmem:[#allocation10 + $0xf88] sm:$0xff]
    %v716 = vld [vmem:[#allocation10 + $0xf90] sm:$0xff]
    %v717 = vld [vmem:[#allocation10 + $0xf98] sm:$0xff]
    %v718 = vld [vmem:[#allocation10 + $0xfa0] sm:$0xff]
    %v719 = vld [vmem:[#allocation10 + $0xfa8] sm:$0xff]
    %v720 = vld [vmem:[#allocation10 + $0xfb0] sm:$0xff]
    %v721 = vld [vmem:[#allocation10 + $0xfb8] sm:$0xff]
    %v722 = vld [vmem:[#allocation10 + $0xfc0] sm:$0xff]
    %v723 = vld [vmem:[#allocation10 + $0xfc8] sm:$0xff]
    %v724 = vld [vmem:[#allocation10 + $0xfd0] sm:$0xff]
    %v725 = vld [vmem:[#allocation10 + $0xfd8] sm:$0xff]
    %v726 = vld [vmem:[#allocation10 + $0xfe0] sm:$0xff]
    %v727 = vld [vmem:[#allocation10 + $0xfe8] sm:$0xff]
    %v728 = vld [vmem:[#allocation10 + $0xff0] sm:$0xff]
    %v729 = vld [vmem:[#allocation10 + $0xff8] sm:$0xff]
    %v730 = vld [vmem:[#allocation10 + $0x1000] sm:$0xff]
    %v731 = vld [vmem:[#allocation10 + $0x1008] sm:$0xff]
    %v732 = vld [vmem:[#allocation10 + $0x1010] sm:$0xff]
    %v733 = vld [vmem:[#allocation10 + $0x1018] sm:$0xff]
    %v734 = vld [vmem:[#allocation10 + $0x1020] sm:$0xff]
    %v735 = vld [vmem:[#allocation10 + $0x1028] sm:$0xff]
    %v736 = vld [vmem:[#allocation10 + $0x1030] sm:$0xff]
    %v737 = vld [vmem:[#allocation10 + $0x1038] sm:$0xff]
    %v738 = vld [vmem:[#allocation10 + $0x1040] sm:$0xff]
    %v739 = vld [vmem:[#allocation10 + $0x1048] sm:$0xff]
    %v740 = vld [vmem:[#allocation10 + $0x1050] sm:$0xff]
    %v741 = vld [vmem:[#allocation10 + $0x1058] sm:$0xff]
    %v742 = vld [vmem:[#allocation10 + $0x1060] sm:$0xff]
    %v743 = vld [vmem:[#allocation10 + $0x1068] sm:$0xff]
    %v744 = vld [vmem:[#allocation10 + $0x1070] sm:$0xff]
    %v745 = vld [vmem:[#allocation10 + $0x1078] sm:$0xff]
    %v746 = vld [vmem:[#allocation10 + $0x1080] sm:$0xff]
    %v747 = vld [vmem:[#allocation10 + $0x1088] sm:$0xff]
    %v748 = vld [vmem:[#allocation10 + $0x1090] sm:$0xff]
    %v749 = vld [vmem:[#allocation10 + $0x1098] sm:$0xff]
    %v750 = vld [vmem:[#allocation10 + $0x10a0] sm:$0xff]
    %v751 = vld [vmem:[#allocation10 + $0x10a8] sm:$0xff]
    %v752 = vld [vmem:[#allocation10 + $0x10b0] sm:$0xff]
    %v753 = vld [vmem:[#allocation10 + $0x10b8] sm:$0xff]
    %v754 = vld [vmem:[#allocation10 + $0x10c0] sm:$0xff]
    %v755 = vld [vmem:[#allocation10 + $0x10c8] sm:$0xff]
    %v756 = vld [vmem:[#allocation10 + $0x10d0] sm:$0xff]
    %v757 = vld [vmem:[#allocation10 + $0x10d8] sm:$0xff]
    %v758 = vld [vmem:[#allocation10 + $0x10e0] sm:$0xff]
    %v759 = vld [vmem:[#allocation10 + $0x10e8] sm:$0xff]
    %v760 = vld [vmem:[#allocation10 + $0x10f0] sm:$0xff]
    %v761 = vld [vmem:[#allocation10 + $0x10f8] sm:$0xff]
    %v762 = vld [vmem:[#allocation10 + $0x1100] sm:$0xff]
    %v763 = vld [vmem:[#allocation10 + $0x1108] sm:$0xff]
    %v764 = vld [vmem:[#allocation10 + $0x1110] sm:$0xff]
    %v765 = vld [vmem:[#allocation10 + $0x1118] sm:$0xff]
    %v766 = vld [vmem:[#allocation10 + $0x1120] sm:$0xff]
    %v767 = vld [vmem:[#allocation10 + $0x1128] sm:$0xff]
    %v768 = vld [vmem:[#allocation10 + $0x1130] sm:$0xff]
    %v769 = vld [vmem:[#allocation10 + $0x1138] sm:$0xff]
    %v770 = vld [vmem:[#allocation10 + $0x1140] sm:$0xff]
    %v771 = vld [vmem:[#allocation10 + $0x1148] sm:$0xff]
    %v772 = vld [vmem:[#allocation10 + $0x1150] sm:$0xff]
    %v773 = vld [vmem:[#allocation10 + $0x1158] sm:$0xff]
    %v774 = vld [vmem:[#allocation10 + $0x1160] sm:$0xff]
    %v775 = vld [vmem:[#allocation10 + $0x1168] sm:$0xff]
    %v776 = vld [vmem:[#allocation10 + $0x1170] sm:$0xff]
    %v777 = vld [vmem:[#allocation10 + $0x1178] sm:$0xff]
    %v778 = vld [vmem:[#allocation10 + $0x1180] sm:$0xff]
    %v779 = vld [vmem:[#allocation10 + $0x1188] sm:$0xff]
    %v780 = vld [vmem:[#allocation10 + $0x1190] sm:$0xff]
    %v781 = vld [vmem:[#allocation10 + $0x1198] sm:$0xff]
    %v782 = vld [vmem:[#allocation10 + $0x11a0] sm:$0xff]
    %v783 = vld [vmem:[#allocation10 + $0x11a8] sm:$0xff]
    %v784 = vld [vmem:[#allocation10 + $0x11b0] sm:$0xff]
    %v785 = vld [vmem:[#allocation10 + $0x11b8] sm:$0xff]
    %v786 = vld [vmem:[#allocation10 + $0x11c0] sm:$0xff]
    %v787 = vld [vmem:[#allocation10 + $0x11c8] sm:$0xff]
    %v788 = vld [vmem:[#allocation10 + $0x11d0] sm:$0xff]
    %v789 = vld [vmem:[#allocation10 + $0x11d8] sm:$0xff]
    %v790 = vld [vmem:[#allocation10 + $0x11e0] sm:$0xff]
    %v791 = vld [vmem:[#allocation10 + $0x11e8] sm:$0xff]
    %v792 = vld [vmem:[#allocation10 + $0x11f0] sm:$0xff]
    %v793 = vld [vmem:[#allocation10 + $0x11f8] sm:$0xff]
    %v794 = vld [vmem:[#allocation12] sm:$0x3f]
    %v796 = vperm.slane %v794, 0
    %v797 = vperm.slane %v794, 1
    %v798 = vperm.slane %v794, 2
    %v799 = vperm.slane %v794, 3
    %v800 = vperm.slane %v794, 4
    %v801 = vperm.slane %v794, 5
    %v820 = vunpack.c.l.b16 %v206
    %v821 = vunpack.c.h.b16 %v206
    %v822 = vunpack.c.l.b16 %v207
    %v823 = vunpack.c.h.b16 %v207
    %v824 = vunpack.c.l.b16 %v208
    %v825 = vunpack.c.h.b16 %v208
    %v826 = vunpack.c.l.b16 %v209
    %v827 = vunpack.c.h.b16 %v209
    %v828 = vunpack.c.l.b16 %v210
    %v829 = vunpack.c.h.b16 %v210
    %v830 = vunpack.c.l.b16 %v211
    %v831 = vunpack.c.h.b16 %v211
    %v832 = vunpack.c.l.b16 %v212
    %v833 = vunpack.c.h.b16 %v212
    %v834 = vunpack.c.l.b16 %v213
    %v835 = vunpack.c.h.b16 %v213
    %v836 = vunpack.c.l.b16 %v214
    %v837 = vunpack.c.h.b16 %v214
    %v838 = vunpack.c.l.b16 %v215
    %v839 = vunpack.c.h.b16 %v215
    %v840 = vunpack.c.l.b16 %v216
    %v841 = vunpack.c.h.b16 %v216
    %v842 = vunpack.c.l.b16 %v217
    %v843 = vunpack.c.h.b16 %v217
    %v844 = vpack.c.b16 %v832, %v820
    %v845 = vpack.c.b16 %v833, %v821
    %v846 = vpack.c.b16 %v834, %v822
    %v847 = vpack.c.b16 %v835, %v823
    %v848 = vpack.c.b16 %v836, %v824
    %v849 = vpack.c.b16 %v837, %v825
    %v850 = vpack.c.b16 %v838, %v826
    %v851 = vpack.c.b16 %v839, %v827
    %v852 = vpack.c.b16 %v840, %v828
    %v853 = vpack.c.b16 %v841, %v829
    %v854 = vpack.c.b16 %v842, %v830
    %v855 = vpack.c.b16 %v843, %v831
    %v1444 = vunpack.c.l.b16 %v218
    %v1445 = vunpack.c.h.b16 %v218
    %v1446 = vunpack.c.l.b16 %v219
    %v1447 = vunpack.c.h.b16 %v219
    %v1448 = vunpack.c.l.b16 %v220
    %v1449 = vunpack.c.h.b16 %v220
    %v1450 = vunpack.c.l.b16 %v221
    %v1451 = vunpack.c.h.b16 %v221
    %v1452 = vunpack.c.l.b16 %v222
    %v1453 = vunpack.c.h.b16 %v222
    %v1454 = vunpack.c.l.b16 %v223
    %v1455 = vunpack.c.h.b16 %v223
    %v1456 = vunpack.c.l.b16 %v224
    %v1457 = vunpack.c.h.b16 %v224
    %v1458 = vunpack.c.l.b16 %v225
    %v1459 = vunpack.c.h.b16 %v225
    %v1460 = vunpack.c.l.b16 %v226
    %v1461 = vunpack.c.h.b16 %v226
    %v1462 = vunpack.c.l.b16 %v227
    %v1463 = vunpack.c.h.b16 %v227
    %v1464 = vunpack.c.l.b16 %v228
    %v1465 = vunpack.c.h.b16 %v228
    %v1466 = vunpack.c.l.b16 %v229
    %v1467 = vunpack.c.h.b16 %v229
    %v1468 = vunpack.c.l.b16 %v230
    %v1469 = vunpack.c.h.b16 %v230
    %v1470 = vunpack.c.l.b16 %v231
    %v1471 = vunpack.c.h.b16 %v231
    %v1472 = vunpack.c.l.b16 %v232
    %v1473 = vunpack.c.h.b16 %v232
    %v1474 = vunpack.c.l.b16 %v233
    %v1475 = vunpack.c.h.b16 %v233
    %v1476 = vunpack.c.l.b16 %v234
    %v1477 = vunpack.c.h.b16 %v234
    %v1478 = vunpack.c.l.b16 %v235
    %v1479 = vunpack.c.h.b16 %v235
    %v1480 = vunpack.c.l.b16 %v236
    %v1481 = vunpack.c.h.b16 %v236
    %v1482 = vunpack.c.l.b16 %v237
    %v1483 = vunpack.c.h.b16 %v237
    %v1484 = vunpack.c.l.b16 %v238
    %v1485 = vunpack.c.h.b16 %v238
    %v1486 = vunpack.c.l.b16 %v239
    %v1487 = vunpack.c.h.b16 %v239
    %v1488 = vunpack.c.l.b16 %v240
    %v1489 = vunpack.c.h.b16 %v240
    %v1490 = vunpack.c.l.b16 %v241
    %v1491 = vunpack.c.h.b16 %v241
    %v1492 = vunpack.c.l.b16 %v242
    %v1493 = vunpack.c.h.b16 %v242
    %v1494 = vunpack.c.l.b16 %v243
    %v1495 = vunpack.c.h.b16 %v243
    %v1496 = vunpack.c.l.b16 %v244
    %v1497 = vunpack.c.h.b16 %v244
    %v1498 = vunpack.c.l.b16 %v245
    %v1499 = vunpack.c.h.b16 %v245
    %v1500 = vunpack.c.l.b16 %v246
    %v1501 = vunpack.c.h.b16 %v246
    %v1502 = vunpack.c.l.b16 %v247
    %v1503 = vunpack.c.h.b16 %v247
    %v1504 = vunpack.c.l.b16 %v248
    %v1505 = vunpack.c.h.b16 %v248
    %v1506 = vunpack.c.l.b16 %v249
    %v1507 = vunpack.c.h.b16 %v249
    %v1508 = vunpack.c.l.b16 %v250
    %v1509 = vunpack.c.h.b16 %v250
    %v1510 = vunpack.c.l.b16 %v251
    %v1511 = vunpack.c.h.b16 %v251
    %v1512 = vunpack.c.l.b16 %v252
    %v1513 = vunpack.c.h.b16 %v252
    %v1514 = vunpack.c.l.b16 %v253
    %v1515 = vunpack.c.h.b16 %v253
    %v1516 = vunpack.c.l.b16 %v254
    %v1517 = vunpack.c.h.b16 %v254
    %v1518 = vunpack.c.l.b16 %v255
    %v1519 = vunpack.c.h.b16 %v255
    %v1520 = vunpack.c.l.b16 %v256
    %v1521 = vunpack.c.h.b16 %v256
    %v1522 = vunpack.c.l.b16 %v257
    %v1523 = vunpack.c.h.b16 %v257
    %v1524 = vunpack.c.l.b16 %v258
    %v1525 = vunpack.c.h.b16 %v258
    %v1526 = vunpack.c.l.b16 %v259
    %v1527 = vunpack.c.h.b16 %v259
    %v1528 = vunpack.c.l.b16 %v260
    %v1529 = vunpack.c.h.b16 %v260
    %v1530 = vunpack.c.l.b16 %v261
    %v1531 = vunpack.c.h.b16 %v261
    %v1532 = vunpack.c.l.b16 %v262
    %v1533 = vunpack.c.h.b16 %v262
    %v1534 = vunpack.c.l.b16 %v263
    %v1535 = vunpack.c.h.b16 %v263
    %v1536 = vunpack.c.l.b16 %v264
    %v1537 = vunpack.c.h.b16 %v264
    %v1538 = vunpack.c.l.b16 %v265
    %v1539 = vunpack.c.h.b16 %v265
    %v1540 = vunpack.c.l.b16 %v266
    %v1541 = vunpack.c.h.b16 %v266
    %v1542 = vunpack.c.l.b16 %v267
    %v1543 = vunpack.c.h.b16 %v267
    %v1544 = vunpack.c.l.b16 %v268
    %v1545 = vunpack.c.h.b16 %v268
    %v1546 = vunpack.c.l.b16 %v269
    %v1547 = vunpack.c.h.b16 %v269
    %v1548 = vunpack.c.l.b16 %v270
    %v1549 = vunpack.c.h.b16 %v270
    %v1550 = vunpack.c.l.b16 %v271
    %v1551 = vunpack.c.h.b16 %v271
    %v1552 = vunpack.c.l.b16 %v272
    %v1553 = vunpack.c.h.b16 %v272
    %v1554 = vunpack.c.l.b16 %v273
    %v1555 = vunpack.c.h.b16 %v273
    %v1556 = vunpack.c.l.b16 %v274
    %v1557 = vunpack.c.h.b16 %v274
    %v1558 = vunpack.c.l.b16 %v275
    %v1559 = vunpack.c.h.b16 %v275
    %v1560 = vunpack.c.l.b16 %v276
    %v1561 = vunpack.c.h.b16 %v276
    %v1562 = vunpack.c.l.b16 %v277
    %v1563 = vunpack.c.h.b16 %v277
    %v1564 = vunpack.c.l.b16 %v278
    %v1565 = vunpack.c.h.b16 %v278
    %v1566 = vunpack.c.l.b16 %v279
    %v1567 = vunpack.c.h.b16 %v279
    %v1568 = vunpack.c.l.b16 %v280
    %v1569 = vunpack.c.h.b16 %v280
    %v1570 = vunpack.c.l.b16 %v281
    %v1571 = vunpack.c.h.b16 %v281
    %v1572 = vunpack.c.l.b16 %v282
    %v1573 = vunpack.c.h.b16 %v282
    %v1574 = vunpack.c.l.b16 %v283
    %v1575 = vunpack.c.h.b16 %v283
    %v1576 = vunpack.c.l.b16 %v284
    %v1577 = vunpack.c.h.b16 %v284
    %v1578 = vunpack.c.l.b16 %v285
    %v1579 = vunpack.c.h.b16 %v285
    %v1580 = vunpack.c.l.b16 %v286
    %v1581 = vunpack.c.h.b16 %v286
    %v1582 = vunpack.c.l.b16 %v287
    %v1583 = vunpack.c.h.b16 %v287
    %v1584 = vunpack.c.l.b16 %v288
    %v1585 = vunpack.c.h.b16 %v288
    %v1586 = vunpack.c.l.b16 %v289
    %v1587 = vunpack.c.h.b16 %v289
    %v1588 = vunpack.c.l.b16 %v290
    %v1589 = vunpack.c.h.b16 %v290
    %v1590 = vunpack.c.l.b16 %v291
    %v1591 = vunpack.c.h.b16 %v291
    %v1592 = vunpack.c.l.b16 %v292
    %v1593 = vunpack.c.h.b16 %v292
    %v1594 = vunpack.c.l.b16 %v293
    %v1595 = vunpack.c.h.b16 %v293
    %v1596 = vunpack.c.l.b16 %v294
    %v1597 = vunpack.c.h.b16 %v294
    %v1598 = vunpack.c.l.b16 %v295
    %v1599 = vunpack.c.h.b16 %v295
    %v1600 = vunpack.c.l.b16 %v296
    %v1601 = vunpack.c.h.b16 %v296
    %v1602 = vunpack.c.l.b16 %v297
    %v1603 = vunpack.c.h.b16 %v297
    %v1604 = vunpack.c.l.b16 %v298
    %v1605 = vunpack.c.h.b16 %v298
    %v1606 = vunpack.c.l.b16 %v299
    %v1607 = vunpack.c.h.b16 %v299
    %v1608 = vunpack.c.l.b16 %v300
    %v1609 = vunpack.c.h.b16 %v300
    %v1610 = vunpack.c.l.b16 %v301
    %v1611 = vunpack.c.h.b16 %v301
    %v1612 = vunpack.c.l.b16 %v302
    %v1613 = vunpack.c.h.b16 %v302
    %v1614 = vunpack.c.l.b16 %v303
    %v1615 = vunpack.c.h.b16 %v303
    %v1616 = vunpack.c.l.b16 %v304
    %v1617 = vunpack.c.h.b16 %v304
    %v1618 = vunpack.c.l.b16 %v305
    %v1619 = vunpack.c.h.b16 %v305
    %v1620 = vunpack.c.l.b16 %v306
    %v1621 = vunpack.c.h.b16 %v306
    %v1622 = vunpack.c.l.b16 %v307
    %v1623 = vunpack.c.h.b16 %v307
    %v1624 = vunpack.c.l.b16 %v308
    %v1625 = vunpack.c.h.b16 %v308
    %v1626 = vunpack.c.l.b16 %v309
    %v1627 = vunpack.c.h.b16 %v309
    %v1628 = vunpack.c.l.b16 %v310
    %v1629 = vunpack.c.h.b16 %v310
    %v1630 = vunpack.c.l.b16 %v311
    %v1631 = vunpack.c.h.b16 %v311
    %v1632 = vunpack.c.l.b16 %v312
    %v1633 = vunpack.c.h.b16 %v312
    %v1634 = vunpack.c.l.b16 %v313
    %v1635 = vunpack.c.h.b16 %v313
    %v1636 = vunpack.c.l.b16 %v314
    %v1637 = vunpack.c.h.b16 %v314
    %v1638 = vunpack.c.l.b16 %v315
    %v1639 = vunpack.c.h.b16 %v315
    %v1640 = vunpack.c.l.b16 %v316
    %v1641 = vunpack.c.h.b16 %v316
    %v1642 = vunpack.c.l.b16 %v317
    %v1643 = vunpack.c.h.b16 %v317
    %v1644 = vunpack.c.l.b16 %v318
    %v1645 = vunpack.c.h.b16 %v318
    %v1646 = vunpack.c.l.b16 %v319
    %v1647 = vunpack.c.h.b16 %v319
    %v1648 = vunpack.c.l.b16 %v320
    %v1649 = vunpack.c.h.b16 %v320
    %v1650 = vunpack.c.l.b16 %v321
    %v1651 = vunpack.c.h.b16 %v321
    %v1652 = vunpack.c.l.b16 %v322
    %v1653 = vunpack.c.h.b16 %v322
    %v1654 = vunpack.c.l.b16 %v323
    %v1655 = vunpack.c.h.b16 %v323
    %v1656 = vunpack.c.l.b16 %v324
    %v1657 = vunpack.c.h.b16 %v324
    %v1658 = vunpack.c.l.b16 %v325
    %v1659 = vunpack.c.h.b16 %v325
    %v1660 = vunpack.c.l.b16 %v326
    %v1661 = vunpack.c.h.b16 %v326
    %v1662 = vunpack.c.l.b16 %v327
    %v1663 = vunpack.c.h.b16 %v327
    %v1664 = vunpack.c.l.b16 %v328
    %v1665 = vunpack.c.h.b16 %v328
    %v1666 = vunpack.c.l.b16 %v329
    %v1667 = vunpack.c.h.b16 %v329
    %v1668 = vunpack.c.l.b16 %v330
    %v1669 = vunpack.c.h.b16 %v330
    %v1670 = vunpack.c.l.b16 %v331
    %v1671 = vunpack.c.h.b16 %v331
    %v1672 = vunpack.c.l.b16 %v332
    %v1673 = vunpack.c.h.b16 %v332
    %v1674 = vunpack.c.l.b16 %v333
    %v1675 = vunpack.c.h.b16 %v333
    %v1676 = vunpack.c.l.b16 %v334
    %v1677 = vunpack.c.h.b16 %v334
    %v1678 = vunpack.c.l.b16 %v335
    %v1679 = vunpack.c.h.b16 %v335
    %v1680 = vunpack.c.l.b16 %v336
    %v1681 = vunpack.c.h.b16 %v336
    %v1682 = vunpack.c.l.b16 %v337
    %v1683 = vunpack.c.h.b16 %v337
    %v1684 = vunpack.c.l.b16 %v338
    %v1685 = vunpack.c.h.b16 %v338
    %v1686 = vunpack.c.l.b16 %v339
    %v1687 = vunpack.c.h.b16 %v339
    %v1688 = vunpack.c.l.b16 %v340
    %v1689 = vunpack.c.h.b16 %v340
    %v1690 = vunpack.c.l.b16 %v341
    %v1691 = vunpack.c.h.b16 %v341
    %v1692 = vunpack.c.l.b16 %v342
    %v1693 = vunpack.c.h.b16 %v342
    %v1694 = vunpack.c.l.b16 %v343
    %v1695 = vunpack.c.h.b16 %v343
    %v1696 = vunpack.c.l.b16 %v344
    %v1697 = vunpack.c.h.b16 %v344
    %v1698 = vunpack.c.l.b16 %v345
    %v1699 = vunpack.c.h.b16 %v345
    %v1700 = vunpack.c.l.b16 %v346
    %v1701 = vunpack.c.h.b16 %v346
    %v1702 = vunpack.c.l.b16 %v347
    %v1703 = vunpack.c.h.b16 %v347
    %v1704 = vunpack.c.l.b16 %v348
    %v1705 = vunpack.c.h.b16 %v348
    %v1706 = vunpack.c.l.b16 %v349
    %v1707 = vunpack.c.h.b16 %v349
    %v1708 = vunpack.c.l.b16 %v350
    %v1709 = vunpack.c.h.b16 %v350
    %v1710 = vunpack.c.l.b16 %v351
    %v1711 = vunpack.c.h.b16 %v351
    %v1712 = vunpack.c.l.b16 %v352
    %v1713 = vunpack.c.h.b16 %v352
    %v1714 = vunpack.c.l.b16 %v353
    %v1715 = vunpack.c.h.b16 %v353
    %v1716 = vunpack.c.l.b16 %v354
    %v1717 = vunpack.c.h.b16 %v354
    %v1718 = vunpack.c.l.b16 %v355
    %v1719 = vunpack.c.h.b16 %v355
    %v1720 = vunpack.c.l.b16 %v356
    %v1721 = vunpack.c.h.b16 %v356
    %v1722 = vunpack.c.l.b16 %v357
    %v1723 = vunpack.c.h.b16 %v357
    %v1724 = vunpack.c.l.b16 %v358
    %v1725 = vunpack.c.h.b16 %v358
    %v1726 = vunpack.c.l.b16 %v359
    %v1727 = vunpack.c.h.b16 %v359
    %v1728 = vunpack.c.l.b16 %v360
    %v1729 = vunpack.c.h.b16 %v360
    %v1730 = vunpack.c.l.b16 %v361
    %v1731 = vunpack.c.h.b16 %v361
    %v1732 = vunpack.c.l.b16 %v362
    %v1733 = vunpack.c.h.b16 %v362
    %v1734 = vunpack.c.l.b16 %v363
    %v1735 = vunpack.c.h.b16 %v363
    %v1736 = vunpack.c.l.b16 %v364
    %v1737 = vunpack.c.h.b16 %v364
    %v1738 = vunpack.c.l.b16 %v365
    %v1739 = vunpack.c.h.b16 %v365
    %v1740 = vunpack.c.l.b16 %v366
    %v1741 = vunpack.c.h.b16 %v366
    %v1742 = vunpack.c.l.b16 %v367
    %v1743 = vunpack.c.h.b16 %v367
    %v1744 = vunpack.c.l.b16 %v368
    %v1745 = vunpack.c.h.b16 %v368
    %v1746 = vunpack.c.l.b16 %v369
    %v1747 = vunpack.c.h.b16 %v369
    %v1748 = vunpack.c.l.b16 %v370
    %v1749 = vunpack.c.h.b16 %v370
    %v1750 = vunpack.c.l.b16 %v371
    %v1751 = vunpack.c.h.b16 %v371
    %v1752 = vunpack.c.l.b16 %v372
    %v1753 = vunpack.c.h.b16 %v372
    %v1754 = vunpack.c.l.b16 %v373
    %v1755 = vunpack.c.h.b16 %v373
    %v1756 = vunpack.c.l.b16 %v374
    %v1757 = vunpack.c.h.b16 %v374
    %v1758 = vunpack.c.l.b16 %v375
    %v1759 = vunpack.c.h.b16 %v375
    %v1760 = vunpack.c.l.b16 %v376
    %v1761 = vunpack.c.h.b16 %v376
    %v1762 = vunpack.c.l.b16 %v377
    %v1763 = vunpack.c.h.b16 %v377
    %v1764 = vunpack.c.l.b16 %v378
    %v1765 = vunpack.c.h.b16 %v378
    %v1766 = vunpack.c.l.b16 %v379
    %v1767 = vunpack.c.h.b16 %v379
    %v1768 = vunpack.c.l.b16 %v380
    %v1769 = vunpack.c.h.b16 %v380
    %v1770 = vunpack.c.l.b16 %v381
    %v1771 = vunpack.c.h.b16 %v381
    %v1772 = vunpack.c.l.b16 %v382
    %v1773 = vunpack.c.h.b16 %v382
    %v1774 = vunpack.c.l.b16 %v383
    %v1775 = vunpack.c.h.b16 %v383
    %v1776 = vunpack.c.l.b16 %v384
    %v1777 = vunpack.c.h.b16 %v384
    %v1778 = vunpack.c.l.b16 %v385
    %v1779 = vunpack.c.h.b16 %v385
    %v1780 = vunpack.c.l.b16 %v386
    %v1781 = vunpack.c.h.b16 %v386
    %v1782 = vunpack.c.l.b16 %v387
    %v1783 = vunpack.c.h.b16 %v387
    %v1784 = vunpack.c.l.b16 %v388
    %v1785 = vunpack.c.h.b16 %v388
    %v1786 = vunpack.c.l.b16 %v389
    %v1787 = vunpack.c.h.b16 %v389
    %v1788 = vunpack.c.l.b16 %v390
    %v1789 = vunpack.c.h.b16 %v390
    %v1790 = vunpack.c.l.b16 %v391
    %v1791 = vunpack.c.h.b16 %v391
    %v1792 = vunpack.c.l.b16 %v392
    %v1793 = vunpack.c.h.b16 %v392
    %v1794 = vunpack.c.l.b16 %v393
    %v1795 = vunpack.c.h.b16 %v393
    %v1796 = vunpack.c.l.b16 %v394
    %v1797 = vunpack.c.h.b16 %v394
    %v1798 = vunpack.c.l.b16 %v395
    %v1799 = vunpack.c.h.b16 %v395
    %v1800 = vunpack.c.l.b16 %v396
    %v1801 = vunpack.c.h.b16 %v396
    %v1802 = vunpack.c.l.b16 %v397
    %v1803 = vunpack.c.h.b16 %v397
    %v1804 = vunpack.c.l.b16 %v398
    %v1805 = vunpack.c.h.b16 %v398
    %v1806 = vunpack.c.l.b16 %v399
    %v1807 = vunpack.c.h.b16 %v399
    %v1808 = vunpack.c.l.b16 %v400
    %v1809 = vunpack.c.h.b16 %v400
    %v1810 = vunpack.c.l.b16 %v401
    %v1811 = vunpack.c.h.b16 %v401
    %v1812 = vunpack.c.l.b16 %v402
    %v1813 = vunpack.c.h.b16 %v402
    %v1814 = vunpack.c.l.b16 %v403
    %v1815 = vunpack.c.h.b16 %v403
    %v1816 = vunpack.c.l.b16 %v404
    %v1817 = vunpack.c.h.b16 %v404
    %v1818 = vunpack.c.l.b16 %v405
    %v1819 = vunpack.c.h.b16 %v405
    %v1820 = vunpack.c.l.b16 %v406
    %v1821 = vunpack.c.h.b16 %v406
    %v1822 = vunpack.c.l.b16 %v407
    %v1823 = vunpack.c.h.b16 %v407
    %v1824 = vunpack.c.l.b16 %v408
    %v1825 = vunpack.c.h.b16 %v408
    %v1826 = vunpack.c.l.b16 %v409
    %v1827 = vunpack.c.h.b16 %v409
    %v1828 = vunpack.c.l.b16 %v410
    %v1829 = vunpack.c.h.b16 %v410
    %v1830 = vunpack.c.l.b16 %v411
    %v1831 = vunpack.c.h.b16 %v411
    %v1832 = vunpack.c.l.b16 %v412
    %v1833 = vunpack.c.h.b16 %v412
    %v1834 = vunpack.c.l.b16 %v413
    %v1835 = vunpack.c.h.b16 %v413
    %v1836 = vunpack.c.l.b16 %v414
    %v1837 = vunpack.c.h.b16 %v414
    %v1838 = vunpack.c.l.b16 %v415
    %v1839 = vunpack.c.h.b16 %v415
    %v1840 = vunpack.c.l.b16 %v416
    %v1841 = vunpack.c.h.b16 %v416
    %v1842 = vunpack.c.l.b16 %v417
    %v1843 = vunpack.c.h.b16 %v417
    %v1844 = vunpack.c.l.b16 %v418
    %v1845 = vunpack.c.h.b16 %v418
    %v1846 = vunpack.c.l.b16 %v419
    %v1847 = vunpack.c.h.b16 %v419
    %v1848 = vunpack.c.l.b16 %v420
    %v1849 = vunpack.c.h.b16 %v420
    %v1850 = vunpack.c.l.b16 %v421
    %v1851 = vunpack.c.h.b16 %v421
    %v1852 = vunpack.c.l.b16 %v422
    %v1853 = vunpack.c.h.b16 %v422
    %v1854 = vunpack.c.l.b16 %v423
    %v1855 = vunpack.c.h.b16 %v423
    %v1856 = vunpack.c.l.b16 %v424
    %v1857 = vunpack.c.h.b16 %v424
    %v1858 = vunpack.c.l.b16 %v425
    %v1859 = vunpack.c.h.b16 %v425
    %v1860 = vunpack.c.l.b16 %v426
    %v1861 = vunpack.c.h.b16 %v426
    %v1862 = vunpack.c.l.b16 %v427
    %v1863 = vunpack.c.h.b16 %v427
    %v1864 = vunpack.c.l.b16 %v428
    %v1865 = vunpack.c.h.b16 %v428
    %v1866 = vunpack.c.l.b16 %v429
    %v1867 = vunpack.c.h.b16 %v429
    %v1868 = vunpack.c.l.b16 %v430
    %v1869 = vunpack.c.h.b16 %v430
    %v1870 = vunpack.c.l.b16 %v431
    %v1871 = vunpack.c.h.b16 %v431
    %v1872 = vunpack.c.l.b16 %v432
    %v1873 = vunpack.c.h.b16 %v432
    %v1874 = vunpack.c.l.b16 %v433
    %v1875 = vunpack.c.h.b16 %v433
    %v1876 = vunpack.c.l.b16 %v434
    %v1877 = vunpack.c.h.b16 %v434
    %v1878 = vunpack.c.l.b16 %v435
    %v1879 = vunpack.c.h.b16 %v435
    %v1880 = vunpack.c.l.b16 %v436
    %v1881 = vunpack.c.h.b16 %v436
    %v1882 = vunpack.c.l.b16 %v437
    %v1883 = vunpack.c.h.b16 %v437
    %v1884 = vunpack.c.l.b16 %v438
    %v1885 = vunpack.c.h.b16 %v438
    %v1886 = vunpack.c.l.b16 %v439
    %v1887 = vunpack.c.h.b16 %v439
    %v1888 = vunpack.c.l.b16 %v440
    %v1889 = vunpack.c.h.b16 %v440
    %v1890 = vunpack.c.l.b16 %v441
    %v1891 = vunpack.c.h.b16 %v441
    %v1892 = vunpack.c.l.b16 %v442
    %v1893 = vunpack.c.h.b16 %v442
    %v1894 = vunpack.c.l.b16 %v443
    %v1895 = vunpack.c.h.b16 %v443
    %v1896 = vunpack.c.l.b16 %v444
    %v1897 = vunpack.c.h.b16 %v444
    %v1898 = vunpack.c.l.b16 %v445
    %v1899 = vunpack.c.h.b16 %v445
    %v1900 = vunpack.c.l.b16 %v446
    %v1901 = vunpack.c.h.b16 %v446
    %v1902 = vunpack.c.l.b16 %v447
    %v1903 = vunpack.c.h.b16 %v447
    %v1904 = vunpack.c.l.b16 %v448
    %v1905 = vunpack.c.h.b16 %v448
    %v1906 = vunpack.c.l.b16 %v449
    %v1907 = vunpack.c.h.b16 %v449
    %v1908 = vunpack.c.l.b16 %v450
    %v1909 = vunpack.c.h.b16 %v450
    %v1910 = vunpack.c.l.b16 %v451
    %v1911 = vunpack.c.h.b16 %v451
    %v1912 = vunpack.c.l.b16 %v452
    %v1913 = vunpack.c.h.b16 %v452
    %v1914 = vunpack.c.l.b16 %v453
    %v1915 = vunpack.c.h.b16 %v453
    %v1916 = vunpack.c.l.b16 %v454
    %v1917 = vunpack.c.h.b16 %v454
    %v1918 = vunpack.c.l.b16 %v455
    %v1919 = vunpack.c.h.b16 %v455
    %v1920 = vunpack.c.l.b16 %v456
    %v1921 = vunpack.c.h.b16 %v456
    %v1922 = vunpack.c.l.b16 %v457
    %v1923 = vunpack.c.h.b16 %v457
    %v1924 = vunpack.c.l.b16 %v458
    %v1925 = vunpack.c.h.b16 %v458
    %v1926 = vunpack.c.l.b16 %v459
    %v1927 = vunpack.c.h.b16 %v459
    %v1928 = vunpack.c.l.b16 %v460
    %v1929 = vunpack.c.h.b16 %v460
    %v1930 = vunpack.c.l.b16 %v461
    %v1931 = vunpack.c.h.b16 %v461
    %v1932 = vunpack.c.l.b16 %v462
    %v1933 = vunpack.c.h.b16 %v462
    %v1934 = vunpack.c.l.b16 %v463
    %v1935 = vunpack.c.h.b16 %v463
    %v1936 = vunpack.c.l.b16 %v464
    %v1937 = vunpack.c.h.b16 %v464
    %v1938 = vunpack.c.l.b16 %v465
    %v1939 = vunpack.c.h.b16 %v465
    %v1940 = vunpack.c.l.b16 %v466
    %v1941 = vunpack.c.h.b16 %v466
    %v1942 = vunpack.c.l.b16 %v467
    %v1943 = vunpack.c.h.b16 %v467
    %v1944 = vunpack.c.l.b16 %v468
    %v1945 = vunpack.c.h.b16 %v468
    %v1946 = vunpack.c.l.b16 %v469
    %v1947 = vunpack.c.h.b16 %v469
    %v1948 = vunpack.c.l.b16 %v470
    %v1949 = vunpack.c.h.b16 %v470
    %v1950 = vunpack.c.l.b16 %v471
    %v1951 = vunpack.c.h.b16 %v471
    %v1952 = vunpack.c.l.b16 %v472
    %v1953 = vunpack.c.h.b16 %v472
    %v1954 = vunpack.c.l.b16 %v473
    %v1955 = vunpack.c.h.b16 %v473
    %v1956 = vunpack.c.l.b16 %v474
    %v1957 = vunpack.c.h.b16 %v474
    %v1958 = vunpack.c.l.b16 %v475
    %v1959 = vunpack.c.h.b16 %v475
    %v1960 = vunpack.c.l.b16 %v476
    %v1961 = vunpack.c.h.b16 %v476
    %v1962 = vunpack.c.l.b16 %v477
    %v1963 = vunpack.c.h.b16 %v477
    %v1964 = vunpack.c.l.b16 %v478
    %v1965 = vunpack.c.h.b16 %v478
    %v1966 = vunpack.c.l.b16 %v479
    %v1967 = vunpack.c.h.b16 %v479
    %v1968 = vunpack.c.l.b16 %v480
    %v1969 = vunpack.c.h.b16 %v480
    %v1970 = vunpack.c.l.b16 %v481
    %v1971 = vunpack.c.h.b16 %v481
    %v1972 = vunpack.c.l.b16 %v482
    %v1973 = vunpack.c.h.b16 %v482
    %v1974 = vunpack.c.l.b16 %v483
    %v1975 = vunpack.c.h.b16 %v483
    %v1976 = vunpack.c.l.b16 %v484
    %v1977 = vunpack.c.h.b16 %v484
    %v1978 = vunpack.c.l.b16 %v485
    %v1979 = vunpack.c.h.b16 %v485
    %v1980 = vunpack.c.l.b16 %v486
    %v1981 = vunpack.c.h.b16 %v486
    %v1982 = vunpack.c.l.b16 %v487
    %v1983 = vunpack.c.h.b16 %v487
    %v1984 = vunpack.c.l.b16 %v488
    %v1985 = vunpack.c.h.b16 %v488
    %v1986 = vunpack.c.l.b16 %v489
    %v1987 = vunpack.c.h.b16 %v489
    %v1988 = vunpack.c.l.b16 %v490
    %v1989 = vunpack.c.h.b16 %v490
    %v1990 = vunpack.c.l.b16 %v491
    %v1991 = vunpack.c.h.b16 %v491
    %v1992 = vunpack.c.l.b16 %v492
    %v1993 = vunpack.c.h.b16 %v492
    %v1994 = vunpack.c.l.b16 %v493
    %v1995 = vunpack.c.h.b16 %v493
    %v1996 = vunpack.c.l.b16 %v494
    %v1997 = vunpack.c.h.b16 %v494
    %v1998 = vunpack.c.l.b16 %v495
    %v1999 = vunpack.c.h.b16 %v495
    %v2000 = vunpack.c.l.b16 %v496
    %v2001 = vunpack.c.h.b16 %v496
    %v2002 = vunpack.c.l.b16 %v497
    %v2003 = vunpack.c.h.b16 %v497
    %v2004 = vunpack.c.l.b16 %v498
    %v2005 = vunpack.c.h.b16 %v498
    %v2006 = vunpack.c.l.b16 %v499
    %v2007 = vunpack.c.h.b16 %v499
    %v2008 = vunpack.c.l.b16 %v500
    %v2009 = vunpack.c.h.b16 %v500
    %v2010 = vunpack.c.l.b16 %v501
    %v2011 = vunpack.c.h.b16 %v501
    %v2012 = vunpack.c.l.b16 %v502
    %v2013 = vunpack.c.h.b16 %v502
    %v2014 = vunpack.c.l.b16 %v503
    %v2015 = vunpack.c.h.b16 %v503
    %v2016 = vunpack.c.l.b16 %v504
    %v2017 = vunpack.c.h.b16 %v504
    %v2018 = vunpack.c.l.b16 %v505
    %v2019 = vunpack.c.h.b16 %v505
    %v2020 = vunpack.c.l.b16 %v506
    %v2021 = vunpack.c.h.b16 %v506
    %v2022 = vunpack.c.l.b16 %v507
    %v2023 = vunpack.c.h.b16 %v507
    %v2024 = vunpack.c.l.b16 %v508
    %v2025 = vunpack.c.h.b16 %v508
    %v2026 = vunpack.c.l.b16 %v509
    %v2027 = vunpack.c.h.b16 %v509
    %v2028 = vunpack.c.l.b16 %v510
    %v2029 = vunpack.c.h.b16 %v510
    %v2030 = vunpack.c.l.b16 %v511
    %v2031 = vunpack.c.h.b16 %v511
    %v2032 = vunpack.c.l.b16 %v512
    %v2033 = vunpack.c.h.b16 %v512
    %v2034 = vunpack.c.l.b16 %v513
    %v2035 = vunpack.c.h.b16 %v513
    %v2036 = vunpack.c.l.b16 %v514
    %v2037 = vunpack.c.h.b16 %v514
    %v2038 = vunpack.c.l.b16 %v515
    %v2039 = vunpack.c.h.b16 %v515
    %v2040 = vunpack.c.l.b16 %v516
    %v2041 = vunpack.c.h.b16 %v516
    %v2042 = vunpack.c.l.b16 %v517
    %v2043 = vunpack.c.h.b16 %v517
    %v2044 = vunpack.c.l.b16 %v518
    %v2045 = vunpack.c.h.b16 %v518
    %v2046 = vunpack.c.l.b16 %v519
    %v2047 = vunpack.c.h.b16 %v519
    %v2048 = vunpack.c.l.b16 %v520
    %v2049 = vunpack.c.h.b16 %v520
    %v2050 = vunpack.c.l.b16 %v521
    %v2051 = vunpack.c.h.b16 %v521
    %v2052 = vunpack.c.l.b16 %v522
    %v2053 = vunpack.c.h.b16 %v522
    %v2054 = vunpack.c.l.b16 %v523
    %v2055 = vunpack.c.h.b16 %v523
    %v2056 = vunpack.c.l.b16 %v524
    %v2057 = vunpack.c.h.b16 %v524
    %v2058 = vunpack.c.l.b16 %v525
    %v2059 = vunpack.c.h.b16 %v525
    %v2060 = vunpack.c.l.b16 %v526
    %v2061 = vunpack.c.h.b16 %v526
    %v2062 = vunpack.c.l.b16 %v527
    %v2063 = vunpack.c.h.b16 %v527
    %v2064 = vunpack.c.l.b16 %v528
    %v2065 = vunpack.c.h.b16 %v528
    %v2066 = vunpack.c.l.b16 %v529
    %v2067 = vunpack.c.h.b16 %v529
    %v2068 = vunpack.c.l.b16 %v530
    %v2069 = vunpack.c.h.b16 %v530
    %v2070 = vunpack.c.l.b16 %v531
    %v2071 = vunpack.c.h.b16 %v531
    %v2072 = vunpack.c.l.b16 %v532
    %v2073 = vunpack.c.h.b16 %v532
    %v2074 = vunpack.c.l.b16 %v533
    %v2075 = vunpack.c.h.b16 %v533
    %v2076 = vunpack.c.l.b16 %v534
    %v2077 = vunpack.c.h.b16 %v534
    %v2078 = vunpack.c.l.b16 %v535
    %v2079 = vunpack.c.h.b16 %v535
    %v2080 = vunpack.c.l.b16 %v536
    %v2081 = vunpack.c.h.b16 %v536
    %v2082 = vunpack.c.l.b16 %v537
    %v2083 = vunpack.c.h.b16 %v537
    %v2084 = vunpack.c.l.b16 %v538
    %v2085 = vunpack.c.h.b16 %v538
    %v2086 = vunpack.c.l.b16 %v539
    %v2087 = vunpack.c.h.b16 %v539
    %v2088 = vunpack.c.l.b16 %v540
    %v2089 = vunpack.c.h.b16 %v540
    %v2090 = vunpack.c.l.b16 %v541
    %v2091 = vunpack.c.h.b16 %v541
    %v2092 = vunpack.c.l.b16 %v542
    %v2093 = vunpack.c.h.b16 %v542
    %v2094 = vunpack.c.l.b16 %v543
    %v2095 = vunpack.c.h.b16 %v543
    %v2096 = vunpack.c.l.b16 %v544
    %v2097 = vunpack.c.h.b16 %v544
    %v2098 = vunpack.c.l.b16 %v545
    %v2099 = vunpack.c.h.b16 %v545
    %v2100 = vunpack.c.l.b16 %v546
    %v2101 = vunpack.c.h.b16 %v546
    %v2102 = vunpack.c.l.b16 %v547
    %v2103 = vunpack.c.h.b16 %v547
    %v2104 = vunpack.c.l.b16 %v548
    %v2105 = vunpack.c.h.b16 %v548
    %v2106 = vunpack.c.l.b16 %v549
    %v2107 = vunpack.c.h.b16 %v549
    %v2108 = vunpack.c.l.b16 %v550
    %v2109 = vunpack.c.h.b16 %v550
    %v2110 = vunpack.c.l.b16 %v551
    %v2111 = vunpack.c.h.b16 %v551
    %v2112 = vunpack.c.l.b16 %v552
    %v2113 = vunpack.c.h.b16 %v552
    %v2114 = vunpack.c.l.b16 %v553
    %v2115 = vunpack.c.h.b16 %v553
    %v2116 = vunpack.c.l.b16 %v554
    %v2117 = vunpack.c.h.b16 %v554
    %v2118 = vunpack.c.l.b16 %v555
    %v2119 = vunpack.c.h.b16 %v555
    %v2120 = vunpack.c.l.b16 %v556
    %v2121 = vunpack.c.h.b16 %v556
    %v2122 = vunpack.c.l.b16 %v557
    %v2123 = vunpack.c.h.b16 %v557
    %v2124 = vunpack.c.l.b16 %v558
    %v2125 = vunpack.c.h.b16 %v558
    %v2126 = vunpack.c.l.b16 %v559
    %v2127 = vunpack.c.h.b16 %v559
    %v2128 = vunpack.c.l.b16 %v560
    %v2129 = vunpack.c.h.b16 %v560
    %v2130 = vunpack.c.l.b16 %v561
    %v2131 = vunpack.c.h.b16 %v561
    %v2132 = vunpack.c.l.b16 %v562
    %v2133 = vunpack.c.h.b16 %v562
    %v2134 = vunpack.c.l.b16 %v563
    %v2135 = vunpack.c.h.b16 %v563
    %v2136 = vunpack.c.l.b16 %v564
    %v2137 = vunpack.c.h.b16 %v564
    %v2138 = vunpack.c.l.b16 %v565
    %v2139 = vunpack.c.h.b16 %v565
    %v2140 = vunpack.c.l.b16 %v566
    %v2141 = vunpack.c.h.b16 %v566
    %v2142 = vunpack.c.l.b16 %v567
    %v2143 = vunpack.c.h.b16 %v567
    %v2144 = vunpack.c.l.b16 %v568
    %v2145 = vunpack.c.h.b16 %v568
    %v2146 = vunpack.c.l.b16 %v569
    %v2147 = vunpack.c.h.b16 %v569
    %v2148 = vunpack.c.l.b16 %v570
    %v2149 = vunpack.c.h.b16 %v570
    %v2150 = vunpack.c.l.b16 %v571
    %v2151 = vunpack.c.h.b16 %v571
    %v2152 = vunpack.c.l.b16 %v572
    %v2153 = vunpack.c.h.b16 %v572
    %v2154 = vunpack.c.l.b16 %v573
    %v2155 = vunpack.c.h.b16 %v573
    %v2156 = vunpack.c.l.b16 %v574
    %v2157 = vunpack.c.h.b16 %v574
    %v2158 = vunpack.c.l.b16 %v575
    %v2159 = vunpack.c.h.b16 %v575
    %v2160 = vunpack.c.l.b16 %v576
    %v2161 = vunpack.c.h.b16 %v576
    %v2162 = vunpack.c.l.b16 %v577
    %v2163 = vunpack.c.h.b16 %v577
    %v2164 = vunpack.c.l.b16 %v578
    %v2165 = vunpack.c.h.b16 %v578
    %v2166 = vunpack.c.l.b16 %v579
    %v2167 = vunpack.c.h.b16 %v579
    %v2168 = vunpack.c.l.b16 %v580
    %v2169 = vunpack.c.h.b16 %v580
    %v2170 = vunpack.c.l.b16 %v581
    %v2171 = vunpack.c.h.b16 %v581
    %v2172 = vunpack.c.l.b16 %v582
    %v2173 = vunpack.c.h.b16 %v582
    %v2174 = vunpack.c.l.b16 %v583
    %v2175 = vunpack.c.h.b16 %v583
    %v2176 = vunpack.c.l.b16 %v584
    %v2177 = vunpack.c.h.b16 %v584
    %v2178 = vunpack.c.l.b16 %v585
    %v2179 = vunpack.c.h.b16 %v585
    %v2180 = vunpack.c.l.b16 %v586
    %v2181 = vunpack.c.h.b16 %v586
    %v2182 = vunpack.c.l.b16 %v587
    %v2183 = vunpack.c.h.b16 %v587
    %v2184 = vunpack.c.l.b16 %v588
    %v2185 = vunpack.c.h.b16 %v588
    %v2186 = vunpack.c.l.b16 %v589
    %v2187 = vunpack.c.h.b16 %v589
    %v2188 = vunpack.c.l.b16 %v590
    %v2189 = vunpack.c.h.b16 %v590
    %v2190 = vunpack.c.l.b16 %v591
    %v2191 = vunpack.c.h.b16 %v591
    %v2192 = vunpack.c.l.b16 %v592
    %v2193 = vunpack.c.h.b16 %v592
    %v2194 = vunpack.c.l.b16 %v593
    %v2195 = vunpack.c.h.b16 %v593
    %v2196 = vunpack.c.l.b16 %v594
    %v2197 = vunpack.c.h.b16 %v594
    %v2198 = vunpack.c.l.b16 %v595
    %v2199 = vunpack.c.h.b16 %v595
    %v2200 = vunpack.c.l.b16 %v596
    %v2201 = vunpack.c.h.b16 %v596
    %v2202 = vunpack.c.l.b16 %v597
    %v2203 = vunpack.c.h.b16 %v597
    %v2204 = vunpack.c.l.b16 %v598
    %v2205 = vunpack.c.h.b16 %v598
    %v2206 = vunpack.c.l.b16 %v599
    %v2207 = vunpack.c.h.b16 %v599
    %v2208 = vunpack.c.l.b16 %v600
    %v2209 = vunpack.c.h.b16 %v600
    %v2210 = vunpack.c.l.b16 %v601
    %v2211 = vunpack.c.h.b16 %v601
    %v2212 = vunpack.c.l.b16 %v602
    %v2213 = vunpack.c.h.b16 %v602
    %v2214 = vunpack.c.l.b16 %v603
    %v2215 = vunpack.c.h.b16 %v603
    %v2216 = vunpack.c.l.b16 %v604
    %v2217 = vunpack.c.h.b16 %v604
    %v2218 = vunpack.c.l.b16 %v605
    %v2219 = vunpack.c.h.b16 %v605
    %v2220 = vunpack.c.l.b16 %v606
    %v2221 = vunpack.c.h.b16 %v606
    %v2222 = vunpack.c.l.b16 %v607
    %v2223 = vunpack.c.h.b16 %v607
    %v2224 = vunpack.c.l.b16 %v608
    %v2225 = vunpack.c.h.b16 %v608
    %v2226 = vunpack.c.l.b16 %v609
    %v2227 = vunpack.c.h.b16 %v609
    %v2228 = vunpack.c.l.b16 %v610
    %v2229 = vunpack.c.h.b16 %v610
    %v2230 = vunpack.c.l.b16 %v611
    %v2231 = vunpack.c.h.b16 %v611
    %v2232 = vunpack.c.l.b16 %v612
    %v2233 = vunpack.c.h.b16 %v612
    %v2234 = vunpack.c.l.b16 %v613
    %v2235 = vunpack.c.h.b16 %v613
    %v2236 = vunpack.c.l.b16 %v614
    %v2237 = vunpack.c.h.b16 %v614
    %v2238 = vunpack.c.l.b16 %v615
    %v2239 = vunpack.c.h.b16 %v615
    %v2240 = vunpack.c.l.b16 %v616
    %v2241 = vunpack.c.h.b16 %v616
    %v2242 = vunpack.c.l.b16 %v617
    %v2243 = vunpack.c.h.b16 %v617
    %v2244 = vunpack.c.l.b16 %v618
    %v2245 = vunpack.c.h.b16 %v618
    %v2246 = vunpack.c.l.b16 %v619
    %v2247 = vunpack.c.h.b16 %v619
    %v2248 = vunpack.c.l.b16 %v620
    %v2249 = vunpack.c.h.b16 %v620
    %v2250 = vunpack.c.l.b16 %v621
    %v2251 = vunpack.c.h.b16 %v621
    %v2252 = vunpack.c.l.b16 %v622
    %v2253 = vunpack.c.h.b16 %v622
    %v2254 = vunpack.c.l.b16 %v623
    %v2255 = vunpack.c.h.b16 %v623
    %v2256 = vunpack.c.l.b16 %v624
    %v2257 = vunpack.c.h.b16 %v624
    %v2258 = vunpack.c.l.b16 %v625
    %v2259 = vunpack.c.h.b16 %v625
    %v2260 = vunpack.c.l.b16 %v626
    %v2261 = vunpack.c.h.b16 %v626
    %v2262 = vunpack.c.l.b16 %v627
    %v2263 = vunpack.c.h.b16 %v627
    %v2264 = vunpack.c.l.b16 %v628
    %v2265 = vunpack.c.h.b16 %v628
    %v2266 = vunpack.c.l.b16 %v629
    %v2267 = vunpack.c.h.b16 %v629
    %v2268 = vunpack.c.l.b16 %v630
    %v2269 = vunpack.c.h.b16 %v630
    %v2270 = vunpack.c.l.b16 %v631
    %v2271 = vunpack.c.h.b16 %v631
    %v2272 = vunpack.c.l.b16 %v632
    %v2273 = vunpack.c.h.b16 %v632
    %v2274 = vunpack.c.l.b16 %v633
    %v2275 = vunpack.c.h.b16 %v633
    %v2276 = vunpack.c.l.b16 %v634
    %v2277 = vunpack.c.h.b16 %v634
    %v2278 = vunpack.c.l.b16 %v635
    %v2279 = vunpack.c.h.b16 %v635
    %v2280 = vunpack.c.l.b16 %v636
    %v2281 = vunpack.c.h.b16 %v636
    %v2282 = vunpack.c.l.b16 %v637
    %v2283 = vunpack.c.h.b16 %v637
    %v2284 = vunpack.c.l.b16 %v638
    %v2285 = vunpack.c.h.b16 %v638
    %v2286 = vunpack.c.l.b16 %v639
    %v2287 = vunpack.c.h.b16 %v639
    %v2288 = vunpack.c.l.b16 %v640
    %v2289 = vunpack.c.h.b16 %v640
    %v2290 = vunpack.c.l.b16 %v641
    %v2291 = vunpack.c.h.b16 %v641
    %v2292 = vunpack.c.l.b16 %v642
    %v2293 = vunpack.c.h.b16 %v642
    %v2294 = vunpack.c.l.b16 %v643
    %v2295 = vunpack.c.h.b16 %v643
    %v2296 = vunpack.c.l.b16 %v644
    %v2297 = vunpack.c.h.b16 %v644
    %v2298 = vunpack.c.l.b16 %v645
    %v2299 = vunpack.c.h.b16 %v645
    %v2300 = vunpack.c.l.b16 %v646
    %v2301 = vunpack.c.h.b16 %v646
    %v2302 = vunpack.c.l.b16 %v647
    %v2303 = vunpack.c.h.b16 %v647
    %v2304 = vunpack.c.l.b16 %v648
    %v2305 = vunpack.c.h.b16 %v648
    %v2306 = vunpack.c.l.b16 %v649
    %v2307 = vunpack.c.h.b16 %v649
    %v2308 = vunpack.c.l.b16 %v650
    %v2309 = vunpack.c.h.b16 %v650
    %v2310 = vunpack.c.l.b16 %v651
    %v2311 = vunpack.c.h.b16 %v651
    %v2312 = vunpack.c.l.b16 %v652
    %v2313 = vunpack.c.h.b16 %v652
    %v2314 = vunpack.c.l.b16 %v653
    %v2315 = vunpack.c.h.b16 %v653
    %v2316 = vunpack.c.l.b16 %v654
    %v2317 = vunpack.c.h.b16 %v654
    %v2318 = vunpack.c.l.b16 %v655
    %v2319 = vunpack.c.h.b16 %v655
    %v2320 = vunpack.c.l.b16 %v656
    %v2321 = vunpack.c.h.b16 %v656
    %v2322 = vunpack.c.l.b16 %v657
    %v2323 = vunpack.c.h.b16 %v657
    %v2324 = vunpack.c.l.b16 %v658
    %v2325 = vunpack.c.h.b16 %v658
    %v2326 = vunpack.c.l.b16 %v659
    %v2327 = vunpack.c.h.b16 %v659
    %v2328 = vunpack.c.l.b16 %v660
    %v2329 = vunpack.c.h.b16 %v660
    %v2330 = vunpack.c.l.b16 %v661
    %v2331 = vunpack.c.h.b16 %v661
    %v2332 = vunpack.c.l.b16 %v662
    %v2333 = vunpack.c.h.b16 %v662
    %v2334 = vunpack.c.l.b16 %v663
    %v2335 = vunpack.c.h.b16 %v663
    %v2336 = vunpack.c.l.b16 %v664
    %v2337 = vunpack.c.h.b16 %v664
    %v2338 = vunpack.c.l.b16 %v665
    %v2339 = vunpack.c.h.b16 %v665
    %v2340 = vunpack.c.l.b16 %v666
    %v2341 = vunpack.c.h.b16 %v666
    %v2342 = vunpack.c.l.b16 %v667
    %v2343 = vunpack.c.h.b16 %v667
    %v2344 = vunpack.c.l.b16 %v668
    %v2345 = vunpack.c.h.b16 %v668
    %v2346 = vunpack.c.l.b16 %v669
    %v2347 = vunpack.c.h.b16 %v669
    %v2348 = vunpack.c.l.b16 %v670
    %v2349 = vunpack.c.h.b16 %v670
    %v2350 = vunpack.c.l.b16 %v671
    %v2351 = vunpack.c.h.b16 %v671
    %v2352 = vunpack.c.l.b16 %v672
    %v2353 = vunpack.c.h.b16 %v672
    %v2354 = vunpack.c.l.b16 %v673
    %v2355 = vunpack.c.h.b16 %v673
    %v2356 = vunpack.c.l.b16 %v674
    %v2357 = vunpack.c.h.b16 %v674
    %v2358 = vunpack.c.l.b16 %v675
    %v2359 = vunpack.c.h.b16 %v675
    %v2360 = vunpack.c.l.b16 %v676
    %v2361 = vunpack.c.h.b16 %v676
    %v2362 = vunpack.c.l.b16 %v677
    %v2363 = vunpack.c.h.b16 %v677
    %v2364 = vunpack.c.l.b16 %v678
    %v2365 = vunpack.c.h.b16 %v678
    %v2366 = vunpack.c.l.b16 %v679
    %v2367 = vunpack.c.h.b16 %v679
    %v2368 = vunpack.c.l.b16 %v680
    %v2369 = vunpack.c.h.b16 %v680
    %v2370 = vunpack.c.l.b16 %v681
    %v2371 = vunpack.c.h.b16 %v681
    %v2372 = vunpack.c.l.b16 %v682
    %v2373 = vunpack.c.h.b16 %v682
    %v2374 = vunpack.c.l.b16 %v683
    %v2375 = vunpack.c.h.b16 %v683
    %v2376 = vunpack.c.l.b16 %v684
    %v2377 = vunpack.c.h.b16 %v684
    %v2378 = vunpack.c.l.b16 %v685
    %v2379 = vunpack.c.h.b16 %v685
    %v2380 = vunpack.c.l.b16 %v686
    %v2381 = vunpack.c.h.b16 %v686
    %v2382 = vunpack.c.l.b16 %v687
    %v2383 = vunpack.c.h.b16 %v687
    %v2384 = vunpack.c.l.b16 %v688
    %v2385 = vunpack.c.h.b16 %v688
    %v2386 = vunpack.c.l.b16 %v689
    %v2387 = vunpack.c.h.b16 %v689
    %v2388 = vunpack.c.l.b16 %v690
    %v2389 = vunpack.c.h.b16 %v690
    %v2390 = vunpack.c.l.b16 %v691
    %v2391 = vunpack.c.h.b16 %v691
    %v2392 = vunpack.c.l.b16 %v692
    %v2393 = vunpack.c.h.b16 %v692
    %v2394 = vunpack.c.l.b16 %v693
    %v2395 = vunpack.c.h.b16 %v693
    %v2396 = vunpack.c.l.b16 %v694
    %v2397 = vunpack.c.h.b16 %v694
    %v2398 = vunpack.c.l.b16 %v695
    %v2399 = vunpack.c.h.b16 %v695
    %v2400 = vunpack.c.l.b16 %v696
    %v2401 = vunpack.c.h.b16 %v696
    %v2402 = vunpack.c.l.b16 %v697
    %v2403 = vunpack.c.h.b16 %v697
    %v2404 = vunpack.c.l.b16 %v698
    %v2405 = vunpack.c.h.b16 %v698
    %v2406 = vunpack.c.l.b16 %v699
    %v2407 = vunpack.c.h.b16 %v699
    %v2408 = vunpack.c.l.b16 %v700
    %v2409 = vunpack.c.h.b16 %v700
    %v2410 = vunpack.c.l.b16 %v701
    %v2411 = vunpack.c.h.b16 %v701
    %v2412 = vunpack.c.l.b16 %v702
    %v2413 = vunpack.c.h.b16 %v702
    %v2414 = vunpack.c.l.b16 %v703
    %v2415 = vunpack.c.h.b16 %v703
    %v2416 = vunpack.c.l.b16 %v704
    %v2417 = vunpack.c.h.b16 %v704
    %v2418 = vunpack.c.l.b16 %v705
    %v2419 = vunpack.c.h.b16 %v705
    %v2420 = vunpack.c.l.b16 %v706
    %v2421 = vunpack.c.h.b16 %v706
    %v2422 = vunpack.c.l.b16 %v707
    %v2423 = vunpack.c.h.b16 %v707
    %v2424 = vunpack.c.l.b16 %v708
    %v2425 = vunpack.c.h.b16 %v708
    %v2426 = vunpack.c.l.b16 %v709
    %v2427 = vunpack.c.h.b16 %v709
    %v2428 = vunpack.c.l.b16 %v710
    %v2429 = vunpack.c.h.b16 %v710
    %v2430 = vunpack.c.l.b16 %v711
    %v2431 = vunpack.c.h.b16 %v711
    %v2432 = vunpack.c.l.b16 %v712
    %v2433 = vunpack.c.h.b16 %v712
    %v2434 = vunpack.c.l.b16 %v713
    %v2435 = vunpack.c.h.b16 %v713
    %v2436 = vunpack.c.l.b16 %v714
    %v2437 = vunpack.c.h.b16 %v714
    %v2438 = vunpack.c.l.b16 %v715
    %v2439 = vunpack.c.h.b16 %v715
    %v2440 = vunpack.c.l.b16 %v716
    %v2441 = vunpack.c.h.b16 %v716
    %v2442 = vunpack.c.l.b16 %v717
    %v2443 = vunpack.c.h.b16 %v717
    %v2444 = vunpack.c.l.b16 %v718
    %v2445 = vunpack.c.h.b16 %v718
    %v2446 = vunpack.c.l.b16 %v719
    %v2447 = vunpack.c.h.b16 %v719
    %v2448 = vunpack.c.l.b16 %v720
    %v2449 = vunpack.c.h.b16 %v720
    %v2450 = vunpack.c.l.b16 %v721
    %v2451 = vunpack.c.h.b16 %v721
    %v2452 = vunpack.c.l.b16 %v722
    %v2453 = vunpack.c.h.b16 %v722
    %v2454 = vunpack.c.l.b16 %v723
    %v2455 = vunpack.c.h.b16 %v723
    %v2456 = vunpack.c.l.b16 %v724
    %v2457 = vunpack.c.h.b16 %v724
    %v2458 = vunpack.c.l.b16 %v725
    %v2459 = vunpack.c.h.b16 %v725
    %v2460 = vunpack.c.l.b16 %v726
    %v2461 = vunpack.c.h.b16 %v726
    %v2462 = vunpack.c.l.b16 %v727
    %v2463 = vunpack.c.h.b16 %v727
    %v2464 = vunpack.c.l.b16 %v728
    %v2465 = vunpack.c.h.b16 %v728
    %v2466 = vunpack.c.l.b16 %v729
    %v2467 = vunpack.c.h.b16 %v729
    %v2468 = vunpack.c.l.b16 %v730
    %v2469 = vunpack.c.h.b16 %v730
    %v2470 = vunpack.c.l.b16 %v731
    %v2471 = vunpack.c.h.b16 %v731
    %v2472 = vunpack.c.l.b16 %v732
    %v2473 = vunpack.c.h.b16 %v732
    %v2474 = vunpack.c.l.b16 %v733
    %v2475 = vunpack.c.h.b16 %v733
    %v2476 = vunpack.c.l.b16 %v734
    %v2477 = vunpack.c.h.b16 %v734
    %v2478 = vunpack.c.l.b16 %v735
    %v2479 = vunpack.c.h.b16 %v735
    %v2480 = vunpack.c.l.b16 %v736
    %v2481 = vunpack.c.h.b16 %v736
    %v2482 = vunpack.c.l.b16 %v737
    %v2483 = vunpack.c.h.b16 %v737
    %v2484 = vunpack.c.l.b16 %v738
    %v2485 = vunpack.c.h.b16 %v738
    %v2486 = vunpack.c.l.b16 %v739
    %v2487 = vunpack.c.h.b16 %v739
    %v2488 = vunpack.c.l.b16 %v740
    %v2489 = vunpack.c.h.b16 %v740
    %v2490 = vunpack.c.l.b16 %v741
    %v2491 = vunpack.c.h.b16 %v741
    %v2492 = vunpack.c.l.b16 %v742
    %v2493 = vunpack.c.h.b16 %v742
    %v2494 = vunpack.c.l.b16 %v743
    %v2495 = vunpack.c.h.b16 %v743
    %v2496 = vunpack.c.l.b16 %v744
    %v2497 = vunpack.c.h.b16 %v744
    %v2498 = vunpack.c.l.b16 %v745
    %v2499 = vunpack.c.h.b16 %v745
    %v2500 = vunpack.c.l.b16 %v746
    %v2501 = vunpack.c.h.b16 %v746
    %v2502 = vunpack.c.l.b16 %v747
    %v2503 = vunpack.c.h.b16 %v747
    %v2504 = vunpack.c.l.b16 %v748
    %v2505 = vunpack.c.h.b16 %v748
    %v2506 = vunpack.c.l.b16 %v749
    %v2507 = vunpack.c.h.b16 %v749
    %v2508 = vunpack.c.l.b16 %v750
    %v2509 = vunpack.c.h.b16 %v750
    %v2510 = vunpack.c.l.b16 %v751
    %v2511 = vunpack.c.h.b16 %v751
    %v2512 = vunpack.c.l.b16 %v752
    %v2513 = vunpack.c.h.b16 %v752
    %v2514 = vunpack.c.l.b16 %v753
    %v2515 = vunpack.c.h.b16 %v753
    %v2516 = vunpack.c.l.b16 %v754
    %v2517 = vunpack.c.h.b16 %v754
    %v2518 = vunpack.c.l.b16 %v755
    %v2519 = vunpack.c.h.b16 %v755
    %v2520 = vunpack.c.l.b16 %v756
    %v2521 = vunpack.c.h.b16 %v756
    %v2522 = vunpack.c.l.b16 %v757
    %v2523 = vunpack.c.h.b16 %v757
    %v2524 = vunpack.c.l.b16 %v758
    %v2525 = vunpack.c.h.b16 %v758
    %v2526 = vunpack.c.l.b16 %v759
    %v2527 = vunpack.c.h.b16 %v759
    %v2528 = vunpack.c.l.b16 %v760
    %v2529 = vunpack.c.h.b16 %v760
    %v2530 = vunpack.c.l.b16 %v761
    %v2531 = vunpack.c.h.b16 %v761
    %v2532 = vunpack.c.l.b16 %v762
    %v2533 = vunpack.c.h.b16 %v762
    %v2534 = vunpack.c.l.b16 %v763
    %v2535 = vunpack.c.h.b16 %v763
    %v2536 = vunpack.c.l.b16 %v764
    %v2537 = vunpack.c.h.b16 %v764
    %v2538 = vunpack.c.l.b16 %v765
    %v2539 = vunpack.c.h.b16 %v765
    %v2540 = vunpack.c.l.b16 %v766
    %v2541 = vunpack.c.h.b16 %v766
    %v2542 = vunpack.c.l.b16 %v767
    %v2543 = vunpack.c.h.b16 %v767
    %v2544 = vunpack.c.l.b16 %v768
    %v2545 = vunpack.c.h.b16 %v768
    %v2546 = vunpack.c.l.b16 %v769
    %v2547 = vunpack.c.h.b16 %v769
    %v2548 = vunpack.c.l.b16 %v770
    %v2549 = vunpack.c.h.b16 %v770
    %v2550 = vunpack.c.l.b16 %v771
    %v2551 = vunpack.c.h.b16 %v771
    %v2552 = vunpack.c.l.b16 %v772
    %v2553 = vunpack.c.h.b16 %v772
    %v2554 = vunpack.c.l.b16 %v773
    %v2555 = vunpack.c.h.b16 %v773
    %v2556 = vunpack.c.l.b16 %v774
    %v2557 = vunpack.c.h.b16 %v774
    %v2558 = vunpack.c.l.b16 %v775
    %v2559 = vunpack.c.h.b16 %v775
    %v2560 = vunpack.c.l.b16 %v776
    %v2561 = vunpack.c.h.b16 %v776
    %v2562 = vunpack.c.l.b16 %v777
    %v2563 = vunpack.c.h.b16 %v777
    %v2564 = vunpack.c.l.b16 %v778
    %v2565 = vunpack.c.h.b16 %v778
    %v2566 = vunpack.c.l.b16 %v779
    %v2567 = vunpack.c.h.b16 %v779
    %v2568 = vunpack.c.l.b16 %v780
    %v2569 = vunpack.c.h.b16 %v780
    %v2570 = vunpack.c.l.b16 %v781
    %v2571 = vunpack.c.h.b16 %v781
    %v2572 = vunpack.c.l.b16 %v782
    %v2573 = vunpack.c.h.b16 %v782
    %v2574 = vunpack.c.l.b16 %v783
    %v2575 = vunpack.c.h.b16 %v783
    %v2576 = vunpack.c.l.b16 %v784
    %v2577 = vunpack.c.h.b16 %v784
    %v2578 = vunpack.c.l.b16 %v785
    %v2579 = vunpack.c.h.b16 %v785
    %v2580 = vunpack.c.l.b16 %v786
    %v2581 = vunpack.c.h.b16 %v786
    %v2582 = vunpack.c.l.b16 %v787
    %v2583 = vunpack.c.h.b16 %v787
    %v2584 = vunpack.c.l.b16 %v788
    %v2585 = vunpack.c.h.b16 %v788
    %v2586 = vunpack.c.l.b16 %v789
    %v2587 = vunpack.c.h.b16 %v789
    %v2588 = vunpack.c.l.b16 %v790
    %v2589 = vunpack.c.h.b16 %v790
    %v2590 = vunpack.c.l.b16 %v791
    %v2591 = vunpack.c.h.b16 %v791
    %v2592 = vunpack.c.l.b16 %v792
    %v2593 = vunpack.c.h.b16 %v792
    %v2594 = vunpack.c.l.b16 %v793
    %v2595 = vunpack.c.h.b16 %v793
    %v2596 = vpack.c.b16 %v1450, %v1444
    %v2597 = vpack.c.b16 %v1451, %v1445
    %v2598 = vpack.c.b16 %v1452, %v1446
    %v2599 = vpack.c.b16 %v1453, %v1447
    %v2600 = vpack.c.b16 %v1454, %v1448
    %v2601 = vpack.c.b16 %v1455, %v1449
    %v2602 = vpack.c.b16 %v1462, %v1456
    %v2603 = vpack.c.b16 %v1463, %v1457
    %v2604 = vpack.c.b16 %v1464, %v1458
    %v2605 = vpack.c.b16 %v1465, %v1459
    %v2606 = vpack.c.b16 %v1466, %v1460
    %v2607 = vpack.c.b16 %v1467, %v1461
    %v2608 = vpack.c.b16 %v1474, %v1468
    %v2609 = vpack.c.b16 %v1475, %v1469
    %v2610 = vpack.c.b16 %v1476, %v1470
    %v2611 = vpack.c.b16 %v1477, %v1471
    %v2612 = vpack.c.b16 %v1478, %v1472
    %v2613 = vpack.c.b16 %v1479, %v1473
    %v2614 = vpack.c.b16 %v1486, %v1480
    %v2615 = vpack.c.b16 %v1487, %v1481
    %v2616 = vpack.c.b16 %v1488, %v1482
    %v2617 = vpack.c.b16 %v1489, %v1483
    %v2618 = vpack.c.b16 %v1490, %v1484
    %v2619 = vpack.c.b16 %v1491, %v1485
    %v2620 = vpack.c.b16 %v1498, %v1492
    %v2621 = vpack.c.b16 %v1499, %v1493
    %v2622 = vpack.c.b16 %v1500, %v1494
    %v2623 = vpack.c.b16 %v1501, %v1495
    %v2624 = vpack.c.b16 %v1502, %v1496
    %v2625 = vpack.c.b16 %v1503, %v1497
    %v2626 = vpack.c.b16 %v1510, %v1504
    %v2627 = vpack.c.b16 %v1511, %v1505
    %v2628 = vpack.c.b16 %v1512, %v1506
    %v2629 = vpack.c.b16 %v1513, %v1507
    %v2630 = vpack.c.b16 %v1514, %v1508
    %v2631 = vpack.c.b16 %v1515, %v1509
    %v2632 = vpack.c.b16 %v1522, %v1516
    %v2633 = vpack.c.b16 %v1523, %v1517
    %v2634 = vpack.c.b16 %v1524, %v1518
    %v2635 = vpack.c.b16 %v1525, %v1519
    %v2636 = vpack.c.b16 %v1526, %v1520
    %v2637 = vpack.c.b16 %v1527, %v1521
    %v2638 = vpack.c.b16 %v1534, %v1528
    %v2639 = vpack.c.b16 %v1535, %v1529
    %v2640 = vpack.c.b16 %v1536, %v1530
    %v2641 = vpack.c.b16 %v1537, %v1531
    %v2642 = vpack.c.b16 %v1538, %v1532
    %v2643 = vpack.c.b16 %v1539, %v1533
    %v2644 = vpack.c.b16 %v1546, %v1540
    %v2645 = vpack.c.b16 %v1547, %v1541
    %v2646 = vpack.c.b16 %v1548, %v1542
    %v2647 = vpack.c.b16 %v1549, %v1543
    %v2648 = vpack.c.b16 %v1550, %v1544
    %v2649 = vpack.c.b16 %v1551, %v1545
    %v2650 = vpack.c.b16 %v1558, %v1552
    %v2651 = vpack.c.b16 %v1559, %v1553
    %v2652 = vpack.c.b16 %v1560, %v1554
    %v2653 = vpack.c.b16 %v1561, %v1555
    %v2654 = vpack.c.b16 %v1562, %v1556
    %v2655 = vpack.c.b16 %v1563, %v1557
    %v2656 = vpack.c.b16 %v1570, %v1564
    %v2657 = vpack.c.b16 %v1571, %v1565
    %v2658 = vpack.c.b16 %v1572, %v1566
    %v2659 = vpack.c.b16 %v1573, %v1567
    %v2660 = vpack.c.b16 %v1574, %v1568
    %v2661 = vpack.c.b16 %v1575, %v1569
    %v2662 = vpack.c.b16 %v1582, %v1576
    %v2663 = vpack.c.b16 %v1583, %v1577
    %v2664 = vpack.c.b16 %v1584, %v1578
    %v2665 = vpack.c.b16 %v1585, %v1579
    %v2666 = vpack.c.b16 %v1586, %v1580
    %v2667 = vpack.c.b16 %v1587, %v1581
    %v2668 = vpack.c.b16 %v1594, %v1588
    %v2669 = vpack.c.b16 %v1595, %v1589
    %v2670 = vpack.c.b16 %v1596, %v1590
    %v2671 = vpack.c.b16 %v1597, %v1591
    %v2672 = vpack.c.b16 %v1598, %v1592
    %v2673 = vpack.c.b16 %v1599, %v1593
    %v2674 = vpack.c.b16 %v1606, %v1600
    %v2675 = vpack.c.b16 %v1607, %v1601
    %v2676 = vpack.c.b16 %v1608, %v1602
    %v2677 = vpack.c.b16 %v1609, %v1603
    %v2678 = vpack.c.b16 %v1610, %v1604
    %v2679 = vpack.c.b16 %v1611, %v1605
    %v2680 = vpack.c.b16 %v1618, %v1612
    %v2681 = vpack.c.b16 %v1619, %v1613
    %v2682 = vpack.c.b16 %v1620, %v1614
    %v2683 = vpack.c.b16 %v1621, %v1615
    %v2684 = vpack.c.b16 %v1622, %v1616
    %v2685 = vpack.c.b16 %v1623, %v1617
    %v2686 = vpack.c.b16 %v1630, %v1624
    %v2687 = vpack.c.b16 %v1631, %v1625
    %v2688 = vpack.c.b16 %v1632, %v1626
    %v2689 = vpack.c.b16 %v1633, %v1627
    %v2690 = vpack.c.b16 %v1634, %v1628
    %v2691 = vpack.c.b16 %v1635, %v1629
    %v2692 = vpack.c.b16 %v1642, %v1636
    %v2693 = vpack.c.b16 %v1643, %v1637
    %v2694 = vpack.c.b16 %v1644, %v1638
    %v2695 = vpack.c.b16 %v1645, %v1639
    %v2696 = vpack.c.b16 %v1646, %v1640
    %v2697 = vpack.c.b16 %v1647, %v1641
    %v2698 = vpack.c.b16 %v1654, %v1648
    %v2699 = vpack.c.b16 %v1655, %v1649
    %v2700 = vpack.c.b16 %v1656, %v1650
    %v2701 = vpack.c.b16 %v1657, %v1651
    %v2702 = vpack.c.b16 %v1658, %v1652
    %v2703 = vpack.c.b16 %v1659, %v1653
    %v2704 = vpack.c.b16 %v1666, %v1660
    %v2705 = vpack.c.b16 %v1667, %v1661
    %v2706 = vpack.c.b16 %v1668, %v1662
    %v2707 = vpack.c.b16 %v1669, %v1663
    %v2708 = vpack.c.b16 %v1670, %v1664
    %v2709 = vpack.c.b16 %v1671, %v1665
    %v2710 = vpack.c.b16 %v1678, %v1672
    %v2711 = vpack.c.b16 %v1679, %v1673
    %v2712 = vpack.c.b16 %v1680, %v1674
    %v2713 = vpack.c.b16 %v1681, %v1675
    %v2714 = vpack.c.b16 %v1682, %v1676
    %v2715 = vpack.c.b16 %v1683, %v1677
    %v2716 = vpack.c.b16 %v1690, %v1684
    %v2717 = vpack.c.b16 %v1691, %v1685
    %v2718 = vpack.c.b16 %v1692, %v1686
    %v2719 = vpack.c.b16 %v1693, %v1687
    %v2720 = vpack.c.b16 %v1694, %v1688
    %v2721 = vpack.c.b16 %v1695, %v1689
    %v2722 = vpack.c.b16 %v1702, %v1696
    %v2723 = vpack.c.b16 %v1703, %v1697
    %v2724 = vpack.c.b16 %v1704, %v1698
    %v2725 = vpack.c.b16 %v1705, %v1699
    %v2726 = vpack.c.b16 %v1706, %v1700
    %v2727 = vpack.c.b16 %v1707, %v1701
    %v2728 = vpack.c.b16 %v1714, %v1708
    %v2729 = vpack.c.b16 %v1715, %v1709
    %v2730 = vpack.c.b16 %v1716, %v1710
    %v2731 = vpack.c.b16 %v1717, %v1711
    %v2732 = vpack.c.b16 %v1718, %v1712
    %v2733 = vpack.c.b16 %v1719, %v1713
    %v2734 = vpack.c.b16 %v1726, %v1720
    %v2735 = vpack.c.b16 %v1727, %v1721
    %v2736 = vpack.c.b16 %v1728, %v1722
    %v2737 = vpack.c.b16 %v1729, %v1723
    %v2738 = vpack.c.b16 %v1730, %v1724
    %v2739 = vpack.c.b16 %v1731, %v1725
    %v2740 = vpack.c.b16 %v1738, %v1732
    %v2741 = vpack.c.b16 %v1739, %v1733
    %v2742 = vpack.c.b16 %v1740, %v1734
    %v2743 = vpack.c.b16 %v1741, %v1735
    %v2744 = vpack.c.b16 %v1742, %v1736
    %v2745 = vpack.c.b16 %v1743, %v1737
    %v2746 = vpack.c.b16 %v1750, %v1744
    %v2747 = vpack.c.b16 %v1751, %v1745
    %v2748 = vpack.c.b16 %v1752, %v1746
    %v2749 = vpack.c.b16 %v1753, %v1747
    %v2750 = vpack.c.b16 %v1754, %v1748
    %v2751 = vpack.c.b16 %v1755, %v1749
    %v2752 = vpack.c.b16 %v1762, %v1756
    %v2753 = vpack.c.b16 %v1763, %v1757
    %v2754 = vpack.c.b16 %v1764, %v1758
    %v2755 = vpack.c.b16 %v1765, %v1759
    %v2756 = vpack.c.b16 %v1766, %v1760
    %v2757 = vpack.c.b16 %v1767, %v1761
    %v2758 = vpack.c.b16 %v1774, %v1768
    %v2759 = vpack.c.b16 %v1775, %v1769
    %v2760 = vpack.c.b16 %v1776, %v1770
    %v2761 = vpack.c.b16 %v1777, %v1771
    %v2762 = vpack.c.b16 %v1778, %v1772
    %v2763 = vpack.c.b16 %v1779, %v1773
    %v2764 = vpack.c.b16 %v1786, %v1780
    %v2765 = vpack.c.b16 %v1787, %v1781
    %v2766 = vpack.c.b16 %v1788, %v1782
    %v2767 = vpack.c.b16 %v1789, %v1783
    %v2768 = vpack.c.b16 %v1790, %v1784
    %v2769 = vpack.c.b16 %v1791, %v1785
    %v2770 = vpack.c.b16 %v1798, %v1792
    %v2771 = vpack.c.b16 %v1799, %v1793
    %v2772 = vpack.c.b16 %v1800, %v1794
    %v2773 = vpack.c.b16 %v1801, %v1795
    %v2774 = vpack.c.b16 %v1802, %v1796
    %v2775 = vpack.c.b16 %v1803, %v1797
    %v2776 = vpack.c.b16 %v1810, %v1804
    %v2777 = vpack.c.b16 %v1811, %v1805
    %v2778 = vpack.c.b16 %v1812, %v1806
    %v2779 = vpack.c.b16 %v1813, %v1807
    %v2780 = vpack.c.b16 %v1814, %v1808
    %v2781 = vpack.c.b16 %v1815, %v1809
    %v2782 = vpack.c.b16 %v1822, %v1816
    %v2783 = vpack.c.b16 %v1823, %v1817
    %v2784 = vpack.c.b16 %v1824, %v1818
    %v2785 = vpack.c.b16 %v1825, %v1819
    %v2786 = vpack.c.b16 %v1826, %v1820
    %v2787 = vpack.c.b16 %v1827, %v1821
    %v2788 = vpack.c.b16 %v1834, %v1828
    %v2789 = vpack.c.b16 %v1835, %v1829
    %v2790 = vpack.c.b16 %v1836, %v1830
    %v2791 = vpack.c.b16 %v1837, %v1831
    %v2792 = vpack.c.b16 %v1838, %v1832
    %v2793 = vpack.c.b16 %v1839, %v1833
    %v2794 = vpack.c.b16 %v1846, %v1840
    %v2795 = vpack.c.b16 %v1847, %v1841
    %v2796 = vpack.c.b16 %v1848, %v1842
    %v2797 = vpack.c.b16 %v1849, %v1843
    %v2798 = vpack.c.b16 %v1850, %v1844
    %v2799 = vpack.c.b16 %v1851, %v1845
    %v2800 = vpack.c.b16 %v1858, %v1852
    %v2801 = vpack.c.b16 %v1859, %v1853
    %v2802 = vpack.c.b16 %v1860, %v1854
    %v2803 = vpack.c.b16 %v1861, %v1855
    %v2804 = vpack.c.b16 %v1862, %v1856
    %v2805 = vpack.c.b16 %v1863, %v1857
    %v2806 = vpack.c.b16 %v1870, %v1864
    %v2807 = vpack.c.b16 %v1871, %v1865
    %v2808 = vpack.c.b16 %v1872, %v1866
    %v2809 = vpack.c.b16 %v1873, %v1867
    %v2810 = vpack.c.b16 %v1874, %v1868
    %v2811 = vpack.c.b16 %v1875, %v1869
    %v2812 = vpack.c.b16 %v1882, %v1876
    %v2813 = vpack.c.b16 %v1883, %v1877
    %v2814 = vpack.c.b16 %v1884, %v1878
    %v2815 = vpack.c.b16 %v1885, %v1879
    %v2816 = vpack.c.b16 %v1886, %v1880
    %v2817 = vpack.c.b16 %v1887, %v1881
    %v2818 = vpack.c.b16 %v1894, %v1888
    %v2819 = vpack.c.b16 %v1895, %v1889
    %v2820 = vpack.c.b16 %v1896, %v1890
    %v2821 = vpack.c.b16 %v1897, %v1891
    %v2822 = vpack.c.b16 %v1898, %v1892
    %v2823 = vpack.c.b16 %v1899, %v1893
    %v2824 = vpack.c.b16 %v1906, %v1900
    %v2825 = vpack.c.b16 %v1907, %v1901
    %v2826 = vpack.c.b16 %v1908, %v1902
    %v2827 = vpack.c.b16 %v1909, %v1903
    %v2828 = vpack.c.b16 %v1910, %v1904
    %v2829 = vpack.c.b16 %v1911, %v1905
    %v2830 = vpack.c.b16 %v1918, %v1912
    %v2831 = vpack.c.b16 %v1919, %v1913
    %v2832 = vpack.c.b16 %v1920, %v1914
    %v2833 = vpack.c.b16 %v1921, %v1915
    %v2834 = vpack.c.b16 %v1922, %v1916
    %v2835 = vpack.c.b16 %v1923, %v1917
    %v2836 = vpack.c.b16 %v1930, %v1924
    %v2837 = vpack.c.b16 %v1931, %v1925
    %v2838 = vpack.c.b16 %v1932, %v1926
    %v2839 = vpack.c.b16 %v1933, %v1927
    %v2840 = vpack.c.b16 %v1934, %v1928
    %v2841 = vpack.c.b16 %v1935, %v1929
    %v2842 = vpack.c.b16 %v1942, %v1936
    %v2843 = vpack.c.b16 %v1943, %v1937
    %v2844 = vpack.c.b16 %v1944, %v1938
    %v2845 = vpack.c.b16 %v1945, %v1939
    %v2846 = vpack.c.b16 %v1946, %v1940
    %v2847 = vpack.c.b16 %v1947, %v1941
    %v2848 = vpack.c.b16 %v1954, %v1948
    %v2849 = vpack.c.b16 %v1955, %v1949
    %v2850 = vpack.c.b16 %v1956, %v1950
    %v2851 = vpack.c.b16 %v1957, %v1951
    %v2852 = vpack.c.b16 %v1958, %v1952
    %v2853 = vpack.c.b16 %v1959, %v1953
    %v2854 = vpack.c.b16 %v1966, %v1960
    %v2855 = vpack.c.b16 %v1967, %v1961
    %v2856 = vpack.c.b16 %v1968, %v1962
    %v2857 = vpack.c.b16 %v1969, %v1963
    %v2858 = vpack.c.b16 %v1970, %v1964
    %v2859 = vpack.c.b16 %v1971, %v1965
    %v2860 = vpack.c.b16 %v1978, %v1972
    %v2861 = vpack.c.b16 %v1979, %v1973
    %v2862 = vpack.c.b16 %v1980, %v1974
    %v2863 = vpack.c.b16 %v1981, %v1975
    %v2864 = vpack.c.b16 %v1982, %v1976
    %v2865 = vpack.c.b16 %v1983, %v1977
    %v2866 = vpack.c.b16 %v1990, %v1984
    %v2867 = vpack.c.b16 %v1991, %v1985
    %v2868 = vpack.c.b16 %v1992, %v1986
    %v2869 = vpack.c.b16 %v1993, %v1987
    %v2870 = vpack.c.b16 %v1994, %v1988
    %v2871 = vpack.c.b16 %v1995, %v1989
    %v2872 = vpack.c.b16 %v2002, %v1996
    %v2873 = vpack.c.b16 %v2003, %v1997
    %v2874 = vpack.c.b16 %v2004, %v1998
    %v2875 = vpack.c.b16 %v2005, %v1999
    %v2876 = vpack.c.b16 %v2006, %v2000
    %v2877 = vpack.c.b16 %v2007, %v2001
    %v2878 = vpack.c.b16 %v2014, %v2008
    %v2879 = vpack.c.b16 %v2015, %v2009
    %v2880 = vpack.c.b16 %v2016, %v2010
    %v2881 = vpack.c.b16 %v2017, %v2011
    %v2882 = vpack.c.b16 %v2018, %v2012
    %v2883 = vpack.c.b16 %v2019, %v2013
    %v2884 = vpack.c.b16 %v2026, %v2020
    %v2885 = vpack.c.b16 %v2027, %v2021
    %v2886 = vpack.c.b16 %v2028, %v2022
    %v2887 = vpack.c.b16 %v2029, %v2023
    %v2888 = vpack.c.b16 %v2030, %v2024
    %v2889 = vpack.c.b16 %v2031, %v2025
    %v2890 = vpack.c.b16 %v2038, %v2032
    %v2891 = vpack.c.b16 %v2039, %v2033
    %v2892 = vpack.c.b16 %v2040, %v2034
    %v2893 = vpack.c.b16 %v2041, %v2035
    %v2894 = vpack.c.b16 %v2042, %v2036
    %v2895 = vpack.c.b16 %v2043, %v2037
    %v2896 = vpack.c.b16 %v2050, %v2044
    %v2897 = vpack.c.b16 %v2051, %v2045
    %v2898 = vpack.c.b16 %v2052, %v2046
    %v2899 = vpack.c.b16 %v2053, %v2047
    %v2900 = vpack.c.b16 %v2054, %v2048
    %v2901 = vpack.c.b16 %v2055, %v2049
    %v2902 = vpack.c.b16 %v2062, %v2056
    %v2903 = vpack.c.b16 %v2063, %v2057
    %v2904 = vpack.c.b16 %v2064, %v2058
    %v2905 = vpack.c.b16 %v2065, %v2059
    %v2906 = vpack.c.b16 %v2066, %v2060
    %v2907 = vpack.c.b16 %v2067, %v2061
    %v2908 = vpack.c.b16 %v2074, %v2068
    %v2909 = vpack.c.b16 %v2075, %v2069
    %v2910 = vpack.c.b16 %v2076, %v2070
    %v2911 = vpack.c.b16 %v2077, %v2071
    %v2912 = vpack.c.b16 %v2078, %v2072
    %v2913 = vpack.c.b16 %v2079, %v2073
    %v2914 = vpack.c.b16 %v2086, %v2080
    %v2915 = vpack.c.b16 %v2087, %v2081
    %v2916 = vpack.c.b16 %v2088, %v2082
    %v2917 = vpack.c.b16 %v2089, %v2083
    %v2918 = vpack.c.b16 %v2090, %v2084
    %v2919 = vpack.c.b16 %v2091, %v2085
    %v2920 = vpack.c.b16 %v2098, %v2092
    %v2921 = vpack.c.b16 %v2099, %v2093
    %v2922 = vpack.c.b16 %v2100, %v2094
    %v2923 = vpack.c.b16 %v2101, %v2095
    %v2924 = vpack.c.b16 %v2102, %v2096
    %v2925 = vpack.c.b16 %v2103, %v2097
    %v2926 = vpack.c.b16 %v2110, %v2104
    %v2927 = vpack.c.b16 %v2111, %v2105
    %v2928 = vpack.c.b16 %v2112, %v2106
    %v2929 = vpack.c.b16 %v2113, %v2107
    %v2930 = vpack.c.b16 %v2114, %v2108
    %v2931 = vpack.c.b16 %v2115, %v2109
    %v2932 = vpack.c.b16 %v2122, %v2116
    %v2933 = vpack.c.b16 %v2123, %v2117
    %v2934 = vpack.c.b16 %v2124, %v2118
    %v2935 = vpack.c.b16 %v2125, %v2119
    %v2936 = vpack.c.b16 %v2126, %v2120
    %v2937 = vpack.c.b16 %v2127, %v2121
    %v2938 = vpack.c.b16 %v2134, %v2128
    %v2939 = vpack.c.b16 %v2135, %v2129
    %v2940 = vpack.c.b16 %v2136, %v2130
    %v2941 = vpack.c.b16 %v2137, %v2131
    %v2942 = vpack.c.b16 %v2138, %v2132
    %v2943 = vpack.c.b16 %v2139, %v2133
    %v2944 = vpack.c.b16 %v2146, %v2140
    %v2945 = vpack.c.b16 %v2147, %v2141
    %v2946 = vpack.c.b16 %v2148, %v2142
    %v2947 = vpack.c.b16 %v2149, %v2143
    %v2948 = vpack.c.b16 %v2150, %v2144
    %v2949 = vpack.c.b16 %v2151, %v2145
    %v2950 = vpack.c.b16 %v2158, %v2152
    %v2951 = vpack.c.b16 %v2159, %v2153
    %v2952 = vpack.c.b16 %v2160, %v2154
    %v2953 = vpack.c.b16 %v2161, %v2155
    %v2954 = vpack.c.b16 %v2162, %v2156
    %v2955 = vpack.c.b16 %v2163, %v2157
    %v2956 = vpack.c.b16 %v2170, %v2164
    %v2957 = vpack.c.b16 %v2171, %v2165
    %v2958 = vpack.c.b16 %v2172, %v2166
    %v2959 = vpack.c.b16 %v2173, %v2167
    %v2960 = vpack.c.b16 %v2174, %v2168
    %v2961 = vpack.c.b16 %v2175, %v2169
    %v2962 = vpack.c.b16 %v2182, %v2176
    %v2963 = vpack.c.b16 %v2183, %v2177
    %v2964 = vpack.c.b16 %v2184, %v2178
    %v2965 = vpack.c.b16 %v2185, %v2179
    %v2966 = vpack.c.b16 %v2186, %v2180
    %v2967 = vpack.c.b16 %v2187, %v2181
    %v2968 = vpack.c.b16 %v2194, %v2188
    %v2969 = vpack.c.b16 %v2195, %v2189
    %v2970 = vpack.c.b16 %v2196, %v2190
    %v2971 = vpack.c.b16 %v2197, %v2191
    %v2972 = vpack.c.b16 %v2198, %v2192
    %v2973 = vpack.c.b16 %v2199, %v2193
    %v2974 = vpack.c.b16 %v2206, %v2200
    %v2975 = vpack.c.b16 %v2207, %v2201
    %v2976 = vpack.c.b16 %v2208, %v2202
    %v2977 = vpack.c.b16 %v2209, %v2203
    %v2978 = vpack.c.b16 %v2210, %v2204
    %v2979 = vpack.c.b16 %v2211, %v2205
    %v2980 = vpack.c.b16 %v2218, %v2212
    %v2981 = vpack.c.b16 %v2219, %v2213
    %v2982 = vpack.c.b16 %v2220, %v2214
    %v2983 = vpack.c.b16 %v2221, %v2215
    %v2984 = vpack.c.b16 %v2222, %v2216
    %v2985 = vpack.c.b16 %v2223, %v2217
    %v2986 = vpack.c.b16 %v2230, %v2224
    %v2987 = vpack.c.b16 %v2231, %v2225
    %v2988 = vpack.c.b16 %v2232, %v2226
    %v2989 = vpack.c.b16 %v2233, %v2227
    %v2990 = vpack.c.b16 %v2234, %v2228
    %v2991 = vpack.c.b16 %v2235, %v2229
    %v2992 = vpack.c.b16 %v2242, %v2236
    %v2993 = vpack.c.b16 %v2243, %v2237
    %v2994 = vpack.c.b16 %v2244, %v2238
    %v2995 = vpack.c.b16 %v2245, %v2239
    %v2996 = vpack.c.b16 %v2246, %v2240
    %v2997 = vpack.c.b16 %v2247, %v2241
    %v2998 = vpack.c.b16 %v2254, %v2248
    %v2999 = vpack.c.b16 %v2255, %v2249
    %v3000 = vpack.c.b16 %v2256, %v2250
    %v3001 = vpack.c.b16 %v2257, %v2251
    %v3002 = vpack.c.b16 %v2258, %v2252
    %v3003 = vpack.c.b16 %v2259, %v2253
    %v3004 = vpack.c.b16 %v2266, %v2260
    %v3005 = vpack.c.b16 %v2267, %v2261
    %v3006 = vpack.c.b16 %v2268, %v2262
    %v3007 = vpack.c.b16 %v2269, %v2263
    %v3008 = vpack.c.b16 %v2270, %v2264
    %v3009 = vpack.c.b16 %v2271, %v2265
    %v3010 = vpack.c.b16 %v2278, %v2272
    %v3011 = vpack.c.b16 %v2279, %v2273
    %v3012 = vpack.c.b16 %v2280, %v2274
    %v3013 = vpack.c.b16 %v2281, %v2275
    %v3014 = vpack.c.b16 %v2282, %v2276
    %v3015 = vpack.c.b16 %v2283, %v2277
    %v3016 = vpack.c.b16 %v2290, %v2284
    %v3017 = vpack.c.b16 %v2291, %v2285
    %v3018 = vpack.c.b16 %v2292, %v2286
    %v3019 = vpack.c.b16 %v2293, %v2287
    %v3020 = vpack.c.b16 %v2294, %v2288
    %v3021 = vpack.c.b16 %v2295, %v2289
    %v3022 = vpack.c.b16 %v2302, %v2296
    %v3023 = vpack.c.b16 %v2303, %v2297
    %v3024 = vpack.c.b16 %v2304, %v2298
    %v3025 = vpack.c.b16 %v2305, %v2299
    %v3026 = vpack.c.b16 %v2306, %v2300
    %v3027 = vpack.c.b16 %v2307, %v2301
    %v3028 = vpack.c.b16 %v2314, %v2308
    %v3029 = vpack.c.b16 %v2315, %v2309
    %v3030 = vpack.c.b16 %v2316, %v2310
    %v3031 = vpack.c.b16 %v2317, %v2311
    %v3032 = vpack.c.b16 %v2318, %v2312
    %v3033 = vpack.c.b16 %v2319, %v2313
    %v3034 = vpack.c.b16 %v2326, %v2320
    %v3035 = vpack.c.b16 %v2327, %v2321
    %v3036 = vpack.c.b16 %v2328, %v2322
    %v3037 = vpack.c.b16 %v2329, %v2323
    %v3038 = vpack.c.b16 %v2330, %v2324
    %v3039 = vpack.c.b16 %v2331, %v2325
    %v3040 = vpack.c.b16 %v2338, %v2332
    %v3041 = vpack.c.b16 %v2339, %v2333
    %v3042 = vpack.c.b16 %v2340, %v2334
    %v3043 = vpack.c.b16 %v2341, %v2335
    %v3044 = vpack.c.b16 %v2342, %v2336
    %v3045 = vpack.c.b16 %v2343, %v2337
    %v3046 = vpack.c.b16 %v2350, %v2344
    %v3047 = vpack.c.b16 %v2351, %v2345
    %v3048 = vpack.c.b16 %v2352, %v2346
    %v3049 = vpack.c.b16 %v2353, %v2347
    %v3050 = vpack.c.b16 %v2354, %v2348
    %v3051 = vpack.c.b16 %v2355, %v2349
    %v3052 = vpack.c.b16 %v2362, %v2356
    %v3053 = vpack.c.b16 %v2363, %v2357
    %v3054 = vpack.c.b16 %v2364, %v2358
    %v3055 = vpack.c.b16 %v2365, %v2359
    %v3056 = vpack.c.b16 %v2366, %v2360
    %v3057 = vpack.c.b16 %v2367, %v2361
    %v3058 = vpack.c.b16 %v2374, %v2368
    %v3059 = vpack.c.b16 %v2375, %v2369
    %v3060 = vpack.c.b16 %v2376, %v2370
    %v3061 = vpack.c.b16 %v2377, %v2371
    %v3062 = vpack.c.b16 %v2378, %v2372
    %v3063 = vpack.c.b16 %v2379, %v2373
    %v3064 = vpack.c.b16 %v2386, %v2380
    %v3065 = vpack.c.b16 %v2387, %v2381
    %v3066 = vpack.c.b16 %v2388, %v2382
    %v3067 = vpack.c.b16 %v2389, %v2383
    %v3068 = vpack.c.b16 %v2390, %v2384
    %v3069 = vpack.c.b16 %v2391, %v2385
    %v3070 = vpack.c.b16 %v2398, %v2392
    %v3071 = vpack.c.b16 %v2399, %v2393
    %v3072 = vpack.c.b16 %v2400, %v2394
    %v3073 = vpack.c.b16 %v2401, %v2395
    %v3074 = vpack.c.b16 %v2402, %v2396
    %v3075 = vpack.c.b16 %v2403, %v2397
    %v3076 = vpack.c.b16 %v2410, %v2404
    %v3077 = vpack.c.b16 %v2411, %v2405
    %v3078 = vpack.c.b16 %v2412, %v2406
    %v3079 = vpack.c.b16 %v2413, %v2407
    %v3080 = vpack.c.b16 %v2414, %v2408
    %v3081 = vpack.c.b16 %v2415, %v2409
    %v3082 = vpack.c.b16 %v2422, %v2416
    %v3083 = vpack.c.b16 %v2423, %v2417
    %v3084 = vpack.c.b16 %v2424, %v2418
    %v3085 = vpack.c.b16 %v2425, %v2419
    %v3086 = vpack.c.b16 %v2426, %v2420
    %v3087 = vpack.c.b16 %v2427, %v2421
    %v3088 = vpack.c.b16 %v2434, %v2428
    %v3089 = vpack.c.b16 %v2435, %v2429
    %v3090 = vpack.c.b16 %v2436, %v2430
    %v3091 = vpack.c.b16 %v2437, %v2431
    %v3092 = vpack.c.b16 %v2438, %v2432
    %v3093 = vpack.c.b16 %v2439, %v2433
    %v3094 = vpack.c.b16 %v2446, %v2440
    %v3095 = vpack.c.b16 %v2447, %v2441
    %v3096 = vpack.c.b16 %v2448, %v2442
    %v3097 = vpack.c.b16 %v2449, %v2443
    %v3098 = vpack.c.b16 %v2450, %v2444
    %v3099 = vpack.c.b16 %v2451, %v2445
    %v3100 = vpack.c.b16 %v2458, %v2452
    %v3101 = vpack.c.b16 %v2459, %v2453
    %v3102 = vpack.c.b16 %v2460, %v2454
    %v3103 = vpack.c.b16 %v2461, %v2455
    %v3104 = vpack.c.b16 %v2462, %v2456
    %v3105 = vpack.c.b16 %v2463, %v2457
    %v3106 = vpack.c.b16 %v2470, %v2464
    %v3107 = vpack.c.b16 %v2471, %v2465
    %v3108 = vpack.c.b16 %v2472, %v2466
    %v3109 = vpack.c.b16 %v2473, %v2467
    %v3110 = vpack.c.b16 %v2474, %v2468
    %v3111 = vpack.c.b16 %v2475, %v2469
    %v3112 = vpack.c.b16 %v2482, %v2476
    %v3113 = vpack.c.b16 %v2483, %v2477
    %v3114 = vpack.c.b16 %v2484, %v2478
    %v3115 = vpack.c.b16 %v2485, %v2479
    %v3116 = vpack.c.b16 %v2486, %v2480
    %v3117 = vpack.c.b16 %v2487, %v2481
    %v3118 = vpack.c.b16 %v2494, %v2488
    %v3119 = vpack.c.b16 %v2495, %v2489
    %v3120 = vpack.c.b16 %v2496, %v2490
    %v3121 = vpack.c.b16 %v2497, %v2491
    %v3122 = vpack.c.b16 %v2498, %v2492
    %v3123 = vpack.c.b16 %v2499, %v2493
    %v3124 = vpack.c.b16 %v2506, %v2500
    %v3125 = vpack.c.b16 %v2507, %v2501
    %v3126 = vpack.c.b16 %v2508, %v2502
    %v3127 = vpack.c.b16 %v2509, %v2503
    %v3128 = vpack.c.b16 %v2510, %v2504
    %v3129 = vpack.c.b16 %v2511, %v2505
    %v3130 = vpack.c.b16 %v2518, %v2512
    %v3131 = vpack.c.b16 %v2519, %v2513
    %v3132 = vpack.c.b16 %v2520, %v2514
    %v3133 = vpack.c.b16 %v2521, %v2515
    %v3134 = vpack.c.b16 %v2522, %v2516
    %v3135 = vpack.c.b16 %v2523, %v2517
    %v3136 = vpack.c.b16 %v2530, %v2524
    %v3137 = vpack.c.b16 %v2531, %v2525
    %v3138 = vpack.c.b16 %v2532, %v2526
    %v3139 = vpack.c.b16 %v2533, %v2527
    %v3140 = vpack.c.b16 %v2534, %v2528
    %v3141 = vpack.c.b16 %v2535, %v2529
    %v3142 = vpack.c.b16 %v2542, %v2536
    %v3143 = vpack.c.b16 %v2543, %v2537
    %v3144 = vpack.c.b16 %v2544, %v2538
    %v3145 = vpack.c.b16 %v2545, %v2539
    %v3146 = vpack.c.b16 %v2546, %v2540
    %v3147 = vpack.c.b16 %v2547, %v2541
    %v3148 = vpack.c.b16 %v2554, %v2548
    %v3149 = vpack.c.b16 %v2555, %v2549
    %v3150 = vpack.c.b16 %v2556, %v2550
    %v3151 = vpack.c.b16 %v2557, %v2551
    %v3152 = vpack.c.b16 %v2558, %v2552
    %v3153 = vpack.c.b16 %v2559, %v2553
    %v3154 = vpack.c.b16 %v2566, %v2560
    %v3155 = vpack.c.b16 %v2567, %v2561
    %v3156 = vpack.c.b16 %v2568, %v2562
    %v3157 = vpack.c.b16 %v2569, %v2563
    %v3158 = vpack.c.b16 %v2570, %v2564
    %v3159 = vpack.c.b16 %v2571, %v2565
    %v3160 = vpack.c.b16 %v2578, %v2572
    %v3161 = vpack.c.b16 %v2579, %v2573
    %v3162 = vpack.c.b16 %v2580, %v2574
    %v3163 = vpack.c.b16 %v2581, %v2575
    %v3164 = vpack.c.b16 %v2582, %v2576
    %v3165 = vpack.c.b16 %v2583, %v2577
    %v3166 = vpack.c.b16 %v2590, %v2584
    %v3167 = vpack.c.b16 %v2591, %v2585
    %v3168 = vpack.c.b16 %v2592, %v2586
    %v3169 = vpack.c.b16 %v2593, %v2587
    %v3170 = vpack.c.b16 %v2594, %v2588
    %v3171 = vpack.c.b16 %v2595, %v2589
    %3748 = vmatpush.bf16.msra.mxu0 %v2638
    %3749 = vmatpush.bf16.msra.mxu0 %v2632
    %3750 = vmatpush.bf16.msra.mxu0 %v2626
    %3751 = vmatpush.bf16.msra.mxu0 %v2620
    %3752 = vmatpush.bf16.msra.mxu0 %v2614
    %3753 = vmatpush.bf16.msra.mxu0 %v2608
    %3754 = vmatpush.bf16.msra.mxu0 %v2602
    %3755 = vmatpush.bf16.msra.mxu0 %v2596
    %3756 = vmatmul.bf16.gmra.mxu0 %v844
    %v3757 = vpop.f32.mrf.mxu0
    %v3758 = vadd.f32 %v796, %v3757
    %v3759 = vpop.f32.mrf.mxu0
    %v3760 = vadd.f32 %v796, %v3759
    %3761 = vdwg.mxu0
    %3762 = vmatpush.bf16.msra.mxu0 %v2686
    %3763 = vmatpush.bf16.msra.mxu0 %v2680
    %3764 = vmatpush.bf16.msra.mxu0 %v2674
    %3765 = vmatpush.bf16.msra.mxu0 %v2668
    %3766 = vmatpush.bf16.msra.mxu0 %v2662
    %3767 = vmatpush.bf16.msra.mxu0 %v2656
    %3768 = vmatpush.bf16.msra.mxu0 %v2650
    %3769 = vmatpush.bf16.msra.mxu0 %v2644
    %3770 = vmatmul.bf16.gmra.mxu0 %v845
    %v3771 = vpop.f32.mrf.mxu0
    %v3772 = vadd.f32 %v3758, %v3771
    %v3773 = vpop.f32.mrf.mxu0
    %v3774 = vadd.f32 %v3760, %v3773
    %3775 = vdwg.mxu0
    %3776 = vmatpush.bf16.msra.mxu0 %v2734
    %3777 = vmatpush.bf16.msra.mxu0 %v2728
    %3778 = vmatpush.bf16.msra.mxu0 %v2722
    %3779 = vmatpush.bf16.msra.mxu0 %v2716
    %3780 = vmatpush.bf16.msra.mxu0 %v2710
    %3781 = vmatpush.bf16.msra.mxu0 %v2704
    %3782 = vmatpush.bf16.msra.mxu0 %v2698
    %3783 = vmatpush.bf16.msra.mxu0 %v2692
    %3784 = vmatmul.bf16.gmra.mxu0 %v846
    %v3785 = vpop.f32.mrf.mxu0
    %v3786 = vadd.f32 %v3772, %v3785
    %v3787 = vpop.f32.mrf.mxu0
    %v3788 = vadd.f32 %v3774, %v3787
    %3789 = vdwg.mxu0
    %3790 = vmatpush.bf16.msra.mxu0 %v2782
    %3791 = vmatpush.bf16.msra.mxu0 %v2776
    %3792 = vmatpush.bf16.msra.mxu0 %v2770
    %3793 = vmatpush.bf16.msra.mxu0 %v2764
    %3794 = vmatpush.bf16.msra.mxu0 %v2758
    %3795 = vmatpush.bf16.msra.mxu0 %v2752
    %3796 = vmatpush.bf16.msra.mxu0 %v2746
    %3797 = vmatpush.bf16.msra.mxu0 %v2740
    %3798 = vmatmul.bf16.gmra.mxu0 %v847
    %v3799 = vpop.f32.mrf.mxu0
    %v3800 = vadd.f32 %v3786, %v3799
    %v3801 = vpop.f32.mrf.mxu0
    %v3802 = vadd.f32 %v3788, %v3801
    %3803 = vdwg.mxu0
    %3804 = vmatpush.bf16.msra.mxu0 %v2830
    %3805 = vmatpush.bf16.msra.mxu0 %v2824
    %3806 = vmatpush.bf16.msra.mxu0 %v2818
    %3807 = vmatpush.bf16.msra.mxu0 %v2812
    %3808 = vmatpush.bf16.msra.mxu0 %v2806
    %3809 = vmatpush.bf16.msra.mxu0 %v2800
    %3810 = vmatpush.bf16.msra.mxu0 %v2794
    %3811 = vmatpush.bf16.msra.mxu0 %v2788
    %3812 = vmatmul.bf16.gmra.mxu0 %v848
    %v3813 = vpop.f32.mrf.mxu0
    %v3814 = vadd.f32 %v3800, %v3813
    %v3815 = vpop.f32.mrf.mxu0
    %v3816 = vadd.f32 %v3802, %v3815
    %3817 = vdwg.mxu0
    %3818 = vmatpush.bf16.msra.mxu0 %v2878
    %3819 = vmatpush.bf16.msra.mxu0 %v2872
    %3820 = vmatpush.bf16.msra.mxu0 %v2866
    %3821 = vmatpush.bf16.msra.mxu0 %v2860
    %3822 = vmatpush.bf16.msra.mxu0 %v2854
    %3823 = vmatpush.bf16.msra.mxu0 %v2848
    %3824 = vmatpush.bf16.msra.mxu0 %v2842
    %3825 = vmatpush.bf16.msra.mxu0 %v2836
    %3826 = vmatmul.bf16.gmra.mxu0 %v849
    %v3827 = vpop.f32.mrf.mxu0
    %v3828 = vadd.f32 %v3814, %v3827
    %v3829 = vpop.f32.mrf.mxu0
    %v3830 = vadd.f32 %v3816, %v3829
    %3831 = vdwg.mxu0
    %3832 = vmatpush.bf16.msra.mxu0 %v2926
    %3833 = vmatpush.bf16.msra.mxu0 %v2920
    %3834 = vmatpush.bf16.msra.mxu0 %v2914
    %3835 = vmatpush.bf16.msra.mxu0 %v2908
    %3836 = vmatpush.bf16.msra.mxu0 %v2902
    %3837 = vmatpush.bf16.msra.mxu0 %v2896
    %3838 = vmatpush.bf16.msra.mxu0 %v2890
    %3839 = vmatpush.bf16.msra.mxu0 %v2884
    %3840 = vmatmul.bf16.gmra.mxu0 %v850
    %v3841 = vpop.f32.mrf.mxu0
    %v3842 = vadd.f32 %v3828, %v3841
    %v3843 = vpop.f32.mrf.mxu0
    %v3844 = vadd.f32 %v3830, %v3843
    %3845 = vdwg.mxu0
    %3846 = vmatpush.bf16.msra.mxu0 %v2974
    %3847 = vmatpush.bf16.msra.mxu0 %v2968
    %3848 = vmatpush.bf16.msra.mxu0 %v2962
    %3849 = vmatpush.bf16.msra.mxu0 %v2956
    %3850 = vmatpush.bf16.msra.mxu0 %v2950
    %3851 = vmatpush.bf16.msra.mxu0 %v2944
    %3852 = vmatpush.bf16.msra.mxu0 %v2938
    %3853 = vmatpush.bf16.msra.mxu0 %v2932
    %3854 = vmatmul.bf16.gmra.mxu0 %v851
    %v3855 = vpop.f32.mrf.mxu0
    %v3856 = vadd.f32 %v3842, %v3855
    %v3857 = vpop.f32.mrf.mxu0
    %v3858 = vadd.f32 %v3844, %v3857
    %3859 = vdwg.mxu0
    %3860 = vmatpush.bf16.msra.mxu0 %v3022
    %3861 = vmatpush.bf16.msra.mxu0 %v3016
    %3862 = vmatpush.bf16.msra.mxu0 %v3010
    %3863 = vmatpush.bf16.msra.mxu0 %v3004
    %3864 = vmatpush.bf16.msra.mxu0 %v2998
    %3865 = vmatpush.bf16.msra.mxu0 %v2992
    %3866 = vmatpush.bf16.msra.mxu0 %v2986
    %3867 = vmatpush.bf16.msra.mxu0 %v2980
    %3868 = vmatmul.bf16.gmra.mxu0 %v852
    %v3869 = vpop.f32.mrf.mxu0
    %v3870 = vadd.f32 %v3856, %v3869
    %v3871 = vpop.f32.mrf.mxu0
    %v3872 = vadd.f32 %v3858, %v3871
    %3873 = vdwg.mxu0
    %3874 = vmatpush.bf16.msra.mxu0 %v3070
    %3875 = vmatpush.bf16.msra.mxu0 %v3064
    %3876 = vmatpush.bf16.msra.mxu0 %v3058
    %3877 = vmatpush.bf16.msra.mxu0 %v3052
    %3878 = vmatpush.bf16.msra.mxu0 %v3046
    %3879 = vmatpush.bf16.msra.mxu0 %v3040
    %3880 = vmatpush.bf16.msra.mxu0 %v3034
    %3881 = vmatpush.bf16.msra.mxu0 %v3028
    %3882 = vmatmul.bf16.gmra.mxu0 %v853
    %v3883 = vpop.f32.mrf.mxu0
    %v3884 = vadd.f32 %v3870, %v3883
    %v3885 = vpop.f32.mrf.mxu0
    %v3886 = vadd.f32 %v3872, %v3885
    %3887 = vdwg.mxu0
    %3888 = vmatpush.bf16.msra.mxu0 %v3118
    %3889 = vmatpush.bf16.msra.mxu0 %v3112
    %3890 = vmatpush.bf16.msra.mxu0 %v3106
    %3891 = vmatpush.bf16.msra.mxu0 %v3100
    %3892 = vmatpush.bf16.msra.mxu0 %v3094
    %3893 = vmatpush.bf16.msra.mxu0 %v3088
    %3894 = vmatpush.bf16.msra.mxu0 %v3082
    %3895 = vmatpush.bf16.msra.mxu0 %v3076
    %3896 = vmatmul.bf16.gmra.mxu0 %v854
    %v3897 = vpop.f32.mrf.mxu0
    %v3898 = vadd.f32 %v3884, %v3897
    %v3899 = vpop.f32.mrf.mxu0
    %v3900 = vadd.f32 %v3886, %v3899
    %3901 = vdwg.mxu0
    %3902 = vmatpush.bf16.msra.mxu0 %v3166
    %3903 = vmatpush.bf16.msra.mxu0 %v3160
    %3904 = vmatpush.bf16.msra.mxu0 %v3154
    %3905 = vmatpush.bf16.msra.mxu0 %v3148
    %3906 = vmatpush.bf16.msra.mxu0 %v3142
    %3907 = vmatpush.bf16.msra.mxu0 %v3136
    %3908 = vmatpush.bf16.msra.mxu0 %v3130
    %3909 = vmatpush.bf16.msra.mxu0 %v3124
    %3910 = vmatmul.bf16.gmra.mxu0 %v855
    %v3911 = vpop.f32.mrf.mxu0
    %v3912 = vadd.f32 %v3898, %v3911
    %v3913 = vpop.f32.mrf.mxu0
    %v3914 = vadd.f32 %v3900, %v3913
    %3915 = vdwg.mxu0
    %3916 = vmatpush.bf16.msra.mxu0 %v2639
    %3917 = vmatpush.bf16.msra.mxu0 %v2633
    %3918 = vmatpush.bf16.msra.mxu0 %v2627
    %3919 = vmatpush.bf16.msra.mxu0 %v2621
    %3920 = vmatpush.bf16.msra.mxu0 %v2615
    %3921 = vmatpush.bf16.msra.mxu0 %v2609
    %3922 = vmatpush.bf16.msra.mxu0 %v2603
    %3923 = vmatpush.bf16.msra.mxu0 %v2597
    %3924 = vmatmul.bf16.gmra.mxu0 %v844
    %v3925 = vpop.f32.mrf.mxu0
    %v3926 = vadd.f32 %v797, %v3925
    %v3927 = vpop.f32.mrf.mxu0
    %v3928 = vadd.f32 %v797, %v3927
    %3929 = vdwg.mxu0
    %3930 = vmatpush.bf16.msra.mxu0 %v2687
    %3931 = vmatpush.bf16.msra.mxu0 %v2681
    %3932 = vmatpush.bf16.msra.mxu0 %v2675
    %3933 = vmatpush.bf16.msra.mxu0 %v2669
    %3934 = vmatpush.bf16.msra.mxu0 %v2663
    %3935 = vmatpush.bf16.msra.mxu0 %v2657
    %3936 = vmatpush.bf16.msra.mxu0 %v2651
    %3937 = vmatpush.bf16.msra.mxu0 %v2645
    %3938 = vmatmul.bf16.gmra.mxu0 %v845
    %v3939 = vpop.f32.mrf.mxu0
    %v3940 = vadd.f32 %v3926, %v3939
    %v3941 = vpop.f32.mrf.mxu0
    %v3942 = vadd.f32 %v3928, %v3941
    %3943 = vdwg.mxu0
    %3944 = vmatpush.bf16.msra.mxu0 %v2735
    %3945 = vmatpush.bf16.msra.mxu0 %v2729
    %3946 = vmatpush.bf16.msra.mxu0 %v2723
    %3947 = vmatpush.bf16.msra.mxu0 %v2717
    %3948 = vmatpush.bf16.msra.mxu0 %v2711
    %3949 = vmatpush.bf16.msra.mxu0 %v2705
    %3950 = vmatpush.bf16.msra.mxu0 %v2699
    %3951 = vmatpush.bf16.msra.mxu0 %v2693
    %3952 = vmatmul.bf16.gmra.mxu0 %v846
    %v3953 = vpop.f32.mrf.mxu0
    %v3954 = vadd.f32 %v3940, %v3953
    %v3955 = vpop.f32.mrf.mxu0
    %v3956 = vadd.f32 %v3942, %v3955
    %3957 = vdwg.mxu0
    %3958 = vmatpush.bf16.msra.mxu0 %v2783
    %3959 = vmatpush.bf16.msra.mxu0 %v2777
    %3960 = vmatpush.bf16.msra.mxu0 %v2771
    %3961 = vmatpush.bf16.msra.mxu0 %v2765
    %3962 = vmatpush.bf16.msra.mxu0 %v2759
    %3963 = vmatpush.bf16.msra.mxu0 %v2753
    %3964 = vmatpush.bf16.msra.mxu0 %v2747
    %3965 = vmatpush.bf16.msra.mxu0 %v2741
    %3966 = vmatmul.bf16.gmra.mxu0 %v847
    %v3967 = vpop.f32.mrf.mxu0
    %v3968 = vadd.f32 %v3954, %v3967
    %v3969 = vpop.f32.mrf.mxu0
    %v3970 = vadd.f32 %v3956, %v3969
    %3971 = vdwg.mxu0
    %3972 = vmatpush.bf16.msra.mxu0 %v2831
    %3973 = vmatpush.bf16.msra.mxu0 %v2825
    %3974 = vmatpush.bf16.msra.mxu0 %v2819
    %3975 = vmatpush.bf16.msra.mxu0 %v2813
    %3976 = vmatpush.bf16.msra.mxu0 %v2807
    %3977 = vmatpush.bf16.msra.mxu0 %v2801
    %3978 = vmatpush.bf16.msra.mxu0 %v2795
    %3979 = vmatpush.bf16.msra.mxu0 %v2789
    %3980 = vmatmul.bf16.gmra.mxu0 %v848
    %v3981 = vpop.f32.mrf.mxu0
    %v3982 = vadd.f32 %v3968, %v3981
    %v3983 = vpop.f32.mrf.mxu0
    %v3984 = vadd.f32 %v3970, %v3983
    %3985 = vdwg.mxu0
    %3986 = vmatpush.bf16.msra.mxu0 %v2879
    %3987 = vmatpush.bf16.msra.mxu0 %v2873
    %3988 = vmatpush.bf16.msra.mxu0 %v2867
    %3989 = vmatpush.bf16.msra.mxu0 %v2861
    %3990 = vmatpush.bf16.msra.mxu0 %v2855
    %3991 = vmatpush.bf16.msra.mxu0 %v2849
    %3992 = vmatpush.bf16.msra.mxu0 %v2843
    %3993 = vmatpush.bf16.msra.mxu0 %v2837
    %3994 = vmatmul.bf16.gmra.mxu0 %v849
    %v3995 = vpop.f32.mrf.mxu0
    %v3996 = vadd.f32 %v3982, %v3995
    %v3997 = vpop.f32.mrf.mxu0
    %v3998 = vadd.f32 %v3984, %v3997
    %3999 = vdwg.mxu0
    %4000 = vmatpush.bf16.msra.mxu0 %v2927
    %4001 = vmatpush.bf16.msra.mxu0 %v2921
    %4002 = vmatpush.bf16.msra.mxu0 %v2915
    %4003 = vmatpush.bf16.msra.mxu0 %v2909
    %4004 = vmatpush.bf16.msra.mxu0 %v2903
    %4005 = vmatpush.bf16.msra.mxu0 %v2897
    %4006 = vmatpush.bf16.msra.mxu0 %v2891
    %4007 = vmatpush.bf16.msra.mxu0 %v2885
    %4008 = vmatmul.bf16.gmra.mxu0 %v850
    %v4009 = vpop.f32.mrf.mxu0
    %v4010 = vadd.f32 %v3996, %v4009
    %v4011 = vpop.f32.mrf.mxu0
    %v4012 = vadd.f32 %v3998, %v4011
    %4013 = vdwg.mxu0
    %4014 = vmatpush.bf16.msra.mxu0 %v2975
    %4015 = vmatpush.bf16.msra.mxu0 %v2969
    %4016 = vmatpush.bf16.msra.mxu0 %v2963
    %4017 = vmatpush.bf16.msra.mxu0 %v2957
    %4018 = vmatpush.bf16.msra.mxu0 %v2951
    %4019 = vmatpush.bf16.msra.mxu0 %v2945
    %4020 = vmatpush.bf16.msra.mxu0 %v2939
    %4021 = vmatpush.bf16.msra.mxu0 %v2933
    %4022 = vmatmul.bf16.gmra.mxu0 %v851
    %v4023 = vpop.f32.mrf.mxu0
    %v4024 = vadd.f32 %v4010, %v4023
    %v4025 = vpop.f32.mrf.mxu0
    %v4026 = vadd.f32 %v4012, %v4025
    %4027 = vdwg.mxu0
    %4028 = vmatpush.bf16.msra.mxu0 %v3023
    %4029 = vmatpush.bf16.msra.mxu0 %v3017
    %4030 = vmatpush.bf16.msra.mxu0 %v3011
    %4031 = vmatpush.bf16.msra.mxu0 %v3005
    %4032 = vmatpush.bf16.msra.mxu0 %v2999
    %4033 = vmatpush.bf16.msra.mxu0 %v2993
    %4034 = vmatpush.bf16.msra.mxu0 %v2987
    %4035 = vmatpush.bf16.msra.mxu0 %v2981
    %4036 = vmatmul.bf16.gmra.mxu0 %v852
    %v4037 = vpop.f32.mrf.mxu0
    %v4038 = vadd.f32 %v4024, %v4037
    %v4039 = vpop.f32.mrf.mxu0
    %v4040 = vadd.f32 %v4026, %v4039
    %4041 = vdwg.mxu0
    %4042 = vmatpush.bf16.msra.mxu0 %v3071
    %4043 = vmatpush.bf16.msra.mxu0 %v3065
    %4044 = vmatpush.bf16.msra.mxu0 %v3059
    %4045 = vmatpush.bf16.msra.mxu0 %v3053
    %4046 = vmatpush.bf16.msra.mxu0 %v3047
    %4047 = vmatpush.bf16.msra.mxu0 %v3041
    %4048 = vmatpush.bf16.msra.mxu0 %v3035
    %4049 = vmatpush.bf16.msra.mxu0 %v3029
    %4050 = vmatmul.bf16.gmra.mxu0 %v853
    %v4051 = vpop.f32.mrf.mxu0
    %v4052 = vadd.f32 %v4038, %v4051
    %v4053 = vpop.f32.mrf.mxu0
    %v4054 = vadd.f32 %v4040, %v4053
    %4055 = vdwg.mxu0
    %4056 = vmatpush.bf16.msra.mxu0 %v3119
    %4057 = vmatpush.bf16.msra.mxu0 %v3113
    %4058 = vmatpush.bf16.msra.mxu0 %v3107
    %4059 = vmatpush.bf16.msra.mxu0 %v3101
    %4060 = vmatpush.bf16.msra.mxu0 %v3095
    %4061 = vmatpush.bf16.msra.mxu0 %v3089
    %4062 = vmatpush.bf16.msra.mxu0 %v3083
    %4063 = vmatpush.bf16.msra.mxu0 %v3077
    %4064 = vmatmul.bf16.gmra.mxu0 %v854
    %v4065 = vpop.f32.mrf.mxu0
    %v4066 = vadd.f32 %v4052, %v4065
    %v4067 = vpop.f32.mrf.mxu0
    %v4068 = vadd.f32 %v4054, %v4067
    %4069 = vdwg.mxu0
    %4070 = vmatpush.bf16.msra.mxu0 %v3167
    %4071 = vmatpush.bf16.msra.mxu0 %v3161
    %4072 = vmatpush.bf16.msra.mxu0 %v3155
    %4073 = vmatpush.bf16.msra.mxu0 %v3149
    %4074 = vmatpush.bf16.msra.mxu0 %v3143
    %4075 = vmatpush.bf16.msra.mxu0 %v3137
    %4076 = vmatpush.bf16.msra.mxu0 %v3131
    %4077 = vmatpush.bf16.msra.mxu0 %v3125
    %4078 = vmatmul.bf16.gmra.mxu0 %v855
    %v4079 = vpop.f32.mrf.mxu0
    %v4080 = vadd.f32 %v4066, %v4079
    %v4081 = vpop.f32.mrf.mxu0
    %v4082 = vadd.f32 %v4068, %v4081
    %4083 = vdwg.mxu0
    %4084 = vmatpush.bf16.msra.mxu0 %v2640
    %4085 = vmatpush.bf16.msra.mxu0 %v2634
    %4086 = vmatpush.bf16.msra.mxu0 %v2628
    %4087 = vmatpush.bf16.msra.mxu0 %v2622
    %4088 = vmatpush.bf16.msra.mxu0 %v2616
    %4089 = vmatpush.bf16.msra.mxu0 %v2610
    %4090 = vmatpush.bf16.msra.mxu0 %v2604
    %4091 = vmatpush.bf16.msra.mxu0 %v2598
    %4092 = vmatmul.bf16.gmra.mxu0 %v844
    %v4093 = vpop.f32.mrf.mxu0
    %v4094 = vadd.f32 %v798, %v4093
    %v4095 = vpop.f32.mrf.mxu0
    %v4096 = vadd.f32 %v798, %v4095
    %4097 = vdwg.mxu0
    %4098 = vmatpush.bf16.msra.mxu0 %v2688
    %4099 = vmatpush.bf16.msra.mxu0 %v2682
    %4100 = vmatpush.bf16.msra.mxu0 %v2676
    %4101 = vmatpush.bf16.msra.mxu0 %v2670
    %4102 = vmatpush.bf16.msra.mxu0 %v2664
    %4103 = vmatpush.bf16.msra.mxu0 %v2658
    %4104 = vmatpush.bf16.msra.mxu0 %v2652
    %4105 = vmatpush.bf16.msra.mxu0 %v2646
    %4106 = vmatmul.bf16.gmra.mxu0 %v845
    %v4107 = vpop.f32.mrf.mxu0
    %v4108 = vadd.f32 %v4094, %v4107
    %v4109 = vpop.f32.mrf.mxu0
    %v4110 = vadd.f32 %v4096, %v4109
    %4111 = vdwg.mxu0
    %4112 = vmatpush.bf16.msra.mxu0 %v2736
    %4113 = vmatpush.bf16.msra.mxu0 %v2730
    %4114 = vmatpush.bf16.msra.mxu0 %v2724
    %4115 = vmatpush.bf16.msra.mxu0 %v2718
    %4116 = vmatpush.bf16.msra.mxu0 %v2712
    %4117 = vmatpush.bf16.msra.mxu0 %v2706
    %4118 = vmatpush.bf16.msra.mxu0 %v2700
    %4119 = vmatpush.bf16.msra.mxu0 %v2694
    %4120 = vmatmul.bf16.gmra.mxu0 %v846
    %v4121 = vpop.f32.mrf.mxu0
    %v4122 = vadd.f32 %v4108, %v4121
    %v4123 = vpop.f32.mrf.mxu0
    %v4124 = vadd.f32 %v4110, %v4123
    %4125 = vdwg.mxu0
    %4126 = vmatpush.bf16.msra.mxu0 %v2784
    %4127 = vmatpush.bf16.msra.mxu0 %v2778
    %4128 = vmatpush.bf16.msra.mxu0 %v2772
    %4129 = vmatpush.bf16.msra.mxu0 %v2766
    %4130 = vmatpush.bf16.msra.mxu0 %v2760
    %4131 = vmatpush.bf16.msra.mxu0 %v2754
    %4132 = vmatpush.bf16.msra.mxu0 %v2748
    %4133 = vmatpush.bf16.msra.mxu0 %v2742
    %4134 = vmatmul.bf16.gmra.mxu0 %v847
    %v4135 = vpop.f32.mrf.mxu0
    %v4136 = vadd.f32 %v4122, %v4135
    %v4137 = vpop.f32.mrf.mxu0
    %v4138 = vadd.f32 %v4124, %v4137
    %4139 = vdwg.mxu0
    %4140 = vmatpush.bf16.msra.mxu0 %v2832
    %4141 = vmatpush.bf16.msra.mxu0 %v2826
    %4142 = vmatpush.bf16.msra.mxu0 %v2820
    %4143 = vmatpush.bf16.msra.mxu0 %v2814
    %4144 = vmatpush.bf16.msra.mxu0 %v2808
    %4145 = vmatpush.bf16.msra.mxu0 %v2802
    %4146 = vmatpush.bf16.msra.mxu0 %v2796
    %4147 = vmatpush.bf16.msra.mxu0 %v2790
    %4148 = vmatmul.bf16.gmra.mxu0 %v848
    %v4149 = vpop.f32.mrf.mxu0
    %v4150 = vadd.f32 %v4136, %v4149
    %v4151 = vpop.f32.mrf.mxu0
    %v4152 = vadd.f32 %v4138, %v4151
    %4153 = vdwg.mxu0
    %4154 = vmatpush.bf16.msra.mxu0 %v2880
    %4155 = vmatpush.bf16.msra.mxu0 %v2874
    %4156 = vmatpush.bf16.msra.mxu0 %v2868
    %4157 = vmatpush.bf16.msra.mxu0 %v2862
    %4158 = vmatpush.bf16.msra.mxu0 %v2856
    %4159 = vmatpush.bf16.msra.mxu0 %v2850
    %4160 = vmatpush.bf16.msra.mxu0 %v2844
    %4161 = vmatpush.bf16.msra.mxu0 %v2838
    %4162 = vmatmul.bf16.gmra.mxu0 %v849
    %v4163 = vpop.f32.mrf.mxu0
    %v4164 = vadd.f32 %v4150, %v4163
    %v4165 = vpop.f32.mrf.mxu0
    %v4166 = vadd.f32 %v4152, %v4165
    %4167 = vdwg.mxu0
    %4168 = vmatpush.bf16.msra.mxu0 %v2928
    %4169 = vmatpush.bf16.msra.mxu0 %v2922
    %4170 = vmatpush.bf16.msra.mxu0 %v2916
    %4171 = vmatpush.bf16.msra.mxu0 %v2910
    %4172 = vmatpush.bf16.msra.mxu0 %v2904
    %4173 = vmatpush.bf16.msra.mxu0 %v2898
    %4174 = vmatpush.bf16.msra.mxu0 %v2892
    %4175 = vmatpush.bf16.msra.mxu0 %v2886
    %4176 = vmatmul.bf16.gmra.mxu0 %v850
    %v4177 = vpop.f32.mrf.mxu0
    %v4178 = vadd.f32 %v4164, %v4177
    %v4179 = vpop.f32.mrf.mxu0
    %v4180 = vadd.f32 %v4166, %v4179
    %4181 = vdwg.mxu0
    %4182 = vmatpush.bf16.msra.mxu0 %v2976
    %4183 = vmatpush.bf16.msra.mxu0 %v2970
    %4184 = vmatpush.bf16.msra.mxu0 %v2964
    %4185 = vmatpush.bf16.msra.mxu0 %v2958
    %4186 = vmatpush.bf16.msra.mxu0 %v2952
    %4187 = vmatpush.bf16.msra.mxu0 %v2946
    %4188 = vmatpush.bf16.msra.mxu0 %v2940
    %4189 = vmatpush.bf16.msra.mxu0 %v2934
    %4190 = vmatmul.bf16.gmra.mxu0 %v851
    %v4191 = vpop.f32.mrf.mxu0
    %v4192 = vadd.f32 %v4178, %v4191
    %v4193 = vpop.f32.mrf.mxu0
    %v4194 = vadd.f32 %v4180, %v4193
    %4195 = vdwg.mxu0
    %4196 = vmatpush.bf16.msra.mxu0 %v3024
    %4197 = vmatpush.bf16.msra.mxu0 %v3018
    %4198 = vmatpush.bf16.msra.mxu0 %v3012
    %4199 = vmatpush.bf16.msra.mxu0 %v3006
    %4200 = vmatpush.bf16.msra.mxu0 %v3000
    %4201 = vmatpush.bf16.msra.mxu0 %v2994
    %4202 = vmatpush.bf16.msra.mxu0 %v2988
    %4203 = vmatpush.bf16.msra.mxu0 %v2982
    %4204 = vmatmul.bf16.gmra.mxu0 %v852
    %v4205 = vpop.f32.mrf.mxu0
    %v4206 = vadd.f32 %v4192, %v4205
    %v4207 = vpop.f32.mrf.mxu0
    %v4208 = vadd.f32 %v4194, %v4207
    %4209 = vdwg.mxu0
    %4210 = vmatpush.bf16.msra.mxu0 %v3072
    %4211 = vmatpush.bf16.msra.mxu0 %v3066
    %4212 = vmatpush.bf16.msra.mxu0 %v3060
    %4213 = vmatpush.bf16.msra.mxu0 %v3054
    %4214 = vmatpush.bf16.msra.mxu0 %v3048
    %4215 = vmatpush.bf16.msra.mxu0 %v3042
    %4216 = vmatpush.bf16.msra.mxu0 %v3036
    %4217 = vmatpush.bf16.msra.mxu0 %v3030
    %4218 = vmatmul.bf16.gmra.mxu0 %v853
    %v4219 = vpop.f32.mrf.mxu0
    %v4220 = vadd.f32 %v4206, %v4219
    %v4221 = vpop.f32.mrf.mxu0
    %v4222 = vadd.f32 %v4208, %v4221
    %4223 = vdwg.mxu0
    %4224 = vmatpush.bf16.msra.mxu0 %v3120
    %4225 = vmatpush.bf16.msra.mxu0 %v3114
    %4226 = vmatpush.bf16.msra.mxu0 %v3108
    %4227 = vmatpush.bf16.msra.mxu0 %v3102
    %4228 = vmatpush.bf16.msra.mxu0 %v3096
    %4229 = vmatpush.bf16.msra.mxu0 %v3090
    %4230 = vmatpush.bf16.msra.mxu0 %v3084
    %4231 = vmatpush.bf16.msra.mxu0 %v3078
    %4232 = vmatmul.bf16.gmra.mxu0 %v854
    %v4233 = vpop.f32.mrf.mxu0
    %v4234 = vadd.f32 %v4220, %v4233
    %v4235 = vpop.f32.mrf.mxu0
    %v4236 = vadd.f32 %v4222, %v4235
    %4237 = vdwg.mxu0
    %4238 = vmatpush.bf16.msra.mxu0 %v3168
    %4239 = vmatpush.bf16.msra.mxu0 %v3162
    %4240 = vmatpush.bf16.msra.mxu0 %v3156
    %4241 = vmatpush.bf16.msra.mxu0 %v3150
    %4242 = vmatpush.bf16.msra.mxu0 %v3144
    %4243 = vmatpush.bf16.msra.mxu0 %v3138
    %4244 = vmatpush.bf16.msra.mxu0 %v3132
    %4245 = vmatpush.bf16.msra.mxu0 %v3126
    %4246 = vmatmul.bf16.gmra.mxu0 %v855
    %v4247 = vpop.f32.mrf.mxu0
    %v4248 = vadd.f32 %v4234, %v4247
    %v4249 = vpop.f32.mrf.mxu0
    %v4250 = vadd.f32 %v4236, %v4249
    %4251 = vdwg.mxu0
    %4252 = vmatpush.bf16.msra.mxu0 %v2641
    %4253 = vmatpush.bf16.msra.mxu0 %v2635
    %4254 = vmatpush.bf16.msra.mxu0 %v2629
    %4255 = vmatpush.bf16.msra.mxu0 %v2623
    %4256 = vmatpush.bf16.msra.mxu0 %v2617
    %4257 = vmatpush.bf16.msra.mxu0 %v2611
    %4258 = vmatpush.bf16.msra.mxu0 %v2605
    %4259 = vmatpush.bf16.msra.mxu0 %v2599
    %4260 = vmatmul.bf16.gmra.mxu0 %v844
    %v4261 = vpop.f32.mrf.mxu0
    %v4262 = vadd.f32 %v799, %v4261
    %v4263 = vpop.f32.mrf.mxu0
    %v4264 = vadd.f32 %v799, %v4263
    %4265 = vdwg.mxu0
    %4266 = vmatpush.bf16.msra.mxu0 %v2689
    %4267 = vmatpush.bf16.msra.mxu0 %v2683
    %4268 = vmatpush.bf16.msra.mxu0 %v2677
    %4269 = vmatpush.bf16.msra.mxu0 %v2671
    %4270 = vmatpush.bf16.msra.mxu0 %v2665
    %4271 = vmatpush.bf16.msra.mxu0 %v2659
    %4272 = vmatpush.bf16.msra.mxu0 %v2653
    %4273 = vmatpush.bf16.msra.mxu0 %v2647
    %4274 = vmatmul.bf16.gmra.mxu0 %v845
    %v4275 = vpop.f32.mrf.mxu0
    %v4276 = vadd.f32 %v4262, %v4275
    %v4277 = vpop.f32.mrf.mxu0
    %v4278 = vadd.f32 %v4264, %v4277
    %4279 = vdwg.mxu0
    %4280 = vmatpush.bf16.msra.mxu0 %v2737
    %4281 = vmatpush.bf16.msra.mxu0 %v2731
    %4282 = vmatpush.bf16.msra.mxu0 %v2725
    %4283 = vmatpush.bf16.msra.mxu0 %v2719
    %4284 = vmatpush.bf16.msra.mxu0 %v2713
    %4285 = vmatpush.bf16.msra.mxu0 %v2707
    %4286 = vmatpush.bf16.msra.mxu0 %v2701
    %4287 = vmatpush.bf16.msra.mxu0 %v2695
    %4288 = vmatmul.bf16.gmra.mxu0 %v846
    %v4289 = vpop.f32.mrf.mxu0
    %v4290 = vadd.f32 %v4276, %v4289
    %v4291 = vpop.f32.mrf.mxu0
    %v4292 = vadd.f32 %v4278, %v4291
    %4293 = vdwg.mxu0
    %4294 = vmatpush.bf16.msra.mxu0 %v2785
    %4295 = vmatpush.bf16.msra.mxu0 %v2779
    %4296 = vmatpush.bf16.msra.mxu0 %v2773
    %4297 = vmatpush.bf16.msra.mxu0 %v2767
    %4298 = vmatpush.bf16.msra.mxu0 %v2761
    %4299 = vmatpush.bf16.msra.mxu0 %v2755
    %4300 = vmatpush.bf16.msra.mxu0 %v2749
    %4301 = vmatpush.bf16.msra.mxu0 %v2743
    %4302 = vmatmul.bf16.gmra.mxu0 %v847
    %v4303 = vpop.f32.mrf.mxu0
    %v4304 = vadd.f32 %v4290, %v4303
    %v4305 = vpop.f32.mrf.mxu0
    %v4306 = vadd.f32 %v4292, %v4305
    %4307 = vdwg.mxu0
    %4308 = vmatpush.bf16.msra.mxu0 %v2833
    %4309 = vmatpush.bf16.msra.mxu0 %v2827
    %4310 = vmatpush.bf16.msra.mxu0 %v2821
    %4311 = vmatpush.bf16.msra.mxu0 %v2815
    %4312 = vmatpush.bf16.msra.mxu0 %v2809
    %4313 = vmatpush.bf16.msra.mxu0 %v2803
    %4314 = vmatpush.bf16.msra.mxu0 %v2797
    %4315 = vmatpush.bf16.msra.mxu0 %v2791
    %4316 = vmatmul.bf16.gmra.mxu0 %v848
    %v4317 = vpop.f32.mrf.mxu0
    %v4318 = vadd.f32 %v4304, %v4317
    %v4319 = vpop.f32.mrf.mxu0
    %v4320 = vadd.f32 %v4306, %v4319
    %4321 = vdwg.mxu0
    %4322 = vmatpush.bf16.msra.mxu0 %v2881
    %4323 = vmatpush.bf16.msra.mxu0 %v2875
    %4324 = vmatpush.bf16.msra.mxu0 %v2869
    %4325 = vmatpush.bf16.msra.mxu0 %v2863
    %4326 = vmatpush.bf16.msra.mxu0 %v2857
    %4327 = vmatpush.bf16.msra.mxu0 %v2851
    %4328 = vmatpush.bf16.msra.mxu0 %v2845
    %4329 = vmatpush.bf16.msra.mxu0 %v2839
    %4330 = vmatmul.bf16.gmra.mxu0 %v849
    %v4331 = vpop.f32.mrf.mxu0
    %v4332 = vadd.f32 %v4318, %v4331
    %v4333 = vpop.f32.mrf.mxu0
    %v4334 = vadd.f32 %v4320, %v4333
    %4335 = vdwg.mxu0
    %4336 = vmatpush.bf16.msra.mxu0 %v2929
    %4337 = vmatpush.bf16.msra.mxu0 %v2923
    %4338 = vmatpush.bf16.msra.mxu0 %v2917
    %4339 = vmatpush.bf16.msra.mxu0 %v2911
    %4340 = vmatpush.bf16.msra.mxu0 %v2905
    %4341 = vmatpush.bf16.msra.mxu0 %v2899
    %4342 = vmatpush.bf16.msra.mxu0 %v2893
    %4343 = vmatpush.bf16.msra.mxu0 %v2887
    %4344 = vmatmul.bf16.gmra.mxu0 %v850
    %v4345 = vpop.f32.mrf.mxu0
    %v4346 = vadd.f32 %v4332, %v4345
    %v4347 = vpop.f32.mrf.mxu0
    %v4348 = vadd.f32 %v4334, %v4347
    %4349 = vdwg.mxu0
    %4350 = vmatpush.bf16.msra.mxu0 %v2977
    %4351 = vmatpush.bf16.msra.mxu0 %v2971
    %4352 = vmatpush.bf16.msra.mxu0 %v2965
    %4353 = vmatpush.bf16.msra.mxu0 %v2959
    %4354 = vmatpush.bf16.msra.mxu0 %v2953
    %4355 = vmatpush.bf16.msra.mxu0 %v2947
    %4356 = vmatpush.bf16.msra.mxu0 %v2941
    %4357 = vmatpush.bf16.msra.mxu0 %v2935
    %4358 = vmatmul.bf16.gmra.mxu0 %v851
    %v4359 = vpop.f32.mrf.mxu0
    %v4360 = vadd.f32 %v4346, %v4359
    %v4361 = vpop.f32.mrf.mxu0
    %v4362 = vadd.f32 %v4348, %v4361
    %4363 = vdwg.mxu0
    %4364 = vmatpush.bf16.msra.mxu0 %v3025
    %4365 = vmatpush.bf16.msra.mxu0 %v3019
    %4366 = vmatpush.bf16.msra.mxu0 %v3013
    %4367 = vmatpush.bf16.msra.mxu0 %v3007
    %4368 = vmatpush.bf16.msra.mxu0 %v3001
    %4369 = vmatpush.bf16.msra.mxu0 %v2995
    %4370 = vmatpush.bf16.msra.mxu0 %v2989
    %4371 = vmatpush.bf16.msra.mxu0 %v2983
    %4372 = vmatmul.bf16.gmra.mxu0 %v852
    %v4373 = vpop.f32.mrf.mxu0
    %v4374 = vadd.f32 %v4360, %v4373
    %v4375 = vpop.f32.mrf.mxu0
    %v4376 = vadd.f32 %v4362, %v4375
    %4377 = vdwg.mxu0
    %4378 = vmatpush.bf16.msra.mxu0 %v3073
    %4379 = vmatpush.bf16.msra.mxu0 %v3067
    %4380 = vmatpush.bf16.msra.mxu0 %v3061
    %4381 = vmatpush.bf16.msra.mxu0 %v3055
    %4382 = vmatpush.bf16.msra.mxu0 %v3049
    %4383 = vmatpush.bf16.msra.mxu0 %v3043
    %4384 = vmatpush.bf16.msra.mxu0 %v3037
    %4385 = vmatpush.bf16.msra.mxu0 %v3031
    %4386 = vmatmul.bf16.gmra.mxu0 %v853
    %v4387 = vpop.f32.mrf.mxu0
    %v4388 = vadd.f32 %v4374, %v4387
    %v4389 = vpop.f32.mrf.mxu0
    %v4390 = vadd.f32 %v4376, %v4389
    %4391 = vdwg.mxu0
    %4392 = vmatpush.bf16.msra.mxu0 %v3121
    %4393 = vmatpush.bf16.msra.mxu0 %v3115
    %4394 = vmatpush.bf16.msra.mxu0 %v3109
    %4395 = vmatpush.bf16.msra.mxu0 %v3103
    %4396 = vmatpush.bf16.msra.mxu0 %v3097
    %4397 = vmatpush.bf16.msra.mxu0 %v3091
    %4398 = vmatpush.bf16.msra.mxu0 %v3085
    %4399 = vmatpush.bf16.msra.mxu0 %v3079
    %4400 = vmatmul.bf16.gmra.mxu0 %v854
    %v4401 = vpop.f32.mrf.mxu0
    %v4402 = vadd.f32 %v4388, %v4401
    %v4403 = vpop.f32.mrf.mxu0
    %v4404 = vadd.f32 %v4390, %v4403
    %4405 = vdwg.mxu0
    %4406 = vmatpush.bf16.msra.mxu0 %v3169
    %4407 = vmatpush.bf16.msra.mxu0 %v3163
    %4408 = vmatpush.bf16.msra.mxu0 %v3157
    %4409 = vmatpush.bf16.msra.mxu0 %v3151
    %4410 = vmatpush.bf16.msra.mxu0 %v3145
    %4411 = vmatpush.bf16.msra.mxu0 %v3139
    %4412 = vmatpush.bf16.msra.mxu0 %v3133
    %4413 = vmatpush.bf16.msra.mxu0 %v3127
    %4414 = vmatmul.bf16.gmra.mxu0 %v855
    %v4415 = vpop.f32.mrf.mxu0
    %v4416 = vadd.f32 %v4402, %v4415
    %v4417 = vpop.f32.mrf.mxu0
    %v4418 = vadd.f32 %v4404, %v4417
    %4419 = vdwg.mxu0
    %4420 = vmatpush.bf16.msra.mxu0 %v2642
    %4421 = vmatpush.bf16.msra.mxu0 %v2636
    %4422 = vmatpush.bf16.msra.mxu0 %v2630
    %4423 = vmatpush.bf16.msra.mxu0 %v2624
    %4424 = vmatpush.bf16.msra.mxu0 %v2618
    %4425 = vmatpush.bf16.msra.mxu0 %v2612
    %4426 = vmatpush.bf16.msra.mxu0 %v2606
    %4427 = vmatpush.bf16.msra.mxu0 %v2600
    %4428 = vmatmul.bf16.gmra.mxu0 %v844
    %v4429 = vpop.f32.mrf.mxu0
    %v4430 = vadd.f32 %v800, %v4429
    %v4431 = vpop.f32.mrf.mxu0
    %v4432 = vadd.f32 %v800, %v4431
    %4433 = vdwg.mxu0
    %4434 = vmatpush.bf16.msra.mxu0 %v2690
    %4435 = vmatpush.bf16.msra.mxu0 %v2684
    %4436 = vmatpush.bf16.msra.mxu0 %v2678
    %4437 = vmatpush.bf16.msra.mxu0 %v2672
    %4438 = vmatpush.bf16.msra.mxu0 %v2666
    %4439 = vmatpush.bf16.msra.mxu0 %v2660
    %4440 = vmatpush.bf16.msra.mxu0 %v2654
    %4441 = vmatpush.bf16.msra.mxu0 %v2648
    %4442 = vmatmul.bf16.gmra.mxu0 %v845
    %v4443 = vpop.f32.mrf.mxu0
    %v4444 = vadd.f32 %v4430, %v4443
    %v4445 = vpop.f32.mrf.mxu0
    %v4446 = vadd.f32 %v4432, %v4445
    %4447 = vdwg.mxu0
    %4448 = vmatpush.bf16.msra.mxu0 %v2738
    %4449 = vmatpush.bf16.msra.mxu0 %v2732
    %4450 = vmatpush.bf16.msra.mxu0 %v2726
    %4451 = vmatpush.bf16.msra.mxu0 %v2720
    %4452 = vmatpush.bf16.msra.mxu0 %v2714
    %4453 = vmatpush.bf16.msra.mxu0 %v2708
    %4454 = vmatpush.bf16.msra.mxu0 %v2702
    %4455 = vmatpush.bf16.msra.mxu0 %v2696
    %4456 = vmatmul.bf16.gmra.mxu0 %v846
    %v4457 = vpop.f32.mrf.mxu0
    %v4458 = vadd.f32 %v4444, %v4457
    %v4459 = vpop.f32.mrf.mxu0
    %v4460 = vadd.f32 %v4446, %v4459
    %4461 = vdwg.mxu0
    %4462 = vmatpush.bf16.msra.mxu0 %v2786
    %4463 = vmatpush.bf16.msra.mxu0 %v2780
    %4464 = vmatpush.bf16.msra.mxu0 %v2774
    %4465 = vmatpush.bf16.msra.mxu0 %v2768
    %4466 = vmatpush.bf16.msra.mxu0 %v2762
    %4467 = vmatpush.bf16.msra.mxu0 %v2756
    %4468 = vmatpush.bf16.msra.mxu0 %v2750
    %4469 = vmatpush.bf16.msra.mxu0 %v2744
    %4470 = vmatmul.bf16.gmra.mxu0 %v847
    %v4471 = vpop.f32.mrf.mxu0
    %v4472 = vadd.f32 %v4458, %v4471
    %v4473 = vpop.f32.mrf.mxu0
    %v4474 = vadd.f32 %v4460, %v4473
    %4475 = vdwg.mxu0
    %4476 = vmatpush.bf16.msra.mxu0 %v2834
    %4477 = vmatpush.bf16.msra.mxu0 %v2828
    %4478 = vmatpush.bf16.msra.mxu0 %v2822
    %4479 = vmatpush.bf16.msra.mxu0 %v2816
    %4480 = vmatpush.bf16.msra.mxu0 %v2810
    %4481 = vmatpush.bf16.msra.mxu0 %v2804
    %4482 = vmatpush.bf16.msra.mxu0 %v2798
    %4483 = vmatpush.bf16.msra.mxu0 %v2792
    %4484 = vmatmul.bf16.gmra.mxu0 %v848
    %v4485 = vpop.f32.mrf.mxu0
    %v4486 = vadd.f32 %v4472, %v4485
    %v4487 = vpop.f32.mrf.mxu0
    %v4488 = vadd.f32 %v4474, %v4487
    %4489 = vdwg.mxu0
    %4490 = vmatpush.bf16.msra.mxu0 %v2882
    %4491 = vmatpush.bf16.msra.mxu0 %v2876
    %4492 = vmatpush.bf16.msra.mxu0 %v2870
    %4493 = vmatpush.bf16.msra.mxu0 %v2864
    %4494 = vmatpush.bf16.msra.mxu0 %v2858
    %4495 = vmatpush.bf16.msra.mxu0 %v2852
    %4496 = vmatpush.bf16.msra.mxu0 %v2846
    %4497 = vmatpush.bf16.msra.mxu0 %v2840
    %4498 = vmatmul.bf16.gmra.mxu0 %v849
    %v4499 = vpop.f32.mrf.mxu0
    %v4500 = vadd.f32 %v4486, %v4499
    %v4501 = vpop.f32.mrf.mxu0
    %v4502 = vadd.f32 %v4488, %v4501
    %4503 = vdwg.mxu0
    %4504 = vmatpush.bf16.msra.mxu0 %v2930
    %4505 = vmatpush.bf16.msra.mxu0 %v2924
    %4506 = vmatpush.bf16.msra.mxu0 %v2918
    %4507 = vmatpush.bf16.msra.mxu0 %v2912
    %4508 = vmatpush.bf16.msra.mxu0 %v2906
    %4509 = vmatpush.bf16.msra.mxu0 %v2900
    %4510 = vmatpush.bf16.msra.mxu0 %v2894
    %4511 = vmatpush.bf16.msra.mxu0 %v2888
    %4512 = vmatmul.bf16.gmra.mxu0 %v850
    %v4513 = vpop.f32.mrf.mxu0
    %v4514 = vadd.f32 %v4500, %v4513
    %v4515 = vpop.f32.mrf.mxu0
    %v4516 = vadd.f32 %v4502, %v4515
    %4517 = vdwg.mxu0
    %4518 = vmatpush.bf16.msra.mxu0 %v2978
    %4519 = vmatpush.bf16.msra.mxu0 %v2972
    %4520 = vmatpush.bf16.msra.mxu0 %v2966
    %4521 = vmatpush.bf16.msra.mxu0 %v2960
    %4522 = vmatpush.bf16.msra.mxu0 %v2954
    %4523 = vmatpush.bf16.msra.mxu0 %v2948
    %4524 = vmatpush.bf16.msra.mxu0 %v2942
    %4525 = vmatpush.bf16.msra.mxu0 %v2936
    %4526 = vmatmul.bf16.gmra.mxu0 %v851
    %v4527 = vpop.f32.mrf.mxu0
    %v4528 = vadd.f32 %v4514, %v4527
    %v4529 = vpop.f32.mrf.mxu0
    %v4530 = vadd.f32 %v4516, %v4529
    %4531 = vdwg.mxu0
    %4532 = vmatpush.bf16.msra.mxu0 %v3026
    %4533 = vmatpush.bf16.msra.mxu0 %v3020
    %4534 = vmatpush.bf16.msra.mxu0 %v3014
    %4535 = vmatpush.bf16.msra.mxu0 %v3008
    %4536 = vmatpush.bf16.msra.mxu0 %v3002
    %4537 = vmatpush.bf16.msra.mxu0 %v2996
    %4538 = vmatpush.bf16.msra.mxu0 %v2990
    %4539 = vmatpush.bf16.msra.mxu0 %v2984
    %4540 = vmatmul.bf16.gmra.mxu0 %v852
    %v4541 = vpop.f32.mrf.mxu0
    %v4542 = vadd.f32 %v4528, %v4541
    %v4543 = vpop.f32.mrf.mxu0
    %v4544 = vadd.f32 %v4530, %v4543
    %4545 = vdwg.mxu0
    %4546 = vmatpush.bf16.msra.mxu0 %v3074
    %4547 = vmatpush.bf16.msra.mxu0 %v3068
    %4548 = vmatpush.bf16.msra.mxu0 %v3062
    %4549 = vmatpush.bf16.msra.mxu0 %v3056
    %4550 = vmatpush.bf16.msra.mxu0 %v3050
    %4551 = vmatpush.bf16.msra.mxu0 %v3044
    %4552 = vmatpush.bf16.msra.mxu0 %v3038
    %4553 = vmatpush.bf16.msra.mxu0 %v3032
    %4554 = vmatmul.bf16.gmra.mxu0 %v853
    %v4555 = vpop.f32.mrf.mxu0
    %v4556 = vadd.f32 %v4542, %v4555
    %v4557 = vpop.f32.mrf.mxu0
    %v4558 = vadd.f32 %v4544, %v4557
    %4559 = vdwg.mxu0
    %4560 = vmatpush.bf16.msra.mxu0 %v3122
    %4561 = vmatpush.bf16.msra.mxu0 %v3116
    %4562 = vmatpush.bf16.msra.mxu0 %v3110
    %4563 = vmatpush.bf16.msra.mxu0 %v3104
    %4564 = vmatpush.bf16.msra.mxu0 %v3098
    %4565 = vmatpush.bf16.msra.mxu0 %v3092
    %4566 = vmatpush.bf16.msra.mxu0 %v3086
    %4567 = vmatpush.bf16.msra.mxu0 %v3080
    %4568 = vmatmul.bf16.gmra.mxu0 %v854
    %v4569 = vpop.f32.mrf.mxu0
    %v4570 = vadd.f32 %v4556, %v4569
    %v4571 = vpop.f32.mrf.mxu0
    %v4572 = vadd.f32 %v4558, %v4571
    %4573 = vdwg.mxu0
    %4574 = vmatpush.bf16.msra.mxu0 %v3170
    %4575 = vmatpush.bf16.msra.mxu0 %v3164
    %4576 = vmatpush.bf16.msra.mxu0 %v3158
    %4577 = vmatpush.bf16.msra.mxu0 %v3152
    %4578 = vmatpush.bf16.msra.mxu0 %v3146
    %4579 = vmatpush.bf16.msra.mxu0 %v3140
    %4580 = vmatpush.bf16.msra.mxu0 %v3134
    %4581 = vmatpush.bf16.msra.mxu0 %v3128
    %4582 = vmatmul.bf16.gmra.mxu0 %v855
    %v4583 = vpop.f32.mrf.mxu0
    %v4584 = vadd.f32 %v4570, %v4583
    %v4585 = vpop.f32.mrf.mxu0
    %v4586 = vadd.f32 %v4572, %v4585
    %4587 = vdwg.mxu0
    %4588 = vmatpush.bf16.msra.mxu0 %v2643
    %4589 = vmatpush.bf16.msra.mxu0 %v2637
    %4590 = vmatpush.bf16.msra.mxu0 %v2631
    %4591 = vmatpush.bf16.msra.mxu0 %v2625
    %4592 = vmatpush.bf16.msra.mxu0 %v2619
    %4593 = vmatpush.bf16.msra.mxu0 %v2613
    %4594 = vmatpush.bf16.msra.mxu0 %v2607
    %4595 = vmatpush.bf16.msra.mxu0 %v2601
    %4596 = vmatmul.bf16.gmra.mxu0 %v844
    %v4597 = vpop.f32.mrf.mxu0
    %v4598 = vadd.f32 %v801, %v4597
    %v4599 = vpop.f32.mrf.mxu0
    %v4600 = vadd.f32 %v801, %v4599
    %4601 = vdwg.mxu0
    %4602 = vmatpush.bf16.msra.mxu0 %v2691
    %4603 = vmatpush.bf16.msra.mxu0 %v2685
    %4604 = vmatpush.bf16.msra.mxu0 %v2679
    %4605 = vmatpush.bf16.msra.mxu0 %v2673
    %4606 = vmatpush.bf16.msra.mxu0 %v2667
    %4607 = vmatpush.bf16.msra.mxu0 %v2661
    %4608 = vmatpush.bf16.msra.mxu0 %v2655
    %4609 = vmatpush.bf16.msra.mxu0 %v2649
    %4610 = vmatmul.bf16.gmra.mxu0 %v845
    %v4611 = vpop.f32.mrf.mxu0
    %v4612 = vadd.f32 %v4598, %v4611
    %v4613 = vpop.f32.mrf.mxu0
    %v4614 = vadd.f32 %v4600, %v4613
    %4615 = vdwg.mxu0
    %4616 = vmatpush.bf16.msra.mxu0 %v2739
    %4617 = vmatpush.bf16.msra.mxu0 %v2733
    %4618 = vmatpush.bf16.msra.mxu0 %v2727
    %4619 = vmatpush.bf16.msra.mxu0 %v2721
    %4620 = vmatpush.bf16.msra.mxu0 %v2715
    %4621 = vmatpush.bf16.msra.mxu0 %v2709
    %4622 = vmatpush.bf16.msra.mxu0 %v2703
    %4623 = vmatpush.bf16.msra.mxu0 %v2697
    %4624 = vmatmul.bf16.gmra.mxu0 %v846
    %v4625 = vpop.f32.mrf.mxu0
    %v4626 = vadd.f32 %v4612, %v4625
    %v4627 = vpop.f32.mrf.mxu0
    %v4628 = vadd.f32 %v4614, %v4627
    %4629 = vdwg.mxu0
    %4630 = vmatpush.bf16.msra.mxu0 %v2787
    %4631 = vmatpush.bf16.msra.mxu0 %v2781
    %4632 = vmatpush.bf16.msra.mxu0 %v2775
    %4633 = vmatpush.bf16.msra.mxu0 %v2769
    %4634 = vmatpush.bf16.msra.mxu0 %v2763
    %4635 = vmatpush.bf16.msra.mxu0 %v2757
    %4636 = vmatpush.bf16.msra.mxu0 %v2751
    %4637 = vmatpush.bf16.msra.mxu0 %v2745
    %4638 = vmatmul.bf16.gmra.mxu0 %v847
    %v4639 = vpop.f32.mrf.mxu0
    %v4640 = vadd.f32 %v4626, %v4639
    %v4641 = vpop.f32.mrf.mxu0
    %v4642 = vadd.f32 %v4628, %v4641
    %4643 = vdwg.mxu0
    %4644 = vmatpush.bf16.msra.mxu0 %v2835
    %4645 = vmatpush.bf16.msra.mxu0 %v2829
    %4646 = vmatpush.bf16.msra.mxu0 %v2823
    %4647 = vmatpush.bf16.msra.mxu0 %v2817
    %4648 = vmatpush.bf16.msra.mxu0 %v2811
    %4649 = vmatpush.bf16.msra.mxu0 %v2805
    %4650 = vmatpush.bf16.msra.mxu0 %v2799
    %4651 = vmatpush.bf16.msra.mxu0 %v2793
    %4652 = vmatmul.bf16.gmra.mxu0 %v848
    %v4653 = vpop.f32.mrf.mxu0
    %v4654 = vadd.f32 %v4640, %v4653
    %v4655 = vpop.f32.mrf.mxu0
    %v4656 = vadd.f32 %v4642, %v4655
    %4657 = vdwg.mxu0
    %4658 = vmatpush.bf16.msra.mxu0 %v2883
    %4659 = vmatpush.bf16.msra.mxu0 %v2877
    %4660 = vmatpush.bf16.msra.mxu0 %v2871
    %4661 = vmatpush.bf16.msra.mxu0 %v2865
    %4662 = vmatpush.bf16.msra.mxu0 %v2859
    %4663 = vmatpush.bf16.msra.mxu0 %v2853
    %4664 = vmatpush.bf16.msra.mxu0 %v2847
    %4665 = vmatpush.bf16.msra.mxu0 %v2841
    %4666 = vmatmul.bf16.gmra.mxu0 %v849
    %v4667 = vpop.f32.mrf.mxu0
    %v4668 = vadd.f32 %v4654, %v4667
    %v4669 = vpop.f32.mrf.mxu0
    %v4670 = vadd.f32 %v4656, %v4669
    %4671 = vdwg.mxu0
    %4672 = vmatpush.bf16.msra.mxu0 %v2931
    %4673 = vmatpush.bf16.msra.mxu0 %v2925
    %4674 = vmatpush.bf16.msra.mxu0 %v2919
    %4675 = vmatpush.bf16.msra.mxu0 %v2913
    %4676 = vmatpush.bf16.msra.mxu0 %v2907
    %4677 = vmatpush.bf16.msra.mxu0 %v2901
    %4678 = vmatpush.bf16.msra.mxu0 %v2895
    %4679 = vmatpush.bf16.msra.mxu0 %v2889
    %4680 = vmatmul.bf16.gmra.mxu0 %v850
    %v4681 = vpop.f32.mrf.mxu0
    %v4682 = vadd.f32 %v4668, %v4681
    %v4683 = vpop.f32.mrf.mxu0
    %v4684 = vadd.f32 %v4670, %v4683
    %4685 = vdwg.mxu0
    %4686 = vmatpush.bf16.msra.mxu0 %v2979
    %4687 = vmatpush.bf16.msra.mxu0 %v2973
    %4688 = vmatpush.bf16.msra.mxu0 %v2967
    %4689 = vmatpush.bf16.msra.mxu0 %v2961
    %4690 = vmatpush.bf16.msra.mxu0 %v2955
    %4691 = vmatpush.bf16.msra.mxu0 %v2949
    %4692 = vmatpush.bf16.msra.mxu0 %v2943
    %4693 = vmatpush.bf16.msra.mxu0 %v2937
    %4694 = vmatmul.bf16.gmra.mxu0 %v851
    %v4695 = vpop.f32.mrf.mxu0
    %v4696 = vadd.f32 %v4682, %v4695
    %v4697 = vpop.f32.mrf.mxu0
    %v4698 = vadd.f32 %v4684, %v4697
    %4699 = vdwg.mxu0
    %4700 = vmatpush.bf16.msra.mxu0 %v3027
    %4701 = vmatpush.bf16.msra.mxu0 %v3021
    %4702 = vmatpush.bf16.msra.mxu0 %v3015
    %4703 = vmatpush.bf16.msra.mxu0 %v3009
    %4704 = vmatpush.bf16.msra.mxu0 %v3003
    %4705 = vmatpush.bf16.msra.mxu0 %v2997
    %4706 = vmatpush.bf16.msra.mxu0 %v2991
    %4707 = vmatpush.bf16.msra.mxu0 %v2985
    %4708 = vmatmul.bf16.gmra.mxu0 %v852
    %v4709 = vpop.f32.mrf.mxu0
    %v4710 = vadd.f32 %v4696, %v4709
    %v4711 = vpop.f32.mrf.mxu0
    %v4712 = vadd.f32 %v4698, %v4711
    %4713 = vdwg.mxu0
    %4714 = vmatpush.bf16.msra.mxu0 %v3075
    %4715 = vmatpush.bf16.msra.mxu0 %v3069
    %4716 = vmatpush.bf16.msra.mxu0 %v3063
    %4717 = vmatpush.bf16.msra.mxu0 %v3057
    %4718 = vmatpush.bf16.msra.mxu0 %v3051
    %4719 = vmatpush.bf16.msra.mxu0 %v3045
    %4720 = vmatpush.bf16.msra.mxu0 %v3039
    %4721 = vmatpush.bf16.msra.mxu0 %v3033
    %4722 = vmatmul.bf16.gmra.mxu0 %v853
    %v4723 = vpop.f32.mrf.mxu0
    %v4724 = vadd.f32 %v4710, %v4723
    %v4725 = vpop.f32.mrf.mxu0
    %v4726 = vadd.f32 %v4712, %v4725
    %4727 = vdwg.mxu0
    %4728 = vmatpush.bf16.msra.mxu0 %v3123
    %4729 = vmatpush.bf16.msra.mxu0 %v3117
    %4730 = vmatpush.bf16.msra.mxu0 %v3111
    %4731 = vmatpush.bf16.msra.mxu0 %v3105
    %4732 = vmatpush.bf16.msra.mxu0 %v3099
    %4733 = vmatpush.bf16.msra.mxu0 %v3093
    %4734 = vmatpush.bf16.msra.mxu0 %v3087
    %4735 = vmatpush.bf16.msra.mxu0 %v3081
    %4736 = vmatmul.bf16.gmra.mxu0 %v854
    %v4737 = vpop.f32.mrf.mxu0
    %v4738 = vadd.f32 %v4724, %v4737
    %v4739 = vpop.f32.mrf.mxu0
    %v4740 = vadd.f32 %v4726, %v4739
    %4741 = vdwg.mxu0
    %4742 = vmatpush.bf16.msra.mxu0 %v3171
    %4743 = vmatpush.bf16.msra.mxu0 %v3165
    %4744 = vmatpush.bf16.msra.mxu0 %v3159
    %4745 = vmatpush.bf16.msra.mxu0 %v3153
    %4746 = vmatpush.bf16.msra.mxu0 %v3147
    %4747 = vmatpush.bf16.msra.mxu0 %v3141
    %4748 = vmatpush.bf16.msra.mxu0 %v3135
    %4749 = vmatpush.bf16.msra.mxu0 %v3129
    %4750 = vmatmul.bf16.gmra.mxu0 %v855
    %v4751 = vpop.f32.mrf.mxu0
    %v4752 = vadd.f32 %v4738, %v4751
    %v4753 = vpop.f32.mrf.mxu0
    %v4754 = vadd.f32 %v4740, %v4753
    %4755 = vdwg.mxu0
    %v4756 = vld [vmem:[#allocation13] sm:$0x3f]
    %v4758 = vperm.slane %v4756, 0
    %v4759 = vperm.slane %v4756, 1
    %v4760 = vperm.slane %v4756, 2
    %v4761 = vperm.slane %v4756, 3
    %v4762 = vperm.slane %v4756, 4
    %v4763 = vperm.slane %v4756, 5
    %v4770 = vmul.f32 %v3912, %v4758
    %v4771 = vmul.f32 %v4080, %v4759
    %v4772 = vmul.f32 %v4248, %v4760
    %v4773 = vmul.f32 %v4416, %v4761
    %v4774 = vmul.f32 %v4584, %v4762
    %v4775 = vmul.f32 %v4752, %v4763
    %v4776 = vmul.f32 %v3914, %v4758
    %v4777 = vmul.f32 %v4082, %v4759
    %v4778 = vmul.f32 %v4250, %v4760
    %v4779 = vmul.f32 %v4418, %v4761
    %v4780 = vmul.f32 %v4586, %v4762
    %v4781 = vmul.f32 %v4754, %v4763
    %v4782 = vadd.f32 %v4770, %v4771
    %v4783 = vadd.f32 %v4782, %v4772
    %v4784 = vadd.f32 %v4783, %v4773
    %v4785 = vadd.f32 %v4784, %v4774
    %v4786 = vadd.f32 %v4785, %v4775
    %4787 = vadd.xlane.f32.xlu0 %v4786
    %v4788 = vpop.xlane.xlu0 %4787
    %v4789 = vadd.f32 %v4776, %v4777
    %v4790 = vadd.f32 %v4789, %v4778
    %v4791 = vadd.f32 %v4790, %v4779
    %v4792 = vadd.f32 %v4791, %v4780
    %v4793 = vadd.f32 %v4792, %v4781
    %4794 = vadd.xlane.f32.xlu0 %v4793
    %v4795 = vpop.xlane.xlu0 %4794
    %v4796 = vld [vmem:[#allocation2] sm:$0x1]
    %v4798 = vperm.slane %v4796, 0
    %4799 = vset.pattern.permute.xlu0 0
    %4800 = vperm.xlu0 %4799, %v4798
    %v4801 = vpop.permute.xlu0 %4800
    %v4803 = vadd.f32 %v4788, %v4801
    %v4804 = vadd.f32 %v4795, %v4801
    %v4805 = vmul.f32 %v4803, 0.03608439
    %v4806 = vmul.f32 %v4804, 0.03608439
    %v4807 = vld [vmem:[#allocation7] sm:$0x3]
    %vm4808 = vcmp.gt.f32.partialorder %v4807, 0.0
    %v4811 = vlaneseq
    %v4812 = vand.u32 %v4811, 127
    %v4813 = vperm.slane %v4805, %v4812
    %v4814 = vperm.slane %v4806, %v4812
    %vm4815 = vcmask 1041409
    %v4816 = vsel %vm4815, %v4814, %v4813
    %v4818 = vsel %vm4808, %v4816, -1e+30
    %vm4819 = vcmask 58368
    %v4820 = vsel %vm4819, %v4818, -inf
    %4821 = vmax.xlane.f32.xlu0 %v4820
    %v4822 = vpop.xlane.xlu0 %4821
    %v4823 = vsub.f32 %v4818, %v4822
    %v4824 = vmul.f32 %v4823, 1.442695
    %v4825 = vpow.pop %v4824
    %v4826 = vsel %vm4819, %v4825, 0.0
    %4827 = vadd.xlane.f32.xlu0 %v4826
    %v4828 = vpop.xlane.xlu0 %4827
    %v4829 = vrcp.pop %v4828
    %v4830 = vmul.f32 %v4828, %v4829
    %v4831 = vsub.f32 1.0, %v4830
    %v4832 = vmul.f32 %v4829, %v4831
    %v4833 = vadd.f32 %v4829, %v4832
    %vm4834 = vweird.f32 %v4828
    %vm4835 = vweird.f32 %v4829
    %vm4836 = vmor %vm4834, %vm4835
    %v4837 = vsel %vm4836, %v4829, %v4833
    %v4838 = vand.u32 2147483647, %v4828
    %vm4839 = vcmp.eq.f32.partialorder %v4838, 8.507059e+37
    %v4840 = vand.u32 %v4828, 2147483648
    %v4841 = vor.u32 1.1754944e-38, %v4840
    %v4842 = vsel %vm4839, %v4841, %v4837
    %v4843 = vmul.f32 %v4825, %v4842
    %v4844 = vperm.slane %v4843, 0
    %v4845 = vlaneseq
    %v4846 = vshrl.u32 %v4845, 7
    %4848 = vset.pattern.permute.xlu0 %v4846
    %4849 = vperm.xlu0 %4848, %v4844
    %v4850 = vpop.permute.xlu0 %4849
    %v4851 = vperm.slane %v4843, 1
    %v4852 = vlaneseq
    %v4853 = vshrl.u32 %v4852, 7
    %4855 = vset.pattern.permute.xlu0 %v4853
    %4856 = vperm.xlu0 %4855, %v4851
    %v4857 = vpop.permute.xlu0 %4856
    %v4858 = vmul.f32 %v4850, %v3912
    %v4859 = vmul.f32 %v4850, %v4080
    %v4860 = vmul.f32 %v4850, %v4248
    %v4861 = vmul.f32 %v4850, %v4416
    %v4862 = vmul.f32 %v4850, %v4584
    %v4863 = vmul.f32 %v4850, %v4752
    %v4864 = vmul.f32 %v4857, %v3914
    %v4865 = vmul.f32 %v4857, %v4082
    %v4866 = vmul.f32 %v4857, %v4250
    %v4867 = vmul.f32 %v4857, %v4418
    %v4868 = vmul.f32 %v4857, %v4586
    %v4869 = vmul.f32 %v4857, %v4754
    %v4870 = vrot.slane %v4858, 4
    %v4871 = vadd.f32 %v4858, %v4870
    %v4872 = vrot.slane %v4871, 2
    %v4873 = vadd.f32 %v4871, %v4872
    %v4874 = vrot.slane %v4873, 1
    %v4875 = vadd.f32 %v4873, %v4874
    %v4876 = vrot.slane %v4859, 4
    %v4877 = vadd.f32 %v4859, %v4876
    %v4878 = vrot.slane %v4877, 2
    %v4879 = vadd.f32 %v4877, %v4878
    %v4880 = vrot.slane %v4879, 1
    %v4881 = vadd.f32 %v4879, %v4880
    %v4882 = vrot.slane %v4860, 4
    %v4883 = vadd.f32 %v4860, %v4882
    %v4884 = vrot.slane %v4883, 2
    %v4885 = vadd.f32 %v4883, %v4884
    %v4886 = vrot.slane %v4885, 1
    %v4887 = vadd.f32 %v4885, %v4886
    %v4888 = vrot.slane %v4861, 4
    %v4889 = vadd.f32 %v4861, %v4888
    %v4890 = vrot.slane %v4889, 2
    %v4891 = vadd.f32 %v4889, %v4890
    %v4892 = vrot.slane %v4891, 1
    %v4893 = vadd.f32 %v4891, %v4892
    %v4894 = vrot.slane %v4862, 4
    %v4895 = vadd.f32 %v4862, %v4894
    %v4896 = vrot.slane %v4895, 2
    %v4897 = vadd.f32 %v4895, %v4896
    %v4898 = vrot.slane %v4897, 1
    %v4899 = vadd.f32 %v4897, %v4898
    %v4900 = vrot.slane %v4863, 4
    %v4901 = vadd.f32 %v4863, %v4900
    %v4902 = vrot.slane %v4901, 2
    %v4903 = vadd.f32 %v4901, %v4902
    %v4904 = vrot.slane %v4903, 1
    %v4905 = vadd.f32 %v4903, %v4904
    %v4906 = vrot.slane %v4864, 4
    %v4907 = vadd.f32 %v4864, %v4906
    %v4908 = vrot.slane %v4907, 2
    %v4909 = vadd.f32 %v4907, %v4908
    %v4910 = vrot.slane %v4909, 1
    %v4911 = vadd.f32 %v4909, %v4910
    %v4912 = vrot.slane %v4865, 4
    %v4913 = vadd.f32 %v4865, %v4912
    %v4914 = vrot.slane %v4913, 2
    %v4915 = vadd.f32 %v4913, %v4914
    %v4916 = vrot.slane %v4915, 1
    %v4917 = vadd.f32 %v4915, %v4916
    %v4918 = vrot.slane %v4866, 4
    %v4919 = vadd.f32 %v4866, %v4918
    %v4920 = vrot.slane %v4919, 2
    %v4921 = vadd.f32 %v4919, %v4920
    %v4922 = vrot.slane %v4921, 1
    %v4923 = vadd.f32 %v4921, %v4922
    %v4924 = vrot.slane %v4867, 4
    %v4925 = vadd.f32 %v4867, %v4924
    %v4926 = vrot.slane %v4925, 2
    %v4927 = vadd.f32 %v4925, %v4926
    %v4928 = vrot.slane %v4927, 1
    %v4929 = vadd.f32 %v4927, %v4928
    %v4930 = vrot.slane %v4868, 4
    %v4931 = vadd.f32 %v4868, %v4930
    %v4932 = vrot.slane %v4931, 2
    %v4933 = vadd.f32 %v4931, %v4932
    %v4934 = vrot.slane %v4933, 1
    %v4935 = vadd.f32 %v4933, %v4934
    %v4936 = vrot.slane %v4869, 4
    %v4937 = vadd.f32 %v4869, %v4936
    %v4938 = vrot.slane %v4937, 2
    %v4939 = vadd.f32 %v4937, %v4938
    %v4940 = vrot.slane %v4939, 1
    %v4941 = vadd.f32 %v4939, %v4940
    %v4942 = vpack.c.bf16 %v4875, %v4875
    %v4943 = vpack.c.bf16 %v4881, %v4881
    %v4944 = vpack.c.bf16 %v4887, %v4887
    %v4945 = vpack.c.bf16 %v4893, %v4893
    %v4946 = vpack.c.bf16 %v4899, %v4899
    %v4947 = vpack.c.bf16 %v4905, %v4905
    %v4948 = vpack.c.bf16 %v4911, %v4911
    %v4949 = vpack.c.bf16 %v4917, %v4917
    %v4950 = vpack.c.bf16 %v4923, %v4923
    %v4951 = vpack.c.bf16 %v4929, %v4929
    %v4952 = vpack.c.bf16 %v4935, %v4935
    %v4953 = vpack.c.bf16 %v4941, %v4941
    %v4954 = vld [vmem:[#allocation15] sm:$0xff]
    %v4955 = vld [vmem:[#allocation15 + $0x8] sm:$0xff]
    %v4956 = vld [vmem:[#allocation15 + $0x10] sm:$0xff]
    %v4957 = vld [vmem:[#allocation15 + $0x18] sm:$0xff]
    %v4958 = vld [vmem:[#allocation15 + $0x20] sm:$0xff]
    %v4959 = vld [vmem:[#allocation15 + $0x28] sm:$0xff]
    %v4960 = vld [vmem:[#allocation15 + $0x30] sm:$0xff]
    %v4961 = vld [vmem:[#allocation15 + $0x38] sm:$0xff]
    %v4962 = vld [vmem:[#allocation15 + $0x40] sm:$0xff]
    %v4963 = vld [vmem:[#allocation15 + $0x48] sm:$0xff]
    %v4964 = vld [vmem:[#allocation15 + $0x50] sm:$0xff]
    %v4965 = vld [vmem:[#allocation15 + $0x58] sm:$0xff]
    %v4966 = vld [vmem:[#allocation15 + $0x60] sm:$0xff]
    %v4967 = vld [vmem:[#allocation15 + $0x68] sm:$0xff]
    %v4968 = vld [vmem:[#allocation15 + $0x70] sm:$0xff]
    %v4969 = vld [vmem:[#allocation15 + $0x78] sm:$0xff]
    %v4970 = vld [vmem:[#allocation15 + $0x80] sm:$0xff]
    %v4971 = vld [vmem:[#allocation15 + $0x88] sm:$0xff]
    %v4972 = vld [vmem:[#allocation15 + $0x90] sm:$0xff]
    %v4973 = vld [vmem:[#allocation15 + $0x98] sm:$0xff]
    %v4974 = vld [vmem:[#allocation15 + $0xa0] sm:$0xff]
    %v4975 = vld [vmem:[#allocation15 + $0xa8] sm:$0xff]
    %v4976 = vld [vmem:[#allocation15 + $0xb0] sm:$0xff]
    %v4977 = vld [vmem:[#allocation15 + $0xb8] sm:$0xff]
    %v4978 = vld [vmem:[#allocation15 + $0xc0] sm:$0xff]
    %v4979 = vld [vmem:[#allocation15 + $0xc8] sm:$0xff]
    %v4980 = vld [vmem:[#allocation15 + $0xd0] sm:$0xff]
    %v4981 = vld [vmem:[#allocation15 + $0xd8] sm:$0xff]
    %v4982 = vld [vmem:[#allocation15 + $0xe0] sm:$0xff]
    %v4983 = vld [vmem:[#allocation15 + $0xe8] sm:$0xff]
    %v4984 = vld [vmem:[#allocation15 + $0xf0] sm:$0xff]
    %v4985 = vld [vmem:[#allocation15 + $0xf8] sm:$0xff]
    %v4986 = vld [vmem:[#allocation15 + $0x100] sm:$0xff]
    %v4987 = vld [vmem:[#allocation15 + $0x108] sm:$0xff]
    %v4988 = vld [vmem:[#allocation15 + $0x110] sm:$0xff]
    %v4989 = vld [vmem:[#allocation15 + $0x118] sm:$0xff]
    %v4990 = vld [vmem:[#allocation15 + $0x120] sm:$0xff]
    %v4991 = vld [vmem:[#allocation15 + $0x128] sm:$0xff]
    %v4992 = vld [vmem:[#allocation15 + $0x130] sm:$0xff]
    %v4993 = vld [vmem:[#allocation15 + $0x138] sm:$0xff]
    %v4994 = vld [vmem:[#allocation15 + $0x140] sm:$0xff]
    %v4995 = vld [vmem:[#allocation15 + $0x148] sm:$0xff]
    %v4996 = vld [vmem:[#allocation15 + $0x150] sm:$0xff]
    %v4997 = vld [vmem:[#allocation15 + $0x158] sm:$0xff]
    %v4998 = vld [vmem:[#allocation15 + $0x160] sm:$0xff]
    %v4999 = vld [vmem:[#allocation15 + $0x168] sm:$0xff]
    %v5000 = vld [vmem:[#allocation15 + $0x170] sm:$0xff]
    %v5001 = vld [vmem:[#allocation15 + $0x178] sm:$0xff]
    %v5002 = vld [vmem:[#allocation15 + $0x180] sm:$0xff]
    %v5003 = vld [vmem:[#allocation15 + $0x188] sm:$0xff]
    %v5004 = vld [vmem:[#allocation15 + $0x190] sm:$0xff]
    %v5005 = vld [vmem:[#allocation15 + $0x198] sm:$0xff]
    %v5006 = vld [vmem:[#allocation15 + $0x1a0] sm:$0xff]
    %v5007 = vld [vmem:[#allocation15 + $0x1a8] sm:$0xff]
    %v5008 = vld [vmem:[#allocation15 + $0x1b0] sm:$0xff]
    %v5009 = vld [vmem:[#allocation15 + $0x1b8] sm:$0xff]
    %v5010 = vld [vmem:[#allocation15 + $0x1c0] sm:$0xff]
    %v5011 = vld [vmem:[#allocation15 + $0x1c8] sm:$0xff]
    %v5012 = vld [vmem:[#allocation15 + $0x1d0] sm:$0xff]
    %v5013 = vld [vmem:[#allocation15 + $0x1d8] sm:$0xff]
    %v5014 = vld [vmem:[#allocation15 + $0x1e0] sm:$0xff]
    %v5015 = vld [vmem:[#allocation15 + $0x1e8] sm:$0xff]
    %v5016 = vld [vmem:[#allocation15 + $0x1f0] sm:$0xff]
    %v5017 = vld [vmem:[#allocation15 + $0x1f8] sm:$0xff]
    %v5018 = vld [vmem:[#allocation15 + $0x200] sm:$0xff]
    %v5019 = vld [vmem:[#allocation15 + $0x208] sm:$0xff]
    %v5020 = vld [vmem:[#allocation15 + $0x210] sm:$0xff]
    %v5021 = vld [vmem:[#allocation15 + $0x218] sm:$0xff]
    %v5022 = vld [vmem:[#allocation15 + $0x220] sm:$0xff]
    %v5023 = vld [vmem:[#allocation15 + $0x228] sm:$0xff]
    %v5024 = vld [vmem:[#allocation15 + $0x230] sm:$0xff]
    %v5025 = vld [vmem:[#allocation15 + $0x238] sm:$0xff]
    %v5026 = vld [vmem:[#allocation15 + $0x240] sm:$0xff]
    %v5027 = vld [vmem:[#allocation15 + $0x248] sm:$0xff]
    %v5028 = vld [vmem:[#allocation15 + $0x250] sm:$0xff]
    %v5029 = vld [vmem:[#allocation15 + $0x258] sm:$0xff]
    %v5030 = vld [vmem:[#allocation15 + $0x260] sm:$0xff]
    %v5031 = vld [vmem:[#allocation15 + $0x268] sm:$0xff]
    %v5032 = vld [vmem:[#allocation15 + $0x270] sm:$0xff]
    %v5033 = vld [vmem:[#allocation15 + $0x278] sm:$0xff]
    %v5034 = vld [vmem:[#allocation15 + $0x280] sm:$0xff]
    %v5035 = vld [vmem:[#allocation15 + $0x288] sm:$0xff]
    %v5036 = vld [vmem:[#allocation15 + $0x290] sm:$0xff]
    %v5037 = vld [vmem:[#allocation15 + $0x298] sm:$0xff]
    %v5038 = vld [vmem:[#allocation15 + $0x2a0] sm:$0xff]
    %v5039 = vld [vmem:[#allocation15 + $0x2a8] sm:$0xff]
    %v5040 = vld [vmem:[#allocation15 + $0x2b0] sm:$0xff]
    %v5041 = vld [vmem:[#allocation15 + $0x2b8] sm:$0xff]
    %v5042 = vld [vmem:[#allocation15 + $0x2c0] sm:$0xff]
    %v5043 = vld [vmem:[#allocation15 + $0x2c8] sm:$0xff]
    %v5044 = vld [vmem:[#allocation15 + $0x2d0] sm:$0xff]
    %v5045 = vld [vmem:[#allocation15 + $0x2d8] sm:$0xff]
    %v5046 = vld [vmem:[#allocation15 + $0x2e0] sm:$0xff]
    %v5047 = vld [vmem:[#allocation15 + $0x2e8] sm:$0xff]
    %v5048 = vld [vmem:[#allocation15 + $0x2f0] sm:$0xff]
    %v5049 = vld [vmem:[#allocation15 + $0x2f8] sm:$0xff]
    %v5050 = vld [vmem:[#allocation15 + $0x300] sm:$0xff]
    %v5051 = vld [vmem:[#allocation15 + $0x308] sm:$0xff]
    %v5052 = vld [vmem:[#allocation15 + $0x310] sm:$0xff]
    %v5053 = vld [vmem:[#allocation15 + $0x318] sm:$0xff]
    %v5054 = vld [vmem:[#allocation15 + $0x320] sm:$0xff]
    %v5055 = vld [vmem:[#allocation15 + $0x328] sm:$0xff]
    %v5056 = vld [vmem:[#allocation15 + $0x330] sm:$0xff]
    %v5057 = vld [vmem:[#allocation15 + $0x338] sm:$0xff]
    %v5058 = vld [vmem:[#allocation15 + $0x340] sm:$0xff]
    %v5059 = vld [vmem:[#allocation15 + $0x348] sm:$0xff]
    %v5060 = vld [vmem:[#allocation15 + $0x350] sm:$0xff]
    %v5061 = vld [vmem:[#allocation15 + $0x358] sm:$0xff]
    %v5062 = vld [vmem:[#allocation15 + $0x360] sm:$0xff]
    %v5063 = vld [vmem:[#allocation15 + $0x368] sm:$0xff]
    %v5064 = vld [vmem:[#allocation15 + $0x370] sm:$0xff]
    %v5065 = vld [vmem:[#allocation15 + $0x378] sm:$0xff]
    %v5066 = vld [vmem:[#allocation15 + $0x380] sm:$0xff]
    %v5067 = vld [vmem:[#allocation15 + $0x388] sm:$0xff]
    %v5068 = vld [vmem:[#allocation15 + $0x390] sm:$0xff]
    %v5069 = vld [vmem:[#allocation15 + $0x398] sm:$0xff]
    %v5070 = vld [vmem:[#allocation15 + $0x3a0] sm:$0xff]
    %v5071 = vld [vmem:[#allocation15 + $0x3a8] sm:$0xff]
    %v5072 = vld [vmem:[#allocation15 + $0x3b0] sm:$0xff]
    %v5073 = vld [vmem:[#allocation15 + $0x3b8] sm:$0xff]
    %v5074 = vld [vmem:[#allocation15 + $0x3c0] sm:$0xff]
    %v5075 = vld [vmem:[#allocation15 + $0x3c8] sm:$0xff]
    %v5076 = vld [vmem:[#allocation15 + $0x3d0] sm:$0xff]
    %v5077 = vld [vmem:[#allocation15 + $0x3d8] sm:$0xff]
    %v5078 = vld [vmem:[#allocation15 + $0x3e0] sm:$0xff]
    %v5079 = vld [vmem:[#allocation15 + $0x3e8] sm:$0xff]
    %v5080 = vld [vmem:[#allocation15 + $0x3f0] sm:$0xff]
    %v5081 = vld [vmem:[#allocation15 + $0x3f8] sm:$0xff]
    %v5082 = vld [vmem:[#allocation15 + $0x400] sm:$0xff]
    %v5083 = vld [vmem:[#allocation15 + $0x408] sm:$0xff]
    %v5084 = vld [vmem:[#allocation15 + $0x410] sm:$0xff]
    %v5085 = vld [vmem:[#allocation15 + $0x418] sm:$0xff]
    %v5086 = vld [vmem:[#allocation15 + $0x420] sm:$0xff]
    %v5087 = vld [vmem:[#allocation15 + $0x428] sm:$0xff]
    %v5088 = vld [vmem:[#allocation15 + $0x430] sm:$0xff]
    %v5089 = vld [vmem:[#allocation15 + $0x438] sm:$0xff]
    %v5090 = vld [vmem:[#allocation15 + $0x440] sm:$0xff]
    %v5091 = vld [vmem:[#allocation15 + $0x448] sm:$0xff]
    %v5092 = vld [vmem:[#allocation15 + $0x450] sm:$0xff]
    %v5093 = vld [vmem:[#allocation15 + $0x458] sm:$0xff]
    %v5094 = vld [vmem:[#allocation15 + $0x460] sm:$0xff]
    %v5095 = vld [vmem:[#allocation15 + $0x468] sm:$0xff]
    %v5096 = vld [vmem:[#allocation15 + $0x470] sm:$0xff]
    %v5097 = vld [vmem:[#allocation15 + $0x478] sm:$0xff]
    %v5098 = vld [vmem:[#allocation15 + $0x480] sm:$0xff]
    %v5099 = vld [vmem:[#allocation15 + $0x488] sm:$0xff]
    %v5100 = vld [vmem:[#allocation15 + $0x490] sm:$0xff]
    %v5101 = vld [vmem:[#allocation15 + $0x498] sm:$0xff]
    %v5102 = vld [vmem:[#allocation15 + $0x4a0] sm:$0xff]
    %v5103 = vld [vmem:[#allocation15 + $0x4a8] sm:$0xff]
    %v5104 = vld [vmem:[#allocation15 + $0x4b0] sm:$0xff]
    %v5105 = vld [vmem:[#allocation15 + $0x4b8] sm:$0xff]
    %v5106 = vld [vmem:[#allocation15 + $0x4c0] sm:$0xff]
    %v5107 = vld [vmem:[#allocation15 + $0x4c8] sm:$0xff]
    %v5108 = vld [vmem:[#allocation15 + $0x4d0] sm:$0xff]
    %v5109 = vld [vmem:[#allocation15 + $0x4d8] sm:$0xff]
    %v5110 = vld [vmem:[#allocation15 + $0x4e0] sm:$0xff]
    %v5111 = vld [vmem:[#allocation15 + $0x4e8] sm:$0xff]
    %v5112 = vld [vmem:[#allocation15 + $0x4f0] sm:$0xff]
    %v5113 = vld [vmem:[#allocation15 + $0x4f8] sm:$0xff]
    %v5114 = vld [vmem:[#allocation15 + $0x500] sm:$0xff]
    %v5115 = vld [vmem:[#allocation15 + $0x508] sm:$0xff]
    %v5116 = vld [vmem:[#allocation15 + $0x510] sm:$0xff]
    %v5117 = vld [vmem:[#allocation15 + $0x518] sm:$0xff]
    %v5118 = vld [vmem:[#allocation15 + $0x520] sm:$0xff]
    %v5119 = vld [vmem:[#allocation15 + $0x528] sm:$0xff]
    %v5120 = vld [vmem:[#allocation15 + $0x530] sm:$0xff]
    %v5121 = vld [vmem:[#allocation15 + $0x538] sm:$0xff]
    %v5122 = vld [vmem:[#allocation15 + $0x540] sm:$0xff]
    %v5123 = vld [vmem:[#allocation15 + $0x548] sm:$0xff]
    %v5124 = vld [vmem:[#allocation15 + $0x550] sm:$0xff]
    %v5125 = vld [vmem:[#allocation15 + $0x558] sm:$0xff]
    %v5126 = vld [vmem:[#allocation15 + $0x560] sm:$0xff]
    %v5127 = vld [vmem:[#allocation15 + $0x568] sm:$0xff]
    %v5128 = vld [vmem:[#allocation15 + $0x570] sm:$0xff]
    %v5129 = vld [vmem:[#allocation15 + $0x578] sm:$0xff]
    %v5130 = vld [vmem:[#allocation15 + $0x580] sm:$0xff]
    %v5131 = vld [vmem:[#allocation15 + $0x588] sm:$0xff]
    %v5132 = vld [vmem:[#allocation15 + $0x590] sm:$0xff]
    %v5133 = vld [vmem:[#allocation15 + $0x598] sm:$0xff]
    %v5134 = vld [vmem:[#allocation15 + $0x5a0] sm:$0xff]
    %v5135 = vld [vmem:[#allocation15 + $0x5a8] sm:$0xff]
    %v5136 = vld [vmem:[#allocation15 + $0x5b0] sm:$0xff]
    %v5137 = vld [vmem:[#allocation15 + $0x5b8] sm:$0xff]
    %v5138 = vld [vmem:[#allocation15 + $0x5c0] sm:$0xff]
    %v5139 = vld [vmem:[#allocation15 + $0x5c8] sm:$0xff]
    %v5140 = vld [vmem:[#allocation15 + $0x5d0] sm:$0xff]
    %v5141 = vld [vmem:[#allocation15 + $0x5d8] sm:$0xff]
    %v5142 = vld [vmem:[#allocation15 + $0x5e0] sm:$0xff]
    %v5143 = vld [vmem:[#allocation15 + $0x5e8] sm:$0xff]
    %v5144 = vld [vmem:[#allocation15 + $0x5f0] sm:$0xff]
    %v5145 = vld [vmem:[#allocation15 + $0x5f8] sm:$0xff]
    %v5146 = vld [vmem:[#allocation15 + $0x600] sm:$0xff]
    %v5147 = vld [vmem:[#allocation15 + $0x608] sm:$0xff]
    %v5148 = vld [vmem:[#allocation15 + $0x610] sm:$0xff]
    %v5149 = vld [vmem:[#allocation15 + $0x618] sm:$0xff]
    %v5150 = vld [vmem:[#allocation15 + $0x620] sm:$0xff]
    %v5151 = vld [vmem:[#allocation15 + $0x628] sm:$0xff]
    %v5152 = vld [vmem:[#allocation15 + $0x630] sm:$0xff]
    %v5153 = vld [vmem:[#allocation15 + $0x638] sm:$0xff]
    %v5154 = vld [vmem:[#allocation15 + $0x640] sm:$0xff]
    %v5155 = vld [vmem:[#allocation15 + $0x648] sm:$0xff]
    %v5156 = vld [vmem:[#allocation15 + $0x650] sm:$0xff]
    %v5157 = vld [vmem:[#allocation15 + $0x658] sm:$0xff]
    %v5158 = vld [vmem:[#allocation15 + $0x660] sm:$0xff]
    %v5159 = vld [vmem:[#allocation15 + $0x668] sm:$0xff]
    %v5160 = vld [vmem:[#allocation15 + $0x670] sm:$0xff]
    %v5161 = vld [vmem:[#allocation15 + $0x678] sm:$0xff]
    %v5162 = vld [vmem:[#allocation15 + $0x680] sm:$0xff]
    %v5163 = vld [vmem:[#allocation15 + $0x688] sm:$0xff]
    %v5164 = vld [vmem:[#allocation15 + $0x690] sm:$0xff]
    %v5165 = vld [vmem:[#allocation15 + $0x698] sm:$0xff]
    %v5166 = vld [vmem:[#allocation15 + $0x6a0] sm:$0xff]
    %v5167 = vld [vmem:[#allocation15 + $0x6a8] sm:$0xff]
    %v5168 = vld [vmem:[#allocation15 + $0x6b0] sm:$0xff]
    %v5169 = vld [vmem:[#allocation15 + $0x6b8] sm:$0xff]
    %v5170 = vld [vmem:[#allocation15 + $0x6c0] sm:$0xff]
    %v5171 = vld [vmem:[#allocation15 + $0x6c8] sm:$0xff]
    %v5172 = vld [vmem:[#allocation15 + $0x6d0] sm:$0xff]
    %v5173 = vld [vmem:[#allocation15 + $0x6d8] sm:$0xff]
    %v5174 = vld [vmem:[#allocation15 + $0x6e0] sm:$0xff]
    %v5175 = vld [vmem:[#allocation15 + $0x6e8] sm:$0xff]
    %v5176 = vld [vmem:[#allocation15 + $0x6f0] sm:$0xff]
    %v5177 = vld [vmem:[#allocation15 + $0x6f8] sm:$0xff]
    %v5178 = vld [vmem:[#allocation15 + $0x700] sm:$0xff]
    %v5179 = vld [vmem:[#allocation15 + $0x708] sm:$0xff]
    %v5180 = vld [vmem:[#allocation15 + $0x710] sm:$0xff]
    %v5181 = vld [vmem:[#allocation15 + $0x718] sm:$0xff]
    %v5182 = vld [vmem:[#allocation15 + $0x720] sm:$0xff]
    %v5183 = vld [vmem:[#allocation15 + $0x728] sm:$0xff]
    %v5184 = vld [vmem:[#allocation15 + $0x730] sm:$0xff]
    %v5185 = vld [vmem:[#allocation15 + $0x738] sm:$0xff]
    %v5186 = vld [vmem:[#allocation15 + $0x740] sm:$0xff]
    %v5187 = vld [vmem:[#allocation15 + $0x748] sm:$0xff]
    %v5188 = vld [vmem:[#allocation15 + $0x750] sm:$0xff]
    %v5189 = vld [vmem:[#allocation15 + $0x758] sm:$0xff]
    %v5190 = vld [vmem:[#allocation15 + $0x760] sm:$0xff]
    %v5191 = vld [vmem:[#allocation15 + $0x768] sm:$0xff]
    %v5192 = vld [vmem:[#allocation15 + $0x770] sm:$0xff]
    %v5193 = vld [vmem:[#allocation15 + $0x778] sm:$0xff]
    %v5194 = vld [vmem:[#allocation15 + $0x780] sm:$0xff]
    %v5195 = vld [vmem:[#allocation15 + $0x788] sm:$0xff]
    %v5196 = vld [vmem:[#allocation15 + $0x790] sm:$0xff]
    %v5197 = vld [vmem:[#allocation15 + $0x798] sm:$0xff]
    %v5198 = vld [vmem:[#allocation15 + $0x7a0] sm:$0xff]
    %v5199 = vld [vmem:[#allocation15 + $0x7a8] sm:$0xff]
    %v5200 = vld [vmem:[#allocation15 + $0x7b0] sm:$0xff]
    %v5201 = vld [vmem:[#allocation15 + $0x7b8] sm:$0xff]
    %v5202 = vld [vmem:[#allocation15 + $0x7c0] sm:$0xff]
    %v5203 = vld [vmem:[#allocation15 + $0x7c8] sm:$0xff]
    %v5204 = vld [vmem:[#allocation15 + $0x7d0] sm:$0xff]
    %v5205 = vld [vmem:[#allocation15 + $0x7d8] sm:$0xff]
    %v5206 = vld [vmem:[#allocation15 + $0x7e0] sm:$0xff]
    %v5207 = vld [vmem:[#allocation15 + $0x7e8] sm:$0xff]
    %v5208 = vld [vmem:[#allocation15 + $0x7f0] sm:$0xff]
    %v5209 = vld [vmem:[#allocation15 + $0x7f8] sm:$0xff]
    %v5210 = vld [vmem:[#allocation15 + $0x800] sm:$0xff]
    %v5211 = vld [vmem:[#allocation15 + $0x808] sm:$0xff]
    %v5212 = vld [vmem:[#allocation15 + $0x810] sm:$0xff]
    %v5213 = vld [vmem:[#allocation15 + $0x818] sm:$0xff]
    %v5214 = vld [vmem:[#allocation15 + $0x820] sm:$0xff]
    %v5215 = vld [vmem:[#allocation15 + $0x828] sm:$0xff]
    %v5216 = vld [vmem:[#allocation15 + $0x830] sm:$0xff]
    %v5217 = vld [vmem:[#allocation15 + $0x838] sm:$0xff]
    %v5218 = vld [vmem:[#allocation15 + $0x840] sm:$0xff]
    %v5219 = vld [vmem:[#allocation15 + $0x848] sm:$0xff]
    %v5220 = vld [vmem:[#allocation15 + $0x850] sm:$0xff]
    %v5221 = vld [vmem:[#allocation15 + $0x858] sm:$0xff]
    %v5222 = vld [vmem:[#allocation15 + $0x860] sm:$0xff]
    %v5223 = vld [vmem:[#allocation15 + $0x868] sm:$0xff]
    %v5224 = vld [vmem:[#allocation15 + $0x870] sm:$0xff]
    %v5225 = vld [vmem:[#allocation15 + $0x878] sm:$0xff]
    %v5226 = vld [vmem:[#allocation15 + $0x880] sm:$0xff]
    %v5227 = vld [vmem:[#allocation15 + $0x888] sm:$0xff]
    %v5228 = vld [vmem:[#allocation15 + $0x890] sm:$0xff]
    %v5229 = vld [vmem:[#allocation15 + $0x898] sm:$0xff]
    %v5230 = vld [vmem:[#allocation15 + $0x8a0] sm:$0xff]
    %v5231 = vld [vmem:[#allocation15 + $0x8a8] sm:$0xff]
    %v5232 = vld [vmem:[#allocation15 + $0x8b0] sm:$0xff]
    %v5233 = vld [vmem:[#allocation15 + $0x8b8] sm:$0xff]
    %v5234 = vld [vmem:[#allocation15 + $0x8c0] sm:$0xff]
    %v5235 = vld [vmem:[#allocation15 + $0x8c8] sm:$0xff]
    %v5236 = vld [vmem:[#allocation15 + $0x8d0] sm:$0xff]
    %v5237 = vld [vmem:[#allocation15 + $0x8d8] sm:$0xff]
    %v5238 = vld [vmem:[#allocation15 + $0x8e0] sm:$0xff]
    %v5239 = vld [vmem:[#allocation15 + $0x8e8] sm:$0xff]
    %v5240 = vld [vmem:[#allocation15 + $0x8f0] sm:$0xff]
    %v5241 = vld [vmem:[#allocation15 + $0x8f8] sm:$0xff]
    %v5242 = vld [vmem:[#allocation16] sm:$0x3f]
    %v5244 = vperm.slane %v5242, 0
    %v5245 = vperm.slane %v5242, 1
    %v5246 = vperm.slane %v5242, 2
    %v5247 = vperm.slane %v5242, 3
    %v5248 = vperm.slane %v5242, 4
    %v5249 = vperm.slane %v5242, 5
    %v5268 = vunpack.c.l.b16 %v4942
    %v5269 = vunpack.c.l.b16 %v4943
    %v5270 = vunpack.c.l.b16 %v4944
    %v5271 = vunpack.c.l.b16 %v4945
    %v5272 = vunpack.c.l.b16 %v4946
    %v5273 = vunpack.c.l.b16 %v4947
    %v5274 = vunpack.c.l.b16 %v4948
    %v5275 = vunpack.c.l.b16 %v4949
    %v5276 = vunpack.c.l.b16 %v4950
    %v5277 = vunpack.c.l.b16 %v4951
    %v5278 = vunpack.c.l.b16 %v4952
    %v5279 = vunpack.c.l.b16 %v4953
    %v5280 = vsel %vm4815, %v5274, %v5268
    %v5281 = vsel %vm4815, %v5275, %v5269
    %v5282 = vsel %vm4815, %v5276, %v5270
    %v5283 = vsel %vm4815, %v5277, %v5271
    %v5284 = vsel %vm4815, %v5278, %v5272
    %v5285 = vsel %vm4815, %v5279, %v5273
    %v5286 = vpack.c.b16 %v5280, %v5280
    %v5287 = vpack.c.b16 %v5281, %v5281
    %v5288 = vpack.c.b16 %v5282, %v5282
    %v5289 = vpack.c.b16 %v5283, %v5283
    %v5290 = vpack.c.b16 %v5284, %v5284
    %v5291 = vpack.c.b16 %v5285, %v5285
    %v5586 = vunpack.c.l.b16 %v4954
    %v5587 = vunpack.c.h.b16 %v4954
    %v5588 = vunpack.c.l.b16 %v4955
    %v5589 = vunpack.c.h.b16 %v4955
    %v5590 = vunpack.c.l.b16 %v4956
    %v5591 = vunpack.c.h.b16 %v4956
    %v5592 = vunpack.c.l.b16 %v4957
    %v5593 = vunpack.c.h.b16 %v4957
    %v5594 = vunpack.c.l.b16 %v4958
    %v5595 = vunpack.c.h.b16 %v4958
    %v5596 = vunpack.c.l.b16 %v4959
    %v5597 = vunpack.c.h.b16 %v4959
    %v5598 = vunpack.c.l.b16 %v4960
    %v5599 = vunpack.c.h.b16 %v4960
    %v5600 = vunpack.c.l.b16 %v4961
    %v5601 = vunpack.c.h.b16 %v4961
    %v5602 = vunpack.c.l.b16 %v4962
    %v5603 = vunpack.c.h.b16 %v4962
    %v5604 = vunpack.c.l.b16 %v4963
    %v5605 = vunpack.c.h.b16 %v4963
    %v5606 = vunpack.c.l.b16 %v4964
    %v5607 = vunpack.c.h.b16 %v4964
    %v5608 = vunpack.c.l.b16 %v4965
    %v5609 = vunpack.c.h.b16 %v4965
    %v5610 = vunpack.c.l.b16 %v4966
    %v5611 = vunpack.c.h.b16 %v4966
    %v5612 = vunpack.c.l.b16 %v4967
    %v5613 = vunpack.c.h.b16 %v4967
    %v5614 = vunpack.c.l.b16 %v4968
    %v5615 = vunpack.c.h.b16 %v4968
    %v5616 = vunpack.c.l.b16 %v4969
    %v5617 = vunpack.c.h.b16 %v4969
    %v5618 = vunpack.c.l.b16 %v4970
    %v5619 = vunpack.c.h.b16 %v4970
    %v5620 = vunpack.c.l.b16 %v4971
    %v5621 = vunpack.c.h.b16 %v4971
    %v5622 = vunpack.c.l.b16 %v4972
    %v5623 = vunpack.c.h.b16 %v4972
    %v5624 = vunpack.c.l.b16 %v4973
    %v5625 = vunpack.c.h.b16 %v4973
    %v5626 = vunpack.c.l.b16 %v4974
    %v5627 = vunpack.c.h.b16 %v4974
    %v5628 = vunpack.c.l.b16 %v4975
    %v5629 = vunpack.c.h.b16 %v4975
    %v5630 = vunpack.c.l.b16 %v4976
    %v5631 = vunpack.c.h.b16 %v4976
    %v5632 = vunpack.c.l.b16 %v4977
    %v5633 = vunpack.c.h.b16 %v4977
    %v5634 = vunpack.c.l.b16 %v4978
    %v5635 = vunpack.c.h.b16 %v4978
    %v5636 = vunpack.c.l.b16 %v4979
    %v5637 = vunpack.c.h.b16 %v4979
    %v5638 = vunpack.c.l.b16 %v4980
    %v5639 = vunpack.c.h.b16 %v4980
    %v5640 = vunpack.c.l.b16 %v4981
    %v5641 = vunpack.c.h.b16 %v4981
    %v5642 = vunpack.c.l.b16 %v4982
    %v5643 = vunpack.c.h.b16 %v4982
    %v5644 = vunpack.c.l.b16 %v4983
    %v5645 = vunpack.c.h.b16 %v4983
    %v5646 = vunpack.c.l.b16 %v4984
    %v5647 = vunpack.c.h.b16 %v4984
    %v5648 = vunpack.c.l.b16 %v4985
    %v5649 = vunpack.c.h.b16 %v4985
    %v5650 = vunpack.c.l.b16 %v4986
    %v5651 = vunpack.c.h.b16 %v4986
    %v5652 = vunpack.c.l.b16 %v4987
    %v5653 = vunpack.c.h.b16 %v4987
    %v5654 = vunpack.c.l.b16 %v4988
    %v5655 = vunpack.c.h.b16 %v4988
    %v5656 = vunpack.c.l.b16 %v4989
    %v5657 = vunpack.c.h.b16 %v4989
    %v5658 = vunpack.c.l.b16 %v4990
    %v5659 = vunpack.c.h.b16 %v4990
    %v5660 = vunpack.c.l.b16 %v4991
    %v5661 = vunpack.c.h.b16 %v4991
    %v5662 = vunpack.c.l.b16 %v4992
    %v5663 = vunpack.c.h.b16 %v4992
    %v5664 = vunpack.c.l.b16 %v4993
    %v5665 = vunpack.c.h.b16 %v4993
    %v5666 = vunpack.c.l.b16 %v4994
    %v5667 = vunpack.c.h.b16 %v4994
    %v5668 = vunpack.c.l.b16 %v4995
    %v5669 = vunpack.c.h.b16 %v4995
    %v5670 = vunpack.c.l.b16 %v4996
    %v5671 = vunpack.c.h.b16 %v4996
    %v5672 = vunpack.c.l.b16 %v4997
    %v5673 = vunpack.c.h.b16 %v4997
    %v5674 = vunpack.c.l.b16 %v4998
    %v5675 = vunpack.c.h.b16 %v4998
    %v5676 = vunpack.c.l.b16 %v4999
    %v5677 = vunpack.c.h.b16 %v4999
    %v5678 = vunpack.c.l.b16 %v5000
    %v5679 = vunpack.c.h.b16 %v5000
    %v5680 = vunpack.c.l.b16 %v5001
    %v5681 = vunpack.c.h.b16 %v5001
    %v5682 = vunpack.c.l.b16 %v5002
    %v5683 = vunpack.c.h.b16 %v5002
    %v5684 = vunpack.c.l.b16 %v5003
    %v5685 = vunpack.c.h.b16 %v5003
    %v5686 = vunpack.c.l.b16 %v5004
    %v5687 = vunpack.c.h.b16 %v5004
    %v5688 = vunpack.c.l.b16 %v5005
    %v5689 = vunpack.c.h.b16 %v5005
    %v5690 = vunpack.c.l.b16 %v5006
    %v5691 = vunpack.c.h.b16 %v5006
    %v5692 = vunpack.c.l.b16 %v5007
    %v5693 = vunpack.c.h.b16 %v5007
    %v5694 = vunpack.c.l.b16 %v5008
    %v5695 = vunpack.c.h.b16 %v5008
    %v5696 = vunpack.c.l.b16 %v5009
    %v5697 = vunpack.c.h.b16 %v5009
    %v5698 = vunpack.c.l.b16 %v5010
    %v5699 = vunpack.c.h.b16 %v5010
    %v5700 = vunpack.c.l.b16 %v5011
    %v5701 = vunpack.c.h.b16 %v5011
    %v5702 = vunpack.c.l.b16 %v5012
    %v5703 = vunpack.c.h.b16 %v5012
    %v5704 = vunpack.c.l.b16 %v5013
    %v5705 = vunpack.c.h.b16 %v5013
    %v5706 = vunpack.c.l.b16 %v5014
    %v5707 = vunpack.c.h.b16 %v5014
    %v5708 = vunpack.c.l.b16 %v5015
    %v5709 = vunpack.c.h.b16 %v5015
    %v5710 = vunpack.c.l.b16 %v5016
    %v5711 = vunpack.c.h.b16 %v5016
    %v5712 = vunpack.c.l.b16 %v5017
    %v5713 = vunpack.c.h.b16 %v5017
    %v5714 = vunpack.c.l.b16 %v5018
    %v5715 = vunpack.c.h.b16 %v5018
    %v5716 = vunpack.c.l.b16 %v5019
    %v5717 = vunpack.c.h.b16 %v5019
    %v5718 = vunpack.c.l.b16 %v5020
    %v5719 = vunpack.c.h.b16 %v5020
    %v5720 = vunpack.c.l.b16 %v5021
    %v5721 = vunpack.c.h.b16 %v5021
    %v5722 = vunpack.c.l.b16 %v5022
    %v5723 = vunpack.c.h.b16 %v5022
    %v5724 = vunpack.c.l.b16 %v5023
    %v5725 = vunpack.c.h.b16 %v5023
    %v5726 = vunpack.c.l.b16 %v5024
    %v5727 = vunpack.c.h.b16 %v5024
    %v5728 = vunpack.c.l.b16 %v5025
    %v5729 = vunpack.c.h.b16 %v5025
    %v5730 = vunpack.c.l.b16 %v5026
    %v5731 = vunpack.c.h.b16 %v5026
    %v5732 = vunpack.c.l.b16 %v5027
    %v5733 = vunpack.c.h.b16 %v5027
    %v5734 = vunpack.c.l.b16 %v5028
    %v5735 = vunpack.c.h.b16 %v5028
    %v5736 = vunpack.c.l.b16 %v5029
    %v5737 = vunpack.c.h.b16 %v5029
    %v5738 = vunpack.c.l.b16 %v5030
    %v5739 = vunpack.c.h.b16 %v5030
    %v5740 = vunpack.c.l.b16 %v5031
    %v5741 = vunpack.c.h.b16 %v5031
    %v5742 = vunpack.c.l.b16 %v5032
    %v5743 = vunpack.c.h.b16 %v5032
    %v5744 = vunpack.c.l.b16 %v5033
    %v5745 = vunpack.c.h.b16 %v5033
    %v5746 = vunpack.c.l.b16 %v5034
    %v5747 = vunpack.c.h.b16 %v5034
    %v5748 = vunpack.c.l.b16 %v5035
    %v5749 = vunpack.c.h.b16 %v5035
    %v5750 = vunpack.c.l.b16 %v5036
    %v5751 = vunpack.c.h.b16 %v5036
    %v5752 = vunpack.c.l.b16 %v5037
    %v5753 = vunpack.c.h.b16 %v5037
    %v5754 = vunpack.c.l.b16 %v5038
    %v5755 = vunpack.c.h.b16 %v5038
    %v5756 = vunpack.c.l.b16 %v5039
    %v5757 = vunpack.c.h.b16 %v5039
    %v5758 = vunpack.c.l.b16 %v5040
    %v5759 = vunpack.c.h.b16 %v5040
    %v5760 = vunpack.c.l.b16 %v5041
    %v5761 = vunpack.c.h.b16 %v5041
    %v5762 = vunpack.c.l.b16 %v5042
    %v5763 = vunpack.c.h.b16 %v5042
    %v5764 = vunpack.c.l.b16 %v5043
    %v5765 = vunpack.c.h.b16 %v5043
    %v5766 = vunpack.c.l.b16 %v5044
    %v5767 = vunpack.c.h.b16 %v5044
    %v5768 = vunpack.c.l.b16 %v5045
    %v5769 = vunpack.c.h.b16 %v5045
    %v5770 = vunpack.c.l.b16 %v5046
    %v5771 = vunpack.c.h.b16 %v5046
    %v5772 = vunpack.c.l.b16 %v5047
    %v5773 = vunpack.c.h.b16 %v5047
    %v5774 = vunpack.c.l.b16 %v5048
    %v5775 = vunpack.c.h.b16 %v5048
    %v5776 = vunpack.c.l.b16 %v5049
    %v5777 = vunpack.c.h.b16 %v5049
    %v5778 = vunpack.c.l.b16 %v5050
    %v5779 = vunpack.c.h.b16 %v5050
    %v5780 = vunpack.c.l.b16 %v5051
    %v5781 = vunpack.c.h.b16 %v5051
    %v5782 = vunpack.c.l.b16 %v5052
    %v5783 = vunpack.c.h.b16 %v5052
    %v5784 = vunpack.c.l.b16 %v5053
    %v5785 = vunpack.c.h.b16 %v5053
    %v5786 = vunpack.c.l.b16 %v5054
    %v5787 = vunpack.c.h.b16 %v5054
    %v5788 = vunpack.c.l.b16 %v5055
    %v5789 = vunpack.c.h.b16 %v5055
    %v5790 = vunpack.c.l.b16 %v5056
    %v5791 = vunpack.c.h.b16 %v5056
    %v5792 = vunpack.c.l.b16 %v5057
    %v5793 = vunpack.c.h.b16 %v5057
    %v5794 = vunpack.c.l.b16 %v5058
    %v5795 = vunpack.c.h.b16 %v5058
    %v5796 = vunpack.c.l.b16 %v5059
    %v5797 = vunpack.c.h.b16 %v5059
    %v5798 = vunpack.c.l.b16 %v5060
    %v5799 = vunpack.c.h.b16 %v5060
    %v5800 = vunpack.c.l.b16 %v5061
    %v5801 = vunpack.c.h.b16 %v5061
    %v5802 = vunpack.c.l.b16 %v5062
    %v5803 = vunpack.c.h.b16 %v5062
    %v5804 = vunpack.c.l.b16 %v5063
    %v5805 = vunpack.c.h.b16 %v5063
    %v5806 = vunpack.c.l.b16 %v5064
    %v5807 = vunpack.c.h.b16 %v5064
    %v5808 = vunpack.c.l.b16 %v5065
    %v5809 = vunpack.c.h.b16 %v5065
    %v5810 = vunpack.c.l.b16 %v5066
    %v5811 = vunpack.c.h.b16 %v5066
    %v5812 = vunpack.c.l.b16 %v5067
    %v5813 = vunpack.c.h.b16 %v5067
    %v5814 = vunpack.c.l.b16 %v5068
    %v5815 = vunpack.c.h.b16 %v5068
    %v5816 = vunpack.c.l.b16 %v5069
    %v5817 = vunpack.c.h.b16 %v5069
    %v5818 = vunpack.c.l.b16 %v5070
    %v5819 = vunpack.c.h.b16 %v5070
    %v5820 = vunpack.c.l.b16 %v5071
    %v5821 = vunpack.c.h.b16 %v5071
    %v5822 = vunpack.c.l.b16 %v5072
    %v5823 = vunpack.c.h.b16 %v5072
    %v5824 = vunpack.c.l.b16 %v5073
    %v5825 = vunpack.c.h.b16 %v5073
    %v5826 = vunpack.c.l.b16 %v5074
    %v5827 = vunpack.c.h.b16 %v5074
    %v5828 = vunpack.c.l.b16 %v5075
    %v5829 = vunpack.c.h.b16 %v5075
    %v5830 = vunpack.c.l.b16 %v5076
    %v5831 = vunpack.c.h.b16 %v5076
    %v5832 = vunpack.c.l.b16 %v5077
    %v5833 = vunpack.c.h.b16 %v5077
    %v5834 = vunpack.c.l.b16 %v5078
    %v5835 = vunpack.c.h.b16 %v5078
    %v5836 = vunpack.c.l.b16 %v5079
    %v5837 = vunpack.c.h.b16 %v5079
    %v5838 = vunpack.c.l.b16 %v5080
    %v5839 = vunpack.c.h.b16 %v5080
    %v5840 = vunpack.c.l.b16 %v5081
    %v5841 = vunpack.c.h.b16 %v5081
    %v5842 = vunpack.c.l.b16 %v5082
    %v5843 = vunpack.c.h.b16 %v5082
    %v5844 = vunpack.c.l.b16 %v5083
    %v5845 = vunpack.c.h.b16 %v5083
    %v5846 = vunpack.c.l.b16 %v5084
    %v5847 = vunpack.c.h.b16 %v5084
    %v5848 = vunpack.c.l.b16 %v5085
    %v5849 = vunpack.c.h.b16 %v5085
    %v5850 = vunpack.c.l.b16 %v5086
    %v5851 = vunpack.c.h.b16 %v5086
    %v5852 = vunpack.c.l.b16 %v5087
    %v5853 = vunpack.c.h.b16 %v5087
    %v5854 = vunpack.c.l.b16 %v5088
    %v5855 = vunpack.c.h.b16 %v5088
    %v5856 = vunpack.c.l.b16 %v5089
    %v5857 = vunpack.c.h.b16 %v5089
    %v5858 = vunpack.c.l.b16 %v5090
    %v5859 = vunpack.c.h.b16 %v5090
    %v5860 = vunpack.c.l.b16 %v5091
    %v5861 = vunpack.c.h.b16 %v5091
    %v5862 = vunpack.c.l.b16 %v5092
    %v5863 = vunpack.c.h.b16 %v5092
    %v5864 = vunpack.c.l.b16 %v5093
    %v5865 = vunpack.c.h.b16 %v5093
    %v5866 = vunpack.c.l.b16 %v5094
    %v5867 = vunpack.c.h.b16 %v5094
    %v5868 = vunpack.c.l.b16 %v5095
    %v5869 = vunpack.c.h.b16 %v5095
    %v5870 = vunpack.c.l.b16 %v5096
    %v5871 = vunpack.c.h.b16 %v5096
    %v5872 = vunpack.c.l.b16 %v5097
    %v5873 = vunpack.c.h.b16 %v5097
    %v5874 = vunpack.c.l.b16 %v5098
    %v5875 = vunpack.c.h.b16 %v5098
    %v5876 = vunpack.c.l.b16 %v5099
    %v5877 = vunpack.c.h.b16 %v5099
    %v5878 = vunpack.c.l.b16 %v5100
    %v5879 = vunpack.c.h.b16 %v5100
    %v5880 = vunpack.c.l.b16 %v5101
    %v5881 = vunpack.c.h.b16 %v5101
    %v5882 = vunpack.c.l.b16 %v5102
    %v5883 = vunpack.c.h.b16 %v5102
    %v5884 = vunpack.c.l.b16 %v5103
    %v5885 = vunpack.c.h.b16 %v5103
    %v5886 = vunpack.c.l.b16 %v5104
    %v5887 = vunpack.c.h.b16 %v5104
    %v5888 = vunpack.c.l.b16 %v5105
    %v5889 = vunpack.c.h.b16 %v5105
    %v5890 = vunpack.c.l.b16 %v5106
    %v5891 = vunpack.c.h.b16 %v5106
    %v5892 = vunpack.c.l.b16 %v5107
    %v5893 = vunpack.c.h.b16 %v5107
    %v5894 = vunpack.c.l.b16 %v5108
    %v5895 = vunpack.c.h.b16 %v5108
    %v5896 = vunpack.c.l.b16 %v5109
    %v5897 = vunpack.c.h.b16 %v5109
    %v5898 = vunpack.c.l.b16 %v5110
    %v5899 = vunpack.c.h.b16 %v5110
    %v5900 = vunpack.c.l.b16 %v5111
    %v5901 = vunpack.c.h.b16 %v5111
    %v5902 = vunpack.c.l.b16 %v5112
    %v5903 = vunpack.c.h.b16 %v5112
    %v5904 = vunpack.c.l.b16 %v5113
    %v5905 = vunpack.c.h.b16 %v5113
    %v5906 = vunpack.c.l.b16 %v5114
    %v5907 = vunpack.c.h.b16 %v5114
    %v5908 = vunpack.c.l.b16 %v5115
    %v5909 = vunpack.c.h.b16 %v5115
    %v5910 = vunpack.c.l.b16 %v5116
    %v5911 = vunpack.c.h.b16 %v5116
    %v5912 = vunpack.c.l.b16 %v5117
    %v5913 = vunpack.c.h.b16 %v5117
    %v5914 = vunpack.c.l.b16 %v5118
    %v5915 = vunpack.c.h.b16 %v5118
    %v5916 = vunpack.c.l.b16 %v5119
    %v5917 = vunpack.c.h.b16 %v5119
    %v5918 = vunpack.c.l.b16 %v5120
    %v5919 = vunpack.c.h.b16 %v5120
    %v5920 = vunpack.c.l.b16 %v5121
    %v5921 = vunpack.c.h.b16 %v5121
    %v5922 = vunpack.c.l.b16 %v5122
    %v5923 = vunpack.c.h.b16 %v5122
    %v5924 = vunpack.c.l.b16 %v5123
    %v5925 = vunpack.c.h.b16 %v5123
    %v5926 = vunpack.c.l.b16 %v5124
    %v5927 = vunpack.c.h.b16 %v5124
    %v5928 = vunpack.c.l.b16 %v5125
    %v5929 = vunpack.c.h.b16 %v5125
    %v5930 = vunpack.c.l.b16 %v5126
    %v5931 = vunpack.c.h.b16 %v5126
    %v5932 = vunpack.c.l.b16 %v5127
    %v5933 = vunpack.c.h.b16 %v5127
    %v5934 = vunpack.c.l.b16 %v5128
    %v5935 = vunpack.c.h.b16 %v5128
    %v5936 = vunpack.c.l.b16 %v5129
    %v5937 = vunpack.c.h.b16 %v5129
    %v5938 = vunpack.c.l.b16 %v5130
    %v5939 = vunpack.c.h.b16 %v5130
    %v5940 = vunpack.c.l.b16 %v5131
    %v5941 = vunpack.c.h.b16 %v5131
    %v5942 = vunpack.c.l.b16 %v5132
    %v5943 = vunpack.c.h.b16 %v5132
    %v5944 = vunpack.c.l.b16 %v5133
    %v5945 = vunpack.c.h.b16 %v5133
    %v5946 = vunpack.c.l.b16 %v5134
    %v5947 = vunpack.c.h.b16 %v5134
    %v5948 = vunpack.c.l.b16 %v5135
    %v5949 = vunpack.c.h.b16 %v5135
    %v5950 = vunpack.c.l.b16 %v5136
    %v5951 = vunpack.c.h.b16 %v5136
    %v5952 = vunpack.c.l.b16 %v5137
    %v5953 = vunpack.c.h.b16 %v5137
    %v5954 = vunpack.c.l.b16 %v5138
    %v5955 = vunpack.c.h.b16 %v5138
    %v5956 = vunpack.c.l.b16 %v5139
    %v5957 = vunpack.c.h.b16 %v5139
    %v5958 = vunpack.c.l.b16 %v5140
    %v5959 = vunpack.c.h.b16 %v5140
    %v5960 = vunpack.c.l.b16 %v5141
    %v5961 = vunpack.c.h.b16 %v5141
    %v5962 = vunpack.c.l.b16 %v5142
    %v5963 = vunpack.c.h.b16 %v5142
    %v5964 = vunpack.c.l.b16 %v5143
    %v5965 = vunpack.c.h.b16 %v5143
    %v5966 = vunpack.c.l.b16 %v5144
    %v5967 = vunpack.c.h.b16 %v5144
    %v5968 = vunpack.c.l.b16 %v5145
    %v5969 = vunpack.c.h.b16 %v5145
    %v5970 = vunpack.c.l.b16 %v5146
    %v5971 = vunpack.c.h.b16 %v5146
    %v5972 = vunpack.c.l.b16 %v5147
    %v5973 = vunpack.c.h.b16 %v5147
    %v5974 = vunpack.c.l.b16 %v5148
    %v5975 = vunpack.c.h.b16 %v5148
    %v5976 = vunpack.c.l.b16 %v5149
    %v5977 = vunpack.c.h.b16 %v5149
    %v5978 = vunpack.c.l.b16 %v5150
    %v5979 = vunpack.c.h.b16 %v5150
    %v5980 = vunpack.c.l.b16 %v5151
    %v5981 = vunpack.c.h.b16 %v5151
    %v5982 = vunpack.c.l.b16 %v5152
    %v5983 = vunpack.c.h.b16 %v5152
    %v5984 = vunpack.c.l.b16 %v5153
    %v5985 = vunpack.c.h.b16 %v5153
    %v5986 = vunpack.c.l.b16 %v5154
    %v5987 = vunpack.c.h.b16 %v5154
    %v5988 = vunpack.c.l.b16 %v5155
    %v5989 = vunpack.c.h.b16 %v5155
    %v5990 = vunpack.c.l.b16 %v5156
    %v5991 = vunpack.c.h.b16 %v5156
    %v5992 = vunpack.c.l.b16 %v5157
    %v5993 = vunpack.c.h.b16 %v5157
    %v5994 = vunpack.c.l.b16 %v5158
    %v5995 = vunpack.c.h.b16 %v5158
    %v5996 = vunpack.c.l.b16 %v5159
    %v5997 = vunpack.c.h.b16 %v5159
    %v5998 = vunpack.c.l.b16 %v5160
    %v5999 = vunpack.c.h.b16 %v5160
    %v6000 = vunpack.c.l.b16 %v5161
    %v6001 = vunpack.c.h.b16 %v5161
    %v6002 = vunpack.c.l.b16 %v5162
    %v6003 = vunpack.c.h.b16 %v5162
    %v6004 = vunpack.c.l.b16 %v5163
    %v6005 = vunpack.c.h.b16 %v5163
    %v6006 = vunpack.c.l.b16 %v5164
    %v6007 = vunpack.c.h.b16 %v5164
    %v6008 = vunpack.c.l.b16 %v5165
    %v6009 = vunpack.c.h.b16 %v5165
    %v6010 = vunpack.c.l.b16 %v5166
    %v6011 = vunpack.c.h.b16 %v5166
    %v6012 = vunpack.c.l.b16 %v5167
    %v6013 = vunpack.c.h.b16 %v5167
    %v6014 = vunpack.c.l.b16 %v5168
    %v6015 = vunpack.c.h.b16 %v5168
    %v6016 = vunpack.c.l.b16 %v5169
    %v6017 = vunpack.c.h.b16 %v5169
    %v6018 = vunpack.c.l.b16 %v5170
    %v6019 = vunpack.c.h.b16 %v5170
    %v6020 = vunpack.c.l.b16 %v5171
    %v6021 = vunpack.c.h.b16 %v5171
    %v6022 = vunpack.c.l.b16 %v5172
    %v6023 = vunpack.c.h.b16 %v5172
    %v6024 = vunpack.c.l.b16 %v5173
    %v6025 = vunpack.c.h.b16 %v5173
    %v6026 = vunpack.c.l.b16 %v5174
    %v6027 = vunpack.c.h.b16 %v5174
    %v6028 = vunpack.c.l.b16 %v5175
    %v6029 = vunpack.c.h.b16 %v5175
    %v6030 = vunpack.c.l.b16 %v5176
    %v6031 = vunpack.c.h.b16 %v5176
    %v6032 = vunpack.c.l.b16 %v5177
    %v6033 = vunpack.c.h.b16 %v5177
    %v6034 = vunpack.c.l.b16 %v5178
    %v6035 = vunpack.c.h.b16 %v5178
    %v6036 = vunpack.c.l.b16 %v5179
    %v6037 = vunpack.c.h.b16 %v5179
    %v6038 = vunpack.c.l.b16 %v5180
    %v6039 = vunpack.c.h.b16 %v5180
    %v6040 = vunpack.c.l.b16 %v5181
    %v6041 = vunpack.c.h.b16 %v5181
    %v6042 = vunpack.c.l.b16 %v5182
    %v6043 = vunpack.c.h.b16 %v5182
    %v6044 = vunpack.c.l.b16 %v5183
    %v6045 = vunpack.c.h.b16 %v5183
    %v6046 = vunpack.c.l.b16 %v5184
    %v6047 = vunpack.c.h.b16 %v5184
    %v6048 = vunpack.c.l.b16 %v5185
    %v6049 = vunpack.c.h.b16 %v5185
    %v6050 = vunpack.c.l.b16 %v5186
    %v6051 = vunpack.c.h.b16 %v5186
    %v6052 = vunpack.c.l.b16 %v5187
    %v6053 = vunpack.c.h.b16 %v5187
    %v6054 = vunpack.c.l.b16 %v5188
    %v6055 = vunpack.c.h.b16 %v5188
    %v6056 = vunpack.c.l.b16 %v5189
    %v6057 = vunpack.c.h.b16 %v5189
    %v6058 = vunpack.c.l.b16 %v5190
    %v6059 = vunpack.c.h.b16 %v5190
    %v6060 = vunpack.c.l.b16 %v5191
    %v6061 = vunpack.c.h.b16 %v5191
    %v6062 = vunpack.c.l.b16 %v5192
    %v6063 = vunpack.c.h.b16 %v5192
    %v6064 = vunpack.c.l.b16 %v5193
    %v6065 = vunpack.c.h.b16 %v5193
    %v6066 = vunpack.c.l.b16 %v5194
    %v6067 = vunpack.c.h.b16 %v5194
    %v6068 = vunpack.c.l.b16 %v5195
    %v6069 = vunpack.c.h.b16 %v5195
    %v6070 = vunpack.c.l.b16 %v5196
    %v6071 = vunpack.c.h.b16 %v5196
    %v6072 = vunpack.c.l.b16 %v5197
    %v6073 = vunpack.c.h.b16 %v5197
    %v6074 = vunpack.c.l.b16 %v5198
    %v6075 = vunpack.c.h.b16 %v5198
    %v6076 = vunpack.c.l.b16 %v5199
    %v6077 = vunpack.c.h.b16 %v5199
    %v6078 = vunpack.c.l.b16 %v5200
    %v6079 = vunpack.c.h.b16 %v5200
    %v6080 = vunpack.c.l.b16 %v5201
    %v6081 = vunpack.c.h.b16 %v5201
    %v6082 = vunpack.c.l.b16 %v5202
    %v6083 = vunpack.c.h.b16 %v5202
    %v6084 = vunpack.c.l.b16 %v5203
    %v6085 = vunpack.c.h.b16 %v5203
    %v6086 = vunpack.c.l.b16 %v5204
    %v6087 = vunpack.c.h.b16 %v5204
    %v6088 = vunpack.c.l.b16 %v5205
    %v6089 = vunpack.c.h.b16 %v5205
    %v6090 = vunpack.c.l.b16 %v5206
    %v6091 = vunpack.c.h.b16 %v5206
    %v6092 = vunpack.c.l.b16 %v5207
    %v6093 = vunpack.c.h.b16 %v5207
    %v6094 = vunpack.c.l.b16 %v5208
    %v6095 = vunpack.c.h.b16 %v5208
    %v6096 = vunpack.c.l.b16 %v5209
    %v6097 = vunpack.c.h.b16 %v5209
    %v6098 = vunpack.c.l.b16 %v5210
    %v6099 = vunpack.c.h.b16 %v5210
    %v6100 = vunpack.c.l.b16 %v5211
    %v6101 = vunpack.c.h.b16 %v5211
    %v6102 = vunpack.c.l.b16 %v5212
    %v6103 = vunpack.c.h.b16 %v5212
    %v6104 = vunpack.c.l.b16 %v5213
    %v6105 = vunpack.c.h.b16 %v5213
    %v6106 = vunpack.c.l.b16 %v5214
    %v6107 = vunpack.c.h.b16 %v5214
    %v6108 = vunpack.c.l.b16 %v5215
    %v6109 = vunpack.c.h.b16 %v5215
    %v6110 = vunpack.c.l.b16 %v5216
    %v6111 = vunpack.c.h.b16 %v5216
    %v6112 = vunpack.c.l.b16 %v5217
    %v6113 = vunpack.c.h.b16 %v5217
    %v6114 = vunpack.c.l.b16 %v5218
    %v6115 = vunpack.c.h.b16 %v5218
    %v6116 = vunpack.c.l.b16 %v5219
    %v6117 = vunpack.c.h.b16 %v5219
    %v6118 = vunpack.c.l.b16 %v5220
    %v6119 = vunpack.c.h.b16 %v5220
    %v6120 = vunpack.c.l.b16 %v5221
    %v6121 = vunpack.c.h.b16 %v5221
    %v6122 = vunpack.c.l.b16 %v5222
    %v6123 = vunpack.c.h.b16 %v5222
    %v6124 = vunpack.c.l.b16 %v5223
    %v6125 = vunpack.c.h.b16 %v5223
    %v6126 = vunpack.c.l.b16 %v5224
    %v6127 = vunpack.c.h.b16 %v5224
    %v6128 = vunpack.c.l.b16 %v5225
    %v6129 = vunpack.c.h.b16 %v5225
    %v6130 = vunpack.c.l.b16 %v5226
    %v6131 = vunpack.c.h.b16 %v5226
    %v6132 = vunpack.c.l.b16 %v5227
    %v6133 = vunpack.c.h.b16 %v5227
    %v6134 = vunpack.c.l.b16 %v5228
    %v6135 = vunpack.c.h.b16 %v5228
    %v6136 = vunpack.c.l.b16 %v5229
    %v6137 = vunpack.c.h.b16 %v5229
    %v6138 = vunpack.c.l.b16 %v5230
    %v6139 = vunpack.c.h.b16 %v5230
    %v6140 = vunpack.c.l.b16 %v5231
    %v6141 = vunpack.c.h.b16 %v5231
    %v6142 = vunpack.c.l.b16 %v5232
    %v6143 = vunpack.c.h.b16 %v5232
    %v6144 = vunpack.c.l.b16 %v5233
    %v6145 = vunpack.c.h.b16 %v5233
    %v6146 = vunpack.c.l.b16 %v5234
    %v6147 = vunpack.c.h.b16 %v5234
    %v6148 = vunpack.c.l.b16 %v5235
    %v6149 = vunpack.c.h.b16 %v5235
    %v6150 = vunpack.c.l.b16 %v5236
    %v6151 = vunpack.c.h.b16 %v5236
    %v6152 = vunpack.c.l.b16 %v5237
    %v6153 = vunpack.c.h.b16 %v5237
    %v6154 = vunpack.c.l.b16 %v5238
    %v6155 = vunpack.c.h.b16 %v5238
    %v6156 = vunpack.c.l.b16 %v5239
    %v6157 = vunpack.c.h.b16 %v5239
    %v6158 = vunpack.c.l.b16 %v5240
    %v6159 = vunpack.c.h.b16 %v5240
    %v6160 = vunpack.c.l.b16 %v5241
    %v6161 = vunpack.c.h.b16 %v5241
    %v6162 = vpack.c.b16 %v5592, %v5586
    %v6163 = vpack.c.b16 %v5593, %v5587
    %v6164 = vpack.c.b16 %v5594, %v5588
    %v6165 = vpack.c.b16 %v5595, %v5589
    %v6166 = vpack.c.b16 %v5596, %v5590
    %v6167 = vpack.c.b16 %v5597, %v5591
    %v6168 = vpack.c.b16 %v5604, %v5598
    %v6169 = vpack.c.b16 %v5605, %v5599
    %v6170 = vpack.c.b16 %v5606, %v5600
    %v6171 = vpack.c.b16 %v5607, %v5601
    %v6172 = vpack.c.b16 %v5608, %v5602
    %v6173 = vpack.c.b16 %v5609, %v5603
    %v6174 = vpack.c.b16 %v5616, %v5610
    %v6175 = vpack.c.b16 %v5617, %v5611
    %v6176 = vpack.c.b16 %v5618, %v5612
    %v6177 = vpack.c.b16 %v5619, %v5613
    %v6178 = vpack.c.b16 %v5620, %v5614
    %v6179 = vpack.c.b16 %v5621, %v5615
    %v6180 = vpack.c.b16 %v5628, %v5622
    %v6181 = vpack.c.b16 %v5629, %v5623
    %v6182 = vpack.c.b16 %v5630, %v5624
    %v6183 = vpack.c.b16 %v5631, %v5625
    %v6184 = vpack.c.b16 %v5632, %v5626
    %v6185 = vpack.c.b16 %v5633, %v5627
    %v6186 = vpack.c.b16 %v5640, %v5634
    %v6187 = vpack.c.b16 %v5641, %v5635
    %v6188 = vpack.c.b16 %v5642, %v5636
    %v6189 = vpack.c.b16 %v5643, %v5637
    %v6190 = vpack.c.b16 %v5644, %v5638
    %v6191 = vpack.c.b16 %v5645, %v5639
    %v6192 = vpack.c.b16 %v5652, %v5646
    %v6193 = vpack.c.b16 %v5653, %v5647
    %v6194 = vpack.c.b16 %v5654, %v5648
    %v6195 = vpack.c.b16 %v5655, %v5649
    %v6196 = vpack.c.b16 %v5656, %v5650
    %v6197 = vpack.c.b16 %v5657, %v5651
    %v6198 = vpack.c.b16 %v5664, %v5658
    %v6199 = vpack.c.b16 %v5665, %v5659
    %v6200 = vpack.c.b16 %v5666, %v5660
    %v6201 = vpack.c.b16 %v5667, %v5661
    %v6202 = vpack.c.b16 %v5668, %v5662
    %v6203 = vpack.c.b16 %v5669, %v5663
    %v6204 = vpack.c.b16 %v5676, %v5670
    %v6205 = vpack.c.b16 %v5677, %v5671
    %v6206 = vpack.c.b16 %v5678, %v5672
    %v6207 = vpack.c.b16 %v5679, %v5673
    %v6208 = vpack.c.b16 %v5680, %v5674
    %v6209 = vpack.c.b16 %v5681, %v5675
    %v6210 = vpack.c.b16 %v5688, %v5682
    %v6211 = vpack.c.b16 %v5689, %v5683
    %v6212 = vpack.c.b16 %v5690, %v5684
    %v6213 = vpack.c.b16 %v5691, %v5685
    %v6214 = vpack.c.b16 %v5692, %v5686
    %v6215 = vpack.c.b16 %v5693, %v5687
    %v6216 = vpack.c.b16 %v5700, %v5694
    %v6217 = vpack.c.b16 %v5701, %v5695
    %v6218 = vpack.c.b16 %v5702, %v5696
    %v6219 = vpack.c.b16 %v5703, %v5697
    %v6220 = vpack.c.b16 %v5704, %v5698
    %v6221 = vpack.c.b16 %v5705, %v5699
    %v6222 = vpack.c.b16 %v5712, %v5706
    %v6223 = vpack.c.b16 %v5713, %v5707
    %v6224 = vpack.c.b16 %v5714, %v5708
    %v6225 = vpack.c.b16 %v5715, %v5709
    %v6226 = vpack.c.b16 %v5716, %v5710
    %v6227 = vpack.c.b16 %v5717, %v5711
    %v6228 = vpack.c.b16 %v5724, %v5718
    %v6229 = vpack.c.b16 %v5725, %v5719
    %v6230 = vpack.c.b16 %v5726, %v5720
    %v6231 = vpack.c.b16 %v5727, %v5721
    %v6232 = vpack.c.b16 %v5728, %v5722
    %v6233 = vpack.c.b16 %v5729, %v5723
    %v6234 = vpack.c.b16 %v5736, %v5730
    %v6235 = vpack.c.b16 %v5737, %v5731
    %v6236 = vpack.c.b16 %v5738, %v5732
    %v6237 = vpack.c.b16 %v5739, %v5733
    %v6238 = vpack.c.b16 %v5740, %v5734
    %v6239 = vpack.c.b16 %v5741, %v5735
    %v6240 = vpack.c.b16 %v5748, %v5742
    %v6241 = vpack.c.b16 %v5749, %v5743
    %v6242 = vpack.c.b16 %v5750, %v5744
    %v6243 = vpack.c.b16 %v5751, %v5745
    %v6244 = vpack.c.b16 %v5752, %v5746
    %v6245 = vpack.c.b16 %v5753, %v5747
    %v6246 = vpack.c.b16 %v5760, %v5754
    %v6247 = vpack.c.b16 %v5761, %v5755
    %v6248 = vpack.c.b16 %v5762, %v5756
    %v6249 = vpack.c.b16 %v5763, %v5757
    %v6250 = vpack.c.b16 %v5764, %v5758
    %v6251 = vpack.c.b16 %v5765, %v5759
    %v6252 = vpack.c.b16 %v5772, %v5766
    %v6253 = vpack.c.b16 %v5773, %v5767
    %v6254 = vpack.c.b16 %v5774, %v5768
    %v6255 = vpack.c.b16 %v5775, %v5769
    %v6256 = vpack.c.b16 %v5776, %v5770
    %v6257 = vpack.c.b16 %v5777, %v5771
    %v6258 = vpack.c.b16 %v5784, %v5778
    %v6259 = vpack.c.b16 %v5785, %v5779
    %v6260 = vpack.c.b16 %v5786, %v5780
    %v6261 = vpack.c.b16 %v5787, %v5781
    %v6262 = vpack.c.b16 %v5788, %v5782
    %v6263 = vpack.c.b16 %v5789, %v5783
    %v6264 = vpack.c.b16 %v5796, %v5790
    %v6265 = vpack.c.b16 %v5797, %v5791
    %v6266 = vpack.c.b16 %v5798, %v5792
    %v6267 = vpack.c.b16 %v5799, %v5793
    %v6268 = vpack.c.b16 %v5800, %v5794
    %v6269 = vpack.c.b16 %v5801, %v5795
    %v6270 = vpack.c.b16 %v5808, %v5802
    %v6271 = vpack.c.b16 %v5809, %v5803
    %v6272 = vpack.c.b16 %v5810, %v5804
    %v6273 = vpack.c.b16 %v5811, %v5805
    %v6274 = vpack.c.b16 %v5812, %v5806
    %v6275 = vpack.c.b16 %v5813, %v5807
    %v6276 = vpack.c.b16 %v5820, %v5814
    %v6277 = vpack.c.b16 %v5821, %v5815
    %v6278 = vpack.c.b16 %v5822, %v5816
    %v6279 = vpack.c.b16 %v5823, %v5817
    %v6280 = vpack.c.b16 %v5824, %v5818
    %v6281 = vpack.c.b16 %v5825, %v5819
    %v6282 = vpack.c.b16 %v5832, %v5826
    %v6283 = vpack.c.b16 %v5833, %v5827
    %v6284 = vpack.c.b16 %v5834, %v5828
    %v6285 = vpack.c.b16 %v5835, %v5829
    %v6286 = vpack.c.b16 %v5836, %v5830
    %v6287 = vpack.c.b16 %v5837, %v5831
    %v6288 = vpack.c.b16 %v5844, %v5838
    %v6289 = vpack.c.b16 %v5845, %v5839
    %v6290 = vpack.c.b16 %v5846, %v5840
    %v6291 = vpack.c.b16 %v5847, %v5841
    %v6292 = vpack.c.b16 %v5848, %v5842
    %v6293 = vpack.c.b16 %v5849, %v5843
    %v6294 = vpack.c.b16 %v5856, %v5850
    %v6295 = vpack.c.b16 %v5857, %v5851
    %v6296 = vpack.c.b16 %v5858, %v5852
    %v6297 = vpack.c.b16 %v5859, %v5853
    %v6298 = vpack.c.b16 %v5860, %v5854
    %v6299 = vpack.c.b16 %v5861, %v5855
    %v6300 = vpack.c.b16 %v5868, %v5862
    %v6301 = vpack.c.b16 %v5869, %v5863
    %v6302 = vpack.c.b16 %v5870, %v5864
    %v6303 = vpack.c.b16 %v5871, %v5865
    %v6304 = vpack.c.b16 %v5872, %v5866
    %v6305 = vpack.c.b16 %v5873, %v5867
    %v6306 = vpack.c.b16 %v5880, %v5874
    %v6307 = vpack.c.b16 %v5881, %v5875
    %v6308 = vpack.c.b16 %v5882, %v5876
    %v6309 = vpack.c.b16 %v5883, %v5877
    %v6310 = vpack.c.b16 %v5884, %v5878
    %v6311 = vpack.c.b16 %v5885, %v5879
    %v6312 = vpack.c.b16 %v5892, %v5886
    %v6313 = vpack.c.b16 %v5893, %v5887
    %v6314 = vpack.c.b16 %v5894, %v5888
    %v6315 = vpack.c.b16 %v5895, %v5889
    %v6316 = vpack.c.b16 %v5896, %v5890
    %v6317 = vpack.c.b16 %v5897, %v5891
    %v6318 = vpack.c.b16 %v5904, %v5898
    %v6319 = vpack.c.b16 %v5905, %v5899
    %v6320 = vpack.c.b16 %v5906, %v5900
    %v6321 = vpack.c.b16 %v5907, %v5901
    %v6322 = vpack.c.b16 %v5908, %v5902
    %v6323 = vpack.c.b16 %v5909, %v5903
    %v6324 = vpack.c.b16 %v5916, %v5910
    %v6325 = vpack.c.b16 %v5917, %v5911
    %v6326 = vpack.c.b16 %v5918, %v5912
    %v6327 = vpack.c.b16 %v5919, %v5913
    %v6328 = vpack.c.b16 %v5920, %v5914
    %v6329 = vpack.c.b16 %v5921, %v5915
    %v6330 = vpack.c.b16 %v5928, %v5922
    %v6331 = vpack.c.b16 %v5929, %v5923
    %v6332 = vpack.c.b16 %v5930, %v5924
    %v6333 = vpack.c.b16 %v5931, %v5925
    %v6334 = vpack.c.b16 %v5932, %v5926
    %v6335 = vpack.c.b16 %v5933, %v5927
    %v6336 = vpack.c.b16 %v5940, %v5934
    %v6337 = vpack.c.b16 %v5941, %v5935
    %v6338 = vpack.c.b16 %v5942, %v5936
    %v6339 = vpack.c.b16 %v5943, %v5937
    %v6340 = vpack.c.b16 %v5944, %v5938
    %v6341 = vpack.c.b16 %v5945, %v5939
    %v6342 = vpack.c.b16 %v5952, %v5946
    %v6343 = vpack.c.b16 %v5953, %v5947
    %v6344 = vpack.c.b16 %v5954, %v5948
    %v6345 = vpack.c.b16 %v5955, %v5949
    %v6346 = vpack.c.b16 %v5956, %v5950
    %v6347 = vpack.c.b16 %v5957, %v5951
    %v6348 = vpack.c.b16 %v5964, %v5958
    %v6349 = vpack.c.b16 %v5965, %v5959
    %v6350 = vpack.c.b16 %v5966, %v5960
    %v6351 = vpack.c.b16 %v5967, %v5961
    %v6352 = vpack.c.b16 %v5968, %v5962
    %v6353 = vpack.c.b16 %v5969, %v5963
    %v6354 = vpack.c.b16 %v5976, %v5970
    %v6355 = vpack.c.b16 %v5977, %v5971
    %v6356 = vpack.c.b16 %v5978, %v5972
    %v6357 = vpack.c.b16 %v5979, %v5973
    %v6358 = vpack.c.b16 %v5980, %v5974
    %v6359 = vpack.c.b16 %v5981, %v5975
    %v6360 = vpack.c.b16 %v5988, %v5982
    %v6361 = vpack.c.b16 %v5989, %v5983
    %v6362 = vpack.c.b16 %v5990, %v5984
    %v6363 = vpack.c.b16 %v5991, %v5985
    %v6364 = vpack.c.b16 %v5992, %v5986
    %v6365 = vpack.c.b16 %v5993, %v5987
    %v6366 = vpack.c.b16 %v6000, %v5994
    %v6367 = vpack.c.b16 %v6001, %v5995
    %v6368 = vpack.c.b16 %v6002, %v5996
    %v6369 = vpack.c.b16 %v6003, %v5997
    %v6370 = vpack.c.b16 %v6004, %v5998
    %v6371 = vpack.c.b16 %v6005, %v5999
    %v6372 = vpack.c.b16 %v6012, %v6006
    %v6373 = vpack.c.b16 %v6013, %v6007
    %v6374 = vpack.c.b16 %v6014, %v6008
    %v6375 = vpack.c.b16 %v6015, %v6009
    %v6376 = vpack.c.b16 %v6016, %v6010
    %v6377 = vpack.c.b16 %v6017, %v6011
    %v6378 = vpack.c.b16 %v6024, %v6018
    %v6379 = vpack.c.b16 %v6025, %v6019
    %v6380 = vpack.c.b16 %v6026, %v6020
    %v6381 = vpack.c.b16 %v6027, %v6021
    %v6382 = vpack.c.b16 %v6028, %v6022
    %v6383 = vpack.c.b16 %v6029, %v6023
    %v6384 = vpack.c.b16 %v6036, %v6030
    %v6385 = vpack.c.b16 %v6037, %v6031
    %v6386 = vpack.c.b16 %v6038, %v6032
    %v6387 = vpack.c.b16 %v6039, %v6033
    %v6388 = vpack.c.b16 %v6040, %v6034
    %v6389 = vpack.c.b16 %v6041, %v6035
    %v6390 = vpack.c.b16 %v6048, %v6042
    %v6391 = vpack.c.b16 %v6049, %v6043
    %v6392 = vpack.c.b16 %v6050, %v6044
    %v6393 = vpack.c.b16 %v6051, %v6045
    %v6394 = vpack.c.b16 %v6052, %v6046
    %v6395 = vpack.c.b16 %v6053, %v6047
    %v6396 = vpack.c.b16 %v6060, %v6054
    %v6397 = vpack.c.b16 %v6061, %v6055
    %v6398 = vpack.c.b16 %v6062, %v6056
    %v6399 = vpack.c.b16 %v6063, %v6057
    %v6400 = vpack.c.b16 %v6064, %v6058
    %v6401 = vpack.c.b16 %v6065, %v6059
    %v6402 = vpack.c.b16 %v6072, %v6066
    %v6403 = vpack.c.b16 %v6073, %v6067
    %v6404 = vpack.c.b16 %v6074, %v6068
    %v6405 = vpack.c.b16 %v6075, %v6069
    %v6406 = vpack.c.b16 %v6076, %v6070
    %v6407 = vpack.c.b16 %v6077, %v6071
    %v6408 = vpack.c.b16 %v6084, %v6078
    %v6409 = vpack.c.b16 %v6085, %v6079
    %v6410 = vpack.c.b16 %v6086, %v6080
    %v6411 = vpack.c.b16 %v6087, %v6081
    %v6412 = vpack.c.b16 %v6088, %v6082
    %v6413 = vpack.c.b16 %v6089, %v6083
    %v6414 = vpack.c.b16 %v6096, %v6090
    %v6415 = vpack.c.b16 %v6097, %v6091
    %v6416 = vpack.c.b16 %v6098, %v6092
    %v6417 = vpack.c.b16 %v6099, %v6093
    %v6418 = vpack.c.b16 %v6100, %v6094
    %v6419 = vpack.c.b16 %v6101, %v6095
    %v6420 = vpack.c.b16 %v6108, %v6102
    %v6421 = vpack.c.b16 %v6109, %v6103
    %v6422 = vpack.c.b16 %v6110, %v6104
    %v6423 = vpack.c.b16 %v6111, %v6105
    %v6424 = vpack.c.b16 %v6112, %v6106
    %v6425 = vpack.c.b16 %v6113, %v6107
    %v6426 = vpack.c.b16 %v6120, %v6114
    %v6427 = vpack.c.b16 %v6121, %v6115
    %v6428 = vpack.c.b16 %v6122, %v6116
    %v6429 = vpack.c.b16 %v6123, %v6117
    %v6430 = vpack.c.b16 %v6124, %v6118
    %v6431 = vpack.c.b16 %v6125, %v6119
    %v6432 = vpack.c.b16 %v6132, %v6126
    %v6433 = vpack.c.b16 %v6133, %v6127
    %v6434 = vpack.c.b16 %v6134, %v6128
    %v6435 = vpack.c.b16 %v6135, %v6129
    %v6436 = vpack.c.b16 %v6136, %v6130
    %v6437 = vpack.c.b16 %v6137, %v6131
    %v6438 = vpack.c.b16 %v6144, %v6138
    %v6439 = vpack.c.b16 %v6145, %v6139
    %v6440 = vpack.c.b16 %v6146, %v6140
    %v6441 = vpack.c.b16 %v6147, %v6141
    %v6442 = vpack.c.b16 %v6148, %v6142
    %v6443 = vpack.c.b16 %v6149, %v6143
    %v6444 = vpack.c.b16 %v6156, %v6150
    %v6445 = vpack.c.b16 %v6157, %v6151
    %v6446 = vpack.c.b16 %v6158, %v6152
    %v6447 = vpack.c.b16 %v6159, %v6153
    %v6448 = vpack.c.b16 %v6160, %v6154
    %v6449 = vpack.c.b16 %v6161, %v6155
    %6738 = vmatpush.bf16.msra.mxu0 %v6204
    %6739 = vmatpush.bf16.msra.mxu0 %v6198
    %6740 = vmatpush.bf16.msra.mxu0 %v6192
    %6741 = vmatpush.bf16.msra.mxu0 %v6186
    %6742 = vmatpush.bf16.msra.mxu0 %v6180
    %6743 = vmatpush.bf16.msra.mxu0 %v6174
    %6744 = vmatpush.bf16.msra.mxu0 %v6168
    %6745 = vmatpush.bf16.msra.mxu0 %v6162
    %6746 = vmatmul.bf16.gmra.mxu0 %v5286
    %v6747 = vpop.f32.mrf.mxu0
    %v6748 = vadd.f32 %v5244, %v6747
    %v6749 = vpop.f32.mrf.mxu0
    %6750 = vdwg.mxu0
    %6751 = vmatpush.bf16.msra.mxu0 %v6252
    %6752 = vmatpush.bf16.msra.mxu0 %v6246
    %6753 = vmatpush.bf16.msra.mxu0 %v6240
    %6754 = vmatpush.bf16.msra.mxu0 %v6234
    %6755 = vmatpush.bf16.msra.mxu0 %v6228
    %6756 = vmatpush.bf16.msra.mxu0 %v6222
    %6757 = vmatpush.bf16.msra.mxu0 %v6216
    %6758 = vmatpush.bf16.msra.mxu0 %v6210
    %6759 = vmatmul.bf16.gmra.mxu0 %v5287
    %v6760 = vpop.f32.mrf.mxu0
    %v6761 = vadd.f32 %v6748, %v6760
    %v6762 = vpop.f32.mrf.mxu0
    %6763 = vdwg.mxu0
    %6764 = vmatpush.bf16.msra.mxu0 %v6300
    %6765 = vmatpush.bf16.msra.mxu0 %v6294
    %6766 = vmatpush.bf16.msra.mxu0 %v6288
    %6767 = vmatpush.bf16.msra.mxu0 %v6282
    %6768 = vmatpush.bf16.msra.mxu0 %v6276
    %6769 = vmatpush.bf16.msra.mxu0 %v6270
    %6770 = vmatpush.bf16.msra.mxu0 %v6264
    %6771 = vmatpush.bf16.msra.mxu0 %v6258
    %6772 = vmatmul.bf16.gmra.mxu0 %v5288
    %v6773 = vpop.f32.mrf.mxu0
    %v6774 = vadd.f32 %v6761, %v6773
    %v6775 = vpop.f32.mrf.mxu0
    %6776 = vdwg.mxu0
    %6777 = vmatpush.bf16.msra.mxu0 %v6348
    %6778 = vmatpush.bf16.msra.mxu0 %v6342
    %6779 = vmatpush.bf16.msra.mxu0 %v6336
    %6780 = vmatpush.bf16.msra.mxu0 %v6330
    %6781 = vmatpush.bf16.msra.mxu0 %v6324
    %6782 = vmatpush.bf16.msra.mxu0 %v6318
    %6783 = vmatpush.bf16.msra.mxu0 %v6312
    %6784 = vmatpush.bf16.msra.mxu0 %v6306
    %6785 = vmatmul.bf16.gmra.mxu0 %v5289
    %v6786 = vpop.f32.mrf.mxu0
    %v6787 = vadd.f32 %v6774, %v6786
    %v6788 = vpop.f32.mrf.mxu0
    %6789 = vdwg.mxu0
    %6790 = vmatpush.bf16.msra.mxu0 %v6396
    %6791 = vmatpush.bf16.msra.mxu0 %v6390
    %6792 = vmatpush.bf16.msra.mxu0 %v6384
    %6793 = vmatpush.bf16.msra.mxu0 %v6378
    %6794 = vmatpush.bf16.msra.mxu0 %v6372
    %6795 = vmatpush.bf16.msra.mxu0 %v6366
    %6796 = vmatpush.bf16.msra.mxu0 %v6360
    %6797 = vmatpush.bf16.msra.mxu0 %v6354
    %6798 = vmatmul.bf16.gmra.mxu0 %v5290
    %v6799 = vpop.f32.mrf.mxu0
    %v6800 = vadd.f32 %v6787, %v6799
    %v6801 = vpop.f32.mrf.mxu0
    %6802 = vdwg.mxu0
    %6803 = vmatpush.bf16.msra.mxu0 %v6444
    %6804 = vmatpush.bf16.msra.mxu0 %v6438
    %6805 = vmatpush.bf16.msra.mxu0 %v6432
    %6806 = vmatpush.bf16.msra.mxu0 %v6426
    %6807 = vmatpush.bf16.msra.mxu0 %v6420
    %6808 = vmatpush.bf16.msra.mxu0 %v6414
    %6809 = vmatpush.bf16.msra.mxu0 %v6408
    %6810 = vmatpush.bf16.msra.mxu0 %v6402
    %6811 = vmatmul.bf16.gmra.mxu0 %v5291
    %v6812 = vpop.f32.mrf.mxu0
    %v6813 = vadd.f32 %v6800, %v6812
    %v6814 = vpop.f32.mrf.mxu0
    %6815 = vdwg.mxu0
    %6816 = vmatpush.bf16.msra.mxu0 %v6205
    %6817 = vmatpush.bf16.msra.mxu0 %v6199
    %6818 = vmatpush.bf16.msra.mxu0 %v6193
    %6819 = vmatpush.bf16.msra.mxu0 %v6187
    %6820 = vmatpush.bf16.msra.mxu0 %v6181
    %6821 = vmatpush.bf16.msra.mxu0 %v6175
    %6822 = vmatpush.bf16.msra.mxu0 %v6169
    %6823 = vmatpush.bf16.msra.mxu0 %v6163
    %6824 = vmatmul.bf16.gmra.mxu0 %v5286
    %v6825 = vpop.f32.mrf.mxu0
    %v6826 = vadd.f32 %v5245, %v6825
    %v6827 = vpop.f32.mrf.mxu0
    %6828 = vdwg.mxu0
    %6829 = vmatpush.bf16.msra.mxu0 %v6253
    %6830 = vmatpush.bf16.msra.mxu0 %v6247
    %6831 = vmatpush.bf16.msra.mxu0 %v6241
    %6832 = vmatpush.bf16.msra.mxu0 %v6235
    %6833 = vmatpush.bf16.msra.mxu0 %v6229
    %6834 = vmatpush.bf16.msra.mxu0 %v6223
    %6835 = vmatpush.bf16.msra.mxu0 %v6217
    %6836 = vmatpush.bf16.msra.mxu0 %v6211
    %6837 = vmatmul.bf16.gmra.mxu0 %v5287
    %v6838 = vpop.f32.mrf.mxu0
    %v6839 = vadd.f32 %v6826, %v6838
    %v6840 = vpop.f32.mrf.mxu0
    %6841 = vdwg.mxu0
    %6842 = vmatpush.bf16.msra.mxu0 %v6301
    %6843 = vmatpush.bf16.msra.mxu0 %v6295
    %6844 = vmatpush.bf16.msra.mxu0 %v6289
    %6845 = vmatpush.bf16.msra.mxu0 %v6283
    %6846 = vmatpush.bf16.msra.mxu0 %v6277
    %6847 = vmatpush.bf16.msra.mxu0 %v6271
    %6848 = vmatpush.bf16.msra.mxu0 %v6265
    %6849 = vmatpush.bf16.msra.mxu0 %v6259
    %6850 = vmatmul.bf16.gmra.mxu0 %v5288
    %v6851 = vpop.f32.mrf.mxu0
    %v6852 = vadd.f32 %v6839, %v6851
    %v6853 = vpop.f32.mrf.mxu0
    %6854 = vdwg.mxu0
    %6855 = vmatpush.bf16.msra.mxu0 %v6349
    %6856 = vmatpush.bf16.msra.mxu0 %v6343
    %6857 = vmatpush.bf16.msra.mxu0 %v6337
    %6858 = vmatpush.bf16.msra.mxu0 %v6331
    %6859 = vmatpush.bf16.msra.mxu0 %v6325
    %6860 = vmatpush.bf16.msra.mxu0 %v6319
    %6861 = vmatpush.bf16.msra.mxu0 %v6313
    %6862 = vmatpush.bf16.msra.mxu0 %v6307
    %6863 = vmatmul.bf16.gmra.mxu0 %v5289
    %v6864 = vpop.f32.mrf.mxu0
    %v6865 = vadd.f32 %v6852, %v6864
    %v6866 = vpop.f32.mrf.mxu0
    %6867 = vdwg.mxu0
    %6868 = vmatpush.bf16.msra.mxu0 %v6397
    %6869 = vmatpush.bf16.msra.mxu0 %v6391
    %6870 = vmatpush.bf16.msra.mxu0 %v6385
    %6871 = vmatpush.bf16.msra.mxu0 %v6379
    %6872 = vmatpush.bf16.msra.mxu0 %v6373
    %6873 = vmatpush.bf16.msra.mxu0 %v6367
    %6874 = vmatpush.bf16.msra.mxu0 %v6361
    %6875 = vmatpush.bf16.msra.mxu0 %v6355
    %6876 = vmatmul.bf16.gmra.mxu0 %v5290
    %v6877 = vpop.f32.mrf.mxu0
    %v6878 = vadd.f32 %v6865, %v6877
    %v6879 = vpop.f32.mrf.mxu0
    %6880 = vdwg.mxu0
    %6881 = vmatpush.bf16.msra.mxu0 %v6445
    %6882 = vmatpush.bf16.msra.mxu0 %v6439
    %6883 = vmatpush.bf16.msra.mxu0 %v6433
    %6884 = vmatpush.bf16.msra.mxu0 %v6427
    %6885 = vmatpush.bf16.msra.mxu0 %v6421
    %6886 = vmatpush.bf16.msra.mxu0 %v6415
    %6887 = vmatpush.bf16.msra.mxu0 %v6409
    %6888 = vmatpush.bf16.msra.mxu0 %v6403
    %6889 = vmatmul.bf16.gmra.mxu0 %v5291
    %v6890 = vpop.f32.mrf.mxu0
    %v6891 = vadd.f32 %v6878, %v6890
    %v6892 = vpop.f32.mrf.mxu0
    %6893 = vdwg.mxu0
    %6894 = vmatpush.bf16.msra.mxu0 %v6206
    %6895 = vmatpush.bf16.msra.mxu0 %v6200
    %6896 = vmatpush.bf16.msra.mxu0 %v6194
    %6897 = vmatpush.bf16.msra.mxu0 %v6188
    %6898 = vmatpush.bf16.msra.mxu0 %v6182
    %6899 = vmatpush.bf16.msra.mxu0 %v6176
    %6900 = vmatpush.bf16.msra.mxu0 %v6170
    %6901 = vmatpush.bf16.msra.mxu0 %v6164
    %6902 = vmatmul.bf16.gmra.mxu0 %v5286
    %v6903 = vpop.f32.mrf.mxu0
    %v6904 = vadd.f32 %v5246, %v6903
    %v6905 = vpop.f32.mrf.mxu0
    %6906 = vdwg.mxu0
    %6907 = vmatpush.bf16.msra.mxu0 %v6254
    %6908 = vmatpush.bf16.msra.mxu0 %v6248
    %6909 = vmatpush.bf16.msra.mxu0 %v6242
    %6910 = vmatpush.bf16.msra.mxu0 %v6236
    %6911 = vmatpush.bf16.msra.mxu0 %v6230
    %6912 = vmatpush.bf16.msra.mxu0 %v6224
    %6913 = vmatpush.bf16.msra.mxu0 %v6218
    %6914 = vmatpush.bf16.msra.mxu0 %v6212
    %6915 = vmatmul.bf16.gmra.mxu0 %v5287
    %v6916 = vpop.f32.mrf.mxu0
    %v6917 = vadd.f32 %v6904, %v6916
    %v6918 = vpop.f32.mrf.mxu0
    %6919 = vdwg.mxu0
    %6920 = vmatpush.bf16.msra.mxu0 %v6302
    %6921 = vmatpush.bf16.msra.mxu0 %v6296
    %6922 = vmatpush.bf16.msra.mxu0 %v6290
    %6923 = vmatpush.bf16.msra.mxu0 %v6284
    %6924 = vmatpush.bf16.msra.mxu0 %v6278
    %6925 = vmatpush.bf16.msra.mxu0 %v6272
    %6926 = vmatpush.bf16.msra.mxu0 %v6266
    %6927 = vmatpush.bf16.msra.mxu0 %v6260
    %6928 = vmatmul.bf16.gmra.mxu0 %v5288
    %v6929 = vpop.f32.mrf.mxu0
    %v6930 = vadd.f32 %v6917, %v6929
    %v6931 = vpop.f32.mrf.mxu0
    %6932 = vdwg.mxu0
    %6933 = vmatpush.bf16.msra.mxu0 %v6350
    %6934 = vmatpush.bf16.msra.mxu0 %v6344
    %6935 = vmatpush.bf16.msra.mxu0 %v6338
    %6936 = vmatpush.bf16.msra.mxu0 %v6332
    %6937 = vmatpush.bf16.msra.mxu0 %v6326
    %6938 = vmatpush.bf16.msra.mxu0 %v6320
    %6939 = vmatpush.bf16.msra.mxu0 %v6314
    %6940 = vmatpush.bf16.msra.mxu0 %v6308
    %6941 = vmatmul.bf16.gmra.mxu0 %v5289
    %v6942 = vpop.f32.mrf.mxu0
    %v6943 = vadd.f32 %v6930, %v6942
    %v6944 = vpop.f32.mrf.mxu0
    %6945 = vdwg.mxu0
    %6946 = vmatpush.bf16.msra.mxu0 %v6398
    %6947 = vmatpush.bf16.msra.mxu0 %v6392
    %6948 = vmatpush.bf16.msra.mxu0 %v6386
    %6949 = vmatpush.bf16.msra.mxu0 %v6380
    %6950 = vmatpush.bf16.msra.mxu0 %v6374
    %6951 = vmatpush.bf16.msra.mxu0 %v6368
    %6952 = vmatpush.bf16.msra.mxu0 %v6362
    %6953 = vmatpush.bf16.msra.mxu0 %v6356
    %6954 = vmatmul.bf16.gmra.mxu0 %v5290
    %v6955 = vpop.f32.mrf.mxu0
    %v6956 = vadd.f32 %v6943, %v6955
    %v6957 = vpop.f32.mrf.mxu0
    %6958 = vdwg.mxu0
    %6959 = vmatpush.bf16.msra.mxu0 %v6446
    %6960 = vmatpush.bf16.msra.mxu0 %v6440
    %6961 = vmatpush.bf16.msra.mxu0 %v6434
    %6962 = vmatpush.bf16.msra.mxu0 %v6428
    %6963 = vmatpush.bf16.msra.mxu0 %v6422
    %6964 = vmatpush.bf16.msra.mxu0 %v6416
    %6965 = vmatpush.bf16.msra.mxu0 %v6410
    %6966 = vmatpush.bf16.msra.mxu0 %v6404
    %6967 = vmatmul.bf16.gmra.mxu0 %v5291
    %v6968 = vpop.f32.mrf.mxu0
    %v6969 = vadd.f32 %v6956, %v6968
    %v6970 = vpop.f32.mrf.mxu0
    %6971 = vdwg.mxu0
    %6972 = vmatpush.bf16.msra.mxu0 %v6207
    %6973 = vmatpush.bf16.msra.mxu0 %v6201
    %6974 = vmatpush.bf16.msra.mxu0 %v6195
    %6975 = vmatpush.bf16.msra.mxu0 %v6189
    %6976 = vmatpush.bf16.msra.mxu0 %v6183
    %6977 = vmatpush.bf16.msra.mxu0 %v6177
    %6978 = vmatpush.bf16.msra.mxu0 %v6171
    %6979 = vmatpush.bf16.msra.mxu0 %v6165
    %6980 = vmatmul.bf16.gmra.mxu0 %v5286
    %v6981 = vpop.f32.mrf.mxu0
    %v6982 = vadd.f32 %v5247, %v6981
    %v6983 = vpop.f32.mrf.mxu0
    %6984 = vdwg.mxu0
    %6985 = vmatpush.bf16.msra.mxu0 %v6255
    %6986 = vmatpush.bf16.msra.mxu0 %v6249
    %6987 = vmatpush.bf16.msra.mxu0 %v6243
    %6988 = vmatpush.bf16.msra.mxu0 %v6237
    %6989 = vmatpush.bf16.msra.mxu0 %v6231
    %6990 = vmatpush.bf16.msra.mxu0 %v6225
    %6991 = vmatpush.bf16.msra.mxu0 %v6219
    %6992 = vmatpush.bf16.msra.mxu0 %v6213
    %6993 = vmatmul.bf16.gmra.mxu0 %v5287
    %v6994 = vpop.f32.mrf.mxu0
    %v6995 = vadd.f32 %v6982, %v6994
    %v6996 = vpop.f32.mrf.mxu0
    %6997 = vdwg.mxu0
    %6998 = vmatpush.bf16.msra.mxu0 %v6303
    %6999 = vmatpush.bf16.msra.mxu0 %v6297
    %7000 = vmatpush.bf16.msra.mxu0 %v6291
    %7001 = vmatpush.bf16.msra.mxu0 %v6285
    %7002 = vmatpush.bf16.msra.mxu0 %v6279
    %7003 = vmatpush.bf16.msra.mxu0 %v6273
    %7004 = vmatpush.bf16.msra.mxu0 %v6267
    %7005 = vmatpush.bf16.msra.mxu0 %v6261
    %7006 = vmatmul.bf16.gmra.mxu0 %v5288
    %v7007 = vpop.f32.mrf.mxu0
    %v7008 = vadd.f32 %v6995, %v7007
    %v7009 = vpop.f32.mrf.mxu0
    %7010 = vdwg.mxu0
    %7011 = vmatpush.bf16.msra.mxu0 %v6351
    %7012 = vmatpush.bf16.msra.mxu0 %v6345
    %7013 = vmatpush.bf16.msra.mxu0 %v6339
    %7014 = vmatpush.bf16.msra.mxu0 %v6333
    %7015 = vmatpush.bf16.msra.mxu0 %v6327
    %7016 = vmatpush.bf16.msra.mxu0 %v6321
    %7017 = vmatpush.bf16.msra.mxu0 %v6315
    %7018 = vmatpush.bf16.msra.mxu0 %v6309
    %7019 = vmatmul.bf16.gmra.mxu0 %v5289
    %v7020 = vpop.f32.mrf.mxu0
    %v7021 = vadd.f32 %v7008, %v7020
    %v7022 = vpop.f32.mrf.mxu0
    %7023 = vdwg.mxu0
    %7024 = vmatpush.bf16.msra.mxu0 %v6399
    %7025 = vmatpush.bf16.msra.mxu0 %v6393
    %7026 = vmatpush.bf16.msra.mxu0 %v6387
    %7027 = vmatpush.bf16.msra.mxu0 %v6381
    %7028 = vmatpush.bf16.msra.mxu0 %v6375
    %7029 = vmatpush.bf16.msra.mxu0 %v6369
    %7030 = vmatpush.bf16.msra.mxu0 %v6363
    %7031 = vmatpush.bf16.msra.mxu0 %v6357
    %7032 = vmatmul.bf16.gmra.mxu0 %v5290
    %v7033 = vpop.f32.mrf.mxu0
    %v7034 = vadd.f32 %v7021, %v7033
    %v7035 = vpop.f32.mrf.mxu0
    %7036 = vdwg.mxu0
    %7037 = vmatpush.bf16.msra.mxu0 %v6447
    %7038 = vmatpush.bf16.msra.mxu0 %v6441
    %7039 = vmatpush.bf16.msra.mxu0 %v6435
    %7040 = vmatpush.bf16.msra.mxu0 %v6429
    %7041 = vmatpush.bf16.msra.mxu0 %v6423
    %7042 = vmatpush.bf16.msra.mxu0 %v6417
    %7043 = vmatpush.bf16.msra.mxu0 %v6411
    %7044 = vmatpush.bf16.msra.mxu0 %v6405
    %7045 = vmatmul.bf16.gmra.mxu0 %v5291
    %v7046 = vpop.f32.mrf.mxu0
    %v7047 = vadd.f32 %v7034, %v7046
    %v7048 = vpop.f32.mrf.mxu0
    %7049 = vdwg.mxu0
    %7050 = vmatpush.bf16.msra.mxu0 %v6208
    %7051 = vmatpush.bf16.msra.mxu0 %v6202
    %7052 = vmatpush.bf16.msra.mxu0 %v6196
    %7053 = vmatpush.bf16.msra.mxu0 %v6190
    %7054 = vmatpush.bf16.msra.mxu0 %v6184
    %7055 = vmatpush.bf16.msra.mxu0 %v6178
    %7056 = vmatpush.bf16.msra.mxu0 %v6172
    %7057 = vmatpush.bf16.msra.mxu0 %v6166
    %7058 = vmatmul.bf16.gmra.mxu0 %v5286
    %v7059 = vpop.f32.mrf.mxu0
    %v7060 = vadd.f32 %v5248, %v7059
    %v7061 = vpop.f32.mrf.mxu0
    %7062 = vdwg.mxu0
    %7063 = vmatpush.bf16.msra.mxu0 %v6256
    %7064 = vmatpush.bf16.msra.mxu0 %v6250
    %7065 = vmatpush.bf16.msra.mxu0 %v6244
    %7066 = vmatpush.bf16.msra.mxu0 %v6238
    %7067 = vmatpush.bf16.msra.mxu0 %v6232
    %7068 = vmatpush.bf16.msra.mxu0 %v6226
    %7069 = vmatpush.bf16.msra.mxu0 %v6220
    %7070 = vmatpush.bf16.msra.mxu0 %v6214
    %7071 = vmatmul.bf16.gmra.mxu0 %v5287
    %v7072 = vpop.f32.mrf.mxu0
    %v7073 = vadd.f32 %v7060, %v7072
    %v7074 = vpop.f32.mrf.mxu0
    %7075 = vdwg.mxu0
    %7076 = vmatpush.bf16.msra.mxu0 %v6304
    %7077 = vmatpush.bf16.msra.mxu0 %v6298
    %7078 = vmatpush.bf16.msra.mxu0 %v6292
    %7079 = vmatpush.bf16.msra.mxu0 %v6286
    %7080 = vmatpush.bf16.msra.mxu0 %v6280
    %7081 = vmatpush.bf16.msra.mxu0 %v6274
    %7082 = vmatpush.bf16.msra.mxu0 %v6268
    %7083 = vmatpush.bf16.msra.mxu0 %v6262
    %7084 = vmatmul.bf16.gmra.mxu0 %v5288
    %v7085 = vpop.f32.mrf.mxu0
    %v7086 = vadd.f32 %v7073, %v7085
    %v7087 = vpop.f32.mrf.mxu0
    %7088 = vdwg.mxu0
    %7089 = vmatpush.bf16.msra.mxu0 %v6352
    %7090 = vmatpush.bf16.msra.mxu0 %v6346
    %7091 = vmatpush.bf16.msra.mxu0 %v6340
    %7092 = vmatpush.bf16.msra.mxu0 %v6334
    %7093 = vmatpush.bf16.msra.mxu0 %v6328
    %7094 = vmatpush.bf16.msra.mxu0 %v6322
    %7095 = vmatpush.bf16.msra.mxu0 %v6316
    %7096 = vmatpush.bf16.msra.mxu0 %v6310
    %7097 = vmatmul.bf16.gmra.mxu0 %v5289
    %v7098 = vpop.f32.mrf.mxu0
    %v7099 = vadd.f32 %v7086, %v7098
    %v7100 = vpop.f32.mrf.mxu0
    %7101 = vdwg.mxu0
    %7102 = vmatpush.bf16.msra.mxu0 %v6400
    %7103 = vmatpush.bf16.msra.mxu0 %v6394
    %7104 = vmatpush.bf16.msra.mxu0 %v6388
    %7105 = vmatpush.bf16.msra.mxu0 %v6382
    %7106 = vmatpush.bf16.msra.mxu0 %v6376
    %7107 = vmatpush.bf16.msra.mxu0 %v6370
    %7108 = vmatpush.bf16.msra.mxu0 %v6364
    %7109 = vmatpush.bf16.msra.mxu0 %v6358
    %7110 = vmatmul.bf16.gmra.mxu0 %v5290
    %v7111 = vpop.f32.mrf.mxu0
    %v7112 = vadd.f32 %v7099, %v7111
    %v7113 = vpop.f32.mrf.mxu0
    %7114 = vdwg.mxu0
    %7115 = vmatpush.bf16.msra.mxu0 %v6448
    %7116 = vmatpush.bf16.msra.mxu0 %v6442
    %7117 = vmatpush.bf16.msra.mxu0 %v6436
    %7118 = vmatpush.bf16.msra.mxu0 %v6430
    %7119 = vmatpush.bf16.msra.mxu0 %v6424
    %7120 = vmatpush.bf16.msra.mxu0 %v6418
    %7121 = vmatpush.bf16.msra.mxu0 %v6412
    %7122 = vmatpush.bf16.msra.mxu0 %v6406
    %7123 = vmatmul.bf16.gmra.mxu0 %v5291
    %v7124 = vpop.f32.mrf.mxu0
    %v7125 = vadd.f32 %v7112, %v7124
    %v7126 = vpop.f32.mrf.mxu0
    %7127 = vdwg.mxu0
    %7128 = vmatpush.bf16.msra.mxu0 %v6209
    %7129 = vmatpush.bf16.msra.mxu0 %v6203
    %7130 = vmatpush.bf16.msra.mxu0 %v6197
    %7131 = vmatpush.bf16.msra.mxu0 %v6191
    %7132 = vmatpush.bf16.msra.mxu0 %v6185
    %7133 = vmatpush.bf16.msra.mxu0 %v6179
    %7134 = vmatpush.bf16.msra.mxu0 %v6173
    %7135 = vmatpush.bf16.msra.mxu0 %v6167
    %7136 = vmatmul.bf16.gmra.mxu0 %v5286
    %v7137 = vpop.f32.mrf.mxu0
    %v7138 = vadd.f32 %v5249, %v7137
    %v7139 = vpop.f32.mrf.mxu0
    %7140 = vdwg.mxu0
    %7141 = vmatpush.bf16.msra.mxu0 %v6257
    %7142 = vmatpush.bf16.msra.mxu0 %v6251
    %7143 = vmatpush.bf16.msra.mxu0 %v6245
    %7144 = vmatpush.bf16.msra.mxu0 %v6239
    %7145 = vmatpush.bf16.msra.mxu0 %v6233
    %7146 = vmatpush.bf16.msra.mxu0 %v6227
    %7147 = vmatpush.bf16.msra.mxu0 %v6221
    %7148 = vmatpush.bf16.msra.mxu0 %v6215
    %7149 = vmatmul.bf16.gmra.mxu0 %v5287
    %v7150 = vpop.f32.mrf.mxu0
    %v7151 = vadd.f32 %v7138, %v7150
    %v7152 = vpop.f32.mrf.mxu0
    %7153 = vdwg.mxu0
    %7154 = vmatpush.bf16.msra.mxu0 %v6305
    %7155 = vmatpush.bf16.msra.mxu0 %v6299
    %7156 = vmatpush.bf16.msra.mxu0 %v6293
    %7157 = vmatpush.bf16.msra.mxu0 %v6287
    %7158 = vmatpush.bf16.msra.mxu0 %v6281
    %7159 = vmatpush.bf16.msra.mxu0 %v6275
    %7160 = vmatpush.bf16.msra.mxu0 %v6269
    %7161 = vmatpush.bf16.msra.mxu0 %v6263
    %7162 = vmatmul.bf16.gmra.mxu0 %v5288
    %v7163 = vpop.f32.mrf.mxu0
    %v7164 = vadd.f32 %v7151, %v7163
    %v7165 = vpop.f32.mrf.mxu0
    %7166 = vdwg.mxu0
    %7167 = vmatpush.bf16.msra.mxu0 %v6353
    %7168 = vmatpush.bf16.msra.mxu0 %v6347
    %7169 = vmatpush.bf16.msra.mxu0 %v6341
    %7170 = vmatpush.bf16.msra.mxu0 %v6335
    %7171 = vmatpush.bf16.msra.mxu0 %v6329
    %7172 = vmatpush.bf16.msra.mxu0 %v6323
    %7173 = vmatpush.bf16.msra.mxu0 %v6317
    %7174 = vmatpush.bf16.msra.mxu0 %v6311
    %7175 = vmatmul.bf16.gmra.mxu0 %v5289
    %v7176 = vpop.f32.mrf.mxu0
    %v7177 = vadd.f32 %v7164, %v7176
    %v7178 = vpop.f32.mrf.mxu0
    %7179 = vdwg.mxu0
    %7180 = vmatpush.bf16.msra.mxu0 %v6401
    %7181 = vmatpush.bf16.msra.mxu0 %v6395
    %7182 = vmatpush.bf16.msra.mxu0 %v6389
    %7183 = vmatpush.bf16.msra.mxu0 %v6383
    %7184 = vmatpush.bf16.msra.mxu0 %v6377
    %7185 = vmatpush.bf16.msra.mxu0 %v6371
    %7186 = vmatpush.bf16.msra.mxu0 %v6365
    %7187 = vmatpush.bf16.msra.mxu0 %v6359
    %7188 = vmatmul.bf16.gmra.mxu0 %v5290
    %v7189 = vpop.f32.mrf.mxu0
    %v7190 = vadd.f32 %v7177, %v7189
    %v7191 = vpop.f32.mrf.mxu0
    %7192 = vdwg.mxu0
    %7193 = vmatpush.bf16.msra.mxu0 %v6449
    %7194 = vmatpush.bf16.msra.mxu0 %v6443
    %7195 = vmatpush.bf16.msra.mxu0 %v6437
    %7196 = vmatpush.bf16.msra.mxu0 %v6431
    %7197 = vmatpush.bf16.msra.mxu0 %v6425
    %7198 = vmatpush.bf16.msra.mxu0 %v6419
    %7199 = vmatpush.bf16.msra.mxu0 %v6413
    %7200 = vmatpush.bf16.msra.mxu0 %v6407
    %7201 = vmatmul.bf16.gmra.mxu0 %v5291
    %v7202 = vpop.f32.mrf.mxu0
    %v7203 = vadd.f32 %v7190, %v7202
    %v7204 = vpop.f32.mrf.mxu0
    %7205 = vdwg.mxu0
    %v7206 = vld [vmem:[#allocation9] sm:$0xff]
    %v7207 = vld [vmem:[#allocation9 + $0x8] sm:$0xf]
    %7210 = vst [vmem:[#allocation1] ss:$4 sm:$0xff] %v7206
    %s7211 = scalar_lea.vmem [#allocation1], 32
    %7212 = vst [vmem:[%s7211] ss:$4 sm:$0xff] %v7207
    %v7213 = vld.sshfl [vmem:[#allocation1] sm:$0xff pattern:$0x73625140]
    %v7214 = vld.sshfl [vmem:[#allocation1 + $0x8] sm:$0xff pattern:$0x73625140]
    %v7215 = vld.sshfl [vmem:[#allocation1 + $0x10] sm:$0xff pattern:$0x73625140]
    %v7216 = vld.sshfl [vmem:[#allocation1 + $0x18] sm:$0xff pattern:$0x73625140]
    %v7217 = vld.sshfl [vmem:[#allocation1 + $0x20] sm:$0xff pattern:$0x73625140]
    %v7218 = vld.sshfl [vmem:[#allocation1 + $0x28] sm:$0xff pattern:$0x73625140]
    %v7225 = vadd.f32 %v6813, %v7213
    %v7226 = vadd.f32 %v6891, %v7214
    %v7227 = vadd.f32 %v6969, %v7215
    %v7228 = vadd.f32 %v7047, %v7216
    %v7229 = vadd.f32 %v7125, %v7217
    %v7230 = vadd.f32 %v7203, %v7218
    %v7231 = vmul.f32 %v7225, 0.5
    %v7232 = vmul.f32 %v7226, 0.5
    %v7233 = vmul.f32 %v7227, 0.5
    %v7234 = vmul.f32 %v7228, 0.5
    %v7235 = vmul.f32 %v7229, 0.5
    %v7236 = vmul.f32 %v7230, 0.5
    %v7237 = vmul.f32 %v7225, 0.70710677
    %v7238 = vmul.f32 %v7226, 0.70710677
    %v7239 = vmul.f32 %v7227, 0.70710677
    %v7240 = vmul.f32 %v7228, 0.70710677
    %v7241 = vmul.f32 %v7229, 0.70710677
    %v7242 = vmul.f32 %v7230, 0.70710677
    %v7243 = vmul.f32 %v7237, %v7237
    %v7244 = vmin.f32 16.0, %v7243
    %v7245 = vmul.f32 %v7244, 2.1237322e-06
    %v7246 = vadd.f32 %v7245, 0.00028619796
    %v7247 = vmul.f32 %v7244, %v7246
    %v7248 = vadd.f32 %v7247, 0.0036580483
    %v7249 = vmul.f32 %v7244, %v7248
    %v7250 = vadd.f32 %v7249, 0.05243302
    %v7251 = vmul.f32 %v7244, %v7250
    %v7252 = vadd.f32 %v7251, 0.18741608
    %v7253 = vmul.f32 %v7244, %v7252
    %v7254 = vadd.f32 %v7253, 1.1283791
    %v7255 = vmul.f32 %v7237, %v7254
    %v7256 = vmul.f32 %v7244, 3.8918573e-05
    %v7257 = vadd.f32 %v7256, 0.001143296
    %v7258 = vmul.f32 %v7244, %v7257
    %v7259 = vadd.f32 %v7258, 0.014752088
    %v7260 = vmul.f32 %v7244, %v7259
    %v7261 = vadd.f32 %v7260, 0.112945676
    %v7262 = vmul.f32 %v7244, %v7261
    %v7263 = vadd.f32 %v7262, 0.4994258
    %v7264 = vmul.f32 %v7244, %v7263
    %v7265 = vadd.f32 %v7264, 1.0
    %v7266 = vrcp.pop %v7265
    %v7267 = vmul.f32 %v7265, %v7266
    %v7268 = vsub.f32 1.0, %v7267
    %v7269 = vmul.f32 %v7266, %v7268
    %v7270 = vadd.f32 %v7266, %v7269
    %vm7271 = vweird.f32 %v7265
    %vm7272 = vweird.f32 %v7266
    %vm7273 = vmor %vm7271, %vm7272
    %v7274 = vsel %vm7273, %v7266, %v7270
    %v7275 = vand.u32 2147483647, %v7265
    %vm7276 = vcmp.eq.f32.partialorder %v7275, 8.507059e+37
    %v7277 = vand.u32 %v7265, 2147483648
    %v7278 = vor.u32 1.1754944e-38, %v7277
    %v7279 = vsel %vm7276, %v7278, %v7274
    %v7280 = vmul.f32 %v7255, %v7279
    %v7281 = vmin.f32 %v7280, 1.0
    %v7282 = vmax.f32 %v7281, -1.0
    %v7283 = vmul.f32 %v7238, %v7238
    %v7284 = vmin.f32 16.0, %v7283
    %v7285 = vmul.f32 %v7284, 2.1237322e-06
    %v7286 = vadd.f32 %v7285, 0.00028619796
    %v7287 = vmul.f32 %v7284, %v7286
    %v7288 = vadd.f32 %v7287, 0.0036580483
    %v7289 = vmul.f32 %v7284, %v7288
    %v7290 = vadd.f32 %v7289, 0.05243302
    %v7291 = vmul.f32 %v7284, %v7290
    %v7292 = vadd.f32 %v7291, 0.18741608
    %v7293 = vmul.f32 %v7284, %v7292
    %v7294 = vadd.f32 %v7293, 1.1283791
    %v7295 = vmul.f32 %v7238, %v7294
    %v7296 = vmul.f32 %v7284, 3.8918573e-05
    %v7297 = vadd.f32 %v7296, 0.001143296
    %v7298 = vmul.f32 %v7284, %v7297
    %v7299 = vadd.f32 %v7298, 0.014752088
    %v7300 = vmul.f32 %v7284, %v7299
    %v7301 = vadd.f32 %v7300, 0.112945676
    %v7302 = vmul.f32 %v7284, %v7301
    %v7303 = vadd.f32 %v7302, 0.4994258
    %v7304 = vmul.f32 %v7284, %v7303
    %v7305 = vadd.f32 %v7304, 1.0
    %v7306 = vrcp.pop %v7305
    %v7307 = vmul.f32 %v7305, %v7306
    %v7308 = vsub.f32 1.0, %v7307
    %v7309 = vmul.f32 %v7306, %v7308
    %v7310 = vadd.f32 %v7306, %v7309
    %vm7311 = vweird.f32 %v7305
    %vm7312 = vweird.f32 %v7306
    %vm7313 = vmor %vm7311, %vm7312
    %v7314 = vsel %vm7313, %v7306, %v7310
    %v7315 = vand.u32 2147483647, %v7305
    %vm7316 = vcmp.eq.f32.partialorder %v7315, 8.507059e+37
    %v7317 = vand.u32 %v7305, 2147483648
    %v7318 = vor.u32 1.1754944e-38, %v7317
    %v7319 = vsel %vm7316, %v7318, %v7314
    %v7320 = vmul.f32 %v7295, %v7319
    %v7321 = vmin.f32 %v7320, 1.0
    %v7322 = vmax.f32 %v7321, -1.0
    %v7323 = vmul.f32 %v7239, %v7239
    %v7324 = vmin.f32 16.0, %v7323
    %v7325 = vmul.f32 %v7324, 2.1237322e-06
    %v7326 = vadd.f32 %v7325, 0.00028619796
    %v7327 = vmul.f32 %v7324, %v7326
    %v7328 = vadd.f32 %v7327, 0.0036580483
    %v7329 = vmul.f32 %v7324, %v7328
    %v7330 = vadd.f32 %v7329, 0.05243302
    %v7331 = vmul.f32 %v7324, %v7330
    %v7332 = vadd.f32 %v7331, 0.18741608
    %v7333 = vmul.f32 %v7324, %v7332
    %v7334 = vadd.f32 %v7333, 1.1283791
    %v7335 = vmul.f32 %v7239, %v7334
    %v7336 = vmul.f32 %v7324, 3.8918573e-05
    %v7337 = vadd.f32 %v7336, 0.001143296
    %v7338 = vmul.f32 %v7324, %v7337
    %v7339 = vadd.f32 %v7338, 0.014752088
    %v7340 = vmul.f32 %v7324, %v7339
    %v7341 = vadd.f32 %v7340, 0.112945676
    %v7342 = vmul.f32 %v7324, %v7341
    %v7343 = vadd.f32 %v7342, 0.4994258
    %v7344 = vmul.f32 %v7324, %v7343
    %v7345 = vadd.f32 %v7344, 1.0
    %v7346 = vrcp.pop %v7345
    %v7347 = vmul.f32 %v7345, %v7346
    %v7348 = vsub.f32 1.0, %v7347
    %v7349 = vmul.f32 %v7346, %v7348
    %v7350 = vadd.f32 %v7346, %v7349
    %vm7351 = vweird.f32 %v7345
    %vm7352 = vweird.f32 %v7346
    %vm7353 = vmor %vm7351, %vm7352
    %v7354 = vsel %vm7353, %v7346, %v7350
    %v7355 = vand.u32 2147483647, %v7345
    %vm7356 = vcmp.eq.f32.partialorder %v7355, 8.507059e+37
    %v7357 = vand.u32 %v7345, 2147483648
    %v7358 = vor.u32 1.1754944e-38, %v7357
    %v7359 = vsel %vm7356, %v7358, %v7354
    %v7360 = vmul.f32 %v7335, %v7359
    %v7361 = vmin.f32 %v7360, 1.0
    %v7362 = vmax.f32 %v7361, -1.0
    %v7363 = vmul.f32 %v7240, %v7240
    %v7364 = vmin.f32 16.0, %v7363
    %v7365 = vmul.f32 %v7364, 2.1237322e-06
    %v7366 = vadd.f32 %v7365, 0.00028619796
    %v7367 = vmul.f32 %v7364, %v7366
    %v7368 = vadd.f32 %v7367, 0.0036580483
    %v7369 = vmul.f32 %v7364, %v7368
    %v7370 = vadd.f32 %v7369, 0.05243302
    %v7371 = vmul.f32 %v7364, %v7370
    %v7372 = vadd.f32 %v7371, 0.18741608
    %v7373 = vmul.f32 %v7364, %v7372
    %v7374 = vadd.f32 %v7373, 1.1283791
    %v7375 = vmul.f32 %v7240, %v7374
    %v7376 = vmul.f32 %v7364, 3.8918573e-05
    %v7377 = vadd.f32 %v7376, 0.001143296
    %v7378 = vmul.f32 %v7364, %v7377
    %v7379 = vadd.f32 %v7378, 0.014752088
    %v7380 = vmul.f32 %v7364, %v7379
    %v7381 = vadd.f32 %v7380, 0.112945676
    %v7382 = vmul.f32 %v7364, %v7381
    %v7383 = vadd.f32 %v7382, 0.4994258
    %v7384 = vmul.f32 %v7364, %v7383
    %v7385 = vadd.f32 %v7384, 1.0
    %v7386 = vrcp.pop %v7385
    %v7387 = vmul.f32 %v7385, %v7386
    %v7388 = vsub.f32 1.0, %v7387
    %v7389 = vmul.f32 %v7386, %v7388
    %v7390 = vadd.f32 %v7386, %v7389
    %vm7391 = vweird.f32 %v7385
    %vm7392 = vweird.f32 %v7386
    %vm7393 = vmor %vm7391, %vm7392
    %v7394 = vsel %vm7393, %v7386, %v7390
    %v7395 = vand.u32 2147483647, %v7385
    %vm7396 = vcmp.eq.f32.partialorder %v7395, 8.507059e+37
    %v7397 = vand.u32 %v7385, 2147483648
    %v7398 = vor.u32 1.1754944e-38, %v7397
    %v7399 = vsel %vm7396, %v7398, %v7394
    %v7400 = vmul.f32 %v7375, %v7399
    %v7401 = vmin.f32 %v7400, 1.0
    %v7402 = vmax.f32 %v7401, -1.0
    %v7403 = vmul.f32 %v7241, %v7241
    %v7404 = vmin.f32 16.0, %v7403
    %v7405 = vmul.f32 %v7404, 2.1237322e-06
    %v7406 = vadd.f32 %v7405, 0.00028619796
    %v7407 = vmul.f32 %v7404, %v7406
    %v7408 = vadd.f32 %v7407, 0.0036580483
    %v7409 = vmul.f32 %v7404, %v7408
    %v7410 = vadd.f32 %v7409, 0.05243302
    %v7411 = vmul.f32 %v7404, %v7410
    %v7412 = vadd.f32 %v7411, 0.18741608
    %v7413 = vmul.f32 %v7404, %v7412
    %v7414 = vadd.f32 %v7413, 1.1283791
    %v7415 = vmul.f32 %v7241, %v7414
    %v7416 = vmul.f32 %v7404, 3.8918573e-05
    %v7417 = vadd.f32 %v7416, 0.001143296
    %v7418 = vmul.f32 %v7404, %v7417
    %v7419 = vadd.f32 %v7418, 0.014752088
    %v7420 = vmul.f32 %v7404, %v7419
    %v7421 = vadd.f32 %v7420, 0.112945676
    %v7422 = vmul.f32 %v7404, %v7421
    %v7423 = vadd.f32 %v7422, 0.4994258
    %v7424 = vmul.f32 %v7404, %v7423
    %v7425 = vadd.f32 %v7424, 1.0
    %v7426 = vrcp.pop %v7425
    %v7427 = vmul.f32 %v7425, %v7426
    %v7428 = vsub.f32 1.0, %v7427
    %v7429 = vmul.f32 %v7426, %v7428
    %v7430 = vadd.f32 %v7426, %v7429
    %vm7431 = vweird.f32 %v7425
    %vm7432 = vweird.f32 %v7426
    %vm7433 = vmor %vm7431, %vm7432
    %v7434 = vsel %vm7433, %v7426, %v7430
    %v7435 = vand.u32 2147483647, %v7425
    %vm7436 = vcmp.eq.f32.partialorder %v7435, 8.507059e+37
    %v7437 = vand.u32 %v7425, 2147483648
    %v7438 = vor.u32 1.1754944e-38, %v7437
    %v7439 = vsel %vm7436, %v7438, %v7434
    %v7440 = vmul.f32 %v7415, %v7439
    %v7441 = vmin.f32 %v7440, 1.0
    %v7442 = vmax.f32 %v7441, -1.0
    %v7443 = vmul.f32 %v7242, %v7242
    %v7444 = vmin.f32 16.0, %v7443
    %v7445 = vmul.f32 %v7444, 2.1237322e-06
    %v7446 = vadd.f32 %v7445, 0.00028619796
    %v7447 = vmul.f32 %v7444, %v7446
    %v7448 = vadd.f32 %v7447, 0.0036580483
    %v7449 = vmul.f32 %v7444, %v7448
    %v7450 = vadd.f32 %v7449, 0.05243302
    %v7451 = vmul.f32 %v7444, %v7450
    %v7452 = vadd.f32 %v7451, 0.18741608
    %v7453 = vmul.f32 %v7444, %v7452
    %v7454 = vadd.f32 %v7453, 1.1283791
    %v7455 = vmul.f32 %v7242, %v7454
    %v7456 = vmul.f32 %v7444, 3.8918573e-05
    %v7457 = vadd.f32 %v7456, 0.001143296
    %v7458 = vmul.f32 %v7444, %v7457
    %v7459 = vadd.f32 %v7458, 0.014752088
    %v7460 = vmul.f32 %v7444, %v7459
    %v7461 = vadd.f32 %v7460, 0.112945676
    %v7462 = vmul.f32 %v7444, %v7461
    %v7463 = vadd.f32 %v7462, 0.4994258
    %v7464 = vmul.f32 %v7444, %v7463
    %v7465 = vadd.f32 %v7464, 1.0
    %v7466 = vrcp.pop %v7465
    %v7467 = vmul.f32 %v7465, %v7466
    %v7468 = vsub.f32 1.0, %v7467
    %v7469 = vmul.f32 %v7466, %v7468
    %v7470 = vadd.f32 %v7466, %v7469
    %vm7471 = vweird.f32 %v7465
    %vm7472 = vweird.f32 %v7466
    %vm7473 = vmor %vm7471, %vm7472
    %v7474 = vsel %vm7473, %v7466, %v7470
    %v7475 = vand.u32 2147483647, %v7465
    %vm7476 = vcmp.eq.f32.partialorder %v7475, 8.507059e+37
    %v7477 = vand.u32 %v7465, 2147483648
    %v7478 = vor.u32 1.1754944e-38, %v7477
    %v7479 = vsel %vm7476, %v7478, %v7474
    %v7480 = vmul.f32 %v7455, %v7479
    %v7481 = vmin.f32 %v7480, 1.0
    %v7482 = vmax.f32 %v7481, -1.0
    %v7483 = vadd.f32 %v7282, 1.0
    %v7484 = vadd.f32 %v7322, 1.0
    %v7485 = vadd.f32 %v7362, 1.0
    %v7486 = vadd.f32 %v7402, 1.0
    %v7487 = vadd.f32 %v7442, 1.0
    %v7488 = vadd.f32 %v7482, 1.0
    %v7489 = vmul.f32 %v7231, %v7483
    %v7490 = vmul.f32 %v7232, %v7484
    %v7491 = vmul.f32 %v7233, %v7485
    %v7492 = vmul.f32 %v7234, %v7486
    %v7493 = vmul.f32 %v7235, %v7487
    %v7494 = vmul.f32 %v7236, %v7488
    %v7495 = vpack.c.bf16 %v7489, %v7489
    %v7496 = vpack.c.bf16 %v7490, %v7490
    %v7497 = vpack.c.bf16 %v7491, %v7491
    %v7498 = vpack.c.bf16 %v7492, %v7492
    %v7499 = vpack.c.bf16 %v7493, %v7493
    %v7500 = vpack.c.bf16 %v7494, %v7494
    %v7501 = vld [vmem:[#allocation18] sm:$0xff]
    %v7502 = vld [vmem:[#allocation18 + $0x8] sm:$0xff]
    %v7503 = vld [vmem:[#allocation18 + $0x10] sm:$0xff]
    %v7504 = vld [vmem:[#allocation18 + $0x18] sm:$0xff]
    %v7505 = vld [vmem:[#allocation18 + $0x20] sm:$0xff]
    %v7506 = vld [vmem:[#allocation18 + $0x28] sm:$0xff]
    %v7507 = vld [vmem:[#allocation18 + $0x30] sm:$0xff]
    %v7508 = vld [vmem:[#allocation18 + $0x38] sm:$0xff]
    %v7509 = vld [vmem:[#allocation18 + $0x40] sm:$0xff]
    %v7510 = vld [vmem:[#allocation18 + $0x48] sm:$0xff]
    %v7511 = vld [vmem:[#allocation18 + $0x50] sm:$0xff]
    %v7512 = vld [vmem:[#allocation18 + $0x58] sm:$0xff]
    %v7513 = vld [vmem:[#allocation18 + $0x60] sm:$0xff]
    %v7514 = vld [vmem:[#allocation18 + $0x68] sm:$0xff]
    %v7515 = vld [vmem:[#allocation18 + $0x70] sm:$0xff]
    %v7516 = vld [vmem:[#allocation18 + $0x78] sm:$0xff]
    %v7517 = vld [vmem:[#allocation18 + $0x80] sm:$0xff]
    %v7518 = vld [vmem:[#allocation18 + $0x88] sm:$0xff]
    %v7519 = vld [vmem:[#allocation18 + $0x90] sm:$0xff]
    %v7520 = vld [vmem:[#allocation18 + $0x98] sm:$0xff]
    %v7521 = vld [vmem:[#allocation18 + $0xa0] sm:$0xff]
    %v7522 = vld [vmem:[#allocation18 + $0xa8] sm:$0xff]
    %v7523 = vld [vmem:[#allocation18 + $0xb0] sm:$0xff]
    %v7524 = vld [vmem:[#allocation18 + $0xb8] sm:$0xff]
    %v7525 = vld [vmem:[#allocation18 + $0xc0] sm:$0xff]
    %v7526 = vld [vmem:[#allocation18 + $0xc8] sm:$0xff]
    %v7527 = vld [vmem:[#allocation18 + $0xd0] sm:$0xff]
    %v7528 = vld [vmem:[#allocation18 + $0xd8] sm:$0xff]
    %v7529 = vld [vmem:[#allocation18 + $0xe0] sm:$0xff]
    %v7530 = vld [vmem:[#allocation18 + $0xe8] sm:$0xff]
    %v7531 = vld [vmem:[#allocation18 + $0xf0] sm:$0xff]
    %v7532 = vld [vmem:[#allocation18 + $0xf8] sm:$0xff]
    %v7533 = vld [vmem:[#allocation18 + $0x100] sm:$0xff]
    %v7534 = vld [vmem:[#allocation18 + $0x108] sm:$0xff]
    %v7535 = vld [vmem:[#allocation18 + $0x110] sm:$0xff]
    %v7536 = vld [vmem:[#allocation18 + $0x118] sm:$0xff]
    %v7537 = vld [vmem:[#allocation18 + $0x120] sm:$0xff]
    %v7538 = vld [vmem:[#allocation18 + $0x128] sm:$0xff]
    %v7539 = vld [vmem:[#allocation18 + $0x130] sm:$0xff]
    %v7540 = vld [vmem:[#allocation18 + $0x138] sm:$0xff]
    %v7541 = vld [vmem:[#allocation18 + $0x140] sm:$0xff]
    %v7542 = vld [vmem:[#allocation18 + $0x148] sm:$0xff]
    %v7543 = vld [vmem:[#allocation18 + $0x150] sm:$0xff]
    %v7544 = vld [vmem:[#allocation18 + $0x158] sm:$0xff]
    %v7545 = vld [vmem:[#allocation18 + $0x160] sm:$0xff]
    %v7546 = vld [vmem:[#allocation18 + $0x168] sm:$0xff]
    %v7547 = vld [vmem:[#allocation18 + $0x170] sm:$0xff]
    %v7548 = vld [vmem:[#allocation18 + $0x178] sm:$0xff]
    %v7549 = vld [vmem:[#allocation18 + $0x180] sm:$0xff]
    %v7550 = vld [vmem:[#allocation18 + $0x188] sm:$0xff]
    %v7551 = vld [vmem:[#allocation18 + $0x190] sm:$0xff]
    %v7552 = vld [vmem:[#allocation18 + $0x198] sm:$0xff]
    %v7553 = vld [vmem:[#allocation18 + $0x1a0] sm:$0xff]
    %v7554 = vld [vmem:[#allocation18 + $0x1a8] sm:$0xff]
    %v7555 = vld [vmem:[#allocation18 + $0x1b0] sm:$0xff]
    %v7556 = vld [vmem:[#allocation18 + $0x1b8] sm:$0xff]
    %v7557 = vld [vmem:[#allocation18 + $0x1c0] sm:$0xff]
    %v7558 = vld [vmem:[#allocation18 + $0x1c8] sm:$0xff]
    %v7559 = vld [vmem:[#allocation18 + $0x1d0] sm:$0xff]
    %v7560 = vld [vmem:[#allocation18 + $0x1d8] sm:$0xff]
    %v7561 = vld [vmem:[#allocation18 + $0x1e0] sm:$0xff]
    %v7562 = vld [vmem:[#allocation18 + $0x1e8] sm:$0xff]
    %v7563 = vld [vmem:[#allocation18 + $0x1f0] sm:$0xff]
    %v7564 = vld [vmem:[#allocation18 + $0x1f8] sm:$0xff]
    %v7565 = vld [vmem:[#allocation18 + $0x200] sm:$0xff]
    %v7566 = vld [vmem:[#allocation18 + $0x208] sm:$0xff]
    %v7567 = vld [vmem:[#allocation18 + $0x210] sm:$0xff]
    %v7568 = vld [vmem:[#allocation18 + $0x218] sm:$0xff]
    %v7569 = vld [vmem:[#allocation18 + $0x220] sm:$0xff]
    %v7570 = vld [vmem:[#allocation18 + $0x228] sm:$0xff]
    %v7571 = vld [vmem:[#allocation18 + $0x230] sm:$0xff]
    %v7572 = vld [vmem:[#allocation18 + $0x238] sm:$0xff]
    %v7573 = vld [vmem:[#allocation18 + $0x240] sm:$0xff]
    %v7574 = vld [vmem:[#allocation18 + $0x248] sm:$0xff]
    %v7575 = vld [vmem:[#allocation18 + $0x250] sm:$0xff]
    %v7576 = vld [vmem:[#allocation18 + $0x258] sm:$0xff]
    %v7577 = vld [vmem:[#allocation18 + $0x260] sm:$0xff]
    %v7578 = vld [vmem:[#allocation18 + $0x268] sm:$0xff]
    %v7579 = vld [vmem:[#allocation18 + $0x270] sm:$0xff]
    %v7580 = vld [vmem:[#allocation18 + $0x278] sm:$0xff]
    %v7581 = vld [vmem:[#allocation18 + $0x280] sm:$0xff]
    %v7582 = vld [vmem:[#allocation18 + $0x288] sm:$0xff]
    %v7583 = vld [vmem:[#allocation18 + $0x290] sm:$0xff]
    %v7584 = vld [vmem:[#allocation18 + $0x298] sm:$0xff]
    %v7585 = vld [vmem:[#allocation18 + $0x2a0] sm:$0xff]
    %v7586 = vld [vmem:[#allocation18 + $0x2a8] sm:$0xff]
    %v7587 = vld [vmem:[#allocation18 + $0x2b0] sm:$0xff]
    %v7588 = vld [vmem:[#allocation18 + $0x2b8] sm:$0xff]
    %v7589 = vld [vmem:[#allocation18 + $0x2c0] sm:$0xff]
    %v7590 = vld [vmem:[#allocation18 + $0x2c8] sm:$0xff]
    %v7591 = vld [vmem:[#allocation18 + $0x2d0] sm:$0xff]
    %v7592 = vld [vmem:[#allocation18 + $0x2d8] sm:$0xff]
    %v7593 = vld [vmem:[#allocation18 + $0x2e0] sm:$0xff]
    %v7594 = vld [vmem:[#allocation18 + $0x2e8] sm:$0xff]
    %v7595 = vld [vmem:[#allocation18 + $0x2f0] sm:$0xff]
    %v7596 = vld [vmem:[#allocation18 + $0x2f8] sm:$0xff]
    %v7597 = vld [vmem:[#allocation18 + $0x300] sm:$0xff]
    %v7598 = vld [vmem:[#allocation18 + $0x308] sm:$0xff]
    %v7599 = vld [vmem:[#allocation18 + $0x310] sm:$0xff]
    %v7600 = vld [vmem:[#allocation18 + $0x318] sm:$0xff]
    %v7601 = vld [vmem:[#allocation18 + $0x320] sm:$0xff]
    %v7602 = vld [vmem:[#allocation18 + $0x328] sm:$0xff]
    %v7603 = vld [vmem:[#allocation18 + $0x330] sm:$0xff]
    %v7604 = vld [vmem:[#allocation18 + $0x338] sm:$0xff]
    %v7605 = vld [vmem:[#allocation18 + $0x340] sm:$0xff]
    %v7606 = vld [vmem:[#allocation18 + $0x348] sm:$0xff]
    %v7607 = vld [vmem:[#allocation18 + $0x350] sm:$0xff]
    %v7608 = vld [vmem:[#allocation18 + $0x358] sm:$0xff]
    %v7609 = vld [vmem:[#allocation18 + $0x360] sm:$0xff]
    %v7610 = vld [vmem:[#allocation18 + $0x368] sm:$0xff]
    %v7611 = vld [vmem:[#allocation18 + $0x370] sm:$0xff]
    %v7612 = vld [vmem:[#allocation18 + $0x378] sm:$0xff]
    %v7613 = vld [vmem:[#allocation18 + $0x380] sm:$0xff]
    %v7614 = vld [vmem:[#allocation18 + $0x388] sm:$0xff]
    %v7615 = vld [vmem:[#allocation18 + $0x390] sm:$0xff]
    %v7616 = vld [vmem:[#allocation18 + $0x398] sm:$0xff]
    %v7617 = vld [vmem:[#allocation18 + $0x3a0] sm:$0xff]
    %v7618 = vld [vmem:[#allocation18 + $0x3a8] sm:$0xff]
    %v7619 = vld [vmem:[#allocation18 + $0x3b0] sm:$0xff]
    %v7620 = vld [vmem:[#allocation18 + $0x3b8] sm:$0xff]
    %v7621 = vld [vmem:[#allocation18 + $0x3c0] sm:$0xff]
    %v7622 = vld [vmem:[#allocation18 + $0x3c8] sm:$0xff]
    %v7623 = vld [vmem:[#allocation18 + $0x3d0] sm:$0xff]
    %v7624 = vld [vmem:[#allocation18 + $0x3d8] sm:$0xff]
    %v7625 = vld [vmem:[#allocation18 + $0x3e0] sm:$0xff]
    %v7626 = vld [vmem:[#allocation18 + $0x3e8] sm:$0xff]
    %v7627 = vld [vmem:[#allocation18 + $0x3f0] sm:$0xff]
    %v7628 = vld [vmem:[#allocation18 + $0x3f8] sm:$0xff]
    %v7629 = vld [vmem:[#allocation18 + $0x400] sm:$0xff]
    %v7630 = vld [vmem:[#allocation18 + $0x408] sm:$0xff]
    %v7631 = vld [vmem:[#allocation18 + $0x410] sm:$0xff]
    %v7632 = vld [vmem:[#allocation18 + $0x418] sm:$0xff]
    %v7633 = vld [vmem:[#allocation18 + $0x420] sm:$0xff]
    %v7634 = vld [vmem:[#allocation18 + $0x428] sm:$0xff]
    %v7635 = vld [vmem:[#allocation18 + $0x430] sm:$0xff]
    %v7636 = vld [vmem:[#allocation18 + $0x438] sm:$0xff]
    %v7637 = vld [vmem:[#allocation18 + $0x440] sm:$0xff]
    %v7638 = vld [vmem:[#allocation18 + $0x448] sm:$0xff]
    %v7639 = vld [vmem:[#allocation18 + $0x450] sm:$0xff]
    %v7640 = vld [vmem:[#allocation18 + $0x458] sm:$0xff]
    %v7641 = vld [vmem:[#allocation18 + $0x460] sm:$0xff]
    %v7642 = vld [vmem:[#allocation18 + $0x468] sm:$0xff]
    %v7643 = vld [vmem:[#allocation18 + $0x470] sm:$0xff]
    %v7644 = vld [vmem:[#allocation18 + $0x478] sm:$0xff]
    %v7645 = vld [vmem:[#allocation18 + $0x480] sm:$0xff]
    %v7646 = vld [vmem:[#allocation18 + $0x488] sm:$0xff]
    %v7647 = vld [vmem:[#allocation18 + $0x490] sm:$0xff]
    %v7648 = vld [vmem:[#allocation18 + $0x498] sm:$0xff]
    %v7649 = vld [vmem:[#allocation18 + $0x4a0] sm:$0xff]
    %v7650 = vld [vmem:[#allocation18 + $0x4a8] sm:$0xff]
    %v7651 = vld [vmem:[#allocation18 + $0x4b0] sm:$0xff]
    %v7652 = vld [vmem:[#allocation18 + $0x4b8] sm:$0xff]
    %v7653 = vld [vmem:[#allocation18 + $0x4c0] sm:$0xff]
    %v7654 = vld [vmem:[#allocation18 + $0x4c8] sm:$0xff]
    %v7655 = vld [vmem:[#allocation18 + $0x4d0] sm:$0xff]
    %v7656 = vld [vmem:[#allocation18 + $0x4d8] sm:$0xff]
    %v7657 = vld [vmem:[#allocation18 + $0x4e0] sm:$0xff]
    %v7658 = vld [vmem:[#allocation18 + $0x4e8] sm:$0xff]
    %v7659 = vld [vmem:[#allocation18 + $0x4f0] sm:$0xff]
    %v7660 = vld [vmem:[#allocation18 + $0x4f8] sm:$0xff]
    %v7661 = vld [vmem:[#allocation18 + $0x500] sm:$0xff]
    %v7662 = vld [vmem:[#allocation18 + $0x508] sm:$0xff]
    %v7663 = vld [vmem:[#allocation18 + $0x510] sm:$0xff]
    %v7664 = vld [vmem:[#allocation18 + $0x518] sm:$0xff]
    %v7665 = vld [vmem:[#allocation18 + $0x520] sm:$0xff]
    %v7666 = vld [vmem:[#allocation18 + $0x528] sm:$0xff]
    %v7667 = vld [vmem:[#allocation18 + $0x530] sm:$0xff]
    %v7668 = vld [vmem:[#allocation18 + $0x538] sm:$0xff]
    %v7669 = vld [vmem:[#allocation18 + $0x540] sm:$0xff]
    %v7670 = vld [vmem:[#allocation18 + $0x548] sm:$0xff]
    %v7671 = vld [vmem:[#allocation18 + $0x550] sm:$0xff]
    %v7672 = vld [vmem:[#allocation18 + $0x558] sm:$0xff]
    %v7673 = vld [vmem:[#allocation18 + $0x560] sm:$0xff]
    %v7674 = vld [vmem:[#allocation18 + $0x568] sm:$0xff]
    %v7675 = vld [vmem:[#allocation18 + $0x570] sm:$0xff]
    %v7676 = vld [vmem:[#allocation18 + $0x578] sm:$0xff]
    %v7677 = vld [vmem:[#allocation18 + $0x580] sm:$0xff]
    %v7678 = vld [vmem:[#allocation18 + $0x588] sm:$0xff]
    %v7679 = vld [vmem:[#allocation18 + $0x590] sm:$0xff]
    %v7680 = vld [vmem:[#allocation18 + $0x598] sm:$0xff]
    %v7681 = vld [vmem:[#allocation18 + $0x5a0] sm:$0xff]
    %v7682 = vld [vmem:[#allocation18 + $0x5a8] sm:$0xff]
    %v7683 = vld [vmem:[#allocation18 + $0x5b0] sm:$0xff]
    %v7684 = vld [vmem:[#allocation18 + $0x5b8] sm:$0xff]
    %v7685 = vld [vmem:[#allocation18 + $0x5c0] sm:$0xff]
    %v7686 = vld [vmem:[#allocation18 + $0x5c8] sm:$0xff]
    %v7687 = vld [vmem:[#allocation18 + $0x5d0] sm:$0xff]
    %v7688 = vld [vmem:[#allocation18 + $0x5d8] sm:$0xff]
    %v7689 = vld [vmem:[#allocation18 + $0x5e0] sm:$0xff]
    %v7690 = vld [vmem:[#allocation18 + $0x5e8] sm:$0xff]
    %v7691 = vld [vmem:[#allocation18 + $0x5f0] sm:$0xff]
    %v7692 = vld [vmem:[#allocation18 + $0x5f8] sm:$0xff]
    %v7693 = vld [vmem:[#allocation18 + $0x600] sm:$0xff]
    %v7694 = vld [vmem:[#allocation18 + $0x608] sm:$0xff]
    %v7695 = vld [vmem:[#allocation18 + $0x610] sm:$0xff]
    %v7696 = vld [vmem:[#allocation18 + $0x618] sm:$0xff]
    %v7697 = vld [vmem:[#allocation18 + $0x620] sm:$0xff]
    %v7698 = vld [vmem:[#allocation18 + $0x628] sm:$0xff]
    %v7699 = vld [vmem:[#allocation18 + $0x630] sm:$0xff]
    %v7700 = vld [vmem:[#allocation18 + $0x638] sm:$0xff]
    %v7701 = vld [vmem:[#allocation18 + $0x640] sm:$0xff]
    %v7702 = vld [vmem:[#allocation18 + $0x648] sm:$0xff]
    %v7703 = vld [vmem:[#allocation18 + $0x650] sm:$0xff]
    %v7704 = vld [vmem:[#allocation18 + $0x658] sm:$0xff]
    %v7705 = vld [vmem:[#allocation18 + $0x660] sm:$0xff]
    %v7706 = vld [vmem:[#allocation18 + $0x668] sm:$0xff]
    %v7707 = vld [vmem:[#allocation18 + $0x670] sm:$0xff]
    %v7708 = vld [vmem:[#allocation18 + $0x678] sm:$0xff]
    %v7709 = vld [vmem:[#allocation18 + $0x680] sm:$0xff]
    %v7710 = vld [vmem:[#allocation18 + $0x688] sm:$0xff]
    %v7711 = vld [vmem:[#allocation18 + $0x690] sm:$0xff]
    %v7712 = vld [vmem:[#allocation18 + $0x698] sm:$0xff]
    %v7713 = vld [vmem:[#allocation18 + $0x6a0] sm:$0xff]
    %v7714 = vld [vmem:[#allocation18 + $0x6a8] sm:$0xff]
    %v7715 = vld [vmem:[#allocation18 + $0x6b0] sm:$0xff]
    %v7716 = vld [vmem:[#allocation18 + $0x6b8] sm:$0xff]
    %v7717 = vld [vmem:[#allocation18 + $0x6c0] sm:$0xff]
    %v7718 = vld [vmem:[#allocation18 + $0x6c8] sm:$0xff]
    %v7719 = vld [vmem:[#allocation18 + $0x6d0] sm:$0xff]
    %v7720 = vld [vmem:[#allocation18 + $0x6d8] sm:$0xff]
    %v7721 = vld [vmem:[#allocation18 + $0x6e0] sm:$0xff]
    %v7722 = vld [vmem:[#allocation18 + $0x6e8] sm:$0xff]
    %v7723 = vld [vmem:[#allocation18 + $0x6f0] sm:$0xff]
    %v7724 = vld [vmem:[#allocation18 + $0x6f8] sm:$0xff]
    %v7725 = vld [vmem:[#allocation18 + $0x700] sm:$0xff]
    %v7726 = vld [vmem:[#allocation18 + $0x708] sm:$0xff]
    %v7727 = vld [vmem:[#allocation18 + $0x710] sm:$0xff]
    %v7728 = vld [vmem:[#allocation18 + $0x718] sm:$0xff]
    %v7729 = vld [vmem:[#allocation18 + $0x720] sm:$0xff]
    %v7730 = vld [vmem:[#allocation18 + $0x728] sm:$0xff]
    %v7731 = vld [vmem:[#allocation18 + $0x730] sm:$0xff]
    %v7732 = vld [vmem:[#allocation18 + $0x738] sm:$0xff]
    %v7733 = vld [vmem:[#allocation18 + $0x740] sm:$0xff]
    %v7734 = vld [vmem:[#allocation18 + $0x748] sm:$0xff]
    %v7735 = vld [vmem:[#allocation18 + $0x750] sm:$0xff]
    %v7736 = vld [vmem:[#allocation18 + $0x758] sm:$0xff]
    %v7737 = vld [vmem:[#allocation18 + $0x760] sm:$0xff]
    %v7738 = vld [vmem:[#allocation18 + $0x768] sm:$0xff]
    %v7739 = vld [vmem:[#allocation18 + $0x770] sm:$0xff]
    %v7740 = vld [vmem:[#allocation18 + $0x778] sm:$0xff]
    %v7741 = vld [vmem:[#allocation18 + $0x780] sm:$0xff]
    %v7742 = vld [vmem:[#allocation18 + $0x788] sm:$0xff]
    %v7743 = vld [vmem:[#allocation18 + $0x790] sm:$0xff]
    %v7744 = vld [vmem:[#allocation18 + $0x798] sm:$0xff]
    %v7745 = vld [vmem:[#allocation18 + $0x7a0] sm:$0xff]
    %v7746 = vld [vmem:[#allocation18 + $0x7a8] sm:$0xff]
    %v7747 = vld [vmem:[#allocation18 + $0x7b0] sm:$0xff]
    %v7748 = vld [vmem:[#allocation18 + $0x7b8] sm:$0xff]
    %v7749 = vld [vmem:[#allocation18 + $0x7c0] sm:$0xff]
    %v7750 = vld [vmem:[#allocation18 + $0x7c8] sm:$0xff]
    %v7751 = vld [vmem:[#allocation18 + $0x7d0] sm:$0xff]
    %v7752 = vld [vmem:[#allocation18 + $0x7d8] sm:$0xff]
    %v7753 = vld [vmem:[#allocation18 + $0x7e0] sm:$0xff]
    %v7754 = vld [vmem:[#allocation18 + $0x7e8] sm:$0xff]
    %v7755 = vld [vmem:[#allocation18 + $0x7f0] sm:$0xff]
    %v7756 = vld [vmem:[#allocation18 + $0x7f8] sm:$0xff]
    %v7757 = vld [vmem:[#allocation18 + $0x800] sm:$0xff]
    %v7758 = vld [vmem:[#allocation18 + $0x808] sm:$0xff]
    %v7759 = vld [vmem:[#allocation18 + $0x810] sm:$0xff]
    %v7760 = vld [vmem:[#allocation18 + $0x818] sm:$0xff]
    %v7761 = vld [vmem:[#allocation18 + $0x820] sm:$0xff]
    %v7762 = vld [vmem:[#allocation18 + $0x828] sm:$0xff]
    %v7763 = vld [vmem:[#allocation18 + $0x830] sm:$0xff]
    %v7764 = vld [vmem:[#allocation18 + $0x838] sm:$0xff]
    %v7765 = vld [vmem:[#allocation18 + $0x840] sm:$0xff]
    %v7766 = vld [vmem:[#allocation18 + $0x848] sm:$0xff]
    %v7767 = vld [vmem:[#allocation18 + $0x850] sm:$0xff]
    %v7768 = vld [vmem:[#allocation18 + $0x858] sm:$0xff]
    %v7769 = vld [vmem:[#allocation18 + $0x860] sm:$0xff]
    %v7770 = vld [vmem:[#allocation18 + $0x868] sm:$0xff]
    %v7771 = vld [vmem:[#allocation18 + $0x870] sm:$0xff]
    %v7772 = vld [vmem:[#allocation18 + $0x878] sm:$0xff]
    %v7773 = vld [vmem:[#allocation18 + $0x880] sm:$0xff]
    %v7774 = vld [vmem:[#allocation18 + $0x888] sm:$0xff]
    %v7775 = vld [vmem:[#allocation18 + $0x890] sm:$0xff]
    %v7776 = vld [vmem:[#allocation18 + $0x898] sm:$0xff]
    %v7777 = vld [vmem:[#allocation18 + $0x8a0] sm:$0xff]
    %v7778 = vld [vmem:[#allocation18 + $0x8a8] sm:$0xff]
    %v7779 = vld [vmem:[#allocation18 + $0x8b0] sm:$0xff]
    %v7780 = vld [vmem:[#allocation18 + $0x8b8] sm:$0xff]
    %v7781 = vld [vmem:[#allocation18 + $0x8c0] sm:$0xff]
    %v7782 = vld [vmem:[#allocation18 + $0x8c8] sm:$0xff]
    %v7783 = vld [vmem:[#allocation18 + $0x8d0] sm:$0xff]
    %v7784 = vld [vmem:[#allocation18 + $0x8d8] sm:$0xff]
    %v7785 = vld [vmem:[#allocation18 + $0x8e0] sm:$0xff]
    %v7786 = vld [vmem:[#allocation18 + $0x8e8] sm:$0xff]
    %v7787 = vld [vmem:[#allocation18 + $0x8f0] sm:$0xff]
    %v7788 = vld [vmem:[#allocation18 + $0x8f8] sm:$0xff]
    %v7789 = vld [vmem:[#allocation18 + $0x900] sm:$0xff]
    %v7790 = vld [vmem:[#allocation18 + $0x908] sm:$0xff]
    %v7791 = vld [vmem:[#allocation18 + $0x910] sm:$0xff]
    %v7792 = vld [vmem:[#allocation18 + $0x918] sm:$0xff]
    %v7793 = vld [vmem:[#allocation18 + $0x920] sm:$0xff]
    %v7794 = vld [vmem:[#allocation18 + $0x928] sm:$0xff]
    %v7795 = vld [vmem:[#allocation18 + $0x930] sm:$0xff]
    %v7796 = vld [vmem:[#allocation18 + $0x938] sm:$0xff]
    %v7797 = vld [vmem:[#allocation18 + $0x940] sm:$0xff]
    %v7798 = vld [vmem:[#allocation18 + $0x948] sm:$0xff]
    %v7799 = vld [vmem:[#allocation18 + $0x950] sm:$0xff]
    %v7800 = vld [vmem:[#allocation18 + $0x958] sm:$0xff]
    %v7801 = vld [vmem:[#allocation18 + $0x960] sm:$0xff]
    %v7802 = vld [vmem:[#allocation18 + $0x968] sm:$0xff]
    %v7803 = vld [vmem:[#allocation18 + $0x970] sm:$0xff]
    %v7804 = vld [vmem:[#allocation18 + $0x978] sm:$0xff]
    %v7805 = vld [vmem:[#allocation18 + $0x980] sm:$0xff]
    %v7806 = vld [vmem:[#allocation18 + $0x988] sm:$0xff]
    %v7807 = vld [vmem:[#allocation18 + $0x990] sm:$0xff]
    %v7808 = vld [vmem:[#allocation18 + $0x998] sm:$0xff]
    %v7809 = vld [vmem:[#allocation18 + $0x9a0] sm:$0xff]
    %v7810 = vld [vmem:[#allocation18 + $0x9a8] sm:$0xff]
    %v7811 = vld [vmem:[#allocation18 + $0x9b0] sm:$0xff]
    %v7812 = vld [vmem:[#allocation18 + $0x9b8] sm:$0xff]
    %v7813 = vld [vmem:[#allocation18 + $0x9c0] sm:$0xff]
    %v7814 = vld [vmem:[#allocation18 + $0x9c8] sm:$0xff]
    %v7815 = vld [vmem:[#allocation18 + $0x9d0] sm:$0xff]
    %v7816 = vld [vmem:[#allocation18 + $0x9d8] sm:$0xff]
    %v7817 = vld [vmem:[#allocation18 + $0x9e0] sm:$0xff]
    %v7818 = vld [vmem:[#allocation18 + $0x9e8] sm:$0xff]
    %v7819 = vld [vmem:[#allocation18 + $0x9f0] sm:$0xff]
    %v7820 = vld [vmem:[#allocation18 + $0x9f8] sm:$0xff]
    %v7821 = vld [vmem:[#allocation18 + $0xa00] sm:$0xff]
    %v7822 = vld [vmem:[#allocation18 + $0xa08] sm:$0xff]
    %v7823 = vld [vmem:[#allocation18 + $0xa10] sm:$0xff]
    %v7824 = vld [vmem:[#allocation18 + $0xa18] sm:$0xff]
    %v7825 = vld [vmem:[#allocation18 + $0xa20] sm:$0xff]
    %v7826 = vld [vmem:[#allocation18 + $0xa28] sm:$0xff]
    %v7827 = vld [vmem:[#allocation18 + $0xa30] sm:$0xff]
    %v7828 = vld [vmem:[#allocation18 + $0xa38] sm:$0xff]
    %v7829 = vld [vmem:[#allocation18 + $0xa40] sm:$0xff]
    %v7830 = vld [vmem:[#allocation18 + $0xa48] sm:$0xff]
    %v7831 = vld [vmem:[#allocation18 + $0xa50] sm:$0xff]
    %v7832 = vld [vmem:[#allocation18 + $0xa58] sm:$0xff]
    %v7833 = vld [vmem:[#allocation18 + $0xa60] sm:$0xff]
    %v7834 = vld [vmem:[#allocation18 + $0xa68] sm:$0xff]
    %v7835 = vld [vmem:[#allocation18 + $0xa70] sm:$0xff]
    %v7836 = vld [vmem:[#allocation18 + $0xa78] sm:$0xff]
    %v7837 = vld [vmem:[#allocation18 + $0xa80] sm:$0xff]
    %v7838 = vld [vmem:[#allocation18 + $0xa88] sm:$0xff]
    %v7839 = vld [vmem:[#allocation18 + $0xa90] sm:$0xff]
    %v7840 = vld [vmem:[#allocation18 + $0xa98] sm:$0xff]
    %v7841 = vld [vmem:[#allocation18 + $0xaa0] sm:$0xff]
    %v7842 = vld [vmem:[#allocation18 + $0xaa8] sm:$0xff]
    %v7843 = vld [vmem:[#allocation18 + $0xab0] sm:$0xff]
    %v7844 = vld [vmem:[#allocation18 + $0xab8] sm:$0xff]
    %v7845 = vld [vmem:[#allocation18 + $0xac0] sm:$0xff]
    %v7846 = vld [vmem:[#allocation18 + $0xac8] sm:$0xff]
    %v7847 = vld [vmem:[#allocation18 + $0xad0] sm:$0xff]
    %v7848 = vld [vmem:[#allocation18 + $0xad8] sm:$0xff]
    %v7849 = vld [vmem:[#allocation18 + $0xae0] sm:$0xff]
    %v7850 = vld [vmem:[#allocation18 + $0xae8] sm:$0xff]
    %v7851 = vld [vmem:[#allocation18 + $0xaf0] sm:$0xff]
    %v7852 = vld [vmem:[#allocation18 + $0xaf8] sm:$0xff]
    %v7853 = vld [vmem:[#allocation18 + $0xb00] sm:$0xff]
    %v7854 = vld [vmem:[#allocation18 + $0xb08] sm:$0xff]
    %v7855 = vld [vmem:[#allocation18 + $0xb10] sm:$0xff]
    %v7856 = vld [vmem:[#allocation18 + $0xb18] sm:$0xff]
    %v7857 = vld [vmem:[#allocation18 + $0xb20] sm:$0xff]
    %v7858 = vld [vmem:[#allocation18 + $0xb28] sm:$0xff]
    %v7859 = vld [vmem:[#allocation18 + $0xb30] sm:$0xff]
    %v7860 = vld [vmem:[#allocation18 + $0xb38] sm:$0xff]
    %v7861 = vld [vmem:[#allocation18 + $0xb40] sm:$0xff]
    %v7862 = vld [vmem:[#allocation18 + $0xb48] sm:$0xff]
    %v7863 = vld [vmem:[#allocation18 + $0xb50] sm:$0xff]
    %v7864 = vld [vmem:[#allocation18 + $0xb58] sm:$0xff]
    %v7865 = vld [vmem:[#allocation18 + $0xb60] sm:$0xff]
    %v7866 = vld [vmem:[#allocation18 + $0xb68] sm:$0xff]
    %v7867 = vld [vmem:[#allocation18 + $0xb70] sm:$0xff]
    %v7868 = vld [vmem:[#allocation18 + $0xb78] sm:$0xff]
    %v7869 = vld [vmem:[#allocation18 + $0xb80] sm:$0xff]
    %v7870 = vld [vmem:[#allocation18 + $0xb88] sm:$0xff]
    %v7871 = vld [vmem:[#allocation18 + $0xb90] sm:$0xff]
    %v7872 = vld [vmem:[#allocation18 + $0xb98] sm:$0xff]
    %v7873 = vld [vmem:[#allocation18 + $0xba0] sm:$0xff]
    %v7874 = vld [vmem:[#allocation18 + $0xba8] sm:$0xff]
    %v7875 = vld [vmem:[#allocation18 + $0xbb0] sm:$0xff]
    %v7876 = vld [vmem:[#allocation18 + $0xbb8] sm:$0xff]
    %v7877 = vld [vmem:[#allocation18 + $0xbc0] sm:$0xff]
    %v7878 = vld [vmem:[#allocation18 + $0xbc8] sm:$0xff]
    %v7879 = vld [vmem:[#allocation18 + $0xbd0] sm:$0xff]
    %v7880 = vld [vmem:[#allocation18 + $0xbd8] sm:$0xff]
    %v7881 = vld [vmem:[#allocation18 + $0xbe0] sm:$0xff]
    %v7882 = vld [vmem:[#allocation18 + $0xbe8] sm:$0xff]
    %v7883 = vld [vmem:[#allocation18 + $0xbf0] sm:$0xff]
    %v7884 = vld [vmem:[#allocation18 + $0xbf8] sm:$0xff]
    %v7885 = vld [vmem:[#allocation18 + $0xc00] sm:$0xff]
    %v7886 = vld [vmem:[#allocation18 + $0xc08] sm:$0xff]
    %v7887 = vld [vmem:[#allocation18 + $0xc10] sm:$0xff]
    %v7888 = vld [vmem:[#allocation18 + $0xc18] sm:$0xff]
    %v7889 = vld [vmem:[#allocation18 + $0xc20] sm:$0xff]
    %v7890 = vld [vmem:[#allocation18 + $0xc28] sm:$0xff]
    %v7891 = vld [vmem:[#allocation18 + $0xc30] sm:$0xff]
    %v7892 = vld [vmem:[#allocation18 + $0xc38] sm:$0xff]
    %v7893 = vld [vmem:[#allocation18 + $0xc40] sm:$0xff]
    %v7894 = vld [vmem:[#allocation18 + $0xc48] sm:$0xff]
    %v7895 = vld [vmem:[#allocation18 + $0xc50] sm:$0xff]
    %v7896 = vld [vmem:[#allocation18 + $0xc58] sm:$0xff]
    %v7897 = vld [vmem:[#allocation18 + $0xc60] sm:$0xff]
    %v7898 = vld [vmem:[#allocation18 + $0xc68] sm:$0xff]
    %v7899 = vld [vmem:[#allocation18 + $0xc70] sm:$0xff]
    %v7900 = vld [vmem:[#allocation18 + $0xc78] sm:$0xff]
    %v7901 = vld [vmem:[#allocation18 + $0xc80] sm:$0xff]
    %v7902 = vld [vmem:[#allocation18 + $0xc88] sm:$0xff]
    %v7903 = vld [vmem:[#allocation18 + $0xc90] sm:$0xff]
    %v7904 = vld [vmem:[#allocation18 + $0xc98] sm:$0xff]
    %v7905 = vld [vmem:[#allocation18 + $0xca0] sm:$0xff]
    %v7906 = vld [vmem:[#allocation18 + $0xca8] sm:$0xff]
    %v7907 = vld [vmem:[#allocation18 + $0xcb0] sm:$0xff]
    %v7908 = vld [vmem:[#allocation18 + $0xcb8] sm:$0xff]
    %v7909 = vld [vmem:[#allocation18 + $0xcc0] sm:$0xff]
    %v7910 = vld [vmem:[#allocation18 + $0xcc8] sm:$0xff]
    %v7911 = vld [vmem:[#allocation18 + $0xcd0] sm:$0xff]
    %v7912 = vld [vmem:[#allocation18 + $0xcd8] sm:$0xff]
    %v7913 = vld [vmem:[#allocation18 + $0xce0] sm:$0xff]
    %v7914 = vld [vmem:[#allocation18 + $0xce8] sm:$0xff]
    %v7915 = vld [vmem:[#allocation18 + $0xcf0] sm:$0xff]
    %v7916 = vld [vmem:[#allocation18 + $0xcf8] sm:$0xff]
    %v7917 = vld [vmem:[#allocation18 + $0xd00] sm:$0xff]
    %v7918 = vld [vmem:[#allocation18 + $0xd08] sm:$0xff]
    %v7919 = vld [vmem:[#allocation18 + $0xd10] sm:$0xff]
    %v7920 = vld [vmem:[#allocation18 + $0xd18] sm:$0xff]
    %v7921 = vld [vmem:[#allocation18 + $0xd20] sm:$0xff]
    %v7922 = vld [vmem:[#allocation18 + $0xd28] sm:$0xff]
    %v7923 = vld [vmem:[#allocation18 + $0xd30] sm:$0xff]
    %v7924 = vld [vmem:[#allocation18 + $0xd38] sm:$0xff]
    %v7925 = vld [vmem:[#allocation18 + $0xd40] sm:$0xff]
    %v7926 = vld [vmem:[#allocation18 + $0xd48] sm:$0xff]
    %v7927 = vld [vmem:[#allocation18 + $0xd50] sm:$0xff]
    %v7928 = vld [vmem:[#allocation18 + $0xd58] sm:$0xff]
    %v7929 = vld [vmem:[#allocation18 + $0xd60] sm:$0xff]
    %v7930 = vld [vmem:[#allocation18 + $0xd68] sm:$0xff]
    %v7931 = vld [vmem:[#allocation18 + $0xd70] sm:$0xff]
    %v7932 = vld [vmem:[#allocation18 + $0xd78] sm:$0xff]
    %v7933 = vld [vmem:[#allocation18 + $0xd80] sm:$0xff]
    %v7934 = vld [vmem:[#allocation18 + $0xd88] sm:$0xff]
    %v7935 = vld [vmem:[#allocation18 + $0xd90] sm:$0xff]
    %v7936 = vld [vmem:[#allocation18 + $0xd98] sm:$0xff]
    %v7937 = vld [vmem:[#allocation18 + $0xda0] sm:$0xff]
    %v7938 = vld [vmem:[#allocation18 + $0xda8] sm:$0xff]
    %v7939 = vld [vmem:[#allocation18 + $0xdb0] sm:$0xff]
    %v7940 = vld [vmem:[#allocation18 + $0xdb8] sm:$0xff]
    %v7941 = vld [vmem:[#allocation18 + $0xdc0] sm:$0xff]
    %v7942 = vld [vmem:[#allocation18 + $0xdc8] sm:$0xff]
    %v7943 = vld [vmem:[#allocation18 + $0xdd0] sm:$0xff]
    %v7944 = vld [vmem:[#allocation18 + $0xdd8] sm:$0xff]
    %v7945 = vld [vmem:[#allocation18 + $0xde0] sm:$0xff]
    %v7946 = vld [vmem:[#allocation18 + $0xde8] sm:$0xff]
    %v7947 = vld [vmem:[#allocation18 + $0xdf0] sm:$0xff]
    %v7948 = vld [vmem:[#allocation18 + $0xdf8] sm:$0xff]
    %v7949 = vld [vmem:[#allocation18 + $0xe00] sm:$0xff]
    %v7950 = vld [vmem:[#allocation18 + $0xe08] sm:$0xff]
    %v7951 = vld [vmem:[#allocation18 + $0xe10] sm:$0xff]
    %v7952 = vld [vmem:[#allocation18 + $0xe18] sm:$0xff]
    %v7953 = vld [vmem:[#allocation18 + $0xe20] sm:$0xff]
    %v7954 = vld [vmem:[#allocation18 + $0xe28] sm:$0xff]
    %v7955 = vld [vmem:[#allocation18 + $0xe30] sm:$0xff]
    %v7956 = vld [vmem:[#allocation18 + $0xe38] sm:$0xff]
    %v7957 = vld [vmem:[#allocation18 + $0xe40] sm:$0xff]
    %v7958 = vld [vmem:[#allocation18 + $0xe48] sm:$0xff]
    %v7959 = vld [vmem:[#allocation18 + $0xe50] sm:$0xff]
    %v7960 = vld [vmem:[#allocation18 + $0xe58] sm:$0xff]
    %v7961 = vld [vmem:[#allocation18 + $0xe60] sm:$0xff]
    %v7962 = vld [vmem:[#allocation18 + $0xe68] sm:$0xff]
    %v7963 = vld [vmem:[#allocation18 + $0xe70] sm:$0xff]
    %v7964 = vld [vmem:[#allocation18 + $0xe78] sm:$0xff]
    %v7965 = vld [vmem:[#allocation18 + $0xe80] sm:$0xff]
    %v7966 = vld [vmem:[#allocation18 + $0xe88] sm:$0xff]
    %v7967 = vld [vmem:[#allocation18 + $0xe90] sm:$0xff]
    %v7968 = vld [vmem:[#allocation18 + $0xe98] sm:$0xff]
    %v7969 = vld [vmem:[#allocation18 + $0xea0] sm:$0xff]
    %v7970 = vld [vmem:[#allocation18 + $0xea8] sm:$0xff]
    %v7971 = vld [vmem:[#allocation18 + $0xeb0] sm:$0xff]
    %v7972 = vld [vmem:[#allocation18 + $0xeb8] sm:$0xff]
    %v7973 = vld [vmem:[#allocation18 + $0xec0] sm:$0xff]
    %v7974 = vld [vmem:[#allocation18 + $0xec8] sm:$0xff]
    %v7975 = vld [vmem:[#allocation18 + $0xed0] sm:$0xff]
    %v7976 = vld [vmem:[#allocation18 + $0xed8] sm:$0xff]
    %v7977 = vld [vmem:[#allocation18 + $0xee0] sm:$0xff]
    %v7978 = vld [vmem:[#allocation18 + $0xee8] sm:$0xff]
    %v7979 = vld [vmem:[#allocation18 + $0xef0] sm:$0xff]
    %v7980 = vld [vmem:[#allocation18 + $0xef8] sm:$0xff]
    %v7981 = vld [vmem:[#allocation18 + $0xf00] sm:$0xff]
    %v7982 = vld [vmem:[#allocation18 + $0xf08] sm:$0xff]
    %v7983 = vld [vmem:[#allocation18 + $0xf10] sm:$0xff]
    %v7984 = vld [vmem:[#allocation18 + $0xf18] sm:$0xff]
    %v7985 = vld [vmem:[#allocation18 + $0xf20] sm:$0xff]
    %v7986 = vld [vmem:[#allocation18 + $0xf28] sm:$0xff]
    %v7987 = vld [vmem:[#allocation18 + $0xf30] sm:$0xff]
    %v7988 = vld [vmem:[#allocation18 + $0xf38] sm:$0xff]
    %v7989 = vld [vmem:[#allocation18 + $0xf40] sm:$0xff]
    %v7990 = vld [vmem:[#allocation18 + $0xf48] sm:$0xff]
    %v7991 = vld [vmem:[#allocation18 + $0xf50] sm:$0xff]
    %v7992 = vld [vmem:[#allocation18 + $0xf58] sm:$0xff]
    %v7993 = vld [vmem:[#allocation18 + $0xf60] sm:$0xff]
    %v7994 = vld [vmem:[#allocation18 + $0xf68] sm:$0xff]
    %v7995 = vld [vmem:[#allocation18 + $0xf70] sm:$0xff]
    %v7996 = vld [vmem:[#allocation18 + $0xf78] sm:$0xff]
    %v7997 = vld [vmem:[#allocation18 + $0xf80] sm:$0xff]
    %v7998 = vld [vmem:[#allocation18 + $0xf88] sm:$0xff]
    %v7999 = vld [vmem:[#allocation18 + $0xf90] sm:$0xff]
    %v8000 = vld [vmem:[#allocation18 + $0xf98] sm:$0xff]
    %v8001 = vld [vmem:[#allocation18 + $0xfa0] sm:$0xff]
    %v8002 = vld [vmem:[#allocation18 + $0xfa8] sm:$0xff]
    %v8003 = vld [vmem:[#allocation18 + $0xfb0] sm:$0xff]
    %v8004 = vld [vmem:[#allocation18 + $0xfb8] sm:$0xff]
    %v8005 = vld [vmem:[#allocation18 + $0xfc0] sm:$0xff]
    %v8006 = vld [vmem:[#allocation18 + $0xfc8] sm:$0xff]
    %v8007 = vld [vmem:[#allocation18 + $0xfd0] sm:$0xff]
    %v8008 = vld [vmem:[#allocation18 + $0xfd8] sm:$0xff]
    %v8009 = vld [vmem:[#allocation18 + $0xfe0] sm:$0xff]
    %v8010 = vld [vmem:[#allocation18 + $0xfe8] sm:$0xff]
    %v8011 = vld [vmem:[#allocation18 + $0xff0] sm:$0xff]
    %v8012 = vld [vmem:[#allocation18 + $0xff8] sm:$0xff]
    %v8013 = vld [vmem:[#allocation18 + $0x1000] sm:$0xff]
    %v8014 = vld [vmem:[#allocation18 + $0x1008] sm:$0xff]
    %v8015 = vld [vmem:[#allocation18 + $0x1010] sm:$0xff]
    %v8016 = vld [vmem:[#allocation18 + $0x1018] sm:$0xff]
    %v8017 = vld [vmem:[#allocation18 + $0x1020] sm:$0xff]
    %v8018 = vld [vmem:[#allocation18 + $0x1028] sm:$0xff]
    %v8019 = vld [vmem:[#allocation18 + $0x1030] sm:$0xff]
    %v8020 = vld [vmem:[#allocation18 + $0x1038] sm:$0xff]
    %v8021 = vld [vmem:[#allocation18 + $0x1040] sm:$0xff]
    %v8022 = vld [vmem:[#allocation18 + $0x1048] sm:$0xff]
    %v8023 = vld [vmem:[#allocation18 + $0x1050] sm:$0xff]
    %v8024 = vld [vmem:[#allocation18 + $0x1058] sm:$0xff]
    %v8025 = vld [vmem:[#allocation18 + $0x1060] sm:$0xff]
    %v8026 = vld [vmem:[#allocation18 + $0x1068] sm:$0xff]
    %v8027 = vld [vmem:[#allocation18 + $0x1070] sm:$0xff]
    %v8028 = vld [vmem:[#allocation18 + $0x1078] sm:$0xff]
    %v8029 = vld [vmem:[#allocation18 + $0x1080] sm:$0xff]
    %v8030 = vld [vmem:[#allocation18 + $0x1088] sm:$0xff]
    %v8031 = vld [vmem:[#allocation18 + $0x1090] sm:$0xff]
    %v8032 = vld [vmem:[#allocation18 + $0x1098] sm:$0xff]
    %v8033 = vld [vmem:[#allocation18 + $0x10a0] sm:$0xff]
    %v8034 = vld [vmem:[#allocation18 + $0x10a8] sm:$0xff]
    %v8035 = vld [vmem:[#allocation18 + $0x10b0] sm:$0xff]
    %v8036 = vld [vmem:[#allocation18 + $0x10b8] sm:$0xff]
    %v8037 = vld [vmem:[#allocation18 + $0x10c0] sm:$0xff]
    %v8038 = vld [vmem:[#allocation18 + $0x10c8] sm:$0xff]
    %v8039 = vld [vmem:[#allocation18 + $0x10d0] sm:$0xff]
    %v8040 = vld [vmem:[#allocation18 + $0x10d8] sm:$0xff]
    %v8041 = vld [vmem:[#allocation18 + $0x10e0] sm:$0xff]
    %v8042 = vld [vmem:[#allocation18 + $0x10e8] sm:$0xff]
    %v8043 = vld [vmem:[#allocation18 + $0x10f0] sm:$0xff]
    %v8044 = vld [vmem:[#allocation18 + $0x10f8] sm:$0xff]
    %v8045 = vld [vmem:[#allocation18 + $0x1100] sm:$0xff]
    %v8046 = vld [vmem:[#allocation18 + $0x1108] sm:$0xff]
    %v8047 = vld [vmem:[#allocation18 + $0x1110] sm:$0xff]
    %v8048 = vld [vmem:[#allocation18 + $0x1118] sm:$0xff]
    %v8049 = vld [vmem:[#allocation18 + $0x1120] sm:$0xff]
    %v8050 = vld [vmem:[#allocation18 + $0x1128] sm:$0xff]
    %v8051 = vld [vmem:[#allocation18 + $0x1130] sm:$0xff]
    %v8052 = vld [vmem:[#allocation18 + $0x1138] sm:$0xff]
    %v8053 = vld [vmem:[#allocation18 + $0x1140] sm:$0xff]
    %v8054 = vld [vmem:[#allocation18 + $0x1148] sm:$0xff]
    %v8055 = vld [vmem:[#allocation18 + $0x1150] sm:$0xff]
    %v8056 = vld [vmem:[#allocation18 + $0x1158] sm:$0xff]
    %v8057 = vld [vmem:[#allocation18 + $0x1160] sm:$0xff]
    %v8058 = vld [vmem:[#allocation18 + $0x1168] sm:$0xff]
    %v8059 = vld [vmem:[#allocation18 + $0x1170] sm:$0xff]
    %v8060 = vld [vmem:[#allocation18 + $0x1178] sm:$0xff]
    %v8061 = vld [vmem:[#allocation18 + $0x1180] sm:$0xff]
    %v8062 = vld [vmem:[#allocation18 + $0x1188] sm:$0xff]
    %v8063 = vld [vmem:[#allocation18 + $0x1190] sm:$0xff]
    %v8064 = vld [vmem:[#allocation18 + $0x1198] sm:$0xff]
    %v8065 = vld [vmem:[#allocation18 + $0x11a0] sm:$0xff]
    %v8066 = vld [vmem:[#allocation18 + $0x11a8] sm:$0xff]
    %v8067 = vld [vmem:[#allocation18 + $0x11b0] sm:$0xff]
    %v8068 = vld [vmem:[#allocation18 + $0x11b8] sm:$0xff]
    %v8069 = vld [vmem:[#allocation18 + $0x11c0] sm:$0xff]
    %v8070 = vld [vmem:[#allocation18 + $0x11c8] sm:$0xff]
    %v8071 = vld [vmem:[#allocation18 + $0x11d0] sm:$0xff]
    %v8072 = vld [vmem:[#allocation18 + $0x11d8] sm:$0xff]
    %v8073 = vld [vmem:[#allocation18 + $0x11e0] sm:$0xff]
    %v8074 = vld [vmem:[#allocation18 + $0x11e8] sm:$0xff]
    %v8075 = vld [vmem:[#allocation18 + $0x11f0] sm:$0xff]
    %v8076 = vld [vmem:[#allocation18 + $0x11f8] sm:$0xff]
    %v8077 = vld [vmem:[#allocation19] sm:$0xff]
    %v8078 = vld [vmem:[#allocation19 + $0x8] sm:$0xf]
    %v8081 = vperm.slane %v8077, 0
    %v8082 = vperm.slane %v8077, 1
    %v8083 = vperm.slane %v8077, 2
    %v8084 = vperm.slane %v8077, 3
    %v8085 = vperm.slane %v8077, 4
    %v8086 = vperm.slane %v8077, 5
    %v8087 = vperm.slane %v8077, 6
    %v8088 = vperm.slane %v8077, 7
    %v8089 = vperm.slane %v8078, 0
    %v8090 = vperm.slane %v8078, 1
    %v8091 = vperm.slane %v8078, 2
    %v8092 = vperm.slane %v8078, 3
    %v8681 = vunpack.c.l.b16 %v7501
    %v8682 = vunpack.c.h.b16 %v7501
    %v8683 = vunpack.c.l.b16 %v7502
    %v8684 = vunpack.c.h.b16 %v7502
    %v8685 = vunpack.c.l.b16 %v7503
    %v8686 = vunpack.c.h.b16 %v7503
    %v8687 = vunpack.c.l.b16 %v7504
    %v8688 = vunpack.c.h.b16 %v7504
    %v8689 = vunpack.c.l.b16 %v7505
    %v8690 = vunpack.c.h.b16 %v7505
    %v8691 = vunpack.c.l.b16 %v7506
    %v8692 = vunpack.c.h.b16 %v7506
    %v8693 = vunpack.c.l.b16 %v7507
    %v8694 = vunpack.c.h.b16 %v7507
    %v8695 = vunpack.c.l.b16 %v7508
    %v8696 = vunpack.c.h.b16 %v7508
    %v8697 = vunpack.c.l.b16 %v7509
    %v8698 = vunpack.c.h.b16 %v7509
    %v8699 = vunpack.c.l.b16 %v7510
    %v8700 = vunpack.c.h.b16 %v7510
    %v8701 = vunpack.c.l.b16 %v7511
    %v8702 = vunpack.c.h.b16 %v7511
    %v8703 = vunpack.c.l.b16 %v7512
    %v8704 = vunpack.c.h.b16 %v7512
    %v8705 = vunpack.c.l.b16 %v7513
    %v8706 = vunpack.c.h.b16 %v7513
    %v8707 = vunpack.c.l.b16 %v7514
    %v8708 = vunpack.c.h.b16 %v7514
    %v8709 = vunpack.c.l.b16 %v7515
    %v8710 = vunpack.c.h.b16 %v7515
    %v8711 = vunpack.c.l.b16 %v7516
    %v8712 = vunpack.c.h.b16 %v7516
    %v8713 = vunpack.c.l.b16 %v7517
    %v8714 = vunpack.c.h.b16 %v7517
    %v8715 = vunpack.c.l.b16 %v7518
    %v8716 = vunpack.c.h.b16 %v7518
    %v8717 = vunpack.c.l.b16 %v7519
    %v8718 = vunpack.c.h.b16 %v7519
    %v8719 = vunpack.c.l.b16 %v7520
    %v8720 = vunpack.c.h.b16 %v7520
    %v8721 = vunpack.c.l.b16 %v7521
    %v8722 = vunpack.c.h.b16 %v7521
    %v8723 = vunpack.c.l.b16 %v7522
    %v8724 = vunpack.c.h.b16 %v7522
    %v8725 = vunpack.c.l.b16 %v7523
    %v8726 = vunpack.c.h.b16 %v7523
    %v8727 = vunpack.c.l.b16 %v7524
    %v8728 = vunpack.c.h.b16 %v7524
    %v8729 = vunpack.c.l.b16 %v7525
    %v8730 = vunpack.c.h.b16 %v7525
    %v8731 = vunpack.c.l.b16 %v7526
    %v8732 = vunpack.c.h.b16 %v7526
    %v8733 = vunpack.c.l.b16 %v7527
    %v8734 = vunpack.c.h.b16 %v7527
    %v8735 = vunpack.c.l.b16 %v7528
    %v8736 = vunpack.c.h.b16 %v7528
    %v8737 = vunpack.c.l.b16 %v7529
    %v8738 = vunpack.c.h.b16 %v7529
    %v8739 = vunpack.c.l.b16 %v7530
    %v8740 = vunpack.c.h.b16 %v7530
    %v8741 = vunpack.c.l.b16 %v7531
    %v8742 = vunpack.c.h.b16 %v7531
    %v8743 = vunpack.c.l.b16 %v7532
    %v8744 = vunpack.c.h.b16 %v7532
    %v8745 = vunpack.c.l.b16 %v7533
    %v8746 = vunpack.c.h.b16 %v7533
    %v8747 = vunpack.c.l.b16 %v7534
    %v8748 = vunpack.c.h.b16 %v7534
    %v8749 = vunpack.c.l.b16 %v7535
    %v8750 = vunpack.c.h.b16 %v7535
    %v8751 = vunpack.c.l.b16 %v7536
    %v8752 = vunpack.c.h.b16 %v7536
    %v8753 = vunpack.c.l.b16 %v7537
    %v8754 = vunpack.c.h.b16 %v7537
    %v8755 = vunpack.c.l.b16 %v7538
    %v8756 = vunpack.c.h.b16 %v7538
    %v8757 = vunpack.c.l.b16 %v7539
    %v8758 = vunpack.c.h.b16 %v7539
    %v8759 = vunpack.c.l.b16 %v7540
    %v8760 = vunpack.c.h.b16 %v7540
    %v8761 = vunpack.c.l.b16 %v7541
    %v8762 = vunpack.c.h.b16 %v7541
    %v8763 = vunpack.c.l.b16 %v7542
    %v8764 = vunpack.c.h.b16 %v7542
    %v8765 = vunpack.c.l.b16 %v7543
    %v8766 = vunpack.c.h.b16 %v7543
    %v8767 = vunpack.c.l.b16 %v7544
    %v8768 = vunpack.c.h.b16 %v7544
    %v8769 = vunpack.c.l.b16 %v7545
    %v8770 = vunpack.c.h.b16 %v7545
    %v8771 = vunpack.c.l.b16 %v7546
    %v8772 = vunpack.c.h.b16 %v7546
    %v8773 = vunpack.c.l.b16 %v7547
    %v8774 = vunpack.c.h.b16 %v7547
    %v8775 = vunpack.c.l.b16 %v7548
    %v8776 = vunpack.c.h.b16 %v7548
    %v8777 = vunpack.c.l.b16 %v7549
    %v8778 = vunpack.c.h.b16 %v7549
    %v8779 = vunpack.c.l.b16 %v7550
    %v8780 = vunpack.c.h.b16 %v7550
    %v8781 = vunpack.c.l.b16 %v7551
    %v8782 = vunpack.c.h.b16 %v7551
    %v8783 = vunpack.c.l.b16 %v7552
    %v8784 = vunpack.c.h.b16 %v7552
    %v8785 = vunpack.c.l.b16 %v7553
    %v8786 = vunpack.c.h.b16 %v7553
    %v8787 = vunpack.c.l.b16 %v7554
    %v8788 = vunpack.c.h.b16 %v7554
    %v8789 = vunpack.c.l.b16 %v7555
    %v8790 = vunpack.c.h.b16 %v7555
    %v8791 = vunpack.c.l.b16 %v7556
    %v8792 = vunpack.c.h.b16 %v7556
    %v8793 = vunpack.c.l.b16 %v7557
    %v8794 = vunpack.c.h.b16 %v7557
    %v8795 = vunpack.c.l.b16 %v7558
    %v8796 = vunpack.c.h.b16 %v7558
    %v8797 = vunpack.c.l.b16 %v7559
    %v8798 = vunpack.c.h.b16 %v7559
    %v8799 = vunpack.c.l.b16 %v7560
    %v8800 = vunpack.c.h.b16 %v7560
    %v8801 = vunpack.c.l.b16 %v7561
    %v8802 = vunpack.c.h.b16 %v7561
    %v8803 = vunpack.c.l.b16 %v7562
    %v8804 = vunpack.c.h.b16 %v7562
    %v8805 = vunpack.c.l.b16 %v7563
    %v8806 = vunpack.c.h.b16 %v7563
    %v8807 = vunpack.c.l.b16 %v7564
    %v8808 = vunpack.c.h.b16 %v7564
    %v8809 = vunpack.c.l.b16 %v7565
    %v8810 = vunpack.c.h.b16 %v7565
    %v8811 = vunpack.c.l.b16 %v7566
    %v8812 = vunpack.c.h.b16 %v7566
    %v8813 = vunpack.c.l.b16 %v7567
    %v8814 = vunpack.c.h.b16 %v7567
    %v8815 = vunpack.c.l.b16 %v7568
    %v8816 = vunpack.c.h.b16 %v7568
    %v8817 = vunpack.c.l.b16 %v7569
    %v8818 = vunpack.c.h.b16 %v7569
    %v8819 = vunpack.c.l.b16 %v7570
    %v8820 = vunpack.c.h.b16 %v7570
    %v8821 = vunpack.c.l.b16 %v7571
    %v8822 = vunpack.c.h.b16 %v7571
    %v8823 = vunpack.c.l.b16 %v7572
    %v8824 = vunpack.c.h.b16 %v7572
    %v8825 = vunpack.c.l.b16 %v7573
    %v8826 = vunpack.c.h.b16 %v7573
    %v8827 = vunpack.c.l.b16 %v7574
    %v8828 = vunpack.c.h.b16 %v7574
    %v8829 = vunpack.c.l.b16 %v7575
    %v8830 = vunpack.c.h.b16 %v7575
    %v8831 = vunpack.c.l.b16 %v7576
    %v8832 = vunpack.c.h.b16 %v7576
    %v8833 = vunpack.c.l.b16 %v7577
    %v8834 = vunpack.c.h.b16 %v7577
    %v8835 = vunpack.c.l.b16 %v7578
    %v8836 = vunpack.c.h.b16 %v7578
    %v8837 = vunpack.c.l.b16 %v7579
    %v8838 = vunpack.c.h.b16 %v7579
    %v8839 = vunpack.c.l.b16 %v7580
    %v8840 = vunpack.c.h.b16 %v7580
    %v8841 = vunpack.c.l.b16 %v7581
    %v8842 = vunpack.c.h.b16 %v7581
    %v8843 = vunpack.c.l.b16 %v7582
    %v8844 = vunpack.c.h.b16 %v7582
    %v8845 = vunpack.c.l.b16 %v7583
    %v8846 = vunpack.c.h.b16 %v7583
    %v8847 = vunpack.c.l.b16 %v7584
    %v8848 = vunpack.c.h.b16 %v7584
    %v8849 = vunpack.c.l.b16 %v7585
    %v8850 = vunpack.c.h.b16 %v7585
    %v8851 = vunpack.c.l.b16 %v7586
    %v8852 = vunpack.c.h.b16 %v7586
    %v8853 = vunpack.c.l.b16 %v7587
    %v8854 = vunpack.c.h.b16 %v7587
    %v8855 = vunpack.c.l.b16 %v7588
    %v8856 = vunpack.c.h.b16 %v7588
    %v8857 = vunpack.c.l.b16 %v7589
    %v8858 = vunpack.c.h.b16 %v7589
    %v8859 = vunpack.c.l.b16 %v7590
    %v8860 = vunpack.c.h.b16 %v7590
    %v8861 = vunpack.c.l.b16 %v7591
    %v8862 = vunpack.c.h.b16 %v7591
    %v8863 = vunpack.c.l.b16 %v7592
    %v8864 = vunpack.c.h.b16 %v7592
    %v8865 = vunpack.c.l.b16 %v7593
    %v8866 = vunpack.c.h.b16 %v7593
    %v8867 = vunpack.c.l.b16 %v7594
    %v8868 = vunpack.c.h.b16 %v7594
    %v8869 = vunpack.c.l.b16 %v7595
    %v8870 = vunpack.c.h.b16 %v7595
    %v8871 = vunpack.c.l.b16 %v7596
    %v8872 = vunpack.c.h.b16 %v7596
    %v8873 = vunpack.c.l.b16 %v7597
    %v8874 = vunpack.c.h.b16 %v7597
    %v8875 = vunpack.c.l.b16 %v7598
    %v8876 = vunpack.c.h.b16 %v7598
    %v8877 = vunpack.c.l.b16 %v7599
    %v8878 = vunpack.c.h.b16 %v7599
    %v8879 = vunpack.c.l.b16 %v7600
    %v8880 = vunpack.c.h.b16 %v7600
    %v8881 = vunpack.c.l.b16 %v7601
    %v8882 = vunpack.c.h.b16 %v7601
    %v8883 = vunpack.c.l.b16 %v7602
    %v8884 = vunpack.c.h.b16 %v7602
    %v8885 = vunpack.c.l.b16 %v7603
    %v8886 = vunpack.c.h.b16 %v7603
    %v8887 = vunpack.c.l.b16 %v7604
    %v8888 = vunpack.c.h.b16 %v7604
    %v8889 = vunpack.c.l.b16 %v7605
    %v8890 = vunpack.c.h.b16 %v7605
    %v8891 = vunpack.c.l.b16 %v7606
    %v8892 = vunpack.c.h.b16 %v7606
    %v8893 = vunpack.c.l.b16 %v7607
    %v8894 = vunpack.c.h.b16 %v7607
    %v8895 = vunpack.c.l.b16 %v7608
    %v8896 = vunpack.c.h.b16 %v7608
    %v8897 = vunpack.c.l.b16 %v7609
    %v8898 = vunpack.c.h.b16 %v7609
    %v8899 = vunpack.c.l.b16 %v7610
    %v8900 = vunpack.c.h.b16 %v7610
    %v8901 = vunpack.c.l.b16 %v7611
    %v8902 = vunpack.c.h.b16 %v7611
    %v8903 = vunpack.c.l.b16 %v7612
    %v8904 = vunpack.c.h.b16 %v7612
    %v8905 = vunpack.c.l.b16 %v7613
    %v8906 = vunpack.c.h.b16 %v7613
    %v8907 = vunpack.c.l.b16 %v7614
    %v8908 = vunpack.c.h.b16 %v7614
    %v8909 = vunpack.c.l.b16 %v7615
    %v8910 = vunpack.c.h.b16 %v7615
    %v8911 = vunpack.c.l.b16 %v7616
    %v8912 = vunpack.c.h.b16 %v7616
    %v8913 = vunpack.c.l.b16 %v7617
    %v8914 = vunpack.c.h.b16 %v7617
    %v8915 = vunpack.c.l.b16 %v7618
    %v8916 = vunpack.c.h.b16 %v7618
    %v8917 = vunpack.c.l.b16 %v7619
    %v8918 = vunpack.c.h.b16 %v7619
    %v8919 = vunpack.c.l.b16 %v7620
    %v8920 = vunpack.c.h.b16 %v7620
    %v8921 = vunpack.c.l.b16 %v7621
    %v8922 = vunpack.c.h.b16 %v7621
    %v8923 = vunpack.c.l.b16 %v7622
    %v8924 = vunpack.c.h.b16 %v7622
    %v8925 = vunpack.c.l.b16 %v7623
    %v8926 = vunpack.c.h.b16 %v7623
    %v8927 = vunpack.c.l.b16 %v7624
    %v8928 = vunpack.c.h.b16 %v7624
    %v8929 = vunpack.c.l.b16 %v7625
    %v8930 = vunpack.c.h.b16 %v7625
    %v8931 = vunpack.c.l.b16 %v7626
    %v8932 = vunpack.c.h.b16 %v7626
    %v8933 = vunpack.c.l.b16 %v7627
    %v8934 = vunpack.c.h.b16 %v7627
    %v8935 = vunpack.c.l.b16 %v7628
    %v8936 = vunpack.c.h.b16 %v7628
    %v8937 = vunpack.c.l.b16 %v7629
    %v8938 = vunpack.c.h.b16 %v7629
    %v8939 = vunpack.c.l.b16 %v7630
    %v8940 = vunpack.c.h.b16 %v7630
    %v8941 = vunpack.c.l.b16 %v7631
    %v8942 = vunpack.c.h.b16 %v7631
    %v8943 = vunpack.c.l.b16 %v7632
    %v8944 = vunpack.c.h.b16 %v7632
    %v8945 = vunpack.c.l.b16 %v7633
    %v8946 = vunpack.c.h.b16 %v7633
    %v8947 = vunpack.c.l.b16 %v7634
    %v8948 = vunpack.c.h.b16 %v7634
    %v8949 = vunpack.c.l.b16 %v7635
    %v8950 = vunpack.c.h.b16 %v7635
    %v8951 = vunpack.c.l.b16 %v7636
    %v8952 = vunpack.c.h.b16 %v7636
    %v8953 = vunpack.c.l.b16 %v7637
    %v8954 = vunpack.c.h.b16 %v7637
    %v8955 = vunpack.c.l.b16 %v7638
    %v8956 = vunpack.c.h.b16 %v7638
    %v8957 = vunpack.c.l.b16 %v7639
    %v8958 = vunpack.c.h.b16 %v7639
    %v8959 = vunpack.c.l.b16 %v7640
    %v8960 = vunpack.c.h.b16 %v7640
    %v8961 = vunpack.c.l.b16 %v7641
    %v8962 = vunpack.c.h.b16 %v7641
    %v8963 = vunpack.c.l.b16 %v7642
    %v8964 = vunpack.c.h.b16 %v7642
    %v8965 = vunpack.c.l.b16 %v7643
    %v8966 = vunpack.c.h.b16 %v7643
    %v8967 = vunpack.c.l.b16 %v7644
    %v8968 = vunpack.c.h.b16 %v7644
    %v8969 = vunpack.c.l.b16 %v7645
    %v8970 = vunpack.c.h.b16 %v7645
    %v8971 = vunpack.c.l.b16 %v7646
    %v8972 = vunpack.c.h.b16 %v7646
    %v8973 = vunpack.c.l.b16 %v7647
    %v8974 = vunpack.c.h.b16 %v7647
    %v8975 = vunpack.c.l.b16 %v7648
    %v8976 = vunpack.c.h.b16 %v7648
    %v8977 = vunpack.c.l.b16 %v7649
    %v8978 = vunpack.c.h.b16 %v7649
    %v8979 = vunpack.c.l.b16 %v7650
    %v8980 = vunpack.c.h.b16 %v7650
    %v8981 = vunpack.c.l.b16 %v7651
    %v8982 = vunpack.c.h.b16 %v7651
    %v8983 = vunpack.c.l.b16 %v7652
    %v8984 = vunpack.c.h.b16 %v7652
    %v8985 = vunpack.c.l.b16 %v7653
    %v8986 = vunpack.c.h.b16 %v7653
    %v8987 = vunpack.c.l.b16 %v7654
    %v8988 = vunpack.c.h.b16 %v7654
    %v8989 = vunpack.c.l.b16 %v7655
    %v8990 = vunpack.c.h.b16 %v7655
    %v8991 = vunpack.c.l.b16 %v7656
    %v8992 = vunpack.c.h.b16 %v7656
    %v8993 = vunpack.c.l.b16 %v7657
    %v8994 = vunpack.c.h.b16 %v7657
    %v8995 = vunpack.c.l.b16 %v7658
    %v8996 = vunpack.c.h.b16 %v7658
    %v8997 = vunpack.c.l.b16 %v7659
    %v8998 = vunpack.c.h.b16 %v7659
    %v8999 = vunpack.c.l.b16 %v7660
    %v9000 = vunpack.c.h.b16 %v7660
    %v9001 = vunpack.c.l.b16 %v7661
    %v9002 = vunpack.c.h.b16 %v7661
    %v9003 = vunpack.c.l.b16 %v7662
    %v9004 = vunpack.c.h.b16 %v7662
    %v9005 = vunpack.c.l.b16 %v7663
    %v9006 = vunpack.c.h.b16 %v7663
    %v9007 = vunpack.c.l.b16 %v7664
    %v9008 = vunpack.c.h.b16 %v7664
    %v9009 = vunpack.c.l.b16 %v7665
    %v9010 = vunpack.c.h.b16 %v7665
    %v9011 = vunpack.c.l.b16 %v7666
    %v9012 = vunpack.c.h.b16 %v7666
    %v9013 = vunpack.c.l.b16 %v7667
    %v9014 = vunpack.c.h.b16 %v7667
    %v9015 = vunpack.c.l.b16 %v7668
    %v9016 = vunpack.c.h.b16 %v7668
    %v9017 = vunpack.c.l.b16 %v7669
    %v9018 = vunpack.c.h.b16 %v7669
    %v9019 = vunpack.c.l.b16 %v7670
    %v9020 = vunpack.c.h.b16 %v7670
    %v9021 = vunpack.c.l.b16 %v7671
    %v9022 = vunpack.c.h.b16 %v7671
    %v9023 = vunpack.c.l.b16 %v7672
    %v9024 = vunpack.c.h.b16 %v7672
    %v9025 = vunpack.c.l.b16 %v7673
    %v9026 = vunpack.c.h.b16 %v7673
    %v9027 = vunpack.c.l.b16 %v7674
    %v9028 = vunpack.c.h.b16 %v7674
    %v9029 = vunpack.c.l.b16 %v7675
    %v9030 = vunpack.c.h.b16 %v7675
    %v9031 = vunpack.c.l.b16 %v7676
    %v9032 = vunpack.c.h.b16 %v7676
    %v9033 = vunpack.c.l.b16 %v7677
    %v9034 = vunpack.c.h.b16 %v7677
    %v9035 = vunpack.c.l.b16 %v7678
    %v9036 = vunpack.c.h.b16 %v7678
    %v9037 = vunpack.c.l.b16 %v7679
    %v9038 = vunpack.c.h.b16 %v7679
    %v9039 = vunpack.c.l.b16 %v7680
    %v9040 = vunpack.c.h.b16 %v7680
    %v9041 = vunpack.c.l.b16 %v7681
    %v9042 = vunpack.c.h.b16 %v7681
    %v9043 = vunpack.c.l.b16 %v7682
    %v9044 = vunpack.c.h.b16 %v7682
    %v9045 = vunpack.c.l.b16 %v7683
    %v9046 = vunpack.c.h.b16 %v7683
    %v9047 = vunpack.c.l.b16 %v7684
    %v9048 = vunpack.c.h.b16 %v7684
    %v9049 = vunpack.c.l.b16 %v7685
    %v9050 = vunpack.c.h.b16 %v7685
    %v9051 = vunpack.c.l.b16 %v7686
    %v9052 = vunpack.c.h.b16 %v7686
    %v9053 = vunpack.c.l.b16 %v7687
    %v9054 = vunpack.c.h.b16 %v7687
    %v9055 = vunpack.c.l.b16 %v7688
    %v9056 = vunpack.c.h.b16 %v7688
    %v9057 = vunpack.c.l.b16 %v7689
    %v9058 = vunpack.c.h.b16 %v7689
    %v9059 = vunpack.c.l.b16 %v7690
    %v9060 = vunpack.c.h.b16 %v7690
    %v9061 = vunpack.c.l.b16 %v7691
    %v9062 = vunpack.c.h.b16 %v7691
    %v9063 = vunpack.c.l.b16 %v7692
    %v9064 = vunpack.c.h.b16 %v7692
    %v9065 = vunpack.c.l.b16 %v7693
    %v9066 = vunpack.c.h.b16 %v7693
    %v9067 = vunpack.c.l.b16 %v7694
    %v9068 = vunpack.c.h.b16 %v7694
    %v9069 = vunpack.c.l.b16 %v7695
    %v9070 = vunpack.c.h.b16 %v7695
    %v9071 = vunpack.c.l.b16 %v7696
    %v9072 = vunpack.c.h.b16 %v7696
    %v9073 = vunpack.c.l.b16 %v7697
    %v9074 = vunpack.c.h.b16 %v7697
    %v9075 = vunpack.c.l.b16 %v7698
    %v9076 = vunpack.c.h.b16 %v7698
    %v9077 = vunpack.c.l.b16 %v7699
    %v9078 = vunpack.c.h.b16 %v7699
    %v9079 = vunpack.c.l.b16 %v7700
    %v9080 = vunpack.c.h.b16 %v7700
    %v9081 = vunpack.c.l.b16 %v7701
    %v9082 = vunpack.c.h.b16 %v7701
    %v9083 = vunpack.c.l.b16 %v7702
    %v9084 = vunpack.c.h.b16 %v7702
    %v9085 = vunpack.c.l.b16 %v7703
    %v9086 = vunpack.c.h.b16 %v7703
    %v9087 = vunpack.c.l.b16 %v7704
    %v9088 = vunpack.c.h.b16 %v7704
    %v9089 = vunpack.c.l.b16 %v7705
    %v9090 = vunpack.c.h.b16 %v7705
    %v9091 = vunpack.c.l.b16 %v7706
    %v9092 = vunpack.c.h.b16 %v7706
    %v9093 = vunpack.c.l.b16 %v7707
    %v9094 = vunpack.c.h.b16 %v7707
    %v9095 = vunpack.c.l.b16 %v7708
    %v9096 = vunpack.c.h.b16 %v7708
    %v9097 = vunpack.c.l.b16 %v7709
    %v9098 = vunpack.c.h.b16 %v7709
    %v9099 = vunpack.c.l.b16 %v7710
    %v9100 = vunpack.c.h.b16 %v7710
    %v9101 = vunpack.c.l.b16 %v7711
    %v9102 = vunpack.c.h.b16 %v7711
    %v9103 = vunpack.c.l.b16 %v7712
    %v9104 = vunpack.c.h.b16 %v7712
    %v9105 = vunpack.c.l.b16 %v7713
    %v9106 = vunpack.c.h.b16 %v7713
    %v9107 = vunpack.c.l.b16 %v7714
    %v9108 = vunpack.c.h.b16 %v7714
    %v9109 = vunpack.c.l.b16 %v7715
    %v9110 = vunpack.c.h.b16 %v7715
    %v9111 = vunpack.c.l.b16 %v7716
    %v9112 = vunpack.c.h.b16 %v7716
    %v9113 = vunpack.c.l.b16 %v7717
    %v9114 = vunpack.c.h.b16 %v7717
    %v9115 = vunpack.c.l.b16 %v7718
    %v9116 = vunpack.c.h.b16 %v7718
    %v9117 = vunpack.c.l.b16 %v7719
    %v9118 = vunpack.c.h.b16 %v7719
    %v9119 = vunpack.c.l.b16 %v7720
    %v9120 = vunpack.c.h.b16 %v7720
    %v9121 = vunpack.c.l.b16 %v7721
    %v9122 = vunpack.c.h.b16 %v7721
    %v9123 = vunpack.c.l.b16 %v7722
    %v9124 = vunpack.c.h.b16 %v7722
    %v9125 = vunpack.c.l.b16 %v7723
    %v9126 = vunpack.c.h.b16 %v7723
    %v9127 = vunpack.c.l.b16 %v7724
    %v9128 = vunpack.c.h.b16 %v7724
    %v9129 = vunpack.c.l.b16 %v7725
    %v9130 = vunpack.c.h.b16 %v7725
    %v9131 = vunpack.c.l.b16 %v7726
    %v9132 = vunpack.c.h.b16 %v7726
    %v9133 = vunpack.c.l.b16 %v7727
    %v9134 = vunpack.c.h.b16 %v7727
    %v9135 = vunpack.c.l.b16 %v7728
    %v9136 = vunpack.c.h.b16 %v7728
    %v9137 = vunpack.c.l.b16 %v7729
    %v9138 = vunpack.c.h.b16 %v7729
    %v9139 = vunpack.c.l.b16 %v7730
    %v9140 = vunpack.c.h.b16 %v7730
    %v9141 = vunpack.c.l.b16 %v7731
    %v9142 = vunpack.c.h.b16 %v7731
    %v9143 = vunpack.c.l.b16 %v7732
    %v9144 = vunpack.c.h.b16 %v7732
    %v9145 = vunpack.c.l.b16 %v7733
    %v9146 = vunpack.c.h.b16 %v7733
    %v9147 = vunpack.c.l.b16 %v7734
    %v9148 = vunpack.c.h.b16 %v7734
    %v9149 = vunpack.c.l.b16 %v7735
    %v9150 = vunpack.c.h.b16 %v7735
    %v9151 = vunpack.c.l.b16 %v7736
    %v9152 = vunpack.c.h.b16 %v7736
    %v9153 = vunpack.c.l.b16 %v7737
    %v9154 = vunpack.c.h.b16 %v7737
    %v9155 = vunpack.c.l.b16 %v7738
    %v9156 = vunpack.c.h.b16 %v7738
    %v9157 = vunpack.c.l.b16 %v7739
    %v9158 = vunpack.c.h.b16 %v7739
    %v9159 = vunpack.c.l.b16 %v7740
    %v9160 = vunpack.c.h.b16 %v7740
    %v9161 = vunpack.c.l.b16 %v7741
    %v9162 = vunpack.c.h.b16 %v7741
    %v9163 = vunpack.c.l.b16 %v7742
    %v9164 = vunpack.c.h.b16 %v7742
    %v9165 = vunpack.c.l.b16 %v7743
    %v9166 = vunpack.c.h.b16 %v7743
    %v9167 = vunpack.c.l.b16 %v7744
    %v9168 = vunpack.c.h.b16 %v7744
    %v9169 = vunpack.c.l.b16 %v7745
    %v9170 = vunpack.c.h.b16 %v7745
    %v9171 = vunpack.c.l.b16 %v7746
    %v9172 = vunpack.c.h.b16 %v7746
    %v9173 = vunpack.c.l.b16 %v7747
    %v9174 = vunpack.c.h.b16 %v7747
    %v9175 = vunpack.c.l.b16 %v7748
    %v9176 = vunpack.c.h.b16 %v7748
    %v9177 = vunpack.c.l.b16 %v7749
    %v9178 = vunpack.c.h.b16 %v7749
    %v9179 = vunpack.c.l.b16 %v7750
    %v9180 = vunpack.c.h.b16 %v7750
    %v9181 = vunpack.c.l.b16 %v7751
    %v9182 = vunpack.c.h.b16 %v7751
    %v9183 = vunpack.c.l.b16 %v7752
    %v9184 = vunpack.c.h.b16 %v7752
    %v9185 = vunpack.c.l.b16 %v7753
    %v9186 = vunpack.c.h.b16 %v7753
    %v9187 = vunpack.c.l.b16 %v7754
    %v9188 = vunpack.c.h.b16 %v7754
    %v9189 = vunpack.c.l.b16 %v7755
    %v9190 = vunpack.c.h.b16 %v7755
    %v9191 = vunpack.c.l.b16 %v7756
    %v9192 = vunpack.c.h.b16 %v7756
    %v9193 = vunpack.c.l.b16 %v7757
    %v9194 = vunpack.c.h.b16 %v7757
    %v9195 = vunpack.c.l.b16 %v7758
    %v9196 = vunpack.c.h.b16 %v7758
    %v9197 = vunpack.c.l.b16 %v7759
    %v9198 = vunpack.c.h.b16 %v7759
    %v9199 = vunpack.c.l.b16 %v7760
    %v9200 = vunpack.c.h.b16 %v7760
    %v9201 = vunpack.c.l.b16 %v7761
    %v9202 = vunpack.c.h.b16 %v7761
    %v9203 = vunpack.c.l.b16 %v7762
    %v9204 = vunpack.c.h.b16 %v7762
    %v9205 = vunpack.c.l.b16 %v7763
    %v9206 = vunpack.c.h.b16 %v7763
    %v9207 = vunpack.c.l.b16 %v7764
    %v9208 = vunpack.c.h.b16 %v7764
    %v9209 = vunpack.c.l.b16 %v7765
    %v9210 = vunpack.c.h.b16 %v7765
    %v9211 = vunpack.c.l.b16 %v7766
    %v9212 = vunpack.c.h.b16 %v7766
    %v9213 = vunpack.c.l.b16 %v7767
    %v9214 = vunpack.c.h.b16 %v7767
    %v9215 = vunpack.c.l.b16 %v7768
    %v9216 = vunpack.c.h.b16 %v7768
    %v9217 = vunpack.c.l.b16 %v7769
    %v9218 = vunpack.c.h.b16 %v7769
    %v9219 = vunpack.c.l.b16 %v7770
    %v9220 = vunpack.c.h.b16 %v7770
    %v9221 = vunpack.c.l.b16 %v7771
    %v9222 = vunpack.c.h.b16 %v7771
    %v9223 = vunpack.c.l.b16 %v7772
    %v9224 = vunpack.c.h.b16 %v7772
    %v9225 = vunpack.c.l.b16 %v7773
    %v9226 = vunpack.c.h.b16 %v7773
    %v9227 = vunpack.c.l.b16 %v7774
    %v9228 = vunpack.c.h.b16 %v7774
    %v9229 = vunpack.c.l.b16 %v7775
    %v9230 = vunpack.c.h.b16 %v7775
    %v9231 = vunpack.c.l.b16 %v7776
    %v9232 = vunpack.c.h.b16 %v7776
    %v9233 = vunpack.c.l.b16 %v7777
    %v9234 = vunpack.c.h.b16 %v7777
    %v9235 = vunpack.c.l.b16 %v7778
    %v9236 = vunpack.c.h.b16 %v7778
    %v9237 = vunpack.c.l.b16 %v7779
    %v9238 = vunpack.c.h.b16 %v7779
    %v9239 = vunpack.c.l.b16 %v7780
    %v9240 = vunpack.c.h.b16 %v7780
    %v9241 = vunpack.c.l.b16 %v7781
    %v9242 = vunpack.c.h.b16 %v7781
    %v9243 = vunpack.c.l.b16 %v7782
    %v9244 = vunpack.c.h.b16 %v7782
    %v9245 = vunpack.c.l.b16 %v7783
    %v9246 = vunpack.c.h.b16 %v7783
    %v9247 = vunpack.c.l.b16 %v7784
    %v9248 = vunpack.c.h.b16 %v7784
    %v9249 = vunpack.c.l.b16 %v7785
    %v9250 = vunpack.c.h.b16 %v7785
    %v9251 = vunpack.c.l.b16 %v7786
    %v9252 = vunpack.c.h.b16 %v7786
    %v9253 = vunpack.c.l.b16 %v7787
    %v9254 = vunpack.c.h.b16 %v7787
    %v9255 = vunpack.c.l.b16 %v7788
    %v9256 = vunpack.c.h.b16 %v7788
    %v9257 = vunpack.c.l.b16 %v7789
    %v9258 = vunpack.c.h.b16 %v7789
    %v9259 = vunpack.c.l.b16 %v7790
    %v9260 = vunpack.c.h.b16 %v7790
    %v9261 = vunpack.c.l.b16 %v7791
    %v9262 = vunpack.c.h.b16 %v7791
    %v9263 = vunpack.c.l.b16 %v7792
    %v9264 = vunpack.c.h.b16 %v7792
    %v9265 = vunpack.c.l.b16 %v7793
    %v9266 = vunpack.c.h.b16 %v7793
    %v9267 = vunpack.c.l.b16 %v7794
    %v9268 = vunpack.c.h.b16 %v7794
    %v9269 = vunpack.c.l.b16 %v7795
    %v9270 = vunpack.c.h.b16 %v7795
    %v9271 = vunpack.c.l.b16 %v7796
    %v9272 = vunpack.c.h.b16 %v7796
    %v9273 = vunpack.c.l.b16 %v7797
    %v9274 = vunpack.c.h.b16 %v7797
    %v9275 = vunpack.c.l.b16 %v7798
    %v9276 = vunpack.c.h.b16 %v7798
    %v9277 = vunpack.c.l.b16 %v7799
    %v9278 = vunpack.c.h.b16 %v7799
    %v9279 = vunpack.c.l.b16 %v7800
    %v9280 = vunpack.c.h.b16 %v7800
    %v9281 = vunpack.c.l.b16 %v7801
    %v9282 = vunpack.c.h.b16 %v7801
    %v9283 = vunpack.c.l.b16 %v7802
    %v9284 = vunpack.c.h.b16 %v7802
    %v9285 = vunpack.c.l.b16 %v7803
    %v9286 = vunpack.c.h.b16 %v7803
    %v9287 = vunpack.c.l.b16 %v7804
    %v9288 = vunpack.c.h.b16 %v7804
    %v9289 = vunpack.c.l.b16 %v7805
    %v9290 = vunpack.c.h.b16 %v7805
    %v9291 = vunpack.c.l.b16 %v7806
    %v9292 = vunpack.c.h.b16 %v7806
    %v9293 = vunpack.c.l.b16 %v7807
    %v9294 = vunpack.c.h.b16 %v7807
    %v9295 = vunpack.c.l.b16 %v7808
    %v9296 = vunpack.c.h.b16 %v7808
    %v9297 = vunpack.c.l.b16 %v7809
    %v9298 = vunpack.c.h.b16 %v7809
    %v9299 = vunpack.c.l.b16 %v7810
    %v9300 = vunpack.c.h.b16 %v7810
    %v9301 = vunpack.c.l.b16 %v7811
    %v9302 = vunpack.c.h.b16 %v7811
    %v9303 = vunpack.c.l.b16 %v7812
    %v9304 = vunpack.c.h.b16 %v7812
    %v9305 = vunpack.c.l.b16 %v7813
    %v9306 = vunpack.c.h.b16 %v7813
    %v9307 = vunpack.c.l.b16 %v7814
    %v9308 = vunpack.c.h.b16 %v7814
    %v9309 = vunpack.c.l.b16 %v7815
    %v9310 = vunpack.c.h.b16 %v7815
    %v9311 = vunpack.c.l.b16 %v7816
    %v9312 = vunpack.c.h.b16 %v7816
    %v9313 = vunpack.c.l.b16 %v7817
    %v9314 = vunpack.c.h.b16 %v7817
    %v9315 = vunpack.c.l.b16 %v7818
    %v9316 = vunpack.c.h.b16 %v7818
    %v9317 = vunpack.c.l.b16 %v7819
    %v9318 = vunpack.c.h.b16 %v7819
    %v9319 = vunpack.c.l.b16 %v7820
    %v9320 = vunpack.c.h.b16 %v7820
    %v9321 = vunpack.c.l.b16 %v7821
    %v9322 = vunpack.c.h.b16 %v7821
    %v9323 = vunpack.c.l.b16 %v7822
    %v9324 = vunpack.c.h.b16 %v7822
    %v9325 = vunpack.c.l.b16 %v7823
    %v9326 = vunpack.c.h.b16 %v7823
    %v9327 = vunpack.c.l.b16 %v7824
    %v9328 = vunpack.c.h.b16 %v7824
    %v9329 = vunpack.c.l.b16 %v7825
    %v9330 = vunpack.c.h.b16 %v7825
    %v9331 = vunpack.c.l.b16 %v7826
    %v9332 = vunpack.c.h.b16 %v7826
    %v9333 = vunpack.c.l.b16 %v7827
    %v9334 = vunpack.c.h.b16 %v7827
    %v9335 = vunpack.c.l.b16 %v7828
    %v9336 = vunpack.c.h.b16 %v7828
    %v9337 = vunpack.c.l.b16 %v7829
    %v9338 = vunpack.c.h.b16 %v7829
    %v9339 = vunpack.c.l.b16 %v7830
    %v9340 = vunpack.c.h.b16 %v7830
    %v9341 = vunpack.c.l.b16 %v7831
    %v9342 = vunpack.c.h.b16 %v7831
    %v9343 = vunpack.c.l.b16 %v7832
    %v9344 = vunpack.c.h.b16 %v7832
    %v9345 = vunpack.c.l.b16 %v7833
    %v9346 = vunpack.c.h.b16 %v7833
    %v9347 = vunpack.c.l.b16 %v7834
    %v9348 = vunpack.c.h.b16 %v7834
    %v9349 = vunpack.c.l.b16 %v7835
    %v9350 = vunpack.c.h.b16 %v7835
    %v9351 = vunpack.c.l.b16 %v7836
    %v9352 = vunpack.c.h.b16 %v7836
    %v9353 = vunpack.c.l.b16 %v7837
    %v9354 = vunpack.c.h.b16 %v7837
    %v9355 = vunpack.c.l.b16 %v7838
    %v9356 = vunpack.c.h.b16 %v7838
    %v9357 = vunpack.c.l.b16 %v7839
    %v9358 = vunpack.c.h.b16 %v7839
    %v9359 = vunpack.c.l.b16 %v7840
    %v9360 = vunpack.c.h.b16 %v7840
    %v9361 = vunpack.c.l.b16 %v7841
    %v9362 = vunpack.c.h.b16 %v7841
    %v9363 = vunpack.c.l.b16 %v7842
    %v9364 = vunpack.c.h.b16 %v7842
    %v9365 = vunpack.c.l.b16 %v7843
    %v9366 = vunpack.c.h.b16 %v7843
    %v9367 = vunpack.c.l.b16 %v7844
    %v9368 = vunpack.c.h.b16 %v7844
    %v9369 = vunpack.c.l.b16 %v7845
    %v9370 = vunpack.c.h.b16 %v7845
    %v9371 = vunpack.c.l.b16 %v7846
    %v9372 = vunpack.c.h.b16 %v7846
    %v9373 = vunpack.c.l.b16 %v7847
    %v9374 = vunpack.c.h.b16 %v7847
    %v9375 = vunpack.c.l.b16 %v7848
    %v9376 = vunpack.c.h.b16 %v7848
    %v9377 = vunpack.c.l.b16 %v7849
    %v9378 = vunpack.c.h.b16 %v7849
    %v9379 = vunpack.c.l.b16 %v7850
    %v9380 = vunpack.c.h.b16 %v7850
    %v9381 = vunpack.c.l.b16 %v7851
    %v9382 = vunpack.c.h.b16 %v7851
    %v9383 = vunpack.c.l.b16 %v7852
    %v9384 = vunpack.c.h.b16 %v7852
    %v9385 = vunpack.c.l.b16 %v7853
    %v9386 = vunpack.c.h.b16 %v7853
    %v9387 = vunpack.c.l.b16 %v7854
    %v9388 = vunpack.c.h.b16 %v7854
    %v9389 = vunpack.c.l.b16 %v7855
    %v9390 = vunpack.c.h.b16 %v7855
    %v9391 = vunpack.c.l.b16 %v7856
    %v9392 = vunpack.c.h.b16 %v7856
    %v9393 = vunpack.c.l.b16 %v7857
    %v9394 = vunpack.c.h.b16 %v7857
    %v9395 = vunpack.c.l.b16 %v7858
    %v9396 = vunpack.c.h.b16 %v7858
    %v9397 = vunpack.c.l.b16 %v7859
    %v9398 = vunpack.c.h.b16 %v7859
    %v9399 = vunpack.c.l.b16 %v7860
    %v9400 = vunpack.c.h.b16 %v7860
    %v9401 = vunpack.c.l.b16 %v7861
    %v9402 = vunpack.c.h.b16 %v7861
    %v9403 = vunpack.c.l.b16 %v7862
    %v9404 = vunpack.c.h.b16 %v7862
    %v9405 = vunpack.c.l.b16 %v7863
    %v9406 = vunpack.c.h.b16 %v7863
    %v9407 = vunpack.c.l.b16 %v7864
    %v9408 = vunpack.c.h.b16 %v7864
    %v9409 = vunpack.c.l.b16 %v7865
    %v9410 = vunpack.c.h.b16 %v7865
    %v9411 = vunpack.c.l.b16 %v7866
    %v9412 = vunpack.c.h.b16 %v7866
    %v9413 = vunpack.c.l.b16 %v7867
    %v9414 = vunpack.c.h.b16 %v7867
    %v9415 = vunpack.c.l.b16 %v7868
    %v9416 = vunpack.c.h.b16 %v7868
    %v9417 = vunpack.c.l.b16 %v7869
    %v9418 = vunpack.c.h.b16 %v7869
    %v9419 = vunpack.c.l.b16 %v7870
    %v9420 = vunpack.c.h.b16 %v7870
    %v9421 = vunpack.c.l.b16 %v7871
    %v9422 = vunpack.c.h.b16 %v7871
    %v9423 = vunpack.c.l.b16 %v7872
    %v9424 = vunpack.c.h.b16 %v7872
    %v9425 = vunpack.c.l.b16 %v7873
    %v9426 = vunpack.c.h.b16 %v7873
    %v9427 = vunpack.c.l.b16 %v7874
    %v9428 = vunpack.c.h.b16 %v7874
    %v9429 = vunpack.c.l.b16 %v7875
    %v9430 = vunpack.c.h.b16 %v7875
    %v9431 = vunpack.c.l.b16 %v7876
    %v9432 = vunpack.c.h.b16 %v7876
    %v9433 = vunpack.c.l.b16 %v7877
    %v9434 = vunpack.c.h.b16 %v7877
    %v9435 = vunpack.c.l.b16 %v7878
    %v9436 = vunpack.c.h.b16 %v7878
    %v9437 = vunpack.c.l.b16 %v7879
    %v9438 = vunpack.c.h.b16 %v7879
    %v9439 = vunpack.c.l.b16 %v7880
    %v9440 = vunpack.c.h.b16 %v7880
    %v9441 = vunpack.c.l.b16 %v7881
    %v9442 = vunpack.c.h.b16 %v7881
    %v9443 = vunpack.c.l.b16 %v7882
    %v9444 = vunpack.c.h.b16 %v7882
    %v9445 = vunpack.c.l.b16 %v7883
    %v9446 = vunpack.c.h.b16 %v7883
    %v9447 = vunpack.c.l.b16 %v7884
    %v9448 = vunpack.c.h.b16 %v7884
    %v9449 = vunpack.c.l.b16 %v7885
    %v9450 = vunpack.c.h.b16 %v7885
    %v9451 = vunpack.c.l.b16 %v7886
    %v9452 = vunpack.c.h.b16 %v7886
    %v9453 = vunpack.c.l.b16 %v7887
    %v9454 = vunpack.c.h.b16 %v7887
    %v9455 = vunpack.c.l.b16 %v7888
    %v9456 = vunpack.c.h.b16 %v7888
    %v9457 = vunpack.c.l.b16 %v7889
    %v9458 = vunpack.c.h.b16 %v7889
    %v9459 = vunpack.c.l.b16 %v7890
    %v9460 = vunpack.c.h.b16 %v7890
    %v9461 = vunpack.c.l.b16 %v7891
    %v9462 = vunpack.c.h.b16 %v7891
    %v9463 = vunpack.c.l.b16 %v7892
    %v9464 = vunpack.c.h.b16 %v7892
    %v9465 = vunpack.c.l.b16 %v7893
    %v9466 = vunpack.c.h.b16 %v7893
    %v9467 = vunpack.c.l.b16 %v7894
    %v9468 = vunpack.c.h.b16 %v7894
    %v9469 = vunpack.c.l.b16 %v7895
    %v9470 = vunpack.c.h.b16 %v7895
    %v9471 = vunpack.c.l.b16 %v7896
    %v9472 = vunpack.c.h.b16 %v7896
    %v9473 = vunpack.c.l.b16 %v7897
    %v9474 = vunpack.c.h.b16 %v7897
    %v9475 = vunpack.c.l.b16 %v7898
    %v9476 = vunpack.c.h.b16 %v7898
    %v9477 = vunpack.c.l.b16 %v7899
    %v9478 = vunpack.c.h.b16 %v7899
    %v9479 = vunpack.c.l.b16 %v7900
    %v9480 = vunpack.c.h.b16 %v7900
    %v9481 = vunpack.c.l.b16 %v7901
    %v9482 = vunpack.c.h.b16 %v7901
    %v9483 = vunpack.c.l.b16 %v7902
    %v9484 = vunpack.c.h.b16 %v7902
    %v9485 = vunpack.c.l.b16 %v7903
    %v9486 = vunpack.c.h.b16 %v7903
    %v9487 = vunpack.c.l.b16 %v7904
    %v9488 = vunpack.c.h.b16 %v7904
    %v9489 = vunpack.c.l.b16 %v7905
    %v9490 = vunpack.c.h.b16 %v7905
    %v9491 = vunpack.c.l.b16 %v7906
    %v9492 = vunpack.c.h.b16 %v7906
    %v9493 = vunpack.c.l.b16 %v7907
    %v9494 = vunpack.c.h.b16 %v7907
    %v9495 = vunpack.c.l.b16 %v7908
    %v9496 = vunpack.c.h.b16 %v7908
    %v9497 = vunpack.c.l.b16 %v7909
    %v9498 = vunpack.c.h.b16 %v7909
    %v9499 = vunpack.c.l.b16 %v7910
    %v9500 = vunpack.c.h.b16 %v7910
    %v9501 = vunpack.c.l.b16 %v7911
    %v9502 = vunpack.c.h.b16 %v7911
    %v9503 = vunpack.c.l.b16 %v7912
    %v9504 = vunpack.c.h.b16 %v7912
    %v9505 = vunpack.c.l.b16 %v7913
    %v9506 = vunpack.c.h.b16 %v7913
    %v9507 = vunpack.c.l.b16 %v7914
    %v9508 = vunpack.c.h.b16 %v7914
    %v9509 = vunpack.c.l.b16 %v7915
    %v9510 = vunpack.c.h.b16 %v7915
    %v9511 = vunpack.c.l.b16 %v7916
    %v9512 = vunpack.c.h.b16 %v7916
    %v9513 = vunpack.c.l.b16 %v7917
    %v9514 = vunpack.c.h.b16 %v7917
    %v9515 = vunpack.c.l.b16 %v7918
    %v9516 = vunpack.c.h.b16 %v7918
    %v9517 = vunpack.c.l.b16 %v7919
    %v9518 = vunpack.c.h.b16 %v7919
    %v9519 = vunpack.c.l.b16 %v7920
    %v9520 = vunpack.c.h.b16 %v7920
    %v9521 = vunpack.c.l.b16 %v7921
    %v9522 = vunpack.c.h.b16 %v7921
    %v9523 = vunpack.c.l.b16 %v7922
    %v9524 = vunpack.c.h.b16 %v7922
    %v9525 = vunpack.c.l.b16 %v7923
    %v9526 = vunpack.c.h.b16 %v7923
    %v9527 = vunpack.c.l.b16 %v7924
    %v9528 = vunpack.c.h.b16 %v7924
    %v9529 = vunpack.c.l.b16 %v7925
    %v9530 = vunpack.c.h.b16 %v7925
    %v9531 = vunpack.c.l.b16 %v7926
    %v9532 = vunpack.c.h.b16 %v7926
    %v9533 = vunpack.c.l.b16 %v7927
    %v9534 = vunpack.c.h.b16 %v7927
    %v9535 = vunpack.c.l.b16 %v7928
    %v9536 = vunpack.c.h.b16 %v7928
    %v9537 = vunpack.c.l.b16 %v7929
    %v9538 = vunpack.c.h.b16 %v7929
    %v9539 = vunpack.c.l.b16 %v7930
    %v9540 = vunpack.c.h.b16 %v7930
    %v9541 = vunpack.c.l.b16 %v7931
    %v9542 = vunpack.c.h.b16 %v7931
    %v9543 = vunpack.c.l.b16 %v7932
    %v9544 = vunpack.c.h.b16 %v7932
    %v9545 = vunpack.c.l.b16 %v7933
    %v9546 = vunpack.c.h.b16 %v7933
    %v9547 = vunpack.c.l.b16 %v7934
    %v9548 = vunpack.c.h.b16 %v7934
    %v9549 = vunpack.c.l.b16 %v7935
    %v9550 = vunpack.c.h.b16 %v7935
    %v9551 = vunpack.c.l.b16 %v7936
    %v9552 = vunpack.c.h.b16 %v7936
    %v9553 = vunpack.c.l.b16 %v7937
    %v9554 = vunpack.c.h.b16 %v7937
    %v9555 = vunpack.c.l.b16 %v7938
    %v9556 = vunpack.c.h.b16 %v7938
    %v9557 = vunpack.c.l.b16 %v7939
    %v9558 = vunpack.c.h.b16 %v7939
    %v9559 = vunpack.c.l.b16 %v7940
    %v9560 = vunpack.c.h.b16 %v7940
    %v9561 = vunpack.c.l.b16 %v7941
    %v9562 = vunpack.c.h.b16 %v7941
    %v9563 = vunpack.c.l.b16 %v7942
    %v9564 = vunpack.c.h.b16 %v7942
    %v9565 = vunpack.c.l.b16 %v7943
    %v9566 = vunpack.c.h.b16 %v7943
    %v9567 = vunpack.c.l.b16 %v7944
    %v9568 = vunpack.c.h.b16 %v7944
    %v9569 = vunpack.c.l.b16 %v7945
    %v9570 = vunpack.c.h.b16 %v7945
    %v9571 = vunpack.c.l.b16 %v7946
    %v9572 = vunpack.c.h.b16 %v7946
    %v9573 = vunpack.c.l.b16 %v7947
    %v9574 = vunpack.c.h.b16 %v7947
    %v9575 = vunpack.c.l.b16 %v7948
    %v9576 = vunpack.c.h.b16 %v7948
    %v9577 = vunpack.c.l.b16 %v7949
    %v9578 = vunpack.c.h.b16 %v7949
    %v9579 = vunpack.c.l.b16 %v7950
    %v9580 = vunpack.c.h.b16 %v7950
    %v9581 = vunpack.c.l.b16 %v7951
    %v9582 = vunpack.c.h.b16 %v7951
    %v9583 = vunpack.c.l.b16 %v7952
    %v9584 = vunpack.c.h.b16 %v7952
    %v9585 = vunpack.c.l.b16 %v7953
    %v9586 = vunpack.c.h.b16 %v7953
    %v9587 = vunpack.c.l.b16 %v7954
    %v9588 = vunpack.c.h.b16 %v7954
    %v9589 = vunpack.c.l.b16 %v7955
    %v9590 = vunpack.c.h.b16 %v7955
    %v9591 = vunpack.c.l.b16 %v7956
    %v9592 = vunpack.c.h.b16 %v7956
    %v9593 = vunpack.c.l.b16 %v7957
    %v9594 = vunpack.c.h.b16 %v7957
    %v9595 = vunpack.c.l.b16 %v7958
    %v9596 = vunpack.c.h.b16 %v7958
    %v9597 = vunpack.c.l.b16 %v7959
    %v9598 = vunpack.c.h.b16 %v7959
    %v9599 = vunpack.c.l.b16 %v7960
    %v9600 = vunpack.c.h.b16 %v7960
    %v9601 = vunpack.c.l.b16 %v7961
    %v9602 = vunpack.c.h.b16 %v7961
    %v9603 = vunpack.c.l.b16 %v7962
    %v9604 = vunpack.c.h.b16 %v7962
    %v9605 = vunpack.c.l.b16 %v7963
    %v9606 = vunpack.c.h.b16 %v7963
    %v9607 = vunpack.c.l.b16 %v7964
    %v9608 = vunpack.c.h.b16 %v7964
    %v9609 = vunpack.c.l.b16 %v7965
    %v9610 = vunpack.c.h.b16 %v7965
    %v9611 = vunpack.c.l.b16 %v7966
    %v9612 = vunpack.c.h.b16 %v7966
    %v9613 = vunpack.c.l.b16 %v7967
    %v9614 = vunpack.c.h.b16 %v7967
    %v9615 = vunpack.c.l.b16 %v7968
    %v9616 = vunpack.c.h.b16 %v7968
    %v9617 = vunpack.c.l.b16 %v7969
    %v9618 = vunpack.c.h.b16 %v7969
    %v9619 = vunpack.c.l.b16 %v7970
    %v9620 = vunpack.c.h.b16 %v7970
    %v9621 = vunpack.c.l.b16 %v7971
    %v9622 = vunpack.c.h.b16 %v7971
    %v9623 = vunpack.c.l.b16 %v7972
    %v9624 = vunpack.c.h.b16 %v7972
    %v9625 = vunpack.c.l.b16 %v7973
    %v9626 = vunpack.c.h.b16 %v7973
    %v9627 = vunpack.c.l.b16 %v7974
    %v9628 = vunpack.c.h.b16 %v7974
    %v9629 = vunpack.c.l.b16 %v7975
    %v9630 = vunpack.c.h.b16 %v7975
    %v9631 = vunpack.c.l.b16 %v7976
    %v9632 = vunpack.c.h.b16 %v7976
    %v9633 = vunpack.c.l.b16 %v7977
    %v9634 = vunpack.c.h.b16 %v7977
    %v9635 = vunpack.c.l.b16 %v7978
    %v9636 = vunpack.c.h.b16 %v7978
    %v9637 = vunpack.c.l.b16 %v7979
    %v9638 = vunpack.c.h.b16 %v7979
    %v9639 = vunpack.c.l.b16 %v7980
    %v9640 = vunpack.c.h.b16 %v7980
    %v9641 = vunpack.c.l.b16 %v7981
    %v9642 = vunpack.c.h.b16 %v7981
    %v9643 = vunpack.c.l.b16 %v7982
    %v9644 = vunpack.c.h.b16 %v7982
    %v9645 = vunpack.c.l.b16 %v7983
    %v9646 = vunpack.c.h.b16 %v7983
    %v9647 = vunpack.c.l.b16 %v7984
    %v9648 = vunpack.c.h.b16 %v7984
    %v9649 = vunpack.c.l.b16 %v7985
    %v9650 = vunpack.c.h.b16 %v7985
    %v9651 = vunpack.c.l.b16 %v7986
    %v9652 = vunpack.c.h.b16 %v7986
    %v9653 = vunpack.c.l.b16 %v7987
    %v9654 = vunpack.c.h.b16 %v7987
    %v9655 = vunpack.c.l.b16 %v7988
    %v9656 = vunpack.c.h.b16 %v7988
    %v9657 = vunpack.c.l.b16 %v7989
    %v9658 = vunpack.c.h.b16 %v7989
    %v9659 = vunpack.c.l.b16 %v7990
    %v9660 = vunpack.c.h.b16 %v7990
    %v9661 = vunpack.c.l.b16 %v7991
    %v9662 = vunpack.c.h.b16 %v7991
    %v9663 = vunpack.c.l.b16 %v7992
    %v9664 = vunpack.c.h.b16 %v7992
    %v9665 = vunpack.c.l.b16 %v7993
    %v9666 = vunpack.c.h.b16 %v7993
    %v9667 = vunpack.c.l.b16 %v7994
    %v9668 = vunpack.c.h.b16 %v7994
    %v9669 = vunpack.c.l.b16 %v7995
    %v9670 = vunpack.c.h.b16 %v7995
    %v9671 = vunpack.c.l.b16 %v7996
    %v9672 = vunpack.c.h.b16 %v7996
    %v9673 = vunpack.c.l.b16 %v7997
    %v9674 = vunpack.c.h.b16 %v7997
    %v9675 = vunpack.c.l.b16 %v7998
    %v9676 = vunpack.c.h.b16 %v7998
    %v9677 = vunpack.c.l.b16 %v7999
    %v9678 = vunpack.c.h.b16 %v7999
    %v9679 = vunpack.c.l.b16 %v8000
    %v9680 = vunpack.c.h.b16 %v8000
    %v9681 = vunpack.c.l.b16 %v8001
    %v9682 = vunpack.c.h.b16 %v8001
    %v9683 = vunpack.c.l.b16 %v8002
    %v9684 = vunpack.c.h.b16 %v8002
    %v9685 = vunpack.c.l.b16 %v8003
    %v9686 = vunpack.c.h.b16 %v8003
    %v9687 = vunpack.c.l.b16 %v8004
    %v9688 = vunpack.c.h.b16 %v8004
    %v9689 = vunpack.c.l.b16 %v8005
    %v9690 = vunpack.c.h.b16 %v8005
    %v9691 = vunpack.c.l.b16 %v8006
    %v9692 = vunpack.c.h.b16 %v8006
    %v9693 = vunpack.c.l.b16 %v8007
    %v9694 = vunpack.c.h.b16 %v8007
    %v9695 = vunpack.c.l.b16 %v8008
    %v9696 = vunpack.c.h.b16 %v8008
    %v9697 = vunpack.c.l.b16 %v8009
    %v9698 = vunpack.c.h.b16 %v8009
    %v9699 = vunpack.c.l.b16 %v8010
    %v9700 = vunpack.c.h.b16 %v8010
    %v9701 = vunpack.c.l.b16 %v8011
    %v9702 = vunpack.c.h.b16 %v8011
    %v9703 = vunpack.c.l.b16 %v8012
    %v9704 = vunpack.c.h.b16 %v8012
    %v9705 = vunpack.c.l.b16 %v8013
    %v9706 = vunpack.c.h.b16 %v8013
    %v9707 = vunpack.c.l.b16 %v8014
    %v9708 = vunpack.c.h.b16 %v8014
    %v9709 = vunpack.c.l.b16 %v8015
    %v9710 = vunpack.c.h.b16 %v8015
    %v9711 = vunpack.c.l.b16 %v8016
    %v9712 = vunpack.c.h.b16 %v8016
    %v9713 = vunpack.c.l.b16 %v8017
    %v9714 = vunpack.c.h.b16 %v8017
    %v9715 = vunpack.c.l.b16 %v8018
    %v9716 = vunpack.c.h.b16 %v8018
    %v9717 = vunpack.c.l.b16 %v8019
    %v9718 = vunpack.c.h.b16 %v8019
    %v9719 = vunpack.c.l.b16 %v8020
    %v9720 = vunpack.c.h.b16 %v8020
    %v9721 = vunpack.c.l.b16 %v8021
    %v9722 = vunpack.c.h.b16 %v8021
    %v9723 = vunpack.c.l.b16 %v8022
    %v9724 = vunpack.c.h.b16 %v8022
    %v9725 = vunpack.c.l.b16 %v8023
    %v9726 = vunpack.c.h.b16 %v8023
    %v9727 = vunpack.c.l.b16 %v8024
    %v9728 = vunpack.c.h.b16 %v8024
    %v9729 = vunpack.c.l.b16 %v8025
    %v9730 = vunpack.c.h.b16 %v8025
    %v9731 = vunpack.c.l.b16 %v8026
    %v9732 = vunpack.c.h.b16 %v8026
    %v9733 = vunpack.c.l.b16 %v8027
    %v9734 = vunpack.c.h.b16 %v8027
    %v9735 = vunpack.c.l.b16 %v8028
    %v9736 = vunpack.c.h.b16 %v8028
    %v9737 = vunpack.c.l.b16 %v8029
    %v9738 = vunpack.c.h.b16 %v8029
    %v9739 = vunpack.c.l.b16 %v8030
    %v9740 = vunpack.c.h.b16 %v8030
    %v9741 = vunpack.c.l.b16 %v8031
    %v9742 = vunpack.c.h.b16 %v8031
    %v9743 = vunpack.c.l.b16 %v8032
    %v9744 = vunpack.c.h.b16 %v8032
    %v9745 = vunpack.c.l.b16 %v8033
    %v9746 = vunpack.c.h.b16 %v8033
    %v9747 = vunpack.c.l.b16 %v8034
    %v9748 = vunpack.c.h.b16 %v8034
    %v9749 = vunpack.c.l.b16 %v8035
    %v9750 = vunpack.c.h.b16 %v8035
    %v9751 = vunpack.c.l.b16 %v8036
    %v9752 = vunpack.c.h.b16 %v8036
    %v9753 = vunpack.c.l.b16 %v8037
    %v9754 = vunpack.c.h.b16 %v8037
    %v9755 = vunpack.c.l.b16 %v8038
    %v9756 = vunpack.c.h.b16 %v8038
    %v9757 = vunpack.c.l.b16 %v8039
    %v9758 = vunpack.c.h.b16 %v8039
    %v9759 = vunpack.c.l.b16 %v8040
    %v9760 = vunpack.c.h.b16 %v8040
    %v9761 = vunpack.c.l.b16 %v8041
    %v9762 = vunpack.c.h.b16 %v8041
    %v9763 = vunpack.c.l.b16 %v8042
    %v9764 = vunpack.c.h.b16 %v8042
    %v9765 = vunpack.c.l.b16 %v8043
    %v9766 = vunpack.c.h.b16 %v8043
    %v9767 = vunpack.c.l.b16 %v8044
    %v9768 = vunpack.c.h.b16 %v8044
    %v9769 = vunpack.c.l.b16 %v8045
    %v9770 = vunpack.c.h.b16 %v8045
    %v9771 = vunpack.c.l.b16 %v8046
    %v9772 = vunpack.c.h.b16 %v8046
    %v9773 = vunpack.c.l.b16 %v8047
    %v9774 = vunpack.c.h.b16 %v8047
    %v9775 = vunpack.c.l.b16 %v8048
    %v9776 = vunpack.c.h.b16 %v8048
    %v9777 = vunpack.c.l.b16 %v8049
    %v9778 = vunpack.c.h.b16 %v8049
    %v9779 = vunpack.c.l.b16 %v8050
    %v9780 = vunpack.c.h.b16 %v8050
    %v9781 = vunpack.c.l.b16 %v8051
    %v9782 = vunpack.c.h.b16 %v8051
    %v9783 = vunpack.c.l.b16 %v8052
    %v9784 = vunpack.c.h.b16 %v8052
    %v9785 = vunpack.c.l.b16 %v8053
    %v9786 = vunpack.c.h.b16 %v8053
    %v9787 = vunpack.c.l.b16 %v8054
    %v9788 = vunpack.c.h.b16 %v8054
    %v9789 = vunpack.c.l.b16 %v8055
    %v9790 = vunpack.c.h.b16 %v8055
    %v9791 = vunpack.c.l.b16 %v8056
    %v9792 = vunpack.c.h.b16 %v8056
    %v9793 = vunpack.c.l.b16 %v8057
    %v9794 = vunpack.c.h.b16 %v8057
    %v9795 = vunpack.c.l.b16 %v8058
    %v9796 = vunpack.c.h.b16 %v8058
    %v9797 = vunpack.c.l.b16 %v8059
    %v9798 = vunpack.c.h.b16 %v8059
    %v9799 = vunpack.c.l.b16 %v8060
    %v9800 = vunpack.c.h.b16 %v8060
    %v9801 = vunpack.c.l.b16 %v8061
    %v9802 = vunpack.c.h.b16 %v8061
    %v9803 = vunpack.c.l.b16 %v8062
    %v9804 = vunpack.c.h.b16 %v8062
    %v9805 = vunpack.c.l.b16 %v8063
    %v9806 = vunpack.c.h.b16 %v8063
    %v9807 = vunpack.c.l.b16 %v8064
    %v9808 = vunpack.c.h.b16 %v8064
    %v9809 = vunpack.c.l.b16 %v8065
    %v9810 = vunpack.c.h.b16 %v8065
    %v9811 = vunpack.c.l.b16 %v8066
    %v9812 = vunpack.c.h.b16 %v8066
    %v9813 = vunpack.c.l.b16 %v8067
    %v9814 = vunpack.c.h.b16 %v8067
    %v9815 = vunpack.c.l.b16 %v8068
    %v9816 = vunpack.c.h.b16 %v8068
    %v9817 = vunpack.c.l.b16 %v8069
    %v9818 = vunpack.c.h.b16 %v8069
    %v9819 = vunpack.c.l.b16 %v8070
    %v9820 = vunpack.c.h.b16 %v8070
    %v9821 = vunpack.c.l.b16 %v8071
    %v9822 = vunpack.c.h.b16 %v8071
    %v9823 = vunpack.c.l.b16 %v8072
    %v9824 = vunpack.c.h.b16 %v8072
    %v9825 = vunpack.c.l.b16 %v8073
    %v9826 = vunpack.c.h.b16 %v8073
    %v9827 = vunpack.c.l.b16 %v8074
    %v9828 = vunpack.c.h.b16 %v8074
    %v9829 = vunpack.c.l.b16 %v8075
    %v9830 = vunpack.c.h.b16 %v8075
    %v9831 = vunpack.c.l.b16 %v8076
    %v9832 = vunpack.c.h.b16 %v8076
    %v9833 = vpack.c.b16 %v8693, %v8681
    %v9834 = vpack.c.b16 %v8694, %v8682
    %v9835 = vpack.c.b16 %v8695, %v8683
    %v9836 = vpack.c.b16 %v8696, %v8684
    %v9837 = vpack.c.b16 %v8697, %v8685
    %v9838 = vpack.c.b16 %v8698, %v8686
    %v9839 = vpack.c.b16 %v8699, %v8687
    %v9840 = vpack.c.b16 %v8700, %v8688
    %v9841 = vpack.c.b16 %v8701, %v8689
    %v9842 = vpack.c.b16 %v8702, %v8690
    %v9843 = vpack.c.b16 %v8703, %v8691
    %v9844 = vpack.c.b16 %v8704, %v8692
    %v9845 = vpack.c.b16 %v8717, %v8705
    %v9846 = vpack.c.b16 %v8718, %v8706
    %v9847 = vpack.c.b16 %v8719, %v8707
    %v9848 = vpack.c.b16 %v8720, %v8708
    %v9849 = vpack.c.b16 %v8721, %v8709
    %v9850 = vpack.c.b16 %v8722, %v8710
    %v9851 = vpack.c.b16 %v8723, %v8711
    %v9852 = vpack.c.b16 %v8724, %v8712
    %v9853 = vpack.c.b16 %v8725, %v8713
    %v9854 = vpack.c.b16 %v8726, %v8714
    %v9855 = vpack.c.b16 %v8727, %v8715
    %v9856 = vpack.c.b16 %v8728, %v8716
    %v9857 = vpack.c.b16 %v8741, %v8729
    %v9858 = vpack.c.b16 %v8742, %v8730
    %v9859 = vpack.c.b16 %v8743, %v8731
    %v9860 = vpack.c.b16 %v8744, %v8732
    %v9861 = vpack.c.b16 %v8745, %v8733
    %v9862 = vpack.c.b16 %v8746, %v8734
    %v9863 = vpack.c.b16 %v8747, %v8735
    %v9864 = vpack.c.b16 %v8748, %v8736
    %v9865 = vpack.c.b16 %v8749, %v8737
    %v9866 = vpack.c.b16 %v8750, %v8738
    %v9867 = vpack.c.b16 %v8751, %v8739
    %v9868 = vpack.c.b16 %v8752, %v8740
    %v9869 = vpack.c.b16 %v8765, %v8753
    %v9870 = vpack.c.b16 %v8766, %v8754
    %v9871 = vpack.c.b16 %v8767, %v8755
    %v9872 = vpack.c.b16 %v8768, %v8756
    %v9873 = vpack.c.b16 %v8769, %v8757
    %v9874 = vpack.c.b16 %v8770, %v8758
    %v9875 = vpack.c.b16 %v8771, %v8759
    %v9876 = vpack.c.b16 %v8772, %v8760
    %v9877 = vpack.c.b16 %v8773, %v8761
    %v9878 = vpack.c.b16 %v8774, %v8762
    %v9879 = vpack.c.b16 %v8775, %v8763
    %v9880 = vpack.c.b16 %v8776, %v8764
    %v9881 = vpack.c.b16 %v8789, %v8777
    %v9882 = vpack.c.b16 %v8790, %v8778
    %v9883 = vpack.c.b16 %v8791, %v8779
    %v9884 = vpack.c.b16 %v8792, %v8780
    %v9885 = vpack.c.b16 %v8793, %v8781
    %v9886 = vpack.c.b16 %v8794, %v8782
    %v9887 = vpack.c.b16 %v8795, %v8783
    %v9888 = vpack.c.b16 %v8796, %v8784
    %v9889 = vpack.c.b16 %v8797, %v8785
    %v9890 = vpack.c.b16 %v8798, %v8786
    %v9891 = vpack.c.b16 %v8799, %v8787
    %v9892 = vpack.c.b16 %v8800, %v8788
    %v9893 = vpack.c.b16 %v8813, %v8801
    %v9894 = vpack.c.b16 %v8814, %v8802
    %v9895 = vpack.c.b16 %v8815, %v8803
    %v9896 = vpack.c.b16 %v8816, %v8804
    %v9897 = vpack.c.b16 %v8817, %v8805
    %v9898 = vpack.c.b16 %v8818, %v8806
    %v9899 = vpack.c.b16 %v8819, %v8807
    %v9900 = vpack.c.b16 %v8820, %v8808
    %v9901 = vpack.c.b16 %v8821, %v8809
    %v9902 = vpack.c.b16 %v8822, %v8810
    %v9903 = vpack.c.b16 %v8823, %v8811
    %v9904 = vpack.c.b16 %v8824, %v8812
    %v9905 = vpack.c.b16 %v8837, %v8825
    %v9906 = vpack.c.b16 %v8838, %v8826
    %v9907 = vpack.c.b16 %v8839, %v8827
    %v9908 = vpack.c.b16 %v8840, %v8828
    %v9909 = vpack.c.b16 %v8841, %v8829
    %v9910 = vpack.c.b16 %v8842, %v8830
    %v9911 = vpack.c.b16 %v8843, %v8831
    %v9912 = vpack.c.b16 %v8844, %v8832
    %v9913 = vpack.c.b16 %v8845, %v8833
    %v9914 = vpack.c.b16 %v8846, %v8834
    %v9915 = vpack.c.b16 %v8847, %v8835
    %v9916 = vpack.c.b16 %v8848, %v8836
    %v9917 = vpack.c.b16 %v8861, %v8849
    %v9918 = vpack.c.b16 %v8862, %v8850
    %v9919 = vpack.c.b16 %v8863, %v8851
    %v9920 = vpack.c.b16 %v8864, %v8852
    %v9921 = vpack.c.b16 %v8865, %v8853
    %v9922 = vpack.c.b16 %v8866, %v8854
    %v9923 = vpack.c.b16 %v8867, %v8855
    %v9924 = vpack.c.b16 %v8868, %v8856
    %v9925 = vpack.c.b16 %v8869, %v8857
    %v9926 = vpack.c.b16 %v8870, %v8858
    %v9927 = vpack.c.b16 %v8871, %v8859
    %v9928 = vpack.c.b16 %v8872, %v8860
    %v9929 = vpack.c.b16 %v8885, %v8873
    %v9930 = vpack.c.b16 %v8886, %v8874
    %v9931 = vpack.c.b16 %v8887, %v8875
    %v9932 = vpack.c.b16 %v8888, %v8876
    %v9933 = vpack.c.b16 %v8889, %v8877
    %v9934 = vpack.c.b16 %v8890, %v8878
    %v9935 = vpack.c.b16 %v8891, %v8879
    %v9936 = vpack.c.b16 %v8892, %v8880
    %v9937 = vpack.c.b16 %v8893, %v8881
    %v9938 = vpack.c.b16 %v8894, %v8882
    %v9939 = vpack.c.b16 %v8895, %v8883
    %v9940 = vpack.c.b16 %v8896, %v8884
    %v9941 = vpack.c.b16 %v8909, %v8897
    %v9942 = vpack.c.b16 %v8910, %v8898
    %v9943 = vpack.c.b16 %v8911, %v8899
    %v9944 = vpack.c.b16 %v8912, %v8900
    %v9945 = vpack.c.b16 %v8913, %v8901
    %v9946 = vpack.c.b16 %v8914, %v8902
    %v9947 = vpack.c.b16 %v8915, %v8903
    %v9948 = vpack.c.b16 %v8916, %v8904
    %v9949 = vpack.c.b16 %v8917, %v8905
    %v9950 = vpack.c.b16 %v8918, %v8906
    %v9951 = vpack.c.b16 %v8919, %v8907
    %v9952 = vpack.c.b16 %v8920, %v8908
    %v9953 = vpack.c.b16 %v8933, %v8921
    %v9954 = vpack.c.b16 %v8934, %v8922
    %v9955 = vpack.c.b16 %v8935, %v8923
    %v9956 = vpack.c.b16 %v8936, %v8924
    %v9957 = vpack.c.b16 %v8937, %v8925
    %v9958 = vpack.c.b16 %v8938, %v8926
    %v9959 = vpack.c.b16 %v8939, %v8927
    %v9960 = vpack.c.b16 %v8940, %v8928
    %v9961 = vpack.c.b16 %v8941, %v8929
    %v9962 = vpack.c.b16 %v8942, %v8930
    %v9963 = vpack.c.b16 %v8943, %v8931
    %v9964 = vpack.c.b16 %v8944, %v8932
    %v9965 = vpack.c.b16 %v8957, %v8945
    %v9966 = vpack.c.b16 %v8958, %v8946
    %v9967 = vpack.c.b16 %v8959, %v8947
    %v9968 = vpack.c.b16 %v8960, %v8948
    %v9969 = vpack.c.b16 %v8961, %v8949
    %v9970 = vpack.c.b16 %v8962, %v8950
    %v9971 = vpack.c.b16 %v8963, %v8951
    %v9972 = vpack.c.b16 %v8964, %v8952
    %v9973 = vpack.c.b16 %v8965, %v8953
    %v9974 = vpack.c.b16 %v8966, %v8954
    %v9975 = vpack.c.b16 %v8967, %v8955
    %v9976 = vpack.c.b16 %v8968, %v8956
    %v9977 = vpack.c.b16 %v8981, %v8969
    %v9978 = vpack.c.b16 %v8982, %v8970
    %v9979 = vpack.c.b16 %v8983, %v8971
    %v9980 = vpack.c.b16 %v8984, %v8972
    %v9981 = vpack.c.b16 %v8985, %v8973
    %v9982 = vpack.c.b16 %v8986, %v8974
    %v9983 = vpack.c.b16 %v8987, %v8975
    %v9984 = vpack.c.b16 %v8988, %v8976
    %v9985 = vpack.c.b16 %v8989, %v8977
    %v9986 = vpack.c.b16 %v8990, %v8978
    %v9987 = vpack.c.b16 %v8991, %v8979
    %v9988 = vpack.c.b16 %v8992, %v8980
    %v9989 = vpack.c.b16 %v9005, %v8993
    %v9990 = vpack.c.b16 %v9006, %v8994
    %v9991 = vpack.c.b16 %v9007, %v8995
    %v9992 = vpack.c.b16 %v9008, %v8996
    %v9993 = vpack.c.b16 %v9009, %v8997
    %v9994 = vpack.c.b16 %v9010, %v8998
    %v9995 = vpack.c.b16 %v9011, %v8999
    %v9996 = vpack.c.b16 %v9012, %v9000
    %v9997 = vpack.c.b16 %v9013, %v9001
    %v9998 = vpack.c.b16 %v9014, %v9002
    %v9999 = vpack.c.b16 %v9015, %v9003
    %v10000 = vpack.c.b16 %v9016, %v9004
    %v10001 = vpack.c.b16 %v9029, %v9017
    %v10002 = vpack.c.b16 %v9030, %v9018
    %v10003 = vpack.c.b16 %v9031, %v9019
    %v10004 = vpack.c.b16 %v9032, %v9020
    %v10005 = vpack.c.b16 %v9033, %v9021
    %v10006 = vpack.c.b16 %v9034, %v9022
    %v10007 = vpack.c.b16 %v9035, %v9023
    %v10008 = vpack.c.b16 %v9036, %v9024
    %v10009 = vpack.c.b16 %v9037, %v9025
    %v10010 = vpack.c.b16 %v9038, %v9026
    %v10011 = vpack.c.b16 %v9039, %v9027
    %v10012 = vpack.c.b16 %v9040, %v9028
    %v10013 = vpack.c.b16 %v9053, %v9041
    %v10014 = vpack.c.b16 %v9054, %v9042
    %v10015 = vpack.c.b16 %v9055, %v9043
    %v10016 = vpack.c.b16 %v9056, %v9044
    %v10017 = vpack.c.b16 %v9057, %v9045
    %v10018 = vpack.c.b16 %v9058, %v9046
    %v10019 = vpack.c.b16 %v9059, %v9047
    %v10020 = vpack.c.b16 %v9060, %v9048
    %v10021 = vpack.c.b16 %v9061, %v9049
    %v10022 = vpack.c.b16 %v9062, %v9050
    %v10023 = vpack.c.b16 %v9063, %v9051
    %v10024 = vpack.c.b16 %v9064, %v9052
    %v10025 = vpack.c.b16 %v9077, %v9065
    %v10026 = vpack.c.b16 %v9078, %v9066
    %v10027 = vpack.c.b16 %v9079, %v9067
    %v10028 = vpack.c.b16 %v9080, %v9068
    %v10029 = vpack.c.b16 %v9081, %v9069
    %v10030 = vpack.c.b16 %v9082, %v9070
    %v10031 = vpack.c.b16 %v9083, %v9071
    %v10032 = vpack.c.b16 %v9084, %v9072
    %v10033 = vpack.c.b16 %v9085, %v9073
    %v10034 = vpack.c.b16 %v9086, %v9074
    %v10035 = vpack.c.b16 %v9087, %v9075
    %v10036 = vpack.c.b16 %v9088, %v9076
    %v10037 = vpack.c.b16 %v9101, %v9089
    %v10038 = vpack.c.b16 %v9102, %v9090
    %v10039 = vpack.c.b16 %v9103, %v9091
    %v10040 = vpack.c.b16 %v9104, %v9092
    %v10041 = vpack.c.b16 %v9105, %v9093
    %v10042 = vpack.c.b16 %v9106, %v9094
    %v10043 = vpack.c.b16 %v9107, %v9095
    %v10044 = vpack.c.b16 %v9108, %v9096
    %v10045 = vpack.c.b16 %v9109, %v9097
    %v10046 = vpack.c.b16 %v9110, %v9098
    %v10047 = vpack.c.b16 %v9111, %v9099
    %v10048 = vpack.c.b16 %v9112, %v9100
    %v10049 = vpack.c.b16 %v9125, %v9113
    %v10050 = vpack.c.b16 %v9126, %v9114
    %v10051 = vpack.c.b16 %v9127, %v9115
    %v10052 = vpack.c.b16 %v9128, %v9116
    %v10053 = vpack.c.b16 %v9129, %v9117
    %v10054 = vpack.c.b16 %v9130, %v9118
    %v10055 = vpack.c.b16 %v9131, %v9119
    %v10056 = vpack.c.b16 %v9132, %v9120
    %v10057 = vpack.c.b16 %v9133, %v9121
    %v10058 = vpack.c.b16 %v9134, %v9122
    %v10059 = vpack.c.b16 %v9135, %v9123
    %v10060 = vpack.c.b16 %v9136, %v9124
    %v10061 = vpack.c.b16 %v9149, %v9137
    %v10062 = vpack.c.b16 %v9150, %v9138
    %v10063 = vpack.c.b16 %v9151, %v9139
    %v10064 = vpack.c.b16 %v9152, %v9140
    %v10065 = vpack.c.b16 %v9153, %v9141
    %v10066 = vpack.c.b16 %v9154, %v9142
    %v10067 = vpack.c.b16 %v9155, %v9143
    %v10068 = vpack.c.b16 %v9156, %v9144
    %v10069 = vpack.c.b16 %v9157, %v9145
    %v10070 = vpack.c.b16 %v9158, %v9146
    %v10071 = vpack.c.b16 %v9159, %v9147
    %v10072 = vpack.c.b16 %v9160, %v9148
    %v10073 = vpack.c.b16 %v9173, %v9161
    %v10074 = vpack.c.b16 %v9174, %v9162
    %v10075 = vpack.c.b16 %v9175, %v9163
    %v10076 = vpack.c.b16 %v9176, %v9164
    %v10077 = vpack.c.b16 %v9177, %v9165
    %v10078 = vpack.c.b16 %v9178, %v9166
    %v10079 = vpack.c.b16 %v9179, %v9167
    %v10080 = vpack.c.b16 %v9180, %v9168
    %v10081 = vpack.c.b16 %v9181, %v9169
    %v10082 = vpack.c.b16 %v9182, %v9170
    %v10083 = vpack.c.b16 %v9183, %v9171
    %v10084 = vpack.c.b16 %v9184, %v9172
    %v10085 = vpack.c.b16 %v9197, %v9185
    %v10086 = vpack.c.b16 %v9198, %v9186
    %v10087 = vpack.c.b16 %v9199, %v9187
    %v10088 = vpack.c.b16 %v9200, %v9188
    %v10089 = vpack.c.b16 %v9201, %v9189
    %v10090 = vpack.c.b16 %v9202, %v9190
    %v10091 = vpack.c.b16 %v9203, %v9191
    %v10092 = vpack.c.b16 %v9204, %v9192
    %v10093 = vpack.c.b16 %v9205, %v9193
    %v10094 = vpack.c.b16 %v9206, %v9194
    %v10095 = vpack.c.b16 %v9207, %v9195
    %v10096 = vpack.c.b16 %v9208, %v9196
    %v10097 = vpack.c.b16 %v9221, %v9209
    %v10098 = vpack.c.b16 %v9222, %v9210
    %v10099 = vpack.c.b16 %v9223, %v9211
    %v10100 = vpack.c.b16 %v9224, %v9212
    %v10101 = vpack.c.b16 %v9225, %v9213
    %v10102 = vpack.c.b16 %v9226, %v9214
    %v10103 = vpack.c.b16 %v9227, %v9215
    %v10104 = vpack.c.b16 %v9228, %v9216
    %v10105 = vpack.c.b16 %v9229, %v9217
    %v10106 = vpack.c.b16 %v9230, %v9218
    %v10107 = vpack.c.b16 %v9231, %v9219
    %v10108 = vpack.c.b16 %v9232, %v9220
    %v10109 = vpack.c.b16 %v9245, %v9233
    %v10110 = vpack.c.b16 %v9246, %v9234
    %v10111 = vpack.c.b16 %v9247, %v9235
    %v10112 = vpack.c.b16 %v9248, %v9236
    %v10113 = vpack.c.b16 %v9249, %v9237
    %v10114 = vpack.c.b16 %v9250, %v9238
    %v10115 = vpack.c.b16 %v9251, %v9239
    %v10116 = vpack.c.b16 %v9252, %v9240
    %v10117 = vpack.c.b16 %v9253, %v9241
    %v10118 = vpack.c.b16 %v9254, %v9242
    %v10119 = vpack.c.b16 %v9255, %v9243
    %v10120 = vpack.c.b16 %v9256, %v9244
    %v10121 = vpack.c.b16 %v9269, %v9257
    %v10122 = vpack.c.b16 %v9270, %v9258
    %v10123 = vpack.c.b16 %v9271, %v9259
    %v10124 = vpack.c.b16 %v9272, %v9260
    %v10125 = vpack.c.b16 %v9273, %v9261
    %v10126 = vpack.c.b16 %v9274, %v9262
    %v10127 = vpack.c.b16 %v9275, %v9263
    %v10128 = vpack.c.b16 %v9276, %v9264
    %v10129 = vpack.c.b16 %v9277, %v9265
    %v10130 = vpack.c.b16 %v9278, %v9266
    %v10131 = vpack.c.b16 %v9279, %v9267
    %v10132 = vpack.c.b16 %v9280, %v9268
    %v10133 = vpack.c.b16 %v9293, %v9281
    %v10134 = vpack.c.b16 %v9294, %v9282
    %v10135 = vpack.c.b16 %v9295, %v9283
    %v10136 = vpack.c.b16 %v9296, %v9284
    %v10137 = vpack.c.b16 %v9297, %v9285
    %v10138 = vpack.c.b16 %v9298, %v9286
    %v10139 = vpack.c.b16 %v9299, %v9287
    %v10140 = vpack.c.b16 %v9300, %v9288
    %v10141 = vpack.c.b16 %v9301, %v9289
    %v10142 = vpack.c.b16 %v9302, %v9290
    %v10143 = vpack.c.b16 %v9303, %v9291
    %v10144 = vpack.c.b16 %v9304, %v9292
    %v10145 = vpack.c.b16 %v9317, %v9305
    %v10146 = vpack.c.b16 %v9318, %v9306
    %v10147 = vpack.c.b16 %v9319, %v9307
    %v10148 = vpack.c.b16 %v9320, %v9308
    %v10149 = vpack.c.b16 %v9321, %v9309
    %v10150 = vpack.c.b16 %v9322, %v9310
    %v10151 = vpack.c.b16 %v9323, %v9311
    %v10152 = vpack.c.b16 %v9324, %v9312
    %v10153 = vpack.c.b16 %v9325, %v9313
    %v10154 = vpack.c.b16 %v9326, %v9314
    %v10155 = vpack.c.b16 %v9327, %v9315
    %v10156 = vpack.c.b16 %v9328, %v9316
    %v10157 = vpack.c.b16 %v9341, %v9329
    %v10158 = vpack.c.b16 %v9342, %v9330
    %v10159 = vpack.c.b16 %v9343, %v9331
    %v10160 = vpack.c.b16 %v9344, %v9332
    %v10161 = vpack.c.b16 %v9345, %v9333
    %v10162 = vpack.c.b16 %v9346, %v9334
    %v10163 = vpack.c.b16 %v9347, %v9335
    %v10164 = vpack.c.b16 %v9348, %v9336
    %v10165 = vpack.c.b16 %v9349, %v9337
    %v10166 = vpack.c.b16 %v9350, %v9338
    %v10167 = vpack.c.b16 %v9351, %v9339
    %v10168 = vpack.c.b16 %v9352, %v9340
    %v10169 = vpack.c.b16 %v9365, %v9353
    %v10170 = vpack.c.b16 %v9366, %v9354
    %v10171 = vpack.c.b16 %v9367, %v9355
    %v10172 = vpack.c.b16 %v9368, %v9356
    %v10173 = vpack.c.b16 %v9369, %v9357
    %v10174 = vpack.c.b16 %v9370, %v9358
    %v10175 = vpack.c.b16 %v9371, %v9359
    %v10176 = vpack.c.b16 %v9372, %v9360
    %v10177 = vpack.c.b16 %v9373, %v9361
    %v10178 = vpack.c.b16 %v9374, %v9362
    %v10179 = vpack.c.b16 %v9375, %v9363
    %v10180 = vpack.c.b16 %v9376, %v9364
    %v10181 = vpack.c.b16 %v9389, %v9377
    %v10182 = vpack.c.b16 %v9390, %v9378
    %v10183 = vpack.c.b16 %v9391, %v9379
    %v10184 = vpack.c.b16 %v9392, %v9380
    %v10185 = vpack.c.b16 %v9393, %v9381
    %v10186 = vpack.c.b16 %v9394, %v9382
    %v10187 = vpack.c.b16 %v9395, %v9383
    %v10188 = vpack.c.b16 %v9396, %v9384
    %v10189 = vpack.c.b16 %v9397, %v9385
    %v10190 = vpack.c.b16 %v9398, %v9386
    %v10191 = vpack.c.b16 %v9399, %v9387
    %v10192 = vpack.c.b16 %v9400, %v9388
    %v10193 = vpack.c.b16 %v9413, %v9401
    %v10194 = vpack.c.b16 %v9414, %v9402
    %v10195 = vpack.c.b16 %v9415, %v9403
    %v10196 = vpack.c.b16 %v9416, %v9404
    %v10197 = vpack.c.b16 %v9417, %v9405
    %v10198 = vpack.c.b16 %v9418, %v9406
    %v10199 = vpack.c.b16 %v9419, %v9407
    %v10200 = vpack.c.b16 %v9420, %v9408
    %v10201 = vpack.c.b16 %v9421, %v9409
    %v10202 = vpack.c.b16 %v9422, %v9410
    %v10203 = vpack.c.b16 %v9423, %v9411
    %v10204 = vpack.c.b16 %v9424, %v9412
    %v10205 = vpack.c.b16 %v9437, %v9425
    %v10206 = vpack.c.b16 %v9438, %v9426
    %v10207 = vpack.c.b16 %v9439, %v9427
    %v10208 = vpack.c.b16 %v9440, %v9428
    %v10209 = vpack.c.b16 %v9441, %v9429
    %v10210 = vpack.c.b16 %v9442, %v9430
    %v10211 = vpack.c.b16 %v9443, %v9431
    %v10212 = vpack.c.b16 %v9444, %v9432
    %v10213 = vpack.c.b16 %v9445, %v9433
    %v10214 = vpack.c.b16 %v9446, %v9434
    %v10215 = vpack.c.b16 %v9447, %v9435
    %v10216 = vpack.c.b16 %v9448, %v9436
    %v10217 = vpack.c.b16 %v9461, %v9449
    %v10218 = vpack.c.b16 %v9462, %v9450
    %v10219 = vpack.c.b16 %v9463, %v9451
    %v10220 = vpack.c.b16 %v9464, %v9452
    %v10221 = vpack.c.b16 %v9465, %v9453
    %v10222 = vpack.c.b16 %v9466, %v9454
    %v10223 = vpack.c.b16 %v9467, %v9455
    %v10224 = vpack.c.b16 %v9468, %v9456
    %v10225 = vpack.c.b16 %v9469, %v9457
    %v10226 = vpack.c.b16 %v9470, %v9458
    %v10227 = vpack.c.b16 %v9471, %v9459
    %v10228 = vpack.c.b16 %v9472, %v9460
    %v10229 = vpack.c.b16 %v9485, %v9473
    %v10230 = vpack.c.b16 %v9486, %v9474
    %v10231 = vpack.c.b16 %v9487, %v9475
    %v10232 = vpack.c.b16 %v9488, %v9476
    %v10233 = vpack.c.b16 %v9489, %v9477
    %v10234 = vpack.c.b16 %v9490, %v9478
    %v10235 = vpack.c.b16 %v9491, %v9479
    %v10236 = vpack.c.b16 %v9492, %v9480
    %v10237 = vpack.c.b16 %v9493, %v9481
    %v10238 = vpack.c.b16 %v9494, %v9482
    %v10239 = vpack.c.b16 %v9495, %v9483
    %v10240 = vpack.c.b16 %v9496, %v9484
    %v10241 = vpack.c.b16 %v9509, %v9497
    %v10242 = vpack.c.b16 %v9510, %v9498
    %v10243 = vpack.c.b16 %v9511, %v9499
    %v10244 = vpack.c.b16 %v9512, %v9500
    %v10245 = vpack.c.b16 %v9513, %v9501
    %v10246 = vpack.c.b16 %v9514, %v9502
    %v10247 = vpack.c.b16 %v9515, %v9503
    %v10248 = vpack.c.b16 %v9516, %v9504
    %v10249 = vpack.c.b16 %v9517, %v9505
    %v10250 = vpack.c.b16 %v9518, %v9506
    %v10251 = vpack.c.b16 %v9519, %v9507
    %v10252 = vpack.c.b16 %v9520, %v9508
    %v10253 = vpack.c.b16 %v9533, %v9521
    %v10254 = vpack.c.b16 %v9534, %v9522
    %v10255 = vpack.c.b16 %v9535, %v9523
    %v10256 = vpack.c.b16 %v9536, %v9524
    %v10257 = vpack.c.b16 %v9537, %v9525
    %v10258 = vpack.c.b16 %v9538, %v9526
    %v10259 = vpack.c.b16 %v9539, %v9527
    %v10260 = vpack.c.b16 %v9540, %v9528
    %v10261 = vpack.c.b16 %v9541, %v9529
    %v10262 = vpack.c.b16 %v9542, %v9530
    %v10263 = vpack.c.b16 %v9543, %v9531
    %v10264 = vpack.c.b16 %v9544, %v9532
    %v10265 = vpack.c.b16 %v9557, %v9545
    %v10266 = vpack.c.b16 %v9558, %v9546
    %v10267 = vpack.c.b16 %v9559, %v9547
    %v10268 = vpack.c.b16 %v9560, %v9548
    %v10269 = vpack.c.b16 %v9561, %v9549
    %v10270 = vpack.c.b16 %v9562, %v9550
    %v10271 = vpack.c.b16 %v9563, %v9551
    %v10272 = vpack.c.b16 %v9564, %v9552
    %v10273 = vpack.c.b16 %v9565, %v9553
    %v10274 = vpack.c.b16 %v9566, %v9554
    %v10275 = vpack.c.b16 %v9567, %v9555
    %v10276 = vpack.c.b16 %v9568, %v9556
    %v10277 = vpack.c.b16 %v9581, %v9569
    %v10278 = vpack.c.b16 %v9582, %v9570
    %v10279 = vpack.c.b16 %v9583, %v9571
    %v10280 = vpack.c.b16 %v9584, %v9572
    %v10281 = vpack.c.b16 %v9585, %v9573
    %v10282 = vpack.c.b16 %v9586, %v9574
    %v10283 = vpack.c.b16 %v9587, %v9575
    %v10284 = vpack.c.b16 %v9588, %v9576
    %v10285 = vpack.c.b16 %v9589, %v9577
    %v10286 = vpack.c.b16 %v9590, %v9578
    %v10287 = vpack.c.b16 %v9591, %v9579
    %v10288 = vpack.c.b16 %v9592, %v9580
    %v10289 = vpack.c.b16 %v9605, %v9593
    %v10290 = vpack.c.b16 %v9606, %v9594
    %v10291 = vpack.c.b16 %v9607, %v9595
    %v10292 = vpack.c.b16 %v9608, %v9596
    %v10293 = vpack.c.b16 %v9609, %v9597
    %v10294 = vpack.c.b16 %v9610, %v9598
    %v10295 = vpack.c.b16 %v9611, %v9599
    %v10296 = vpack.c.b16 %v9612, %v9600
    %v10297 = vpack.c.b16 %v9613, %v9601
    %v10298 = vpack.c.b16 %v9614, %v9602
    %v10299 = vpack.c.b16 %v9615, %v9603
    %v10300 = vpack.c.b16 %v9616, %v9604
    %v10301 = vpack.c.b16 %v9629, %v9617
    %v10302 = vpack.c.b16 %v9630, %v9618
    %v10303 = vpack.c.b16 %v9631, %v9619
    %v10304 = vpack.c.b16 %v9632, %v9620
    %v10305 = vpack.c.b16 %v9633, %v9621
    %v10306 = vpack.c.b16 %v9634, %v9622
    %v10307 = vpack.c.b16 %v9635, %v9623
    %v10308 = vpack.c.b16 %v9636, %v9624
    %v10309 = vpack.c.b16 %v9637, %v9625
    %v10310 = vpack.c.b16 %v9638, %v9626
    %v10311 = vpack.c.b16 %v9639, %v9627
    %v10312 = vpack.c.b16 %v9640, %v9628
    %v10313 = vpack.c.b16 %v9653, %v9641
    %v10314 = vpack.c.b16 %v9654, %v9642
    %v10315 = vpack.c.b16 %v9655, %v9643
    %v10316 = vpack.c.b16 %v9656, %v9644
    %v10317 = vpack.c.b16 %v9657, %v9645
    %v10318 = vpack.c.b16 %v9658, %v9646
    %v10319 = vpack.c.b16 %v9659, %v9647
    %v10320 = vpack.c.b16 %v9660, %v9648
    %v10321 = vpack.c.b16 %v9661, %v9649
    %v10322 = vpack.c.b16 %v9662, %v9650
    %v10323 = vpack.c.b16 %v9663, %v9651
    %v10324 = vpack.c.b16 %v9664, %v9652
    %v10325 = vpack.c.b16 %v9677, %v9665
    %v10326 = vpack.c.b16 %v9678, %v9666
    %v10327 = vpack.c.b16 %v9679, %v9667
    %v10328 = vpack.c.b16 %v9680, %v9668
    %v10329 = vpack.c.b16 %v9681, %v9669
    %v10330 = vpack.c.b16 %v9682, %v9670
    %v10331 = vpack.c.b16 %v9683, %v9671
    %v10332 = vpack.c.b16 %v9684, %v9672
    %v10333 = vpack.c.b16 %v9685, %v9673
    %v10334 = vpack.c.b16 %v9686, %v9674
    %v10335 = vpack.c.b16 %v9687, %v9675
    %v10336 = vpack.c.b16 %v9688, %v9676
    %v10337 = vpack.c.b16 %v9701, %v9689
    %v10338 = vpack.c.b16 %v9702, %v9690
    %v10339 = vpack.c.b16 %v9703, %v9691
    %v10340 = vpack.c.b16 %v9704, %v9692
    %v10341 = vpack.c.b16 %v9705, %v9693
    %v10342 = vpack.c.b16 %v9706, %v9694
    %v10343 = vpack.c.b16 %v9707, %v9695
    %v10344 = vpack.c.b16 %v9708, %v9696
    %v10345 = vpack.c.b16 %v9709, %v9697
    %v10346 = vpack.c.b16 %v9710, %v9698
    %v10347 = vpack.c.b16 %v9711, %v9699
    %v10348 = vpack.c.b16 %v9712, %v9700
    %v10349 = vpack.c.b16 %v9725, %v9713
    %v10350 = vpack.c.b16 %v9726, %v9714
    %v10351 = vpack.c.b16 %v9727, %v9715
    %v10352 = vpack.c.b16 %v9728, %v9716
    %v10353 = vpack.c.b16 %v9729, %v9717
    %v10354 = vpack.c.b16 %v9730, %v9718
    %v10355 = vpack.c.b16 %v9731, %v9719
    %v10356 = vpack.c.b16 %v9732, %v9720
    %v10357 = vpack.c.b16 %v9733, %v9721
    %v10358 = vpack.c.b16 %v9734, %v9722
    %v10359 = vpack.c.b16 %v9735, %v9723
    %v10360 = vpack.c.b16 %v9736, %v9724
    %v10361 = vpack.c.b16 %v9749, %v9737
    %v10362 = vpack.c.b16 %v9750, %v9738
    %v10363 = vpack.c.b16 %v9751, %v9739
    %v10364 = vpack.c.b16 %v9752, %v9740
    %v10365 = vpack.c.b16 %v9753, %v9741
    %v10366 = vpack.c.b16 %v9754, %v9742
    %v10367 = vpack.c.b16 %v9755, %v9743
    %v10368 = vpack.c.b16 %v9756, %v9744
    %v10369 = vpack.c.b16 %v9757, %v9745
    %v10370 = vpack.c.b16 %v9758, %v9746
    %v10371 = vpack.c.b16 %v9759, %v9747
    %v10372 = vpack.c.b16 %v9760, %v9748
    %v10373 = vpack.c.b16 %v9773, %v9761
    %v10374 = vpack.c.b16 %v9774, %v9762
    %v10375 = vpack.c.b16 %v9775, %v9763
    %v10376 = vpack.c.b16 %v9776, %v9764
    %v10377 = vpack.c.b16 %v9777, %v9765
    %v10378 = vpack.c.b16 %v9778, %v9766
    %v10379 = vpack.c.b16 %v9779, %v9767
    %v10380 = vpack.c.b16 %v9780, %v9768
    %v10381 = vpack.c.b16 %v9781, %v9769
    %v10382 = vpack.c.b16 %v9782, %v9770
    %v10383 = vpack.c.b16 %v9783, %v9771
    %v10384 = vpack.c.b16 %v9784, %v9772
    %v10385 = vpack.c.b16 %v9797, %v9785
    %v10386 = vpack.c.b16 %v9798, %v9786
    %v10387 = vpack.c.b16 %v9799, %v9787
    %v10388 = vpack.c.b16 %v9800, %v9788
    %v10389 = vpack.c.b16 %v9801, %v9789
    %v10390 = vpack.c.b16 %v9802, %v9790
    %v10391 = vpack.c.b16 %v9803, %v9791
    %v10392 = vpack.c.b16 %v9804, %v9792
    %v10393 = vpack.c.b16 %v9805, %v9793
    %v10394 = vpack.c.b16 %v9806, %v9794
    %v10395 = vpack.c.b16 %v9807, %v9795
    %v10396 = vpack.c.b16 %v9808, %v9796
    %v10397 = vpack.c.b16 %v9821, %v9809
    %v10398 = vpack.c.b16 %v9822, %v9810
    %v10399 = vpack.c.b16 %v9823, %v9811
    %v10400 = vpack.c.b16 %v9824, %v9812
    %v10401 = vpack.c.b16 %v9825, %v9813
    %v10402 = vpack.c.b16 %v9826, %v9814
    %v10403 = vpack.c.b16 %v9827, %v9815
    %v10404 = vpack.c.b16 %v9828, %v9816
    %v10405 = vpack.c.b16 %v9829, %v9817
    %v10406 = vpack.c.b16 %v9830, %v9818
    %v10407 = vpack.c.b16 %v9831, %v9819
    %v10408 = vpack.c.b16 %v9832, %v9820
    %10985 = vmatpush.bf16.msra.mxu0 %v9917
    %10986 = vmatpush.bf16.msra.mxu0 %v9905
    %10987 = vmatpush.bf16.msra.mxu0 %v9893
    %10988 = vmatpush.bf16.msra.mxu0 %v9881
    %10989 = vmatpush.bf16.msra.mxu0 %v9869
    %10990 = vmatpush.bf16.msra.mxu0 %v9857
    %10991 = vmatpush.bf16.msra.mxu0 %v9845
    %10992 = vmatpush.bf16.msra.mxu0 %v9833
    %10993 = vmatmul.bf16.gmra.mxu0 %v7495
    %v10994 = vpop.f32.mrf.mxu0
    %v10995 = vadd.f32 %v8081, %v10994
    %v10996 = vpop.f32.mrf.mxu0
    %10997 = vdwg.mxu0
    %10998 = vmatpush.bf16.msra.mxu0 %v10013
    %10999 = vmatpush.bf16.msra.mxu0 %v10001
    %11000 = vmatpush.bf16.msra.mxu0 %v9989
    %11001 = vmatpush.bf16.msra.mxu0 %v9977
    %11002 = vmatpush.bf16.msra.mxu0 %v9965
    %11003 = vmatpush.bf16.msra.mxu0 %v9953
    %11004 = vmatpush.bf16.msra.mxu0 %v9941
    %11005 = vmatpush.bf16.msra.mxu0 %v9929
    %11006 = vmatmul.bf16.gmra.mxu0 %v7496
    %v11007 = vpop.f32.mrf.mxu0
    %v11008 = vadd.f32 %v10995, %v11007
    %v11009 = vpop.f32.mrf.mxu0
    %11010 = vdwg.mxu0
    %11011 = vmatpush.bf16.msra.mxu0 %v10109
    %11012 = vmatpush.bf16.msra.mxu0 %v10097
    %11013 = vmatpush.bf16.msra.mxu0 %v10085
    %11014 = vmatpush.bf16.msra.mxu0 %v10073
    %11015 = vmatpush.bf16.msra.mxu0 %v10061
    %11016 = vmatpush.bf16.msra.mxu0 %v10049
    %11017 = vmatpush.bf16.msra.mxu0 %v10037
    %11018 = vmatpush.bf16.msra.mxu0 %v10025
    %11019 = vmatmul.bf16.gmra.mxu0 %v7497
    %v11020 = vpop.f32.mrf.mxu0
    %v11021 = vadd.f32 %v11008, %v11020
    %v11022 = vpop.f32.mrf.mxu0
    %11023 = vdwg.mxu0
    %11024 = vmatpush.bf16.msra.mxu0 %v10205
    %11025 = vmatpush.bf16.msra.mxu0 %v10193
    %11026 = vmatpush.bf16.msra.mxu0 %v10181
    %11027 = vmatpush.bf16.msra.mxu0 %v10169
    %11028 = vmatpush.bf16.msra.mxu0 %v10157
    %11029 = vmatpush.bf16.msra.mxu0 %v10145
    %11030 = vmatpush.bf16.msra.mxu0 %v10133
    %11031 = vmatpush.bf16.msra.mxu0 %v10121
    %11032 = vmatmul.bf16.gmra.mxu0 %v7498
    %v11033 = vpop.f32.mrf.mxu0
    %v11034 = vadd.f32 %v11021, %v11033
    %v11035 = vpop.f32.mrf.mxu0
    %11036 = vdwg.mxu0
    %11037 = vmatpush.bf16.msra.mxu0 %v10301
    %11038 = vmatpush.bf16.msra.mxu0 %v10289
    %11039 = vmatpush.bf16.msra.mxu0 %v10277
    %11040 = vmatpush.bf16.msra.mxu0 %v10265
    %11041 = vmatpush.bf16.msra.mxu0 %v10253
    %11042 = vmatpush.bf16.msra.mxu0 %v10241
    %11043 = vmatpush.bf16.msra.mxu0 %v10229
    %11044 = vmatpush.bf16.msra.mxu0 %v10217
    %11045 = vmatmul.bf16.gmra.mxu0 %v7499
    %v11046 = vpop.f32.mrf.mxu0
    %v11047 = vadd.f32 %v11034, %v11046
    %v11048 = vpop.f32.mrf.mxu0
    %11049 = vdwg.mxu0
    %11050 = vmatpush.bf16.msra.mxu0 %v10397
    %11051 = vmatpush.bf16.msra.mxu0 %v10385
    %11052 = vmatpush.bf16.msra.mxu0 %v10373
    %11053 = vmatpush.bf16.msra.mxu0 %v10361
    %11054 = vmatpush.bf16.msra.mxu0 %v10349
    %11055 = vmatpush.bf16.msra.mxu0 %v10337
    %11056 = vmatpush.bf16.msra.mxu0 %v10325
    %11057 = vmatpush.bf16.msra.mxu0 %v10313
    %11058 = vmatmul.bf16.gmra.mxu0 %v7500
    %v11059 = vpop.f32.mrf.mxu0
    %v11060 = vadd.f32 %v11047, %v11059
    %v11061 = vpop.f32.mrf.mxu0
    %11062 = vdwg.mxu0
    %11063 = vmatpush.bf16.msra.mxu0 %v9918
    %11064 = vmatpush.bf16.msra.mxu0 %v9906
    %11065 = vmatpush.bf16.msra.mxu0 %v9894
    %11066 = vmatpush.bf16.msra.mxu0 %v9882
    %11067 = vmatpush.bf16.msra.mxu0 %v9870
    %11068 = vmatpush.bf16.msra.mxu0 %v9858
    %11069 = vmatpush.bf16.msra.mxu0 %v9846
    %11070 = vmatpush.bf16.msra.mxu0 %v9834
    %11071 = vmatmul.bf16.gmra.mxu0 %v7495
    %v11072 = vpop.f32.mrf.mxu0
    %v11073 = vadd.f32 %v8082, %v11072
    %v11074 = vpop.f32.mrf.mxu0
    %11075 = vdwg.mxu0
    %11076 = vmatpush.bf16.msra.mxu0 %v10014
    %11077 = vmatpush.bf16.msra.mxu0 %v10002
    %11078 = vmatpush.bf16.msra.mxu0 %v9990
    %11079 = vmatpush.bf16.msra.mxu0 %v9978
    %11080 = vmatpush.bf16.msra.mxu0 %v9966
    %11081 = vmatpush.bf16.msra.mxu0 %v9954
    %11082 = vmatpush.bf16.msra.mxu0 %v9942
    %11083 = vmatpush.bf16.msra.mxu0 %v9930
    %11084 = vmatmul.bf16.gmra.mxu0 %v7496
    %v11085 = vpop.f32.mrf.mxu0
    %v11086 = vadd.f32 %v11073, %v11085
    %v11087 = vpop.f32.mrf.mxu0
    %11088 = vdwg.mxu0
    %11089 = vmatpush.bf16.msra.mxu0 %v10110
    %11090 = vmatpush.bf16.msra.mxu0 %v10098
    %11091 = vmatpush.bf16.msra.mxu0 %v10086
    %11092 = vmatpush.bf16.msra.mxu0 %v10074
    %11093 = vmatpush.bf16.msra.mxu0 %v10062
    %11094 = vmatpush.bf16.msra.mxu0 %v10050
    %11095 = vmatpush.bf16.msra.mxu0 %v10038
    %11096 = vmatpush.bf16.msra.mxu0 %v10026
    %11097 = vmatmul.bf16.gmra.mxu0 %v7497
    %v11098 = vpop.f32.mrf.mxu0
    %v11099 = vadd.f32 %v11086, %v11098
    %v11100 = vpop.f32.mrf.mxu0
    %11101 = vdwg.mxu0
    %11102 = vmatpush.bf16.msra.mxu0 %v10206
    %11103 = vmatpush.bf16.msra.mxu0 %v10194
    %11104 = vmatpush.bf16.msra.mxu0 %v10182
    %11105 = vmatpush.bf16.msra.mxu0 %v10170
    %11106 = vmatpush.bf16.msra.mxu0 %v10158
    %11107 = vmatpush.bf16.msra.mxu0 %v10146
    %11108 = vmatpush.bf16.msra.mxu0 %v10134
    %11109 = vmatpush.bf16.msra.mxu0 %v10122
    %11110 = vmatmul.bf16.gmra.mxu0 %v7498
    %v11111 = vpop.f32.mrf.mxu0
    %v11112 = vadd.f32 %v11099, %v11111
    %v11113 = vpop.f32.mrf.mxu0
    %11114 = vdwg.mxu0
    %11115 = vmatpush.bf16.msra.mxu0 %v10302
    %11116 = vmatpush.bf16.msra.mxu0 %v10290
    %11117 = vmatpush.bf16.msra.mxu0 %v10278
    %11118 = vmatpush.bf16.msra.mxu0 %v10266
    %11119 = vmatpush.bf16.msra.mxu0 %v10254
    %11120 = vmatpush.bf16.msra.mxu0 %v10242
    %11121 = vmatpush.bf16.msra.mxu0 %v10230
    %11122 = vmatpush.bf16.msra.mxu0 %v10218
    %11123 = vmatmul.bf16.gmra.mxu0 %v7499
    %v11124 = vpop.f32.mrf.mxu0
    %v11125 = vadd.f32 %v11112, %v11124
    %v11126 = vpop.f32.mrf.mxu0
    %11127 = vdwg.mxu0
    %11128 = vmatpush.bf16.msra.mxu0 %v10398
    %11129 = vmatpush.bf16.msra.mxu0 %v10386
    %11130 = vmatpush.bf16.msra.mxu0 %v10374
    %11131 = vmatpush.bf16.msra.mxu0 %v10362
    %11132 = vmatpush.bf16.msra.mxu0 %v10350
    %11133 = vmatpush.bf16.msra.mxu0 %v10338
    %11134 = vmatpush.bf16.msra.mxu0 %v10326
    %11135 = vmatpush.bf16.msra.mxu0 %v10314
    %11136 = vmatmul.bf16.gmra.mxu0 %v7500
    %v11137 = vpop.f32.mrf.mxu0
    %v11138 = vadd.f32 %v11125, %v11137
    %v11139 = vpop.f32.mrf.mxu0
    %11140 = vdwg.mxu0
    %11141 = vmatpush.bf16.msra.mxu0 %v9919
    %11142 = vmatpush.bf16.msra.mxu0 %v9907
    %11143 = vmatpush.bf16.msra.mxu0 %v9895
    %11144 = vmatpush.bf16.msra.mxu0 %v9883
    %11145 = vmatpush.bf16.msra.mxu0 %v9871
    %11146 = vmatpush.bf16.msra.mxu0 %v9859
    %11147 = vmatpush.bf16.msra.mxu0 %v9847
    %11148 = vmatpush.bf16.msra.mxu0 %v9835
    %11149 = vmatmul.bf16.gmra.mxu0 %v7495
    %v11150 = vpop.f32.mrf.mxu0
    %v11151 = vadd.f32 %v8083, %v11150
    %v11152 = vpop.f32.mrf.mxu0
    %11153 = vdwg.mxu0
    %11154 = vmatpush.bf16.msra.mxu0 %v10015
    %11155 = vmatpush.bf16.msra.mxu0 %v10003
    %11156 = vmatpush.bf16.msra.mxu0 %v9991
    %11157 = vmatpush.bf16.msra.mxu0 %v9979
    %11158 = vmatpush.bf16.msra.mxu0 %v9967
    %11159 = vmatpush.bf16.msra.mxu0 %v9955
    %11160 = vmatpush.bf16.msra.mxu0 %v9943
    %11161 = vmatpush.bf16.msra.mxu0 %v9931
    %11162 = vmatmul.bf16.gmra.mxu0 %v7496
    %v11163 = vpop.f32.mrf.mxu0
    %v11164 = vadd.f32 %v11151, %v11163
    %v11165 = vpop.f32.mrf.mxu0
    %11166 = vdwg.mxu0
    %11167 = vmatpush.bf16.msra.mxu0 %v10111
    %11168 = vmatpush.bf16.msra.mxu0 %v10099
    %11169 = vmatpush.bf16.msra.mxu0 %v10087
    %11170 = vmatpush.bf16.msra.mxu0 %v10075
    %11171 = vmatpush.bf16.msra.mxu0 %v10063
    %11172 = vmatpush.bf16.msra.mxu0 %v10051
    %11173 = vmatpush.bf16.msra.mxu0 %v10039
    %11174 = vmatpush.bf16.msra.mxu0 %v10027
    %11175 = vmatmul.bf16.gmra.mxu0 %v7497
    %v11176 = vpop.f32.mrf.mxu0
    %v11177 = vadd.f32 %v11164, %v11176
    %v11178 = vpop.f32.mrf.mxu0
    %11179 = vdwg.mxu0
    %11180 = vmatpush.bf16.msra.mxu0 %v10207
    %11181 = vmatpush.bf16.msra.mxu0 %v10195
    %11182 = vmatpush.bf16.msra.mxu0 %v10183
    %11183 = vmatpush.bf16.msra.mxu0 %v10171
    %11184 = vmatpush.bf16.msra.mxu0 %v10159
    %11185 = vmatpush.bf16.msra.mxu0 %v10147
    %11186 = vmatpush.bf16.msra.mxu0 %v10135
    %11187 = vmatpush.bf16.msra.mxu0 %v10123
    %11188 = vmatmul.bf16.gmra.mxu0 %v7498
    %v11189 = vpop.f32.mrf.mxu0
    %v11190 = vadd.f32 %v11177, %v11189
    %v11191 = vpop.f32.mrf.mxu0
    %11192 = vdwg.mxu0
    %11193 = vmatpush.bf16.msra.mxu0 %v10303
    %11194 = vmatpush.bf16.msra.mxu0 %v10291
    %11195 = vmatpush.bf16.msra.mxu0 %v10279
    %11196 = vmatpush.bf16.msra.mxu0 %v10267
    %11197 = vmatpush.bf16.msra.mxu0 %v10255
    %11198 = vmatpush.bf16.msra.mxu0 %v10243
    %11199 = vmatpush.bf16.msra.mxu0 %v10231
    %11200 = vmatpush.bf16.msra.mxu0 %v10219
    %11201 = vmatmul.bf16.gmra.mxu0 %v7499
    %v11202 = vpop.f32.mrf.mxu0
    %v11203 = vadd.f32 %v11190, %v11202
    %v11204 = vpop.f32.mrf.mxu0
    %11205 = vdwg.mxu0
    %11206 = vmatpush.bf16.msra.mxu0 %v10399
    %11207 = vmatpush.bf16.msra.mxu0 %v10387
    %11208 = vmatpush.bf16.msra.mxu0 %v10375
    %11209 = vmatpush.bf16.msra.mxu0 %v10363
    %11210 = vmatpush.bf16.msra.mxu0 %v10351
    %11211 = vmatpush.bf16.msra.mxu0 %v10339
    %11212 = vmatpush.bf16.msra.mxu0 %v10327
    %11213 = vmatpush.bf16.msra.mxu0 %v10315
    %11214 = vmatmul.bf16.gmra.mxu0 %v7500
    %v11215 = vpop.f32.mrf.mxu0
    %v11216 = vadd.f32 %v11203, %v11215
    %v11217 = vpop.f32.mrf.mxu0
    %11218 = vdwg.mxu0
    %11219 = vmatpush.bf16.msra.mxu0 %v9920
    %11220 = vmatpush.bf16.msra.mxu0 %v9908
    %11221 = vmatpush.bf16.msra.mxu0 %v9896
    %11222 = vmatpush.bf16.msra.mxu0 %v9884
    %11223 = vmatpush.bf16.msra.mxu0 %v9872
    %11224 = vmatpush.bf16.msra.mxu0 %v9860
    %11225 = vmatpush.bf16.msra.mxu0 %v9848
    %11226 = vmatpush.bf16.msra.mxu0 %v9836
    %11227 = vmatmul.bf16.gmra.mxu0 %v7495
    %v11228 = vpop.f32.mrf.mxu0
    %v11229 = vadd.f32 %v8084, %v11228
    %v11230 = vpop.f32.mrf.mxu0
    %11231 = vdwg.mxu0
    %11232 = vmatpush.bf16.msra.mxu0 %v10016
    %11233 = vmatpush.bf16.msra.mxu0 %v10004
    %11234 = vmatpush.bf16.msra.mxu0 %v9992
    %11235 = vmatpush.bf16.msra.mxu0 %v9980
    %11236 = vmatpush.bf16.msra.mxu0 %v9968
    %11237 = vmatpush.bf16.msra.mxu0 %v9956
    %11238 = vmatpush.bf16.msra.mxu0 %v9944
    %11239 = vmatpush.bf16.msra.mxu0 %v9932
    %11240 = vmatmul.bf16.gmra.mxu0 %v7496
    %v11241 = vpop.f32.mrf.mxu0
    %v11242 = vadd.f32 %v11229, %v11241
    %v11243 = vpop.f32.mrf.mxu0
    %11244 = vdwg.mxu0
    %11245 = vmatpush.bf16.msra.mxu0 %v10112
    %11246 = vmatpush.bf16.msra.mxu0 %v10100
    %11247 = vmatpush.bf16.msra.mxu0 %v10088
    %11248 = vmatpush.bf16.msra.mxu0 %v10076
    %11249 = vmatpush.bf16.msra.mxu0 %v10064
    %11250 = vmatpush.bf16.msra.mxu0 %v10052
    %11251 = vmatpush.bf16.msra.mxu0 %v10040
    %11252 = vmatpush.bf16.msra.mxu0 %v10028
    %11253 = vmatmul.bf16.gmra.mxu0 %v7497
    %v11254 = vpop.f32.mrf.mxu0
    %v11255 = vadd.f32 %v11242, %v11254
    %v11256 = vpop.f32.mrf.mxu0
    %11257 = vdwg.mxu0
    %11258 = vmatpush.bf16.msra.mxu0 %v10208
    %11259 = vmatpush.bf16.msra.mxu0 %v10196
    %11260 = vmatpush.bf16.msra.mxu0 %v10184
    %11261 = vmatpush.bf16.msra.mxu0 %v10172
    %11262 = vmatpush.bf16.msra.mxu0 %v10160
    %11263 = vmatpush.bf16.msra.mxu0 %v10148
    %11264 = vmatpush.bf16.msra.mxu0 %v10136
    %11265 = vmatpush.bf16.msra.mxu0 %v10124
    %11266 = vmatmul.bf16.gmra.mxu0 %v7498
    %v11267 = vpop.f32.mrf.mxu0
    %v11268 = vadd.f32 %v11255, %v11267
    %v11269 = vpop.f32.mrf.mxu0
    %11270 = vdwg.mxu0
    %11271 = vmatpush.bf16.msra.mxu0 %v10304
    %11272 = vmatpush.bf16.msra.mxu0 %v10292
    %11273 = vmatpush.bf16.msra.mxu0 %v10280
    %11274 = vmatpush.bf16.msra.mxu0 %v10268
    %11275 = vmatpush.bf16.msra.mxu0 %v10256
    %11276 = vmatpush.bf16.msra.mxu0 %v10244
    %11277 = vmatpush.bf16.msra.mxu0 %v10232
    %11278 = vmatpush.bf16.msra.mxu0 %v10220
    %11279 = vmatmul.bf16.gmra.mxu0 %v7499
    %v11280 = vpop.f32.mrf.mxu0
    %v11281 = vadd.f32 %v11268, %v11280
    %v11282 = vpop.f32.mrf.mxu0
    %11283 = vdwg.mxu0
    %11284 = vmatpush.bf16.msra.mxu0 %v10400
    %11285 = vmatpush.bf16.msra.mxu0 %v10388
    %11286 = vmatpush.bf16.msra.mxu0 %v10376
    %11287 = vmatpush.bf16.msra.mxu0 %v10364
    %11288 = vmatpush.bf16.msra.mxu0 %v10352
    %11289 = vmatpush.bf16.msra.mxu0 %v10340
    %11290 = vmatpush.bf16.msra.mxu0 %v10328
    %11291 = vmatpush.bf16.msra.mxu0 %v10316
    %11292 = vmatmul.bf16.gmra.mxu0 %v7500
    %v11293 = vpop.f32.mrf.mxu0
    %v11294 = vadd.f32 %v11281, %v11293
    %v11295 = vpop.f32.mrf.mxu0
    %11296 = vdwg.mxu0
    %11297 = vmatpush.bf16.msra.mxu0 %v9921
    %11298 = vmatpush.bf16.msra.mxu0 %v9909
    %11299 = vmatpush.bf16.msra.mxu0 %v9897
    %11300 = vmatpush.bf16.msra.mxu0 %v9885
    %11301 = vmatpush.bf16.msra.mxu0 %v9873
    %11302 = vmatpush.bf16.msra.mxu0 %v9861
    %11303 = vmatpush.bf16.msra.mxu0 %v9849
    %11304 = vmatpush.bf16.msra.mxu0 %v9837
    %11305 = vmatmul.bf16.gmra.mxu0 %v7495
    %v11306 = vpop.f32.mrf.mxu0
    %v11307 = vadd.f32 %v8085, %v11306
    %v11308 = vpop.f32.mrf.mxu0
    %11309 = vdwg.mxu0
    %11310 = vmatpush.bf16.msra.mxu0 %v10017
    %11311 = vmatpush.bf16.msra.mxu0 %v10005
    %11312 = vmatpush.bf16.msra.mxu0 %v9993
    %11313 = vmatpush.bf16.msra.mxu0 %v9981
    %11314 = vmatpush.bf16.msra.mxu0 %v9969
    %11315 = vmatpush.bf16.msra.mxu0 %v9957
    %11316 = vmatpush.bf16.msra.mxu0 %v9945
    %11317 = vmatpush.bf16.msra.mxu0 %v9933
    %11318 = vmatmul.bf16.gmra.mxu0 %v7496
    %v11319 = vpop.f32.mrf.mxu0
    %v11320 = vadd.f32 %v11307, %v11319
    %v11321 = vpop.f32.mrf.mxu0
    %11322 = vdwg.mxu0
    %11323 = vmatpush.bf16.msra.mxu0 %v10113
    %11324 = vmatpush.bf16.msra.mxu0 %v10101
    %11325 = vmatpush.bf16.msra.mxu0 %v10089
    %11326 = vmatpush.bf16.msra.mxu0 %v10077
    %11327 = vmatpush.bf16.msra.mxu0 %v10065
    %11328 = vmatpush.bf16.msra.mxu0 %v10053
    %11329 = vmatpush.bf16.msra.mxu0 %v10041
    %11330 = vmatpush.bf16.msra.mxu0 %v10029
    %11331 = vmatmul.bf16.gmra.mxu0 %v7497
    %v11332 = vpop.f32.mrf.mxu0
    %v11333 = vadd.f32 %v11320, %v11332
    %v11334 = vpop.f32.mrf.mxu0
    %11335 = vdwg.mxu0
    %11336 = vmatpush.bf16.msra.mxu0 %v10209
    %11337 = vmatpush.bf16.msra.mxu0 %v10197
    %11338 = vmatpush.bf16.msra.mxu0 %v10185
    %11339 = vmatpush.bf16.msra.mxu0 %v10173
    %11340 = vmatpush.bf16.msra.mxu0 %v10161
    %11341 = vmatpush.bf16.msra.mxu0 %v10149
    %11342 = vmatpush.bf16.msra.mxu0 %v10137
    %11343 = vmatpush.bf16.msra.mxu0 %v10125
    %11344 = vmatmul.bf16.gmra.mxu0 %v7498
    %v11345 = vpop.f32.mrf.mxu0
    %v11346 = vadd.f32 %v11333, %v11345
    %v11347 = vpop.f32.mrf.mxu0
    %11348 = vdwg.mxu0
    %11349 = vmatpush.bf16.msra.mxu0 %v10305
    %11350 = vmatpush.bf16.msra.mxu0 %v10293
    %11351 = vmatpush.bf16.msra.mxu0 %v10281
    %11352 = vmatpush.bf16.msra.mxu0 %v10269
    %11353 = vmatpush.bf16.msra.mxu0 %v10257
    %11354 = vmatpush.bf16.msra.mxu0 %v10245
    %11355 = vmatpush.bf16.msra.mxu0 %v10233
    %11356 = vmatpush.bf16.msra.mxu0 %v10221
    %11357 = vmatmul.bf16.gmra.mxu0 %v7499
    %v11358 = vpop.f32.mrf.mxu0
    %v11359 = vadd.f32 %v11346, %v11358
    %v11360 = vpop.f32.mrf.mxu0
    %11361 = vdwg.mxu0
    %11362 = vmatpush.bf16.msra.mxu0 %v10401
    %11363 = vmatpush.bf16.msra.mxu0 %v10389
    %11364 = vmatpush.bf16.msra.mxu0 %v10377
    %11365 = vmatpush.bf16.msra.mxu0 %v10365
    %11366 = vmatpush.bf16.msra.mxu0 %v10353
    %11367 = vmatpush.bf16.msra.mxu0 %v10341
    %11368 = vmatpush.bf16.msra.mxu0 %v10329
    %11369 = vmatpush.bf16.msra.mxu0 %v10317
    %11370 = vmatmul.bf16.gmra.mxu0 %v7500
    %v11371 = vpop.f32.mrf.mxu0
    %v11372 = vadd.f32 %v11359, %v11371
    %v11373 = vpop.f32.mrf.mxu0
    %11374 = vdwg.mxu0
    %11375 = vmatpush.bf16.msra.mxu0 %v9922
    %11376 = vmatpush.bf16.msra.mxu0 %v9910
    %11377 = vmatpush.bf16.msra.mxu0 %v9898
    %11378 = vmatpush.bf16.msra.mxu0 %v9886
    %11379 = vmatpush.bf16.msra.mxu0 %v9874
    %11380 = vmatpush.bf16.msra.mxu0 %v9862
    %11381 = vmatpush.bf16.msra.mxu0 %v9850
    %11382 = vmatpush.bf16.msra.mxu0 %v9838
    %11383 = vmatmul.bf16.gmra.mxu0 %v7495
    %v11384 = vpop.f32.mrf.mxu0
    %v11385 = vadd.f32 %v8086, %v11384
    %v11386 = vpop.f32.mrf.mxu0
    %11387 = vdwg.mxu0
    %11388 = vmatpush.bf16.msra.mxu0 %v10018
    %11389 = vmatpush.bf16.msra.mxu0 %v10006
    %11390 = vmatpush.bf16.msra.mxu0 %v9994
    %11391 = vmatpush.bf16.msra.mxu0 %v9982
    %11392 = vmatpush.bf16.msra.mxu0 %v9970
    %11393 = vmatpush.bf16.msra.mxu0 %v9958
    %11394 = vmatpush.bf16.msra.mxu0 %v9946
    %11395 = vmatpush.bf16.msra.mxu0 %v9934
    %11396 = vmatmul.bf16.gmra.mxu0 %v7496
    %v11397 = vpop.f32.mrf.mxu0
    %v11398 = vadd.f32 %v11385, %v11397
    %v11399 = vpop.f32.mrf.mxu0
    %11400 = vdwg.mxu0
    %11401 = vmatpush.bf16.msra.mxu0 %v10114
    %11402 = vmatpush.bf16.msra.mxu0 %v10102
    %11403 = vmatpush.bf16.msra.mxu0 %v10090
    %11404 = vmatpush.bf16.msra.mxu0 %v10078
    %11405 = vmatpush.bf16.msra.mxu0 %v10066
    %11406 = vmatpush.bf16.msra.mxu0 %v10054
    %11407 = vmatpush.bf16.msra.mxu0 %v10042
    %11408 = vmatpush.bf16.msra.mxu0 %v10030
    %11409 = vmatmul.bf16.gmra.mxu0 %v7497
    %v11410 = vpop.f32.mrf.mxu0
    %v11411 = vadd.f32 %v11398, %v11410
    %v11412 = vpop.f32.mrf.mxu0
    %11413 = vdwg.mxu0
    %11414 = vmatpush.bf16.msra.mxu0 %v10210
    %11415 = vmatpush.bf16.msra.mxu0 %v10198
    %11416 = vmatpush.bf16.msra.mxu0 %v10186
    %11417 = vmatpush.bf16.msra.mxu0 %v10174
    %11418 = vmatpush.bf16.msra.mxu0 %v10162
    %11419 = vmatpush.bf16.msra.mxu0 %v10150
    %11420 = vmatpush.bf16.msra.mxu0 %v10138
    %11421 = vmatpush.bf16.msra.mxu0 %v10126
    %11422 = vmatmul.bf16.gmra.mxu0 %v7498
    %v11423 = vpop.f32.mrf.mxu0
    %v11424 = vadd.f32 %v11411, %v11423
    %v11425 = vpop.f32.mrf.mxu0
    %11426 = vdwg.mxu0
    %11427 = vmatpush.bf16.msra.mxu0 %v10306
    %11428 = vmatpush.bf16.msra.mxu0 %v10294
    %11429 = vmatpush.bf16.msra.mxu0 %v10282
    %11430 = vmatpush.bf16.msra.mxu0 %v10270
    %11431 = vmatpush.bf16.msra.mxu0 %v10258
    %11432 = vmatpush.bf16.msra.mxu0 %v10246
    %11433 = vmatpush.bf16.msra.mxu0 %v10234
    %11434 = vmatpush.bf16.msra.mxu0 %v10222
    %11435 = vmatmul.bf16.gmra.mxu0 %v7499
    %v11436 = vpop.f32.mrf.mxu0
    %v11437 = vadd.f32 %v11424, %v11436
    %v11438 = vpop.f32.mrf.mxu0
    %11439 = vdwg.mxu0
    %11440 = vmatpush.bf16.msra.mxu0 %v10402
    %11441 = vmatpush.bf16.msra.mxu0 %v10390
    %11442 = vmatpush.bf16.msra.mxu0 %v10378
    %11443 = vmatpush.bf16.msra.mxu0 %v10366
    %11444 = vmatpush.bf16.msra.mxu0 %v10354
    %11445 = vmatpush.bf16.msra.mxu0 %v10342
    %11446 = vmatpush.bf16.msra.mxu0 %v10330
    %11447 = vmatpush.bf16.msra.mxu0 %v10318
    %11448 = vmatmul.bf16.gmra.mxu0 %v7500
    %v11449 = vpop.f32.mrf.mxu0
    %v11450 = vadd.f32 %v11437, %v11449
    %v11451 = vpop.f32.mrf.mxu0
    %11452 = vdwg.mxu0
    %11453 = vmatpush.bf16.msra.mxu0 %v9923
    %11454 = vmatpush.bf16.msra.mxu0 %v9911
    %11455 = vmatpush.bf16.msra.mxu0 %v9899
    %11456 = vmatpush.bf16.msra.mxu0 %v9887
    %11457 = vmatpush.bf16.msra.mxu0 %v9875
    %11458 = vmatpush.bf16.msra.mxu0 %v9863
    %11459 = vmatpush.bf16.msra.mxu0 %v9851
    %11460 = vmatpush.bf16.msra.mxu0 %v9839
    %11461 = vmatmul.bf16.gmra.mxu0 %v7495
    %v11462 = vpop.f32.mrf.mxu0
    %v11463 = vadd.f32 %v8087, %v11462
    %v11464 = vpop.f32.mrf.mxu0
    %11465 = vdwg.mxu0
    %11466 = vmatpush.bf16.msra.mxu0 %v10019
    %11467 = vmatpush.bf16.msra.mxu0 %v10007
    %11468 = vmatpush.bf16.msra.mxu0 %v9995
    %11469 = vmatpush.bf16.msra.mxu0 %v9983
    %11470 = vmatpush.bf16.msra.mxu0 %v9971
    %11471 = vmatpush.bf16.msra.mxu0 %v9959
    %11472 = vmatpush.bf16.msra.mxu0 %v9947
    %11473 = vmatpush.bf16.msra.mxu0 %v9935
    %11474 = vmatmul.bf16.gmra.mxu0 %v7496
    %v11475 = vpop.f32.mrf.mxu0
    %v11476 = vadd.f32 %v11463, %v11475
    %v11477 = vpop.f32.mrf.mxu0
    %11478 = vdwg.mxu0
    %11479 = vmatpush.bf16.msra.mxu0 %v10115
    %11480 = vmatpush.bf16.msra.mxu0 %v10103
    %11481 = vmatpush.bf16.msra.mxu0 %v10091
    %11482 = vmatpush.bf16.msra.mxu0 %v10079
    %11483 = vmatpush.bf16.msra.mxu0 %v10067
    %11484 = vmatpush.bf16.msra.mxu0 %v10055
    %11485 = vmatpush.bf16.msra.mxu0 %v10043
    %11486 = vmatpush.bf16.msra.mxu0 %v10031
    %11487 = vmatmul.bf16.gmra.mxu0 %v7497
    %v11488 = vpop.f32.mrf.mxu0
    %v11489 = vadd.f32 %v11476, %v11488
    %v11490 = vpop.f32.mrf.mxu0
    %11491 = vdwg.mxu0
    %11492 = vmatpush.bf16.msra.mxu0 %v10211
    %11493 = vmatpush.bf16.msra.mxu0 %v10199
    %11494 = vmatpush.bf16.msra.mxu0 %v10187
    %11495 = vmatpush.bf16.msra.mxu0 %v10175
    %11496 = vmatpush.bf16.msra.mxu0 %v10163
    %11497 = vmatpush.bf16.msra.mxu0 %v10151
    %11498 = vmatpush.bf16.msra.mxu0 %v10139
    %11499 = vmatpush.bf16.msra.mxu0 %v10127
    %11500 = vmatmul.bf16.gmra.mxu0 %v7498
    %v11501 = vpop.f32.mrf.mxu0
    %v11502 = vadd.f32 %v11489, %v11501
    %v11503 = vpop.f32.mrf.mxu0
    %11504 = vdwg.mxu0
    %11505 = vmatpush.bf16.msra.mxu0 %v10307
    %11506 = vmatpush.bf16.msra.mxu0 %v10295
    %11507 = vmatpush.bf16.msra.mxu0 %v10283
    %11508 = vmatpush.bf16.msra.mxu0 %v10271
    %11509 = vmatpush.bf16.msra.mxu0 %v10259
    %11510 = vmatpush.bf16.msra.mxu0 %v10247
    %11511 = vmatpush.bf16.msra.mxu0 %v10235
    %11512 = vmatpush.bf16.msra.mxu0 %v10223
    %11513 = vmatmul.bf16.gmra.mxu0 %v7499
    %v11514 = vpop.f32.mrf.mxu0
    %v11515 = vadd.f32 %v11502, %v11514
    %v11516 = vpop.f32.mrf.mxu0
    %11517 = vdwg.mxu0
    %11518 = vmatpush.bf16.msra.mxu0 %v10403
    %11519 = vmatpush.bf16.msra.mxu0 %v10391
    %11520 = vmatpush.bf16.msra.mxu0 %v10379
    %11521 = vmatpush.bf16.msra.mxu0 %v10367
    %11522 = vmatpush.bf16.msra.mxu0 %v10355
    %11523 = vmatpush.bf16.msra.mxu0 %v10343
    %11524 = vmatpush.bf16.msra.mxu0 %v10331
    %11525 = vmatpush.bf16.msra.mxu0 %v10319
    %11526 = vmatmul.bf16.gmra.mxu0 %v7500
    %v11527 = vpop.f32.mrf.mxu0
    %v11528 = vadd.f32 %v11515, %v11527
    %v11529 = vpop.f32.mrf.mxu0
    %11530 = vdwg.mxu0
    %11531 = vmatpush.bf16.msra.mxu0 %v9924
    %11532 = vmatpush.bf16.msra.mxu0 %v9912
    %11533 = vmatpush.bf16.msra.mxu0 %v9900
    %11534 = vmatpush.bf16.msra.mxu0 %v9888
    %11535 = vmatpush.bf16.msra.mxu0 %v9876
    %11536 = vmatpush.bf16.msra.mxu0 %v9864
    %11537 = vmatpush.bf16.msra.mxu0 %v9852
    %11538 = vmatpush.bf16.msra.mxu0 %v9840
    %11539 = vmatmul.bf16.gmra.mxu0 %v7495
    %v11540 = vpop.f32.mrf.mxu0
    %v11541 = vadd.f32 %v8088, %v11540
    %v11542 = vpop.f32.mrf.mxu0
    %11543 = vdwg.mxu0
    %11544 = vmatpush.bf16.msra.mxu0 %v10020
    %11545 = vmatpush.bf16.msra.mxu0 %v10008
    %11546 = vmatpush.bf16.msra.mxu0 %v9996
    %11547 = vmatpush.bf16.msra.mxu0 %v9984
    %11548 = vmatpush.bf16.msra.mxu0 %v9972
    %11549 = vmatpush.bf16.msra.mxu0 %v9960
    %11550 = vmatpush.bf16.msra.mxu0 %v9948
    %11551 = vmatpush.bf16.msra.mxu0 %v9936
    %11552 = vmatmul.bf16.gmra.mxu0 %v7496
    %v11553 = vpop.f32.mrf.mxu0
    %v11554 = vadd.f32 %v11541, %v11553
    %v11555 = vpop.f32.mrf.mxu0
    %11556 = vdwg.mxu0
    %11557 = vmatpush.bf16.msra.mxu0 %v10116
    %11558 = vmatpush.bf16.msra.mxu0 %v10104
    %11559 = vmatpush.bf16.msra.mxu0 %v10092
    %11560 = vmatpush.bf16.msra.mxu0 %v10080
    %11561 = vmatpush.bf16.msra.mxu0 %v10068
    %11562 = vmatpush.bf16.msra.mxu0 %v10056
    %11563 = vmatpush.bf16.msra.mxu0 %v10044
    %11564 = vmatpush.bf16.msra.mxu0 %v10032
    %11565 = vmatmul.bf16.gmra.mxu0 %v7497
    %v11566 = vpop.f32.mrf.mxu0
    %v11567 = vadd.f32 %v11554, %v11566
    %v11568 = vpop.f32.mrf.mxu0
    %11569 = vdwg.mxu0
    %11570 = vmatpush.bf16.msra.mxu0 %v10212
    %11571 = vmatpush.bf16.msra.mxu0 %v10200
    %11572 = vmatpush.bf16.msra.mxu0 %v10188
    %11573 = vmatpush.bf16.msra.mxu0 %v10176
    %11574 = vmatpush.bf16.msra.mxu0 %v10164
    %11575 = vmatpush.bf16.msra.mxu0 %v10152
    %11576 = vmatpush.bf16.msra.mxu0 %v10140
    %11577 = vmatpush.bf16.msra.mxu0 %v10128
    %11578 = vmatmul.bf16.gmra.mxu0 %v7498
    %v11579 = vpop.f32.mrf.mxu0
    %v11580 = vadd.f32 %v11567, %v11579
    %v11581 = vpop.f32.mrf.mxu0
    %11582 = vdwg.mxu0
    %11583 = vmatpush.bf16.msra.mxu0 %v10308
    %11584 = vmatpush.bf16.msra.mxu0 %v10296
    %11585 = vmatpush.bf16.msra.mxu0 %v10284
    %11586 = vmatpush.bf16.msra.mxu0 %v10272
    %11587 = vmatpush.bf16.msra.mxu0 %v10260
    %11588 = vmatpush.bf16.msra.mxu0 %v10248
    %11589 = vmatpush.bf16.msra.mxu0 %v10236
    %11590 = vmatpush.bf16.msra.mxu0 %v10224
    %11591 = vmatmul.bf16.gmra.mxu0 %v7499
    %v11592 = vpop.f32.mrf.mxu0
    %v11593 = vadd.f32 %v11580, %v11592
    %v11594 = vpop.f32.mrf.mxu0
    %11595 = vdwg.mxu0
    %11596 = vmatpush.bf16.msra.mxu0 %v10404
    %11597 = vmatpush.bf16.msra.mxu0 %v10392
    %11598 = vmatpush.bf16.msra.mxu0 %v10380
    %11599 = vmatpush.bf16.msra.mxu0 %v10368
    %11600 = vmatpush.bf16.msra.mxu0 %v10356
    %11601 = vmatpush.bf16.msra.mxu0 %v10344
    %11602 = vmatpush.bf16.msra.mxu0 %v10332
    %11603 = vmatpush.bf16.msra.mxu0 %v10320
    %11604 = vmatmul.bf16.gmra.mxu0 %v7500
    %v11605 = vpop.f32.mrf.mxu0
    %v11606 = vadd.f32 %v11593, %v11605
    %v11607 = vpop.f32.mrf.mxu0
    %11608 = vdwg.mxu0
    %11609 = vmatpush.bf16.msra.mxu0 %v9925
    %11610 = vmatpush.bf16.msra.mxu0 %v9913
    %11611 = vmatpush.bf16.msra.mxu0 %v9901
    %11612 = vmatpush.bf16.msra.mxu0 %v9889
    %11613 = vmatpush.bf16.msra.mxu0 %v9877
    %11614 = vmatpush.bf16.msra.mxu0 %v9865
    %11615 = vmatpush.bf16.msra.mxu0 %v9853
    %11616 = vmatpush.bf16.msra.mxu0 %v9841
    %11617 = vmatmul.bf16.gmra.mxu0 %v7495
    %v11618 = vpop.f32.mrf.mxu0
    %v11619 = vadd.f32 %v8089, %v11618
    %v11620 = vpop.f32.mrf.mxu0
    %11621 = vdwg.mxu0
    %11622 = vmatpush.bf16.msra.mxu0 %v10021
    %11623 = vmatpush.bf16.msra.mxu0 %v10009
    %11624 = vmatpush.bf16.msra.mxu0 %v9997
    %11625 = vmatpush.bf16.msra.mxu0 %v9985
    %11626 = vmatpush.bf16.msra.mxu0 %v9973
    %11627 = vmatpush.bf16.msra.mxu0 %v9961
    %11628 = vmatpush.bf16.msra.mxu0 %v9949
    %11629 = vmatpush.bf16.msra.mxu0 %v9937
    %11630 = vmatmul.bf16.gmra.mxu0 %v7496
    %v11631 = vpop.f32.mrf.mxu0
    %v11632 = vadd.f32 %v11619, %v11631
    %v11633 = vpop.f32.mrf.mxu0
    %11634 = vdwg.mxu0
    %11635 = vmatpush.bf16.msra.mxu0 %v10117
    %11636 = vmatpush.bf16.msra.mxu0 %v10105
    %11637 = vmatpush.bf16.msra.mxu0 %v10093
    %11638 = vmatpush.bf16.msra.mxu0 %v10081
    %11639 = vmatpush.bf16.msra.mxu0 %v10069
    %11640 = vmatpush.bf16.msra.mxu0 %v10057
    %11641 = vmatpush.bf16.msra.mxu0 %v10045
    %11642 = vmatpush.bf16.msra.mxu0 %v10033
    %11643 = vmatmul.bf16.gmra.mxu0 %v7497
    %v11644 = vpop.f32.mrf.mxu0
    %v11645 = vadd.f32 %v11632, %v11644
    %v11646 = vpop.f32.mrf.mxu0
    %11647 = vdwg.mxu0
    %11648 = vmatpush.bf16.msra.mxu0 %v10213
    %11649 = vmatpush.bf16.msra.mxu0 %v10201
    %11650 = vmatpush.bf16.msra.mxu0 %v10189
    %11651 = vmatpush.bf16.msra.mxu0 %v10177
    %11652 = vmatpush.bf16.msra.mxu0 %v10165
    %11653 = vmatpush.bf16.msra.mxu0 %v10153
    %11654 = vmatpush.bf16.msra.mxu0 %v10141
    %11655 = vmatpush.bf16.msra.mxu0 %v10129
    %11656 = vmatmul.bf16.gmra.mxu0 %v7498
    %v11657 = vpop.f32.mrf.mxu0
    %v11658 = vadd.f32 %v11645, %v11657
    %v11659 = vpop.f32.mrf.mxu0
    %11660 = vdwg.mxu0
    %11661 = vmatpush.bf16.msra.mxu0 %v10309
    %11662 = vmatpush.bf16.msra.mxu0 %v10297
    %11663 = vmatpush.bf16.msra.mxu0 %v10285
    %11664 = vmatpush.bf16.msra.mxu0 %v10273
    %11665 = vmatpush.bf16.msra.mxu0 %v10261
    %11666 = vmatpush.bf16.msra.mxu0 %v10249
    %11667 = vmatpush.bf16.msra.mxu0 %v10237
    %11668 = vmatpush.bf16.msra.mxu0 %v10225
    %11669 = vmatmul.bf16.gmra.mxu0 %v7499
    %v11670 = vpop.f32.mrf.mxu0
    %v11671 = vadd.f32 %v11658, %v11670
    %v11672 = vpop.f32.mrf.mxu0
    %11673 = vdwg.mxu0
    %11674 = vmatpush.bf16.msra.mxu0 %v10405
    %11675 = vmatpush.bf16.msra.mxu0 %v10393
    %11676 = vmatpush.bf16.msra.mxu0 %v10381
    %11677 = vmatpush.bf16.msra.mxu0 %v10369
    %11678 = vmatpush.bf16.msra.mxu0 %v10357
    %11679 = vmatpush.bf16.msra.mxu0 %v10345
    %11680 = vmatpush.bf16.msra.mxu0 %v10333
    %11681 = vmatpush.bf16.msra.mxu0 %v10321
    %11682 = vmatmul.bf16.gmra.mxu0 %v7500
    %v11683 = vpop.f32.mrf.mxu0
    %v11684 = vadd.f32 %v11671, %v11683
    %v11685 = vpop.f32.mrf.mxu0
    %11686 = vdwg.mxu0
    %11687 = vmatpush.bf16.msra.mxu0 %v9926
    %11688 = vmatpush.bf16.msra.mxu0 %v9914
    %11689 = vmatpush.bf16.msra.mxu0 %v9902
    %11690 = vmatpush.bf16.msra.mxu0 %v9890
    %11691 = vmatpush.bf16.msra.mxu0 %v9878
    %11692 = vmatpush.bf16.msra.mxu0 %v9866
    %11693 = vmatpush.bf16.msra.mxu0 %v9854
    %11694 = vmatpush.bf16.msra.mxu0 %v9842
    %11695 = vmatmul.bf16.gmra.mxu0 %v7495
    %v11696 = vpop.f32.mrf.mxu0
    %v11697 = vadd.f32 %v8090, %v11696
    %v11698 = vpop.f32.mrf.mxu0
    %11699 = vdwg.mxu0
    %11700 = vmatpush.bf16.msra.mxu0 %v10022
    %11701 = vmatpush.bf16.msra.mxu0 %v10010
    %11702 = vmatpush.bf16.msra.mxu0 %v9998
    %11703 = vmatpush.bf16.msra.mxu0 %v9986
    %11704 = vmatpush.bf16.msra.mxu0 %v9974
    %11705 = vmatpush.bf16.msra.mxu0 %v9962
    %11706 = vmatpush.bf16.msra.mxu0 %v9950
    %11707 = vmatpush.bf16.msra.mxu0 %v9938
    %11708 = vmatmul.bf16.gmra.mxu0 %v7496
    %v11709 = vpop.f32.mrf.mxu0
    %v11710 = vadd.f32 %v11697, %v11709
    %v11711 = vpop.f32.mrf.mxu0
    %11712 = vdwg.mxu0
    %11713 = vmatpush.bf16.msra.mxu0 %v10118
    %11714 = vmatpush.bf16.msra.mxu0 %v10106
    %11715 = vmatpush.bf16.msra.mxu0 %v10094
    %11716 = vmatpush.bf16.msra.mxu0 %v10082
    %11717 = vmatpush.bf16.msra.mxu0 %v10070
    %11718 = vmatpush.bf16.msra.mxu0 %v10058
    %11719 = vmatpush.bf16.msra.mxu0 %v10046
    %11720 = vmatpush.bf16.msra.mxu0 %v10034
    %11721 = vmatmul.bf16.gmra.mxu0 %v7497
    %v11722 = vpop.f32.mrf.mxu0
    %v11723 = vadd.f32 %v11710, %v11722
    %v11724 = vpop.f32.mrf.mxu0
    %11725 = vdwg.mxu0
    %11726 = vmatpush.bf16.msra.mxu0 %v10214
    %11727 = vmatpush.bf16.msra.mxu0 %v10202
    %11728 = vmatpush.bf16.msra.mxu0 %v10190
    %11729 = vmatpush.bf16.msra.mxu0 %v10178
    %11730 = vmatpush.bf16.msra.mxu0 %v10166
    %11731 = vmatpush.bf16.msra.mxu0 %v10154
    %11732 = vmatpush.bf16.msra.mxu0 %v10142
    %11733 = vmatpush.bf16.msra.mxu0 %v10130
    %11734 = vmatmul.bf16.gmra.mxu0 %v7498
    %v11735 = vpop.f32.mrf.mxu0
    %v11736 = vadd.f32 %v11723, %v11735
    %v11737 = vpop.f32.mrf.mxu0
    %11738 = vdwg.mxu0
    %11739 = vmatpush.bf16.msra.mxu0 %v10310
    %11740 = vmatpush.bf16.msra.mxu0 %v10298
    %11741 = vmatpush.bf16.msra.mxu0 %v10286
    %11742 = vmatpush.bf16.msra.mxu0 %v10274
    %11743 = vmatpush.bf16.msra.mxu0 %v10262
    %11744 = vmatpush.bf16.msra.mxu0 %v10250
    %11745 = vmatpush.bf16.msra.mxu0 %v10238
    %11746 = vmatpush.bf16.msra.mxu0 %v10226
    %11747 = vmatmul.bf16.gmra.mxu0 %v7499
    %v11748 = vpop.f32.mrf.mxu0
    %v11749 = vadd.f32 %v11736, %v11748
    %v11750 = vpop.f32.mrf.mxu0
    %11751 = vdwg.mxu0
    %11752 = vmatpush.bf16.msra.mxu0 %v10406
    %11753 = vmatpush.bf16.msra.mxu0 %v10394
    %11754 = vmatpush.bf16.msra.mxu0 %v10382
    %11755 = vmatpush.bf16.msra.mxu0 %v10370
    %11756 = vmatpush.bf16.msra.mxu0 %v10358
    %11757 = vmatpush.bf16.msra.mxu0 %v10346
    %11758 = vmatpush.bf16.msra.mxu0 %v10334
    %11759 = vmatpush.bf16.msra.mxu0 %v10322
    %11760 = vmatmul.bf16.gmra.mxu0 %v7500
    %v11761 = vpop.f32.mrf.mxu0
    %v11762 = vadd.f32 %v11749, %v11761
    %v11763 = vpop.f32.mrf.mxu0
    %11764 = vdwg.mxu0
    %11765 = vmatpush.bf16.msra.mxu0 %v9927
    %11766 = vmatpush.bf16.msra.mxu0 %v9915
    %11767 = vmatpush.bf16.msra.mxu0 %v9903
    %11768 = vmatpush.bf16.msra.mxu0 %v9891
    %11769 = vmatpush.bf16.msra.mxu0 %v9879
    %11770 = vmatpush.bf16.msra.mxu0 %v9867
    %11771 = vmatpush.bf16.msra.mxu0 %v9855
    %11772 = vmatpush.bf16.msra.mxu0 %v9843
    %11773 = vmatmul.bf16.gmra.mxu0 %v7495
    %v11774 = vpop.f32.mrf.mxu0
    %v11775 = vadd.f32 %v8091, %v11774
    %v11776 = vpop.f32.mrf.mxu0
    %11777 = vdwg.mxu0
    %11778 = vmatpush.bf16.msra.mxu0 %v10023
    %11779 = vmatpush.bf16.msra.mxu0 %v10011
    %11780 = vmatpush.bf16.msra.mxu0 %v9999
    %11781 = vmatpush.bf16.msra.mxu0 %v9987
    %11782 = vmatpush.bf16.msra.mxu0 %v9975
    %11783 = vmatpush.bf16.msra.mxu0 %v9963
    %11784 = vmatpush.bf16.msra.mxu0 %v9951
    %11785 = vmatpush.bf16.msra.mxu0 %v9939
    %11786 = vmatmul.bf16.gmra.mxu0 %v7496
    %v11787 = vpop.f32.mrf.mxu0
    %v11788 = vadd.f32 %v11775, %v11787
    %v11789 = vpop.f32.mrf.mxu0
    %11790 = vdwg.mxu0
    %11791 = vmatpush.bf16.msra.mxu0 %v10119
    %11792 = vmatpush.bf16.msra.mxu0 %v10107
    %11793 = vmatpush.bf16.msra.mxu0 %v10095
    %11794 = vmatpush.bf16.msra.mxu0 %v10083
    %11795 = vmatpush.bf16.msra.mxu0 %v10071
    %11796 = vmatpush.bf16.msra.mxu0 %v10059
    %11797 = vmatpush.bf16.msra.mxu0 %v10047
    %11798 = vmatpush.bf16.msra.mxu0 %v10035
    %11799 = vmatmul.bf16.gmra.mxu0 %v7497
    %v11800 = vpop.f32.mrf.mxu0
    %v11801 = vadd.f32 %v11788, %v11800
    %v11802 = vpop.f32.mrf.mxu0
    %11803 = vdwg.mxu0
    %11804 = vmatpush.bf16.msra.mxu0 %v10215
    %11805 = vmatpush.bf16.msra.mxu0 %v10203
    %11806 = vmatpush.bf16.msra.mxu0 %v10191
    %11807 = vmatpush.bf16.msra.mxu0 %v10179
    %11808 = vmatpush.bf16.msra.mxu0 %v10167
    %11809 = vmatpush.bf16.msra.mxu0 %v10155
    %11810 = vmatpush.bf16.msra.mxu0 %v10143
    %11811 = vmatpush.bf16.msra.mxu0 %v10131
    %11812 = vmatmul.bf16.gmra.mxu0 %v7498
    %v11813 = vpop.f32.mrf.mxu0
    %v11814 = vadd.f32 %v11801, %v11813
    %v11815 = vpop.f32.mrf.mxu0
    %11816 = vdwg.mxu0
    %11817 = vmatpush.bf16.msra.mxu0 %v10311
    %11818 = vmatpush.bf16.msra.mxu0 %v10299
    %11819 = vmatpush.bf16.msra.mxu0 %v10287
    %11820 = vmatpush.bf16.msra.mxu0 %v10275
    %11821 = vmatpush.bf16.msra.mxu0 %v10263
    %11822 = vmatpush.bf16.msra.mxu0 %v10251
    %11823 = vmatpush.bf16.msra.mxu0 %v10239
    %11824 = vmatpush.bf16.msra.mxu0 %v10227
    %11825 = vmatmul.bf16.gmra.mxu0 %v7499
    %v11826 = vpop.f32.mrf.mxu0
    %v11827 = vadd.f32 %v11814, %v11826
    %v11828 = vpop.f32.mrf.mxu0
    %11829 = vdwg.mxu0
    %11830 = vmatpush.bf16.msra.mxu0 %v10407
    %11831 = vmatpush.bf16.msra.mxu0 %v10395
    %11832 = vmatpush.bf16.msra.mxu0 %v10383
    %11833 = vmatpush.bf16.msra.mxu0 %v10371
    %11834 = vmatpush.bf16.msra.mxu0 %v10359
    %11835 = vmatpush.bf16.msra.mxu0 %v10347
    %11836 = vmatpush.bf16.msra.mxu0 %v10335
    %11837 = vmatpush.bf16.msra.mxu0 %v10323
    %11838 = vmatmul.bf16.gmra.mxu0 %v7500
    %v11839 = vpop.f32.mrf.mxu0
    %v11840 = vadd.f32 %v11827, %v11839
    %v11841 = vpop.f32.mrf.mxu0
    %11842 = vdwg.mxu0
    %11843 = vmatpush.bf16.msra.mxu0 %v9928
    %11844 = vmatpush.bf16.msra.mxu0 %v9916
    %11845 = vmatpush.bf16.msra.mxu0 %v9904
    %11846 = vmatpush.bf16.msra.mxu0 %v9892
    %11847 = vmatpush.bf16.msra.mxu0 %v9880
    %11848 = vmatpush.bf16.msra.mxu0 %v9868
    %11849 = vmatpush.bf16.msra.mxu0 %v9856
    %11850 = vmatpush.bf16.msra.mxu0 %v9844
    %11851 = vmatmul.bf16.gmra.mxu0 %v7495
    %v11852 = vpop.f32.mrf.mxu0
    %v11853 = vadd.f32 %v8092, %v11852
    %v11854 = vpop.f32.mrf.mxu0
    %11855 = vdwg.mxu0
    %11856 = vmatpush.bf16.msra.mxu0 %v10024
    %11857 = vmatpush.bf16.msra.mxu0 %v10012
    %11858 = vmatpush.bf16.msra.mxu0 %v10000
    %11859 = vmatpush.bf16.msra.mxu0 %v9988
    %11860 = vmatpush.bf16.msra.mxu0 %v9976
    %11861 = vmatpush.bf16.msra.mxu0 %v9964
    %11862 = vmatpush.bf16.msra.mxu0 %v9952
    %11863 = vmatpush.bf16.msra.mxu0 %v9940
    %11864 = vmatmul.bf16.gmra.mxu0 %v7496
    %v11865 = vpop.f32.mrf.mxu0
    %v11866 = vadd.f32 %v11853, %v11865
    %v11867 = vpop.f32.mrf.mxu0
    %11868 = vdwg.mxu0
    %11869 = vmatpush.bf16.msra.mxu0 %v10120
    %11870 = vmatpush.bf16.msra.mxu0 %v10108
    %11871 = vmatpush.bf16.msra.mxu0 %v10096
    %11872 = vmatpush.bf16.msra.mxu0 %v10084
    %11873 = vmatpush.bf16.msra.mxu0 %v10072
    %11874 = vmatpush.bf16.msra.mxu0 %v10060
    %11875 = vmatpush.bf16.msra.mxu0 %v10048
    %11876 = vmatpush.bf16.msra.mxu0 %v10036
    %11877 = vmatmul.bf16.gmra.mxu0 %v7497
    %v11878 = vpop.f32.mrf.mxu0
    %v11879 = vadd.f32 %v11866, %v11878
    %v11880 = vpop.f32.mrf.mxu0
    %11881 = vdwg.mxu0
    %11882 = vmatpush.bf16.msra.mxu0 %v10216
    %11883 = vmatpush.bf16.msra.mxu0 %v10204
    %11884 = vmatpush.bf16.msra.mxu0 %v10192
    %11885 = vmatpush.bf16.msra.mxu0 %v10180
    %11886 = vmatpush.bf16.msra.mxu0 %v10168
    %11887 = vmatpush.bf16.msra.mxu0 %v10156
    %11888 = vmatpush.bf16.msra.mxu0 %v10144
    %11889 = vmatpush.bf16.msra.mxu0 %v10132
    %11890 = vmatmul.bf16.gmra.mxu0 %v7498
    %v11891 = vpop.f32.mrf.mxu0
    %v11892 = vadd.f32 %v11879, %v11891
    %v11893 = vpop.f32.mrf.mxu0
    %11894 = vdwg.mxu0
    %11895 = vmatpush.bf16.msra.mxu0 %v10312
    %11896 = vmatpush.bf16.msra.mxu0 %v10300
    %11897 = vmatpush.bf16.msra.mxu0 %v10288
    %11898 = vmatpush.bf16.msra.mxu0 %v10276
    %11899 = vmatpush.bf16.msra.mxu0 %v10264
    %11900 = vmatpush.bf16.msra.mxu0 %v10252
    %11901 = vmatpush.bf16.msra.mxu0 %v10240
    %11902 = vmatpush.bf16.msra.mxu0 %v10228
    %11903 = vmatmul.bf16.gmra.mxu0 %v7499
    %v11904 = vpop.f32.mrf.mxu0
    %v11905 = vadd.f32 %v11892, %v11904
    %v11906 = vpop.f32.mrf.mxu0
    %11907 = vdwg.mxu0
    %11908 = vmatpush.bf16.msra.mxu0 %v10408
    %11909 = vmatpush.bf16.msra.mxu0 %v10396
    %11910 = vmatpush.bf16.msra.mxu0 %v10384
    %11911 = vmatpush.bf16.msra.mxu0 %v10372
    %11912 = vmatpush.bf16.msra.mxu0 %v10360
    %11913 = vmatpush.bf16.msra.mxu0 %v10348
    %11914 = vmatpush.bf16.msra.mxu0 %v10336
    %11915 = vmatpush.bf16.msra.mxu0 %v10324
    %11916 = vmatmul.bf16.gmra.mxu0 %v7500
    %v11917 = vpop.f32.mrf.mxu0
    %v11918 = vadd.f32 %v11905, %v11917
    %v11919 = vpop.f32.mrf.mxu0
    %11920 = vdwg.mxu0
    %v11921 = vmul.f32 %v11060, 0.5
    %v11922 = vmul.f32 %v11138, 0.5
    %v11923 = vmul.f32 %v11216, 0.5
    %v11924 = vmul.f32 %v11294, 0.5
    %v11925 = vmul.f32 %v11372, 0.5
    %v11926 = vmul.f32 %v11450, 0.5
    %v11927 = vmul.f32 %v11528, 0.5
    %v11928 = vmul.f32 %v11606, 0.5
    %v11929 = vmul.f32 %v11684, 0.5
    %v11930 = vmul.f32 %v11762, 0.5
    %v11931 = vmul.f32 %v11840, 0.5
    %v11932 = vmul.f32 %v11918, 0.5
    %v11933 = vmul.f32 %v11060, 0.70710677
    %v11934 = vmul.f32 %v11138, 0.70710677
    %v11935 = vmul.f32 %v11216, 0.70710677
    %v11936 = vmul.f32 %v11294, 0.70710677
    %v11937 = vmul.f32 %v11372, 0.70710677
    %v11938 = vmul.f32 %v11450, 0.70710677
    %v11939 = vmul.f32 %v11528, 0.70710677
    %v11940 = vmul.f32 %v11606, 0.70710677
    %v11941 = vmul.f32 %v11684, 0.70710677
    %v11942 = vmul.f32 %v11762, 0.70710677
    %v11943 = vmul.f32 %v11840, 0.70710677
    %v11944 = vmul.f32 %v11918, 0.70710677
    %v11945 = vmul.f32 %v11933, %v11933
    %v11946 = vmin.f32 16.0, %v11945
    %v11947 = vmul.f32 %v11946, 2.1237322e-06
    %v11948 = vadd.f32 %v11947, 0.00028619796
    %v11949 = vmul.f32 %v11946, %v11948
    %v11950 = vadd.f32 %v11949, 0.0036580483
    %v11951 = vmul.f32 %v11946, %v11950
    %v11952 = vadd.f32 %v11951, 0.05243302
    %v11953 = vmul.f32 %v11946, %v11952
    %v11954 = vadd.f32 %v11953, 0.18741608
    %v11955 = vmul.f32 %v11946, %v11954
    %v11956 = vadd.f32 %v11955, 1.1283791
    %v11957 = vmul.f32 %v11933, %v11956
    %v11958 = vmul.f32 %v11946, 3.8918573e-05
    %v11959 = vadd.f32 %v11958, 0.001143296
    %v11960 = vmul.f32 %v11946, %v11959
    %v11961 = vadd.f32 %v11960, 0.014752088
    %v11962 = vmul.f32 %v11946, %v11961
    %v11963 = vadd.f32 %v11962, 0.112945676
    %v11964 = vmul.f32 %v11946, %v11963
    %v11965 = vadd.f32 %v11964, 0.4994258
    %v11966 = vmul.f32 %v11946, %v11965
    %v11967 = vadd.f32 %v11966, 1.0
    %v11968 = vrcp.pop %v11967
    %v11969 = vmul.f32 %v11967, %v11968
    %v11970 = vsub.f32 1.0, %v11969
    %v11971 = vmul.f32 %v11968, %v11970
    %v11972 = vadd.f32 %v11968, %v11971
    %vm11973 = vweird.f32 %v11967
    %vm11974 = vweird.f32 %v11968
    %vm11975 = vmor %vm11973, %vm11974
    %v11976 = vsel %vm11975, %v11968, %v11972
    %v11977 = vand.u32 2147483647, %v11967
    %vm11978 = vcmp.eq.f32.partialorder %v11977, 8.507059e+37
    %v11979 = vand.u32 %v11967, 2147483648
    %v11980 = vor.u32 1.1754944e-38, %v11979
    %v11981 = vsel %vm11978, %v11980, %v11976
    %v11982 = vmul.f32 %v11957, %v11981
    %v11983 = vmin.f32 %v11982, 1.0
    %v11984 = vmax.f32 %v11983, -1.0
    %v11985 = vmul.f32 %v11934, %v11934
    %v11986 = vmin.f32 16.0, %v11985
    %v11987 = vmul.f32 %v11986, 2.1237322e-06
    %v11988 = vadd.f32 %v11987, 0.00028619796
    %v11989 = vmul.f32 %v11986, %v11988
    %v11990 = vadd.f32 %v11989, 0.0036580483
    %v11991 = vmul.f32 %v11986, %v11990
    %v11992 = vadd.f32 %v11991, 0.05243302
    %v11993 = vmul.f32 %v11986, %v11992
    %v11994 = vadd.f32 %v11993, 0.18741608
    %v11995 = vmul.f32 %v11986, %v11994
    %v11996 = vadd.f32 %v11995, 1.1283791
    %v11997 = vmul.f32 %v11934, %v11996
    %v11998 = vmul.f32 %v11986, 3.8918573e-05
    %v11999 = vadd.f32 %v11998, 0.001143296
    %v12000 = vmul.f32 %v11986, %v11999
    %v12001 = vadd.f32 %v12000, 0.014752088
    %v12002 = vmul.f32 %v11986, %v12001
    %v12003 = vadd.f32 %v12002, 0.112945676
    %v12004 = vmul.f32 %v11986, %v12003
    %v12005 = vadd.f32 %v12004, 0.4994258
    %v12006 = vmul.f32 %v11986, %v12005
    %v12007 = vadd.f32 %v12006, 1.0
    %v12008 = vrcp.pop %v12007
    %v12009 = vmul.f32 %v12007, %v12008
    %v12010 = vsub.f32 1.0, %v12009
    %v12011 = vmul.f32 %v12008, %v12010
    %v12012 = vadd.f32 %v12008, %v12011
    %vm12013 = vweird.f32 %v12007
    %vm12014 = vweird.f32 %v12008
    %vm12015 = vmor %vm12013, %vm12014
    %v12016 = vsel %vm12015, %v12008, %v12012
    %v12017 = vand.u32 2147483647, %v12007
    %vm12018 = vcmp.eq.f32.partialorder %v12017, 8.507059e+37
    %v12019 = vand.u32 %v12007, 2147483648
    %v12020 = vor.u32 1.1754944e-38, %v12019
    %v12021 = vsel %vm12018, %v12020, %v12016
    %v12022 = vmul.f32 %v11997, %v12021
    %v12023 = vmin.f32 %v12022, 1.0
    %v12024 = vmax.f32 %v12023, -1.0
    %v12025 = vmul.f32 %v11935, %v11935
    %v12026 = vmin.f32 16.0, %v12025
    %v12027 = vmul.f32 %v12026, 2.1237322e-06
    %v12028 = vadd.f32 %v12027, 0.00028619796
    %v12029 = vmul.f32 %v12026, %v12028
    %v12030 = vadd.f32 %v12029, 0.0036580483
    %v12031 = vmul.f32 %v12026, %v12030
    %v12032 = vadd.f32 %v12031, 0.05243302
    %v12033 = vmul.f32 %v12026, %v12032
    %v12034 = vadd.f32 %v12033, 0.18741608
    %v12035 = vmul.f32 %v12026, %v12034
    %v12036 = vadd.f32 %v12035, 1.1283791
    %v12037 = vmul.f32 %v11935, %v12036
    %v12038 = vmul.f32 %v12026, 3.8918573e-05
    %v12039 = vadd.f32 %v12038, 0.001143296
    %v12040 = vmul.f32 %v12026, %v12039
    %v12041 = vadd.f32 %v12040, 0.014752088
    %v12042 = vmul.f32 %v12026, %v12041
    %v12043 = vadd.f32 %v12042, 0.112945676
    %v12044 = vmul.f32 %v12026, %v12043
    %v12045 = vadd.f32 %v12044, 0.4994258
    %v12046 = vmul.f32 %v12026, %v12045
    %v12047 = vadd.f32 %v12046, 1.0
    %v12048 = vrcp.pop %v12047
    %v12049 = vmul.f32 %v12047, %v12048
    %v12050 = vsub.f32 1.0, %v12049
    %v12051 = vmul.f32 %v12048, %v12050
    %v12052 = vadd.f32 %v12048, %v12051
    %vm12053 = vweird.f32 %v12047
    %vm12054 = vweird.f32 %v12048
    %vm12055 = vmor %vm12053, %vm12054
    %v12056 = vsel %vm12055, %v12048, %v12052
    %v12057 = vand.u32 2147483647, %v12047
    %vm12058 = vcmp.eq.f32.partialorder %v12057, 8.507059e+37
    %v12059 = vand.u32 %v12047, 2147483648
    %v12060 = vor.u32 1.1754944e-38, %v12059
    %v12061 = vsel %vm12058, %v12060, %v12056
    %v12062 = vmul.f32 %v12037, %v12061
    %v12063 = vmin.f32 %v12062, 1.0
    %v12064 = vmax.f32 %v12063, -1.0
    %v12065 = vmul.f32 %v11936, %v11936
    %v12066 = vmin.f32 16.0, %v12065
    %v12067 = vmul.f32 %v12066, 2.1237322e-06
    %v12068 = vadd.f32 %v12067, 0.00028619796
    %v12069 = vmul.f32 %v12066, %v12068
    %v12070 = vadd.f32 %v12069, 0.0036580483
    %v12071 = vmul.f32 %v12066, %v12070
    %v12072 = vadd.f32 %v12071, 0.05243302
    %v12073 = vmul.f32 %v12066, %v12072
    %v12074 = vadd.f32 %v12073, 0.18741608
    %v12075 = vmul.f32 %v12066, %v12074
    %v12076 = vadd.f32 %v12075, 1.1283791
    %v12077 = vmul.f32 %v11936, %v12076
    %v12078 = vmul.f32 %v12066, 3.8918573e-05
    %v12079 = vadd.f32 %v12078, 0.001143296
    %v12080 = vmul.f32 %v12066, %v12079
    %v12081 = vadd.f32 %v12080, 0.014752088
    %v12082 = vmul.f32 %v12066, %v12081
    %v12083 = vadd.f32 %v12082, 0.112945676
    %v12084 = vmul.f32 %v12066, %v12083
    %v12085 = vadd.f32 %v12084, 0.4994258
    %v12086 = vmul.f32 %v12066, %v12085
    %v12087 = vadd.f32 %v12086, 1.0
    %v12088 = vrcp.pop %v12087
    %v12089 = vmul.f32 %v12087, %v12088
    %v12090 = vsub.f32 1.0, %v12089
    %v12091 = vmul.f32 %v12088, %v12090
    %v12092 = vadd.f32 %v12088, %v12091
    %vm12093 = vweird.f32 %v12087
    %vm12094 = vweird.f32 %v12088
    %vm12095 = vmor %vm12093, %vm12094
    %v12096 = vsel %vm12095, %v12088, %v12092
    %v12097 = vand.u32 2147483647, %v12087
    %vm12098 = vcmp.eq.f32.partialorder %v12097, 8.507059e+37
    %v12099 = vand.u32 %v12087, 2147483648
    %v12100 = vor.u32 1.1754944e-38, %v12099
    %v12101 = vsel %vm12098, %v12100, %v12096
    %v12102 = vmul.f32 %v12077, %v12101
    %v12103 = vmin.f32 %v12102, 1.0
    %v12104 = vmax.f32 %v12103, -1.0
    %v12105 = vmul.f32 %v11937, %v11937
    %v12106 = vmin.f32 16.0, %v12105
    %v12107 = vmul.f32 %v12106, 2.1237322e-06
    %v12108 = vadd.f32 %v12107, 0.00028619796
    %v12109 = vmul.f32 %v12106, %v12108
    %v12110 = vadd.f32 %v12109, 0.0036580483
    %v12111 = vmul.f32 %v12106, %v12110
    %v12112 = vadd.f32 %v12111, 0.05243302
    %v12113 = vmul.f32 %v12106, %v12112
    %v12114 = vadd.f32 %v12113, 0.18741608
    %v12115 = vmul.f32 %v12106, %v12114
    %v12116 = vadd.f32 %v12115, 1.1283791
    %v12117 = vmul.f32 %v11937, %v12116
    %v12118 = vmul.f32 %v12106, 3.8918573e-05
    %v12119 = vadd.f32 %v12118, 0.001143296
    %v12120 = vmul.f32 %v12106, %v12119
    %v12121 = vadd.f32 %v12120, 0.014752088
    %v12122 = vmul.f32 %v12106, %v12121
    %v12123 = vadd.f32 %v12122, 0.112945676
    %v12124 = vmul.f32 %v12106, %v12123
    %v12125 = vadd.f32 %v12124, 0.4994258
    %v12126 = vmul.f32 %v12106, %v12125
    %v12127 = vadd.f32 %v12126, 1.0
    %v12128 = vrcp.pop %v12127
    %v12129 = vmul.f32 %v12127, %v12128
    %v12130 = vsub.f32 1.0, %v12129
    %v12131 = vmul.f32 %v12128, %v12130
    %v12132 = vadd.f32 %v12128, %v12131
    %vm12133 = vweird.f32 %v12127
    %vm12134 = vweird.f32 %v12128
    %vm12135 = vmor %vm12133, %vm12134
    %v12136 = vsel %vm12135, %v12128, %v12132
    %v12137 = vand.u32 2147483647, %v12127
    %vm12138 = vcmp.eq.f32.partialorder %v12137, 8.507059e+37
    %v12139 = vand.u32 %v12127, 2147483648
    %v12140 = vor.u32 1.1754944e-38, %v12139
    %v12141 = vsel %vm12138, %v12140, %v12136
    %v12142 = vmul.f32 %v12117, %v12141
    %v12143 = vmin.f32 %v12142, 1.0
    %v12144 = vmax.f32 %v12143, -1.0
    %v12145 = vmul.f32 %v11938, %v11938
    %v12146 = vmin.f32 16.0, %v12145
    %v12147 = vmul.f32 %v12146, 2.1237322e-06
    %v12148 = vadd.f32 %v12147, 0.00028619796
    %v12149 = vmul.f32 %v12146, %v12148
    %v12150 = vadd.f32 %v12149, 0.0036580483
    %v12151 = vmul.f32 %v12146, %v12150
    %v12152 = vadd.f32 %v12151, 0.05243302
    %v12153 = vmul.f32 %v12146, %v12152
    %v12154 = vadd.f32 %v12153, 0.18741608
    %v12155 = vmul.f32 %v12146, %v12154
    %v12156 = vadd.f32 %v12155, 1.1283791
    %v12157 = vmul.f32 %v11938, %v12156
    %v12158 = vmul.f32 %v12146, 3.8918573e-05
    %v12159 = vadd.f32 %v12158, 0.001143296
    %v12160 = vmul.f32 %v12146, %v12159
    %v12161 = vadd.f32 %v12160, 0.014752088
    %v12162 = vmul.f32 %v12146, %v12161
    %v12163 = vadd.f32 %v12162, 0.112945676
    %v12164 = vmul.f32 %v12146, %v12163
    %v12165 = vadd.f32 %v12164, 0.4994258
    %v12166 = vmul.f32 %v12146, %v12165
    %v12167 = vadd.f32 %v12166, 1.0
    %v12168 = vrcp.pop %v12167
    %v12169 = vmul.f32 %v12167, %v12168
    %v12170 = vsub.f32 1.0, %v12169
    %v12171 = vmul.f32 %v12168, %v12170
    %v12172 = vadd.f32 %v12168, %v12171
    %vm12173 = vweird.f32 %v12167
    %vm12174 = vweird.f32 %v12168
    %vm12175 = vmor %vm12173, %vm12174
    %v12176 = vsel %vm12175, %v12168, %v12172
    %v12177 = vand.u32 2147483647, %v12167
    %vm12178 = vcmp.eq.f32.partialorder %v12177, 8.507059e+37
    %v12179 = vand.u32 %v12167, 2147483648
    %v12180 = vor.u32 1.1754944e-38, %v12179
    %v12181 = vsel %vm12178, %v12180, %v12176
    %v12182 = vmul.f32 %v12157, %v12181
    %v12183 = vmin.f32 %v12182, 1.0
    %v12184 = vmax.f32 %v12183, -1.0
    %v12185 = vmul.f32 %v11939, %v11939
    %v12186 = vmin.f32 16.0, %v12185
    %v12187 = vmul.f32 %v12186, 2.1237322e-06
    %v12188 = vadd.f32 %v12187, 0.00028619796
    %v12189 = vmul.f32 %v12186, %v12188
    %v12190 = vadd.f32 %v12189, 0.0036580483
    %v12191 = vmul.f32 %v12186, %v12190
    %v12192 = vadd.f32 %v12191, 0.05243302
    %v12193 = vmul.f32 %v12186, %v12192
    %v12194 = vadd.f32 %v12193, 0.18741608
    %v12195 = vmul.f32 %v12186, %v12194
    %v12196 = vadd.f32 %v12195, 1.1283791
    %v12197 = vmul.f32 %v11939, %v12196
    %v12198 = vmul.f32 %v12186, 3.8918573e-05
    %v12199 = vadd.f32 %v12198, 0.001143296
    %v12200 = vmul.f32 %v12186, %v12199
    %v12201 = vadd.f32 %v12200, 0.014752088
    %v12202 = vmul.f32 %v12186, %v12201
    %v12203 = vadd.f32 %v12202, 0.112945676
    %v12204 = vmul.f32 %v12186, %v12203
    %v12205 = vadd.f32 %v12204, 0.4994258
    %v12206 = vmul.f32 %v12186, %v12205
    %v12207 = vadd.f32 %v12206, 1.0
    %v12208 = vrcp.pop %v12207
    %v12209 = vmul.f32 %v12207, %v12208
    %v12210 = vsub.f32 1.0, %v12209
    %v12211 = vmul.f32 %v12208, %v12210
    %v12212 = vadd.f32 %v12208, %v12211
    %vm12213 = vweird.f32 %v12207
    %vm12214 = vweird.f32 %v12208
    %vm12215 = vmor %vm12213, %vm12214
    %v12216 = vsel %vm12215, %v12208, %v12212
    %v12217 = vand.u32 2147483647, %v12207
    %vm12218 = vcmp.eq.f32.partialorder %v12217, 8.507059e+37
    %v12219 = vand.u32 %v12207, 2147483648
    %v12220 = vor.u32 1.1754944e-38, %v12219
    %v12221 = vsel %vm12218, %v12220, %v12216
    %v12222 = vmul.f32 %v12197, %v12221
    %v12223 = vmin.f32 %v12222, 1.0
    %v12224 = vmax.f32 %v12223, -1.0
    %v12225 = vmul.f32 %v11940, %v11940
    %v12226 = vmin.f32 16.0, %v12225
    %v12227 = vmul.f32 %v12226, 2.1237322e-06
    %v12228 = vadd.f32 %v12227, 0.00028619796
    %v12229 = vmul.f32 %v12226, %v12228
    %v12230 = vadd.f32 %v12229, 0.0036580483
    %v12231 = vmul.f32 %v12226, %v12230
    %v12232 = vadd.f32 %v12231, 0.05243302
    %v12233 = vmul.f32 %v12226, %v12232
    %v12234 = vadd.f32 %v12233, 0.18741608
    %v12235 = vmul.f32 %v12226, %v12234
    %v12236 = vadd.f32 %v12235, 1.1283791
    %v12237 = vmul.f32 %v11940, %v12236
    %v12238 = vmul.f32 %v12226, 3.8918573e-05
    %v12239 = vadd.f32 %v12238, 0.001143296
    %v12240 = vmul.f32 %v12226, %v12239
    %v12241 = vadd.f32 %v12240, 0.014752088
    %v12242 = vmul.f32 %v12226, %v12241
    %v12243 = vadd.f32 %v12242, 0.112945676
    %v12244 = vmul.f32 %v12226, %v12243
    %v12245 = vadd.f32 %v12244, 0.4994258
    %v12246 = vmul.f32 %v12226, %v12245
    %v12247 = vadd.f32 %v12246, 1.0
    %v12248 = vrcp.pop %v12247
    %v12249 = vmul.f32 %v12247, %v12248
    %v12250 = vsub.f32 1.0, %v12249
    %v12251 = vmul.f32 %v12248, %v12250
    %v12252 = vadd.f32 %v12248, %v12251
    %vm12253 = vweird.f32 %v12247
    %vm12254 = vweird.f32 %v12248
    %vm12255 = vmor %vm12253, %vm12254
    %v12256 = vsel %vm12255, %v12248, %v12252
    %v12257 = vand.u32 2147483647, %v12247
    %vm12258 = vcmp.eq.f32.partialorder %v12257, 8.507059e+37
    %v12259 = vand.u32 %v12247, 2147483648
    %v12260 = vor.u32 1.1754944e-38, %v12259
    %v12261 = vsel %vm12258, %v12260, %v12256
    %v12262 = vmul.f32 %v12237, %v12261
    %v12263 = vmin.f32 %v12262, 1.0
    %v12264 = vmax.f32 %v12263, -1.0
    %v12265 = vmul.f32 %v11941, %v11941
    %v12266 = vmin.f32 16.0, %v12265
    %v12267 = vmul.f32 %v12266, 2.1237322e-06
    %v12268 = vadd.f32 %v12267, 0.00028619796
    %v12269 = vmul.f32 %v12266, %v12268
    %v12270 = vadd.f32 %v12269, 0.0036580483
    %v12271 = vmul.f32 %v12266, %v12270
    %v12272 = vadd.f32 %v12271, 0.05243302
    %v12273 = vmul.f32 %v12266, %v12272
    %v12274 = vadd.f32 %v12273, 0.18741608
    %v12275 = vmul.f32 %v12266, %v12274
    %v12276 = vadd.f32 %v12275, 1.1283791
    %v12277 = vmul.f32 %v11941, %v12276
    %v12278 = vmul.f32 %v12266, 3.8918573e-05
    %v12279 = vadd.f32 %v12278, 0.001143296
    %v12280 = vmul.f32 %v12266, %v12279
    %v12281 = vadd.f32 %v12280, 0.014752088
    %v12282 = vmul.f32 %v12266, %v12281
    %v12283 = vadd.f32 %v12282, 0.112945676
    %v12284 = vmul.f32 %v12266, %v12283
    %v12285 = vadd.f32 %v12284, 0.4994258
    %v12286 = vmul.f32 %v12266, %v12285
    %v12287 = vadd.f32 %v12286, 1.0
    %v12288 = vrcp.pop %v12287
    %v12289 = vmul.f32 %v12287, %v12288
    %v12290 = vsub.f32 1.0, %v12289
    %v12291 = vmul.f32 %v12288, %v12290
    %v12292 = vadd.f32 %v12288, %v12291
    %vm12293 = vweird.f32 %v12287
    %vm12294 = vweird.f32 %v12288
    %vm12295 = vmor %vm12293, %vm12294
    %v12296 = vsel %vm12295, %v12288, %v12292
    %v12297 = vand.u32 2147483647, %v12287
    %vm12298 = vcmp.eq.f32.partialorder %v12297, 8.507059e+37
    %v12299 = vand.u32 %v12287, 2147483648
    %v12300 = vor.u32 1.1754944e-38, %v12299
    %v12301 = vsel %vm12298, %v12300, %v12296
    %v12302 = vmul.f32 %v12277, %v12301
    %v12303 = vmin.f32 %v12302, 1.0
    %v12304 = vmax.f32 %v12303, -1.0
    %v12305 = vmul.f32 %v11942, %v11942
    %v12306 = vmin.f32 16.0, %v12305
    %v12307 = vmul.f32 %v12306, 2.1237322e-06
    %v12308 = vadd.f32 %v12307, 0.00028619796
    %v12309 = vmul.f32 %v12306, %v12308
    %v12310 = vadd.f32 %v12309, 0.0036580483
    %v12311 = vmul.f32 %v12306, %v12310
    %v12312 = vadd.f32 %v12311, 0.05243302
    %v12313 = vmul.f32 %v12306, %v12312
    %v12314 = vadd.f32 %v12313, 0.18741608
    %v12315 = vmul.f32 %v12306, %v12314
    %v12316 = vadd.f32 %v12315, 1.1283791
    %v12317 = vmul.f32 %v11942, %v12316
    %v12318 = vmul.f32 %v12306, 3.8918573e-05
    %v12319 = vadd.f32 %v12318, 0.001143296
    %v12320 = vmul.f32 %v12306, %v12319
    %v12321 = vadd.f32 %v12320, 0.014752088
    %v12322 = vmul.f32 %v12306, %v12321
    %v12323 = vadd.f32 %v12322, 0.112945676
    %v12324 = vmul.f32 %v12306, %v12323
    %v12325 = vadd.f32 %v12324, 0.4994258
    %v12326 = vmul.f32 %v12306, %v12325
    %v12327 = vadd.f32 %v12326, 1.0
    %v12328 = vrcp.pop %v12327
    %v12329 = vmul.f32 %v12327, %v12328
    %v12330 = vsub.f32 1.0, %v12329
    %v12331 = vmul.f32 %v12328, %v12330
    %v12332 = vadd.f32 %v12328, %v12331
    %vm12333 = vweird.f32 %v12327
    %vm12334 = vweird.f32 %v12328
    %vm12335 = vmor %vm12333, %vm12334
    %v12336 = vsel %vm12335, %v12328, %v12332
    %v12337 = vand.u32 2147483647, %v12327
    %vm12338 = vcmp.eq.f32.partialorder %v12337, 8.507059e+37
    %v12339 = vand.u32 %v12327, 2147483648
    %v12340 = vor.u32 1.1754944e-38, %v12339
    %v12341 = vsel %vm12338, %v12340, %v12336
    %v12342 = vmul.f32 %v12317, %v12341
    %v12343 = vmin.f32 %v12342, 1.0
    %v12344 = vmax.f32 %v12343, -1.0
    %v12345 = vmul.f32 %v11943, %v11943
    %v12346 = vmin.f32 16.0, %v12345
    %v12347 = vmul.f32 %v12346, 2.1237322e-06
    %v12348 = vadd.f32 %v12347, 0.00028619796
    %v12349 = vmul.f32 %v12346, %v12348
    %v12350 = vadd.f32 %v12349, 0.0036580483
    %v12351 = vmul.f32 %v12346, %v12350
    %v12352 = vadd.f32 %v12351, 0.05243302
    %v12353 = vmul.f32 %v12346, %v12352
    %v12354 = vadd.f32 %v12353, 0.18741608
    %v12355 = vmul.f32 %v12346, %v12354
    %v12356 = vadd.f32 %v12355, 1.1283791
    %v12357 = vmul.f32 %v11943, %v12356
    %v12358 = vmul.f32 %v12346, 3.8918573e-05
    %v12359 = vadd.f32 %v12358, 0.001143296
    %v12360 = vmul.f32 %v12346, %v12359
    %v12361 = vadd.f32 %v12360, 0.014752088
    %v12362 = vmul.f32 %v12346, %v12361
    %v12363 = vadd.f32 %v12362, 0.112945676
    %v12364 = vmul.f32 %v12346, %v12363
    %v12365 = vadd.f32 %v12364, 0.4994258
    %v12366 = vmul.f32 %v12346, %v12365
    %v12367 = vadd.f32 %v12366, 1.0
    %v12368 = vrcp.pop %v12367
    %v12369 = vmul.f32 %v12367, %v12368
    %v12370 = vsub.f32 1.0, %v12369
    %v12371 = vmul.f32 %v12368, %v12370
    %v12372 = vadd.f32 %v12368, %v12371
    %vm12373 = vweird.f32 %v12367
    %vm12374 = vweird.f32 %v12368
    %vm12375 = vmor %vm12373, %vm12374
    %v12376 = vsel %vm12375, %v12368, %v12372
    %v12377 = vand.u32 2147483647, %v12367
    %vm12378 = vcmp.eq.f32.partialorder %v12377, 8.507059e+37
    %v12379 = vand.u32 %v12367, 2147483648
    %v12380 = vor.u32 1.1754944e-38, %v12379
    %v12381 = vsel %vm12378, %v12380, %v12376
    %v12382 = vmul.f32 %v12357, %v12381
    %v12383 = vmin.f32 %v12382, 1.0
    %v12384 = vmax.f32 %v12383, -1.0
    %v12385 = vmul.f32 %v11944, %v11944
    %v12386 = vmin.f32 16.0, %v12385
    %v12387 = vmul.f32 %v12386, 2.1237322e-06
    %v12388 = vadd.f32 %v12387, 0.00028619796
    %v12389 = vmul.f32 %v12386, %v12388
    %v12390 = vadd.f32 %v12389, 0.0036580483
    %v12391 = vmul.f32 %v12386, %v12390
    %v12392 = vadd.f32 %v12391, 0.05243302
    %v12393 = vmul.f32 %v12386, %v12392
    %v12394 = vadd.f32 %v12393, 0.18741608
    %v12395 = vmul.f32 %v12386, %v12394
    %v12396 = vadd.f32 %v12395, 1.1283791
    %v12397 = vmul.f32 %v11944, %v12396
    %v12398 = vmul.f32 %v12386, 3.8918573e-05
    %v12399 = vadd.f32 %v12398, 0.001143296
    %v12400 = vmul.f32 %v12386, %v12399
    %v12401 = vadd.f32 %v12400, 0.014752088
    %v12402 = vmul.f32 %v12386, %v12401
    %v12403 = vadd.f32 %v12402, 0.112945676
    %v12404 = vmul.f32 %v12386, %v12403
    %v12405 = vadd.f32 %v12404, 0.4994258
    %v12406 = vmul.f32 %v12386, %v12405
    %v12407 = vadd.f32 %v12406, 1.0
    %v12408 = vrcp.pop %v12407
    %v12409 = vmul.f32 %v12407, %v12408
    %v12410 = vsub.f32 1.0, %v12409
    %v12411 = vmul.f32 %v12408, %v12410
    %v12412 = vadd.f32 %v12408, %v12411
    %vm12413 = vweird.f32 %v12407
    %vm12414 = vweird.f32 %v12408
    %vm12415 = vmor %vm12413, %vm12414
    %v12416 = vsel %vm12415, %v12408, %v12412
    %v12417 = vand.u32 2147483647, %v12407
    %vm12418 = vcmp.eq.f32.partialorder %v12417, 8.507059e+37
    %v12419 = vand.u32 %v12407, 2147483648
    %v12420 = vor.u32 1.1754944e-38, %v12419
    %v12421 = vsel %vm12418, %v12420, %v12416
    %v12422 = vmul.f32 %v12397, %v12421
    %v12423 = vmin.f32 %v12422, 1.0
    %v12424 = vmax.f32 %v12423, -1.0
    %v12425 = vadd.f32 %v11984, 1.0
    %v12426 = vadd.f32 %v12024, 1.0
    %v12427 = vadd.f32 %v12064, 1.0
    %v12428 = vadd.f32 %v12104, 1.0
    %v12429 = vadd.f32 %v12144, 1.0
    %v12430 = vadd.f32 %v12184, 1.0
    %v12431 = vadd.f32 %v12224, 1.0
    %v12432 = vadd.f32 %v12264, 1.0
    %v12433 = vadd.f32 %v12304, 1.0
    %v12434 = vadd.f32 %v12344, 1.0
    %v12435 = vadd.f32 %v12384, 1.0
    %v12436 = vadd.f32 %v12424, 1.0
    %v12437 = vmul.f32 %v11921, %v12425
    %v12438 = vmul.f32 %v11922, %v12426
    %v12439 = vmul.f32 %v11923, %v12427
    %v12440 = vmul.f32 %v11924, %v12428
    %v12441 = vmul.f32 %v11925, %v12429
    %v12442 = vmul.f32 %v11926, %v12430
    %v12443 = vmul.f32 %v11927, %v12431
    %v12444 = vmul.f32 %v11928, %v12432
    %v12445 = vmul.f32 %v11929, %v12433
    %v12446 = vmul.f32 %v11930, %v12434
    %v12447 = vmul.f32 %v11931, %v12435
    %v12448 = vmul.f32 %v11932, %v12436
    %v12449 = vld [vmem:[#allocation21] sm:$0xff]
    %v12450 = vld [vmem:[#allocation21 + $0x8] sm:$0xf]
    %v12453 = vperm.slane %v12449, 0
    %v12454 = vperm.slane %v12449, 1
    %v12455 = vperm.slane %v12449, 2
    %v12456 = vperm.slane %v12449, 3
    %v12457 = vperm.slane %v12449, 4
    %v12458 = vperm.slane %v12449, 5
    %v12459 = vperm.slane %v12449, 6
    %v12460 = vperm.slane %v12449, 7
    %v12461 = vperm.slane %v12450, 0
    %v12462 = vperm.slane %v12450, 1
    %v12463 = vperm.slane %v12450, 2
    %v12464 = vperm.slane %v12450, 3
    %v12477 = vmul.f32 %v12437, %v12453
    %v12478 = vmul.f32 %v12438, %v12454
    %v12479 = vmul.f32 %v12439, %v12455
    %v12480 = vmul.f32 %v12440, %v12456
    %v12481 = vmul.f32 %v12441, %v12457
    %v12482 = vmul.f32 %v12442, %v12458
    %v12483 = vmul.f32 %v12443, %v12459
    %v12484 = vmul.f32 %v12444, %v12460
    %v12485 = vmul.f32 %v12445, %v12461
    %v12486 = vmul.f32 %v12446, %v12462
    %v12487 = vmul.f32 %v12447, %v12463
    %v12488 = vmul.f32 %v12448, %v12464
    %vm12489 = vcmask 1041408
    %v12490 = vsel %vm12489, %v12477, 0.0
    %v12491 = vsel %vm12489, %v12478, 0.0
    %v12492 = vadd.f32 %v12490, %v12491
    %v12493 = vsel %vm12489, %v12479, 0.0
    %v12494 = vadd.f32 %v12492, %v12493
    %v12495 = vsel %vm12489, %v12480, 0.0
    %v12496 = vadd.f32 %v12494, %v12495
    %v12497 = vsel %vm12489, %v12481, 0.0
    %v12498 = vadd.f32 %v12496, %v12497
    %v12499 = vsel %vm12489, %v12482, 0.0
    %v12500 = vadd.f32 %v12498, %v12499
    %v12501 = vsel %vm12489, %v12483, 0.0
    %v12502 = vadd.f32 %v12500, %v12501
    %v12503 = vsel %vm12489, %v12484, 0.0
    %v12504 = vadd.f32 %v12502, %v12503
    %v12505 = vsel %vm12489, %v12485, 0.0
    %v12506 = vadd.f32 %v12504, %v12505
    %v12507 = vsel %vm12489, %v12486, 0.0
    %v12508 = vadd.f32 %v12506, %v12507
    %v12509 = vsel %vm12489, %v12487, 0.0
    %v12510 = vadd.f32 %v12508, %v12509
    %v12511 = vsel %vm12489, %v12488, 0.0
    %v12512 = vadd.f32 %v12510, %v12511
    %12513 = vadd.xlane.f32.xlu0 %v12512
    %v12514 = vpop.xlane.xlu0 %12513
    %v12515 = vld [vmem:[#allocation3] sm:$0x1]
    %v12517 = vperm.slane %v12515, 0
    %v12519 = vadd.f32 %v12514, %v12517
    %12521 = vset.pattern.permute.xlu0 0
    %12522 = vperm.xlu0 %12521, %v12519
    %v12523 = vpop.permute.xlu0 %12522
    %12525 = vst [vmem:[#allocation22] sm:$0x3] %v12523
    // Predicated region
    $region98: #{tpu_custom_call.1} parent=1 // pred_check
      _
    $region99: #{tpu_custom_call.1} parent=1 // pred_check_branch
      %12527 = sbr.rel (0) target = $region101
    $region100: #{tpu_custom_call.1} parent=1 // pred_region
      %12529 = vsyncadd [#allocation6], 0
      %s12531 = sshll.u32 [#allocation22], 4
      %s12532 = int_to_ptr.vmem [resolvable:$true] %s12531
      %s12533 = sshll.u32 %s13, 4
      %s12534 = int_to_ptr.hbm [resolvable:$true] %s12533
      %12536 = dma.vmem_to_hbm [thread:$0]  %s12532, 32, %s12534, [#allocation6]
    $region101: #{tpu_custom_call.1} parent=1 // pred_fallthru
      _
    // Predicated region
    $region102: #{tpu_custom_call.1} parent=1 // pred_check
      _
    $region103: #{tpu_custom_call.1} parent=1 // pred_check_branch
      %12538 = sbr.rel (0) target = $region105
    $region104: #{tpu_custom_call.1} parent=1 // pred_region
      %12540 = dma.done [#allocation6], 32
    $region105: #{tpu_custom_call.1} parent=1 // pred_fallthru
      _
    %12541 = vsyncpa [#allocation5], 1
    %12542 = vsyncpa [#allocation8], 1
    %12543 = vsyncpa [#allocation11], 1
    %12544 = vsyncpa [#allocation14], 1
    %12545 = vsyncpa [#allocation17], 1
    %12546 = vsyncpa [#allocation20], 1
    %12547 = vsyncpa [#allocation6], 1

</llo_original>
